<compile_context>
chip_gen: v7x
topology: tpu7x:2x2x1
jax: 0.10.0
libtpu: 0.0.40
codegen_flags: <defaults>
</compile_context>

<pallas_src>
import functools

import jax
import jax.numpy as jnp
from jax import lax
from jax.experimental import pallas as pl
from jax.experimental.pallas import tpu as pltpu

BN_EPS = 1e-3


# ----------------------------------------------------------------------------
# Fused InceptionA kernel (`images_per_step` batch images per grid step)
# ----------------------------------------------------------------------------
def _inception_a_kernel(x_ref, w_red_ref, b_red_ref,
                        w33_ref, b33_ref,
                        w_bd3_ref, b_bd3_ref,
                        b_pool_ref,
                        o_ref,
                        pad33_ref, padpool_ref,
                        *, H, W, n1x1, n3x3, ndbl, npool, nred3, nredd):
    # x_ref   : (bn, H*W, Cin)  unpadded NHWC input (flattened spatial), compute dtype
    # w_red   : (Cin, nr + n1x1 + npool)  fused 1x1 weights
    #           columns = [b3_reduce | dbl_reduce | branch1x1 | pool_proj*(1/9)]
    # b_red   : (1, nr + n1x1) f32   (pool bias applied after pooling)
    # w33     : (9, nr, n3x3 + ndbl) block-diag merged [branch3x3_2 | branch3x3dbl_2]
    # w_bd3   : (9, ndbl, ndbl)      branch3x3dbl_3
    # o_ref   : (bn, H*W, n1x1+n3x3+ndbl+npool) f32  -- the torch.cat output slab
    # pad33   : (bn, H+2, W+2, max(nr, ndbl)) compute dtype -- shared padded scratch
    # padpool : (bn, H+2, W+2, npool) f32 -- padded pool-projection scratch
    cdt = x_ref.dtype
    bn = x_ref.shape[0]
    cin = x_ref.shape[2]
    m = H * W
    nr = nred3 + nredd
    ctot = n1x1 + n3x3 + ndbl + npool

    # ---- per-step halo zeroing (4 thin stores per buffer; interiors are fully
    #      overwritten below, so no full-buffer zero sweeps are needed).
    def zero_halo(ref):
        c = ref.shape[3]
        dt = ref.dtype
        ref[:, 0:1, :, :] = jnp.zeros((bn, 1, W + 2, c), dt)
        ref[:, H + 1:H + 2, :, :] = jnp.zeros((bn, 1, W + 2, c), dt)
        ref[:, :, 0:1, :] = jnp.zeros((bn, H + 2, 1, c), dt)
        ref[:, :, W + 1:W + 2, :] = jnp.zeros((bn, H + 2, 1, c), dt)

    zero_halo(pad33_ref)
    zero_halo(padpool_ref)

    # ---- fused 1x1 stage: all shared-x 1x1 convs (+ pool projection, using
    #      pool/1x1 commutativity) in ONE MXU matmul.  x is read exactly once.
    x2 = x_ref[...].reshape(bn * m, cin)
    red = jnp.dot(x2, w_red_ref[...], preferred_element_type=jnp.float32)
    red_act = jnp.maximum(red[:, :nr + n1x1] + b_red_ref[...], 0.0)
    red_r = red_act[:, :nr]            # [b3_reduce | dbl_reduce], offset-0 slice
    b1 = red_act[:, nr:]               # branch1x1 output (f32)
    pp = red[:, nr + n1x1:]            # pool projection (pre-pool; 1/9 in weights)

    # ---- branch_pool: separable 3x3 SUM pool of the npool-channel projection
    #      (f32 throughout), then bias + ReLU.
    padpool_ref[:, 1:H + 1, 1:W + 1, :] = pp.reshape(bn, H, W, npool)
    pv = padpool_ref[...]                                        # (bn,H+2,W+2,np)
    rows = pv[:, 0:H] + pv[:, 1:H + 1] + pv[:, 2:H + 2]          # (bn,H,W+2,np)
    pooled = rows[:, :, 0:W] + rows[:, :, 1:W + 1] + rows[:, :, 2:W + 2]
    bp = jnp.maximum(pooled.reshape(bn * m, npool) + b_pool_ref[...], 0.0)

    def conv3x3(c, w_ref):
        # 9 accumulated MXU dots of K=c: no im2col buffer, no masked tap stores.
        padv = pad33_ref[...]
        acc = None
        for dy in range(3):
            for dx in range(3):
                t = dy * 3 + dx
                tap = padv[:, dy:dy + H, dx:dx + W, :c].reshape(bn * m, c)
                d = jnp.dot(tap, w_ref[t], preferred_element_type=jnp.float32)
                acc = d if acc is None else acc + d
        return acc

    # ---- fused first 3x3 stage (branch3x3_2 + branch3x3dbl_2 share one padded
    #      scratch and one 3x3 pass via block-diagonal weights).
    pad33_ref[:, 1:H + 1, 1:W + 1, :nr] = red_r.reshape(bn, H, W, nr).astype(cdt)
    mid = jnp.maximum(conv3x3(nr, w33_ref) + b33_ref[...], 0.0)
    b3 = mid[:, :n3x3]
    bdm = mid[:, n3x3:]

    # ---- second 3x3 of the double branch (reuses the same scratch).
    pad33_ref[:, 1:H + 1, 1:W + 1, :ndbl] = bdm.reshape(bn, H, W, ndbl).astype(cdt)
    bd = jnp.maximum(conv3x3(ndbl, w_bd3_ref) + b_bd3_ref[...], 0.0)

    # ---- single lane-dense store of the concatenated output slab.
    o_ref[...] = jnp.concatenate([b1, b3, bd, bp], axis=-1).reshape(bn, m, ctot)


# ----------------------------------------------------------------------------
# Host-side parameter folding (BN scale folded into conv weights)
# ----------------------------------------------------------------------------
def _fold_bn(p):
    scale = p["gamma"] / jnp.sqrt(p["var"] + BN_EPS)
    bias = (p["beta"] - p["mean"] * scale).reshape(1, -1).astype(jnp.float32)
    return scale, bias


def _folded_w1x1(p, dtype, extra_scale=1.0):
    scale, bias = _fold_bn(p)
    w = p["w"][:, :, 0, 0] * scale[:, None] * extra_scale    # (Cout, Cin)
    return jnp.transpose(w, (1, 0)).astype(dtype), bias      # (Cin, Cout), (1,Cout)


def _folded_w3x3_taps(p, dtype):
    scale, bias = _fold_bn(p)
    cout, cin = p["w"].shape[0], p["w"].shape[1]
    w = p["w"] * scale[:, None, None, None]                   # (Cout, Cin, 3, 3)
    w = jnp.transpose(w, (2, 3, 1, 0)).reshape(9, cin, cout)  # (tap, Cin, Cout)
    return w.astype(dtype), bias


# ----------------------------------------------------------------------------
# Wrappers
# ----------------------------------------------------------------------------
def inception_a_forward_nhwc(x_nhwc, params, compute_dtype=jnp.float32,
                             images_per_step=1):
    n, h, w, cin = x_nhwc.shape
    bn = images_per_step
    assert n % bn == 0, "batch must be divisible by images_per_step"
    m = h * w

    # Order: [b3_reduce | dbl_reduce | b1 | pool] so the 3x3 feed is an
    # offset-0 slice of the fused 1x1 result.
    w_r3, b_r3 = _folded_w1x1(params["b3_1"], compute_dtype)
    w_rd, b_rd = _folded_w1x1(params["bd_1"], compute_dtype)
    w_b1, b_b1 = _folded_w1x1(params["b1"], compute_dtype)
    w_bp, b_bp = _folded_w1x1(params["bp"], compute_dtype, extra_scale=1.0 / 9.0)
    w_b3, b_b3 = _folded_w3x3_taps(params["b3_2"], compute_dtype)
    w_bd2, b_bd2 = _folded_w3x3_taps(params["bd_2"], compute_dtype)
    w_bd3, b_bd3 = _folded_w3x3_taps(params["bd_3"], compute_dtype)

    nred3, nredd = w_r3.shape[1], w_rd.shape[1]
    n1x1, npool = w_b1.shape[1], w_bp.shape[1]
    n3x3, ndbl = w_b3.shape[2], w_bd3.shape[2]
    nr = nred3 + nredd
    ctot = n1x1 + n3x3 + ndbl + npool

    w_red = jnp.concatenate([w_r3, w_rd, w_b1, w_bp], axis=1)   # (Cin, nr+n1x1+np)
    b_red = jnp.concatenate([b_r3, b_rd, b_b1], axis=1)         # (1, nr+n1x1)

    # Block-diagonal merged weight for the two parallel 3x3 convs.
    z1 = jnp.zeros((9, nred3, ndbl), compute_dtype)
    z2 = jnp.zeros((9, nredd, n3x3), compute_dtype)
    w33 = jnp.concatenate([jnp.concatenate([w_b3, z1], axis=2),
                           jnp.concatenate([z2, w_bd2], axis=2)], axis=1)
    b33 = jnp.concatenate([b_b3, b_bd2], axis=1)                 # (1, n3x3+ndbl)

    x2d = x_nhwc.reshape(n, m, cin).astype(compute_dtype)        # no host-side pad

    kernel = functools.partial(_inception_a_kernel, H=h, W=w, n1x1=n1x1,
                               n3x3=n3x3, ndbl=ndbl, npool=npool,
                               nred3=nred3, nredd=nredd)

    def whole(a):
        nd = a.ndim
        return pl.BlockSpec(a.shape, lambda i: (0,) * nd)

    maxc = max(nr, ndbl)
    grid = (n // bn,)

    out = pl.pallas_call(
        kernel,
        out_shape=jax.ShapeDtypeStruct((n, m, ctot), jnp.float32),
        grid=grid,
        in_specs=[
            pl.BlockSpec((bn, m, cin), lambda i: (i, 0, 0)),
            whole(w_red), whole(b_red),
            whole(w33), whole(b33),
            whole(w_bd3), whole(b_bd3),
            whole(b_bp),
        ],
        out_specs=pl.BlockSpec((bn, m, ctot), lambda i: (i, 0, 0)),
        scratch_shapes=[
            pltpu.VMEM((bn, h + 2, w + 2, maxc), compute_dtype),  # shared 3x3 pad
            pltpu.VMEM((bn, h + 2, w + 2, npool), jnp.float32),   # pool-proj pad
        ],
        compiler_params=pltpu.CompilerParams(
            dimension_semantics=("parallel",),
            vmem_limit_bytes=48 * 1024 * 1024),
    )(x2d, w_red, b_red, w33, b33, w_bd3, b_bd3, b_bp)
    # For production H/W (e.g. 35x35x288), add a row-block grid axis with a
    # 2-row halo to bound per-step VMEM; at these shapes grid=(N/bn,) suffices.
    return out.reshape(n, h, w, ctot)


def inception_a_forward(x_nchw, params, compute_dtype=jnp.float32,
                        images_per_step=1):
    # NCHW only at the module boundary (to match PyTorch); kernel is NHWC.
    x = jnp.transpose(x_nchw, (0, 2, 3, 1))
    y = inception_a_forward_nhwc(x, params, compute_dtype, images_per_step)
    return jnp.transpose(y, (0, 3, 1, 2))


# ----------------------------------------------------------------------------
# Deterministic synthetic parameters
# ----------------------------------------------------------------------------
def make_basic_conv_params(key, cin, cout, ksize):
    kw, kg, kb, km, kv = jax.random.split(key, 5)
    fan_in = cin * ksize * ksize
    w = jax.random.normal(kw, (cout, cin, ksize, ksize), jnp.float32) / jnp.sqrt(fan_in)
    gamma = jax.random.uniform(kg, (cout,), jnp.float32, 0.5, 1.5)
    beta = 0.1 * jax.random.normal(kb, (cout,), jnp.float32)
    mean = 0.1 * jax.random.normal(km, (cout,), jnp.float32)
    var = jax.random.uniform(kv, (cout,), jnp.float32, 0.5, 1.5)
    return {"w": w, "gamma": gamma, "beta": beta, "mean": mean, "var": var}


# ----------------------------------------------------------------------------
# Pure-JAX reference (NCHW) for correctness check
# ----------------------------------------------------------------------------
def ref_basic_conv(x, p, pad):
    y = lax.conv_general_dilated(
        x, p["w"], (1, 1), [(pad, pad), (pad, pad)],
        dimension_numbers=("NCHW", "OIHW", "NCHW"))
    scale = (p["gamma"] / jnp.sqrt(p["var"] + BN_EPS))[None, :, None, None]
    bias = (p["beta"] - p["mean"] * p["gamma"] / jnp.sqrt(p["var"] + BN_EPS))[None, :, None, None]
    return jnp.maximum(y * scale + bias, 0.0)


def ref_avgpool3x3(x):
    s = lax.reduce_window(x, 0.0, lax.add, (1, 1, 3, 3), (1, 1, 1, 1),
                          [(0, 0), (0, 0), (1, 1), (1, 1)])
    return s / 9.0  # count_include_pad=True (PyTorch default)


def ref_inception_a(x, params):
    b1 = ref_basic_conv(x, params["b1"], 0)
    b3 = ref_basic_conv(ref_basic_conv(x, params["b3_1"], 0), params["b3_2"], 1)
    bd = ref_basic_conv(x, params["bd_1"], 0)
    bd = ref_basic_conv(bd, params["bd_2"], 1)
    bd = ref_basic_conv(bd, params["bd_3"], 1)
    bp = ref_basic_conv(ref_avgpool3x3(x), params["bp"], 0)
    return jnp.concatenate([b1, b3, bd, bp], axis=1)


# ----------------------------------------------------------------------------
if __name__ == "__main__":
    key = jax.random.PRNGKey(0)
    N, C, H, W = 2, 16, 16, 16
    n1x1, n3x3_reduce, n3x3 = 8, 8, 16
    n3x3_dbl_reduce, n3x3_dbl, pool_proj = 8, 16, 8

    keys = jax.random.split(key, 8)
    x = jax.random.normal(keys[0], (N, C, H, W), jnp.float32)

    params = {
        "b1":   make_basic_conv_params(keys[1], C, n1x1, 1),
        "b3_1": make_basic_conv_params(keys[2], C, n3x3_reduce, 1),
        "b3_2": make_basic_conv_params(keys[3], n3x3_reduce, n3x3, 3),
        "bd_1": make_basic_conv_params(keys[4], C, n3x3_dbl_reduce, 1),
        "bd_2": make_basic_conv_params(keys[5], n3x3_dbl_reduce, n3x3_dbl, 3),
        "bd_3": make_basic_conv_params(keys[6], n3x3_dbl, n3x3_dbl, 3),
        "bp":   make_basic_conv_params(keys[7], C, pool_proj, 1),
    }

    ref = jax.block_until_ready(ref_inception_a(x, params))

    # f32 path, 1 image per grid step: tight check against PyTorch semantics.
    out = jax.block_until_ready(
        inception_a_forward(x, params, jnp.float32, images_per_step=1))
    assert out.shape == (N, n1x1 + n3x3 + n3x3_dbl + pool_proj, H, W), out.shape
    assert jnp.allclose(out, ref, atol=1e-3, rtol=1e-3), \
        float(jnp.max(jnp.abs(out - ref)))

    # bf16 matmul operands + 2 images per grid step (f32 accumulate/epilogue):
    # loose check only (bf16 round-trips of intermediates).
    out_bf16 = jax.block_until_ready(
        inception_a_forward(x, params, jnp.bfloat16, images_per_step=2))
    assert jnp.allclose(out_bf16, ref, atol=0.15, rtol=0.05), \
        float(jnp.max(jnp.abs(out_bf16 - ref)))

    print("KERNEL_OK")
</pallas_src>

<mosaic_0001>
module attributes {stable_mosaic.version = 11 : i64} {
  func.func @_inception_a_kernel(%arg0: i32, %arg1: memref<1x256x16xf32, #tpu.memory_space<vmem>>, %arg2: memref<16x32xf32, #tpu.memory_space<vmem>>, %arg3: memref<1x24xf32, #tpu.memory_space<vmem>>, %arg4: memref<9x16x32xf32, #tpu.memory_space<vmem>>, %arg5: memref<1x32xf32, #tpu.memory_space<vmem>>, %arg6: memref<9x16x16xf32, #tpu.memory_space<vmem>>, %arg7: memref<1x16xf32, #tpu.memory_space<vmem>>, %arg8: memref<1x8xf32, #tpu.memory_space<vmem>>, %arg9: memref<1x256x48xf32, #tpu.memory_space<vmem>>, %arg10: memref<1x18x18x16xf32, #tpu.memory_space<vmem>>, %arg11: memref<1x18x18x8xf32, #tpu.memory_space<vmem>>) attributes {dimension_semantics = [#tpu.dimension_semantics<parallel>], iteration_bounds = array<i64: 2>, scalar_prefetch = 0 : i64, scratch_operands = 2 : i64, tpu.core_type = #tpu.core_type<tc>, window_params = [{transform_indices = @transform_0, window_bounds = array<i64: 1, 256, 16>}, {pipeline_mode = #tpu.pipeline_mode<synchronous>, transform_indices = @transform_1, window_bounds = array<i64: 16, 32>}, {pipeline_mode = #tpu.pipeline_mode<synchronous>, transform_indices = @transform_2, window_bounds = array<i64: 1, 24>}, {pipeline_mode = #tpu.pipeline_mode<synchronous>, transform_indices = @transform_3, window_bounds = array<i64: 9, 16, 32>}, {pipeline_mode = #tpu.pipeline_mode<synchronous>, transform_indices = @transform_4, window_bounds = array<i64: 1, 32>}, {pipeline_mode = #tpu.pipeline_mode<synchronous>, transform_indices = @transform_5, window_bounds = array<i64: 9, 16, 16>}, {pipeline_mode = #tpu.pipeline_mode<synchronous>, transform_indices = @transform_6, window_bounds = array<i64: 1, 16>}, {pipeline_mode = #tpu.pipeline_mode<synchronous>, transform_indices = @transform_7, window_bounds = array<i64: 1, 8>}, {transform_indices = @transform_8, window_bounds = array<i64: 1, 256, 48>}]} {
    %cst = arith.constant 0.000000e+00 : f32
    %0 = vector.broadcast %cst : f32 to vector<1x1x18x16xf32>
    %c0 = arith.constant 0 : index
    %c0_0 = arith.constant 0 : index
    %c0_1 = arith.constant 0 : index
    %c0_2 = arith.constant 0 : index
    %1 = vector.load %arg10[%c0, %c0_0, %c0_1, %c0_2] : memref<1x18x18x16xf32, #tpu.memory_space<vmem>>, vector<1x1x18x16xf32>
    tpu.vector_store %arg10[%c0, %c0_0, %c0_1, %c0_2], %0 {strides = array<i32>} : memref<1x18x18x16xf32, #tpu.memory_space<vmem>>, vector<1x1x18x16xf32>,
    %cst_3 = arith.constant 0.000000e+00 : f32
    %2 = vector.broadcast %cst_3 : f32 to vector<1x1x18x16xf32>
    %c0_4 = arith.constant 0 : index
    %c17 = arith.constant 17 : index
    %c0_5 = arith.constant 0 : index
    %c0_6 = arith.constant 0 : index
    %3 = vector.load %arg10[%c0_4, %c17, %c0_5, %c0_6] : memref<1x18x18x16xf32, #tpu.memory_space<vmem>>, vector<1x1x18x16xf32>
    tpu.vector_store %arg10[%c0_4, %c17, %c0_5, %c0_6], %2 {strides = array<i32>} : memref<1x18x18x16xf32, #tpu.memory_space<vmem>>, vector<1x1x18x16xf32>,
    %cst_7 = arith.constant 0.000000e+00 : f32
    %4 = vector.broadcast %cst_7 : f32 to vector<1x18x1x16xf32>
    %c0_8 = arith.constant 0 : index
    %c0_9 = arith.constant 0 : index
    %c0_10 = arith.constant 0 : index
    %c0_11 = arith.constant 0 : index
    %5 = vector.load %arg10[%c0_8, %c0_9, %c0_10, %c0_11] : memref<1x18x18x16xf32, #tpu.memory_space<vmem>>, vector<1x18x1x16xf32>
    tpu.vector_store %arg10[%c0_8, %c0_9, %c0_10, %c0_11], %4 {strides = array<i32>} : memref<1x18x18x16xf32, #tpu.memory_space<vmem>>, vector<1x18x1x16xf32>,
    %cst_12 = arith.constant 0.000000e+00 : f32
    %6 = vector.broadcast %cst_12 : f32 to vector<1x18x1x16xf32>
    %c0_13 = arith.constant 0 : index
    %c0_14 = arith.constant 0 : index
    %c17_15 = arith.constant 17 : index
    %c0_16 = arith.constant 0 : index
    %7 = vector.load %arg10[%c0_13, %c0_14, %c17_15, %c0_16] : memref<1x18x18x16xf32, #tpu.memory_space<vmem>>, vector<1x18x1x16xf32>
    tpu.vector_store %arg10[%c0_13, %c0_14, %c17_15, %c0_16], %6 {strides = array<i32>} : memref<1x18x18x16xf32, #tpu.memory_space<vmem>>, vector<1x18x1x16xf32>,
    %cst_17 = arith.constant 0.000000e+00 : f32
    %8 = vector.broadcast %cst_17 : f32 to vector<1x1x18x8xf32>
    %c0_18 = arith.constant 0 : index
    %c0_19 = arith.constant 0 : index
    %c0_20 = arith.constant 0 : index
    %c0_21 = arith.constant 0 : index
    %9 = vector.load %arg11[%c0_18, %c0_19, %c0_20, %c0_21] : memref<1x18x18x8xf32, #tpu.memory_space<vmem>>, vector<1x1x18x8xf32>
    tpu.vector_store %arg11[%c0_18, %c0_19, %c0_20, %c0_21], %8 {strides = array<i32>} : memref<1x18x18x8xf32, #tpu.memory_space<vmem>>, vector<1x1x18x8xf32>,
    %cst_22 = arith.constant 0.000000e+00 : f32
    %10 = vector.broadcast %cst_22 : f32 to vector<1x1x18x8xf32>
    %c0_23 = arith.constant 0 : index
    %c17_24 = arith.constant 17 : index
    %c0_25 = arith.constant 0 : index
    %c0_26 = arith.constant 0 : index
    %11 = vector.load %arg11[%c0_23, %c17_24, %c0_25, %c0_26] : memref<1x18x18x8xf32, #tpu.memory_space<vmem>>, vector<1x1x18x8xf32>
    tpu.vector_store %arg11[%c0_23, %c17_24, %c0_25, %c0_26], %10 {strides = array<i32>} : memref<1x18x18x8xf32, #tpu.memory_space<vmem>>, vector<1x1x18x8xf32>,
    %cst_27 = arith.constant 0.000000e+00 : f32
    %12 = vector.broadcast %cst_27 : f32 to vector<1x18x1x8xf32>
    %c0_28 = arith.constant 0 : index
    %c0_29 = arith.constant 0 : index
    %c0_30 = arith.constant 0 : index
    %c0_31 = arith.constant 0 : index
    %13 = vector.load %arg11[%c0_28, %c0_29, %c0_30, %c0_31] : memref<1x18x18x8xf32, #tpu.memory_space<vmem>>, vector<1x18x1x8xf32>
    tpu.vector_store %arg11[%c0_28, %c0_29, %c0_30, %c0_31], %12 {strides = array<i32>} : memref<1x18x18x8xf32, #tpu.memory_space<vmem>>, vector<1x18x1x8xf32>,
    %cst_32 = arith.constant 0.000000e+00 : f32
    %14 = vector.broadcast %cst_32 : f32 to vector<1x18x1x8xf32>
    %c0_33 = arith.constant 0 : index
    %c0_34 = arith.constant 0 : index
    %c17_35 = arith.constant 17 : index
    %c0_36 = arith.constant 0 : index
    %15 = vector.load %arg11[%c0_33, %c0_34, %c17_35, %c0_36] : memref<1x18x18x8xf32, #tpu.memory_space<vmem>>, vector<1x18x1x8xf32>
    tpu.vector_store %arg11[%c0_33, %c0_34, %c17_35, %c0_36], %14 {strides = array<i32>} : memref<1x18x18x8xf32, #tpu.memory_space<vmem>>, vector<1x18x1x8xf32>,
    %c0_37 = arith.constant 0 : index
    %c0_38 = arith.constant 0 : index
    %c0_39 = arith.constant 0 : index
    %16 = vector.load %arg1[%c0_37, %c0_38, %c0_39] : memref<1x256x16xf32, #tpu.memory_space<vmem>>, vector<1x256x16xf32>
    %17 = vector.shape_cast %16 : vector<1x256x16xf32> to vector<256x16xf32>
    %c0_40 = arith.constant 0 : index
    %c0_41 = arith.constant 0 : index
    %18 = vector.load %arg2[%c0_40, %c0_41] : memref<16x32xf32, #tpu.memory_space<vmem>>, vector<16x32xf32>
    %cst_42 = arith.constant dense<0.000000e+00> : vector<256x32xf32>
    %19 = tpu.matmul %17, %18, %cst_42 {dimension_numbers = #tpu.dot_dimension_numbers<[1], [0], [0], [1], [0, 0, 1, 1], [], []>} : vector<256x16xf32>, vector<16x32xf32>, vector<256x32xf32> -> vector<256x32xf32>
    %20 = vector.extract_strided_slice %19 {offsets = [0, 0], sizes = [256, 24], strides = [1, 1]} : vector<256x32xf32> to vector<256x24xf32>
    %c0_43 = arith.constant 0 : index
    %c0_44 = arith.constant 0 : index
    %21 = vector.load %arg3[%c0_43, %c0_44] : memref<1x24xf32, #tpu.memory_space<vmem>>, vector<1x24xf32>
    %22 = vector.broadcast %21 : vector<1x24xf32> to vector<256x24xf32>
    %23 = arith.addf %20, %22 : vector<256x24xf32>
    %cst_45 = arith.constant 0.000000e+00 : f32
    %24 = vector.broadcast %cst_45 : f32 to vector<256x24xf32>
    %25 = arith.maximumf %23, %24 : vector<256x24xf32>
    %26 = vector.extract_strided_slice %25 {offsets = [0, 0], sizes = [256, 16], strides = [1, 1]} : vector<256x24xf32> to vector<256x16xf32>
    %27 = vector.extract_strided_slice %25 {offsets = [0, 16], sizes = [256, 8], strides = [1, 1]} : vector<256x24xf32> to vector<256x8xf32>
    %28 = vector.extract_strided_slice %19 {offsets = [0, 24], sizes = [256, 8], strides = [1, 1]} : vector<256x32xf32> to vector<256x8xf32>
    %29 = vector.shape_cast %28 : vector<256x8xf32> to vector<1x16x16x8xf32>
    %c0_46 = arith.constant 0 : index
    %c1 = arith.constant 1 : index
    %c1_47 = arith.constant 1 : index
    %c0_48 = arith.constant 0 : index
    %30 = vector.load %arg11[%c0_46, %c1, %c1_47, %c0_48] : memref<1x18x18x8xf32, #tpu.memory_space<vmem>>, vector<1x16x16x8xf32>
    tpu.vector_store %arg11[%c0_46, %c1, %c1_47, %c0_48], %29 {strides = array<i32>} : memref<1x18x18x8xf32, #tpu.memory_space<vmem>>, vector<1x16x16x8xf32>,
    %c0_49 = arith.constant 0 : index
    %c0_50 = arith.constant 0 : index
    %c0_51 = arith.constant 0 : index
    %c0_52 = arith.constant 0 : index
    %31 = vector.load %arg11[%c0_49, %c0_50, %c0_51, %c0_52] : memref<1x18x18x8xf32, #tpu.memory_space<vmem>>, vector<1x18x18x8xf32>
    %32 = vector.extract_strided_slice %31 {offsets = [0, 0, 0, 0], sizes = [1, 16, 18, 8], strides = [1, 1, 1, 1]} : vector<1x18x18x8xf32> to vector<1x16x18x8xf32>
    %33 = vector.extract_strided_slice %31 {offsets = [0, 1, 0, 0], sizes = [1, 16, 18, 8], strides = [1, 1, 1, 1]} : vector<1x18x18x8xf32> to vector<1x16x18x8xf32>
    %34 = arith.addf %32, %33 : vector<1x16x18x8xf32>
    %35 = vector.extract_strided_slice %31 {offsets = [0, 2, 0, 0], sizes = [1, 16, 18, 8], strides = [1, 1, 1, 1]} : vector<1x18x18x8xf32> to vector<1x16x18x8xf32>
    %36 = arith.addf %34, %35 : vector<1x16x18x8xf32>
    %37 = vector.extract_strided_slice %36 {offsets = [0, 0, 0, 0], sizes = [1, 16, 16, 8], strides = [1, 1, 1, 1]} : vector<1x16x18x8xf32> to vector<1x16x16x8xf32>
    %38 = vector.extract_strided_slice %36 {offsets = [0, 0, 1, 0], sizes = [1, 16, 16, 8], strides = [1, 1, 1, 1]} : vector<1x16x18x8xf32> to vector<1x16x16x8xf32>
    %39 = arith.addf %37, %38 : vector<1x16x16x8xf32>
    %40 = vector.extract_strided_slice %36 {offsets = [0, 0, 2, 0], sizes = [1, 16, 16, 8], strides = [1, 1, 1, 1]} : vector<1x16x18x8xf32> to vector<1x16x16x8xf32>
    %41 = arith.addf %39, %40 : vector<1x16x16x8xf32>
    %42 = vector.shape_cast %41 : vector<1x16x16x8xf32> to vector<256x8xf32>
    %c0_53 = arith.constant 0 : index
    %c0_54 = arith.constant 0 : index
    %43 = vector.load %arg8[%c0_53, %c0_54] : memref<1x8xf32, #tpu.memory_space<vmem>>, vector<1x8xf32>
    %44 = vector.broadcast %43 : vector<1x8xf32> to vector<256x8xf32>
    %45 = arith.addf %42, %44 : vector<256x8xf32>
    %cst_55 = arith.constant 0.000000e+00 : f32
    %46 = vector.broadcast %cst_55 : f32 to vector<256x8xf32>
    %47 = arith.maximumf %45, %46 : vector<256x8xf32>
    %48 = vector.shape_cast %26 : vector<256x16xf32> to vector<1x16x16x16xf32>
    %c0_56 = arith.constant 0 : index
    %c1_57 = arith.constant 1 : index
    %c1_58 = arith.constant 1 : index
    %c0_59 = arith.constant 0 : index
    %49 = vector.load %arg10[%c0_56, %c1_57, %c1_58, %c0_59] : memref<1x18x18x16xf32, #tpu.memory_space<vmem>>, vector<1x16x16x16xf32>
    tpu.vector_store %arg10[%c0_56, %c1_57, %c1_58, %c0_59], %48 {strides = array<i32>} : memref<1x18x18x16xf32, #tpu.memory_space<vmem>>, vector<1x16x16x16xf32>,
    %c0_60 = arith.constant 0 : index
    %c0_61 = arith.constant 0 : index
    %c0_62 = arith.constant 0 : index
    %c0_63 = arith.constant 0 : index
    %50 = vector.load %arg10[%c0_60, %c0_61, %c0_62, %c0_63] : memref<1x18x18x16xf32, #tpu.memory_space<vmem>>, vector<1x18x18x16xf32>
    %51 = vector.extract_strided_slice %50 {offsets = [0, 0, 0, 0], sizes = [1, 16, 16, 16], strides = [1, 1, 1, 1]} : vector<1x18x18x16xf32> to vector<1x16x16x16xf32>
    %52 = vector.shape_cast %51 : vector<1x16x16x16xf32> to vector<256x16xf32>
    %c0_64 = arith.constant 0 : index
    %c0_65 = arith.constant 0 : index
    %c0_66 = arith.constant 0 : index
    %53 = vector.load %arg4[%c0_64, %c0_65, %c0_66] : memref<9x16x32xf32, #tpu.memory_space<vmem>>, vector<1x16x32xf32>
    %54 = vector.shape_cast %53 : vector<1x16x32xf32> to vector<16x32xf32>
    %cst_67 = arith.constant dense<0.000000e+00> : vector<256x32xf32>
    %55 = tpu.matmul %52, %54, %cst_67 {dimension_numbers = #tpu.dot_dimension_numbers<[1], [0], [0], [1], [0, 0, 1, 1], [], []>} : vector<256x16xf32>, vector<16x32xf32>, vector<256x32xf32> -> vector<256x32xf32>
    %56 = vector.extract_strided_slice %50 {offsets = [0, 0, 1, 0], sizes = [1, 16, 16, 16], strides = [1, 1, 1, 1]} : vector<1x18x18x16xf32> to vector<1x16x16x16xf32>
    %57 = vector.shape_cast %56 : vector<1x16x16x16xf32> to vector<256x16xf32>
    %c1_68 = arith.constant 1 : index
    %c0_69 = arith.constant 0 : index
    %c0_70 = arith.constant 0 : index
    %58 = vector.load %arg4[%c1_68, %c0_69, %c0_70] : memref<9x16x32xf32, #tpu.memory_space<vmem>>, vector<1x16x32xf32>
    %59 = vector.shape_cast %58 : vector<1x16x32xf32> to vector<16x32xf32>
    %cst_71 = arith.constant dense<0.000000e+00> : vector<256x32xf32>
    %60 = tpu.matmul %57, %59, %cst_71 {dimension_numbers = #tpu.dot_dimension_numbers<[1], [0], [0], [1], [0, 0, 1, 1], [], []>} : vector<256x16xf32>, vector<16x32xf32>, vector<256x32xf32> -> vector<256x32xf32>
    %61 = arith.addf %55, %60 : vector<256x32xf32>
    %62 = vector.extract_strided_slice %50 {offsets = [0, 0, 2, 0], sizes = [1, 16, 16, 16], strides = [1, 1, 1, 1]} : vector<1x18x18x16xf32> to vector<1x16x16x16xf32>
    %63 = vector.shape_cast %62 : vector<1x16x16x16xf32> to vector<256x16xf32>
    %c2 = arith.constant 2 : index
    %c0_72 = arith.constant 0 : index
    %c0_73 = arith.constant 0 : index
    %64 = vector.load %arg4[%c2, %c0_72, %c0_73] : memref<9x16x32xf32, #tpu.memory_space<vmem>>, vector<1x16x32xf32>
    %65 = vector.shape_cast %64 : vector<1x16x32xf32> to vector<16x32xf32>
    %cst_74 = arith.constant dense<0.000000e+00> : vector<256x32xf32>
    %66 = tpu.matmul %63, %65, %cst_74 {dimension_numbers = #tpu.dot_dimension_numbers<[1], [0], [0], [1], [0, 0, 1, 1], [], []>} : vector<256x16xf32>, vector<16x32xf32>, vector<256x32xf32> -> vector<256x32xf32>
    %67 = arith.addf %61, %66 : vector<256x32xf32>
    %68 = vector.extract_strided_slice %50 {offsets = [0, 1, 0, 0], sizes = [1, 16, 16, 16], strides = [1, 1, 1, 1]} : vector<1x18x18x16xf32> to vector<1x16x16x16xf32>
    %69 = vector.shape_cast %68 : vector<1x16x16x16xf32> to vector<256x16xf32>
    %c3 = arith.constant 3 : index
    %c0_75 = arith.constant 0 : index
    %c0_76 = arith.constant 0 : index
    %70 = vector.load %arg4[%c3, %c0_75, %c0_76] : memref<9x16x32xf32, #tpu.memory_space<vmem>>, vector<1x16x32xf32>
    %71 = vector.shape_cast %70 : vector<1x16x32xf32> to vector<16x32xf32>
    %cst_77 = arith.constant dense<0.000000e+00> : vector<256x32xf32>
    %72 = tpu.matmul %69, %71, %cst_77 {dimension_numbers = #tpu.dot_dimension_numbers<[1], [0], [0], [1], [0, 0, 1, 1], [], []>} : vector<256x16xf32>, vector<16x32xf32>, vector<256x32xf32> -> vector<256x32xf32>
    %73 = arith.addf %67, %72 : vector<256x32xf32>
    %74 = vector.extract_strided_slice %50 {offsets = [0, 1, 1, 0], sizes = [1, 16, 16, 16], strides = [1, 1, 1, 1]} : vector<1x18x18x16xf32> to vector<1x16x16x16xf32>
    %75 = vector.shape_cast %74 : vector<1x16x16x16xf32> to vector<256x16xf32>
    %c4 = arith.constant 4 : index
    %c0_78 = arith.constant 0 : index
    %c0_79 = arith.constant 0 : index
    %76 = vector.load %arg4[%c4, %c0_78, %c0_79] : memref<9x16x32xf32, #tpu.memory_space<vmem>>, vector<1x16x32xf32>
    %77 = vector.shape_cast %76 : vector<1x16x32xf32> to vector<16x32xf32>
    %cst_80 = arith.constant dense<0.000000e+00> : vector<256x32xf32>
    %78 = tpu.matmul %75, %77, %cst_80 {dimension_numbers = #tpu.dot_dimension_numbers<[1], [0], [0], [1], [0, 0, 1, 1], [], []>} : vector<256x16xf32>, vector<16x32xf32>, vector<256x32xf32> -> vector<256x32xf32>
    %79 = arith.addf %73, %78 : vector<256x32xf32>
    %80 = vector.extract_strided_slice %50 {offsets = [0, 1, 2, 0], sizes = [1, 16, 16, 16], strides = [1, 1, 1, 1]} : vector<1x18x18x16xf32> to vector<1x16x16x16xf32>
    %81 = vector.shape_cast %80 : vector<1x16x16x16xf32> to vector<256x16xf32>
    %c5 = arith.constant 5 : index
    %c0_81 = arith.constant 0 : index
    %c0_82 = arith.constant 0 : index
    %82 = vector.load %arg4[%c5, %c0_81, %c0_82] : memref<9x16x32xf32, #tpu.memory_space<vmem>>, vector<1x16x32xf32>
    %83 = vector.shape_cast %82 : vector<1x16x32xf32> to vector<16x32xf32>
    %cst_83 = arith.constant dense<0.000000e+00> : vector<256x32xf32>
    %84 = tpu.matmul %81, %83, %cst_83 {dimension_numbers = #tpu.dot_dimension_numbers<[1], [0], [0], [1], [0, 0, 1, 1], [], []>} : vector<256x16xf32>, vector<16x32xf32>, vector<256x32xf32> -> vector<256x32xf32>
    %85 = arith.addf %79, %84 : vector<256x32xf32>
    %86 = vector.extract_strided_slice %50 {offsets = [0, 2, 0, 0], sizes = [1, 16, 16, 16], strides = [1, 1, 1, 1]} : vector<1x18x18x16xf32> to vector<1x16x16x16xf32>
    %87 = vector.shape_cast %86 : vector<1x16x16x16xf32> to vector<256x16xf32>
    %c6 = arith.constant 6 : index
    %c0_84 = arith.constant 0 : index
    %c0_85 = arith.constant 0 : index
    %88 = vector.load %arg4[%c6, %c0_84, %c0_85] : memref<9x16x32xf32, #tpu.memory_space<vmem>>, vector<1x16x32xf32>
    %89 = vector.shape_cast %88 : vector<1x16x32xf32> to vector<16x32xf32>
    %cst_86 = arith.constant dense<0.000000e+00> : vector<256x32xf32>
    %90 = tpu.matmul %87, %89, %cst_86 {dimension_numbers = #tpu.dot_dimension_numbers<[1], [0], [0], [1], [0, 0, 1, 1], [], []>} : vector<256x16xf32>, vector<16x32xf32>, vector<256x32xf32> -> vector<256x32xf32>
    %91 = arith.addf %85, %90 : vector<256x32xf32>
    %92 = vector.extract_strided_slice %50 {offsets = [0, 2, 1, 0], sizes = [1, 16, 16, 16], strides = [1, 1, 1, 1]} : vector<1x18x18x16xf32> to vector<1x16x16x16xf32>
    %93 = vector.shape_cast %92 : vector<1x16x16x16xf32> to vector<256x16xf32>
    %c7 = arith.constant 7 : index
    %c0_87 = arith.constant 0 : index
    %c0_88 = arith.constant 0 : index
    %94 = vector.load %arg4[%c7, %c0_87, %c0_88] : memref<9x16x32xf32, #tpu.memory_space<vmem>>, vector<1x16x32xf32>
    %95 = vector.shape_cast %94 : vector<1x16x32xf32> to vector<16x32xf32>
    %cst_89 = arith.constant dense<0.000000e+00> : vector<256x32xf32>
    %96 = tpu.matmul %93, %95, %cst_89 {dimension_numbers = #tpu.dot_dimension_numbers<[1], [0], [0], [1], [0, 0, 1, 1], [], []>} : vector<256x16xf32>, vector<16x32xf32>, vector<256x32xf32> -> vector<256x32xf32>
    %97 = arith.addf %91, %96 : vector<256x32xf32>
    %98 = vector.extract_strided_slice %50 {offsets = [0, 2, 2, 0], sizes = [1, 16, 16, 16], strides = [1, 1, 1, 1]} : vector<1x18x18x16xf32> to vector<1x16x16x16xf32>
    %99 = vector.shape_cast %98 : vector<1x16x16x16xf32> to vector<256x16xf32>
    %c8 = arith.constant 8 : index
    %c0_90 = arith.constant 0 : index
    %c0_91 = arith.constant 0 : index
    %100 = vector.load %arg4[%c8, %c0_90, %c0_91] : memref<9x16x32xf32, #tpu.memory_space<vmem>>, vector<1x16x32xf32>
    %101 = vector.shape_cast %100 : vector<1x16x32xf32> to vector<16x32xf32>
    %cst_92 = arith.constant dense<0.000000e+00> : vector<256x32xf32>
    %102 = tpu.matmul %99, %101, %cst_92 {dimension_numbers = #tpu.dot_dimension_numbers<[1], [0], [0], [1], [0, 0, 1, 1], [], []>} : vector<256x16xf32>, vector<16x32xf32>, vector<256x32xf32> -> vector<256x32xf32>
    %103 = arith.addf %97, %102 : vector<256x32xf32>
    %c0_93 = arith.constant 0 : index
    %c0_94 = arith.constant 0 : index
    %104 = vector.load %arg5[%c0_93, %c0_94] : memref<1x32xf32, #tpu.memory_space<vmem>>, vector<1x32xf32>
    %105 = vector.broadcast %104 : vector<1x32xf32> to vector<256x32xf32>
    %106 = arith.addf %103, %105 : vector<256x32xf32>
    %cst_95 = arith.constant 0.000000e+00 : f32
    %107 = vector.broadcast %cst_95 : f32 to vector<256x32xf32>
    %108 = arith.maximumf %106, %107 : vector<256x32xf32>
    %109 = vector.extract_strided_slice %108 {offsets = [0, 0], sizes = [256, 16], strides = [1, 1]} : vector<256x32xf32> to vector<256x16xf32>
    %110 = vector.extract_strided_slice %108 {offsets = [0, 16], sizes = [256, 16], strides = [1, 1]} : vector<256x32xf32> to vector<256x16xf32>
    %111 = vector.shape_cast %110 : vector<256x16xf32> to vector<1x16x16x16xf32>
    %c0_96 = arith.constant 0 : index
    %c1_97 = arith.constant 1 : index
    %c1_98 = arith.constant 1 : index
    %c0_99 = arith.constant 0 : index
    %112 = vector.load %arg10[%c0_96, %c1_97, %c1_98, %c0_99] : memref<1x18x18x16xf32, #tpu.memory_space<vmem>>, vector<1x16x16x16xf32>
    tpu.vector_store %arg10[%c0_96, %c1_97, %c1_98, %c0_99], %111 {strides = array<i32>} : memref<1x18x18x16xf32, #tpu.memory_space<vmem>>, vector<1x16x16x16xf32>,
    %c0_100 = arith.constant 0 : index
    %c0_101 = arith.constant 0 : index
    %c0_102 = arith.constant 0 : index
    %c0_103 = arith.constant 0 : index
    %113 = vector.load %arg10[%c0_100, %c0_101, %c0_102, %c0_103] : memref<1x18x18x16xf32, #tpu.memory_space<vmem>>, vector<1x18x18x16xf32>
    %114 = vector.extract_strided_slice %113 {offsets = [0, 0, 0, 0], sizes = [1, 16, 16, 16], strides = [1, 1, 1, 1]} : vector<1x18x18x16xf32> to vector<1x16x16x16xf32>
    %115 = vector.shape_cast %114 : vector<1x16x16x16xf32> to vector<256x16xf32>
    %c0_104 = arith.constant 0 : index
    %c0_105 = arith.constant 0 : index
    %c0_106 = arith.constant 0 : index
    %116 = vector.load %arg6[%c0_104, %c0_105, %c0_106] : memref<9x16x16xf32, #tpu.memory_space<vmem>>, vector<1x16x16xf32>
    %117 = vector.shape_cast %116 : vector<1x16x16xf32> to vector<16x16xf32>
    %cst_107 = arith.constant dense<0.000000e+00> : vector<256x16xf32>
    %118 = tpu.matmul %115, %117, %cst_107 {dimension_numbers = #tpu.dot_dimension_numbers<[1], [0], [0], [1], [0, 0, 1, 1], [], []>} : vector<256x16xf32>, vector<16x16xf32>, vector<256x16xf32> -> vector<256x16xf32>
    %119 = vector.extract_strided_slice %113 {offsets = [0, 0, 1, 0], sizes = [1, 16, 16, 16], strides = [1, 1, 1, 1]} : vector<1x18x18x16xf32> to vector<1x16x16x16xf32>
    %120 = vector.shape_cast %119 : vector<1x16x16x16xf32> to vector<256x16xf32>
    %c1_108 = arith.constant 1 : index
    %c0_109 = arith.constant 0 : index
    %c0_110 = arith.constant 0 : index
    %121 = vector.load %arg6[%c1_108, %c0_109, %c0_110] : memref<9x16x16xf32, #tpu.memory_space<vmem>>, vector<1x16x16xf32>
    %122 = vector.shape_cast %121 : vector<1x16x16xf32> to vector<16x16xf32>
    %cst_111 = arith.constant dense<0.000000e+00> : vector<256x16xf32>
    %123 = tpu.matmul %120, %122, %cst_111 {dimension_numbers = #tpu.dot_dimension_numbers<[1], [0], [0], [1], [0, 0, 1, 1], [], []>} : vector<256x16xf32>, vector<16x16xf32>, vector<256x16xf32> -> vector<256x16xf32>
    %124 = arith.addf %118, %123 : vector<256x16xf32>
    %125 = vector.extract_strided_slice %113 {offsets = [0, 0, 2, 0], sizes = [1, 16, 16, 16], strides = [1, 1, 1, 1]} : vector<1x18x18x16xf32> to vector<1x16x16x16xf32>
    %126 = vector.shape_cast %125 : vector<1x16x16x16xf32> to vector<256x16xf32>
    %c2_112 = arith.constant 2 : index
    %c0_113 = arith.constant 0 : index
    %c0_114 = arith.constant 0 : index
    %127 = vector.load %arg6[%c2_112, %c0_113, %c0_114] : memref<9x16x16xf32, #tpu.memory_space<vmem>>, vector<1x16x16xf32>
    %128 = vector.shape_cast %127 : vector<1x16x16xf32> to vector<16x16xf32>
    %cst_115 = arith.constant dense<0.000000e+00> : vector<256x16xf32>
    %129 = tpu.matmul %126, %128, %cst_115 {dimension_numbers = #tpu.dot_dimension_numbers<[1], [0], [0], [1], [0, 0, 1, 1], [], []>} : vector<256x16xf32>, vector<16x16xf32>, vector<256x16xf32> -> vector<256x16xf32>
    %130 = arith.addf %124, %129 : vector<256x16xf32>
    %131 = vector.extract_strided_slice %113 {offsets = [0, 1, 0, 0], sizes = [1, 16, 16, 16], strides = [1, 1, 1, 1]} : vector<1x18x18x16xf32> to vector<1x16x16x16xf32>
    %132 = vector.shape_cast %131 : vector<1x16x16x16xf32> to vector<256x16xf32>
    %c3_116 = arith.constant 3 : index
    %c0_117 = arith.constant 0 : index
    %c0_118 = arith.constant 0 : index
    %133 = vector.load %arg6[%c3_116, %c0_117, %c0_118] : memref<9x16x16xf32, #tpu.memory_space<vmem>>, vector<1x16x16xf32>
    %134 = vector.shape_cast %133 : vector<1x16x16xf32> to vector<16x16xf32>
    %cst_119 = arith.constant dense<0.000000e+00> : vector<256x16xf32>
    %135 = tpu.matmul %132, %134, %cst_119 {dimension_numbers = #tpu.dot_dimension_numbers<[1], [0], [0], [1], [0, 0, 1, 1], [], []>} : vector<256x16xf32>, vector<16x16xf32>, vector<256x16xf32> -> vector<256x16xf32>
    %136 = arith.addf %130, %135 : vector<256x16xf32>
    %137 = vector.extract_strided_slice %113 {offsets = [0, 1, 1, 0], sizes = [1, 16, 16, 16], strides = [1, 1, 1, 1]} : vector<1x18x18x16xf32> to vector<1x16x16x16xf32>
    %138 = vector.shape_cast %137 : vector<1x16x16x16xf32> to vector<256x16xf32>
    %c4_120 = arith.constant 4 : index
    %c0_121 = arith.constant 0 : index
    %c0_122 = arith.constant 0 : index
    %139 = vector.load %arg6[%c4_120, %c0_121, %c0_122] : memref<9x16x16xf32, #tpu.memory_space<vmem>>, vector<1x16x16xf32>
    %140 = vector.shape_cast %139 : vector<1x16x16xf32> to vector<16x16xf32>
    %cst_123 = arith.constant dense<0.000000e+00> : vector<256x16xf32>
    %141 = tpu.matmul %138, %140, %cst_123 {dimension_numbers = #tpu.dot_dimension_numbers<[1], [0], [0], [1], [0, 0, 1, 1], [], []>} : vector<256x16xf32>, vector<16x16xf32>, vector<256x16xf32> -> vector<256x16xf32>
    %142 = arith.addf %136, %141 : vector<256x16xf32>
    %143 = vector.extract_strided_slice %113 {offsets = [0, 1, 2, 0], sizes = [1, 16, 16, 16], strides = [1, 1, 1, 1]} : vector<1x18x18x16xf32> to vector<1x16x16x16xf32>
    %144 = vector.shape_cast %143 : vector<1x16x16x16xf32> to vector<256x16xf32>
    %c5_124 = arith.constant 5 : index
    %c0_125 = arith.constant 0 : index
    %c0_126 = arith.constant 0 : index
    %145 = vector.load %arg6[%c5_124, %c0_125, %c0_126] : memref<9x16x16xf32, #tpu.memory_space<vmem>>, vector<1x16x16xf32>
    %146 = vector.shape_cast %145 : vector<1x16x16xf32> to vector<16x16xf32>
    %cst_127 = arith.constant dense<0.000000e+00> : vector<256x16xf32>
    %147 = tpu.matmul %144, %146, %cst_127 {dimension_numbers = #tpu.dot_dimension_numbers<[1], [0], [0], [1], [0, 0, 1, 1], [], []>} : vector<256x16xf32>, vector<16x16xf32>, vector<256x16xf32> -> vector<256x16xf32>
    %148 = arith.addf %142, %147 : vector<256x16xf32>
    %149 = vector.extract_strided_slice %113 {offsets = [0, 2, 0, 0], sizes = [1, 16, 16, 16], strides = [1, 1, 1, 1]} : vector<1x18x18x16xf32> to vector<1x16x16x16xf32>
    %150 = vector.shape_cast %149 : vector<1x16x16x16xf32> to vector<256x16xf32>
    %c6_128 = arith.constant 6 : index
    %c0_129 = arith.constant 0 : index
    %c0_130 = arith.constant 0 : index
    %151 = vector.load %arg6[%c6_128, %c0_129, %c0_130] : memref<9x16x16xf32, #tpu.memory_space<vmem>>, vector<1x16x16xf32>
    %152 = vector.shape_cast %151 : vector<1x16x16xf32> to vector<16x16xf32>
    %cst_131 = arith.constant dense<0.000000e+00> : vector<256x16xf32>
    %153 = tpu.matmul %150, %152, %cst_131 {dimension_numbers = #tpu.dot_dimension_numbers<[1], [0], [0], [1], [0, 0, 1, 1], [], []>} : vector<256x16xf32>, vector<16x16xf32>, vector<256x16xf32> -> vector<256x16xf32>
    %154 = arith.addf %148, %153 : vector<256x16xf32>
    %155 = vector.extract_strided_slice %113 {offsets = [0, 2, 1, 0], sizes = [1, 16, 16, 16], strides = [1, 1, 1, 1]} : vector<1x18x18x16xf32> to vector<1x16x16x16xf32>
    %156 = vector.shape_cast %155 : vector<1x16x16x16xf32> to vector<256x16xf32>
    %c7_132 = arith.constant 7 : index
    %c0_133 = arith.constant 0 : index
    %c0_134 = arith.constant 0 : index
    %157 = vector.load %arg6[%c7_132, %c0_133, %c0_134] : memref<9x16x16xf32, #tpu.memory_space<vmem>>, vector<1x16x16xf32>
    %158 = vector.shape_cast %157 : vector<1x16x16xf32> to vector<16x16xf32>
    %cst_135 = arith.constant dense<0.000000e+00> : vector<256x16xf32>
    %159 = tpu.matmul %156, %158, %cst_135 {dimension_numbers = #tpu.dot_dimension_numbers<[1], [0], [0], [1], [0, 0, 1, 1], [], []>} : vector<256x16xf32>, vector<16x16xf32>, vector<256x16xf32> -> vector<256x16xf32>
    %160 = arith.addf %154, %159 : vector<256x16xf32>
    %161 = vector.extract_strided_slice %113 {offsets = [0, 2, 2, 0], sizes = [1, 16, 16, 16], strides = [1, 1, 1, 1]} : vector<1x18x18x16xf32> to vector<1x16x16x16xf32>
    %162 = vector.shape_cast %161 : vector<1x16x16x16xf32> to vector<256x16xf32>
    %c8_136 = arith.constant 8 : index
    %c0_137 = arith.constant 0 : index
    %c0_138 = arith.constant 0 : index
    %163 = vector.load %arg6[%c8_136, %c0_137, %c0_138] : memref<9x16x16xf32, #tpu.memory_space<vmem>>, vector<1x16x16xf32>
    %164 = vector.shape_cast %163 : vector<1x16x16xf32> to vector<16x16xf32>
    %cst_139 = arith.constant dense<0.000000e+00> : vector<256x16xf32>
    %165 = tpu.matmul %162, %164, %cst_139 {dimension_numbers = #tpu.dot_dimension_numbers<[1], [0], [0], [1], [0, 0, 1, 1], [], []>} : vector<256x16xf32>, vector<16x16xf32>, vector<256x16xf32> -> vector<256x16xf32>
    %166 = arith.addf %160, %165 : vector<256x16xf32>
    %c0_140 = arith.constant 0 : index
    %c0_141 = arith.constant 0 : index
    %167 = vector.load %arg7[%c0_140, %c0_141] : memref<1x16xf32, #tpu.memory_space<vmem>>, vector<1x16xf32>
    %168 = vector.broadcast %167 : vector<1x16xf32> to vector<256x16xf32>
    %169 = arith.addf %166, %168 : vector<256x16xf32>
    %cst_142 = arith.constant 0.000000e+00 : f32
    %170 = vector.broadcast %cst_142 : f32 to vector<256x16xf32>
    %171 = arith.maximumf %169, %170 : vector<256x16xf32>
    %172 = tpu.concatenate %27, %109, %171, %47 in 1 : vector<256x8xf32>, vector<256x16xf32>, vector<256x16xf32>, vector<256x8xf32> -> vector<256x48xf32>
    %173 = vector.shape_cast %172 : vector<256x48xf32> to vector<1x256x48xf32>
    %c0_143 = arith.constant 0 : index
    %c0_144 = arith.constant 0 : index
    %c0_145 = arith.constant 0 : index
    %174 = vector.load %arg9[%c0_143, %c0_144, %c0_145] : memref<1x256x48xf32, #tpu.memory_space<vmem>>, vector<1x256x48xf32>
    tpu.vector_store %arg9[%c0_143, %c0_144, %c0_145], %173 {strides = array<i32>} : memref<1x256x48xf32, #tpu.memory_space<vmem>>, vector<1x256x48xf32>,
    return
  }
  func.func @transform_0(%arg0: i32) -> (i32, i32, i32) {
    %c0_i32 = arith.constant 0 : i32
    %c0_i32_0 = arith.constant 0 : i32
    %c0_i32_1 = arith.constant 0 : i32
    return %arg0, %c0_i32, %c0_i32_0 : i32, i32, i32
  }
  func.func @transform_1(%arg0: i32) -> (i32, i32) {
    %c0_i32 = arith.constant 0 : i32
    %c0_i32_0 = arith.constant 0 : i32
    %c0_i32_1 = arith.constant 0 : i32
    return %c0_i32, %c0_i32_0 : i32, i32
  }
  func.func @transform_2(%arg0: i32) -> (i32, i32) {
    %c0_i32 = arith.constant 0 : i32
    %c0_i32_0 = arith.constant 0 : i32
    %c0_i32_1 = arith.constant 0 : i32
    return %c0_i32, %c0_i32_0 : i32, i32
  }
  func.func @transform_3(%arg0: i32) -> (i32, i32, i32) {
    %c0_i32 = arith.constant 0 : i32
    %c0_i32_0 = arith.constant 0 : i32
    %c0_i32_1 = arith.constant 0 : i32
    %c0_i32_2 = arith.constant 0 : i32
    return %c0_i32, %c0_i32_0, %c0_i32_1 : i32, i32, i32
  }
  func.func @transform_4(%arg0: i32) -> (i32, i32) {
    %c0_i32 = arith.constant 0 : i32
    %c0_i32_0 = arith.constant 0 : i32
    %c0_i32_1 = arith.constant 0 : i32
    return %c0_i32, %c0_i32_0 : i32, i32
  }
  func.func @transform_5(%arg0: i32) -> (i32, i32, i32) {
    %c0_i32 = arith.constant 0 : i32
    %c0_i32_0 = arith.constant 0 : i32
    %c0_i32_1 = arith.constant 0 : i32
    %c0_i32_2 = arith.constant 0 : i32
    return %c0_i32, %c0_i32_0, %c0_i32_1 : i32, i32, i32
  }
  func.func @transform_6(%arg0: i32) -> (i32, i32) {
    %c0_i32 = arith.constant 0 : i32
    %c0_i32_0 = arith.constant 0 : i32
    %c0_i32_1 = arith.constant 0 : i32
    return %c0_i32, %c0_i32_0 : i32, i32
  }
  func.func @transform_7(%arg0: i32) -> (i32, i32) {
    %c0_i32 = arith.constant 0 : i32
    %c0_i32_0 = arith.constant 0 : i32
    %c0_i32_1 = arith.constant 0 : i32
    return %c0_i32, %c0_i32_0 : i32, i32
  }
  func.func @transform_8(%arg0: i32) -> (i32, i32, i32) {
    %c0_i32 = arith.constant 0 : i32
    %c0_i32_0 = arith.constant 0 : i32
    %c0_i32_1 = arith.constant 0 : i32
    return %arg0, %c0_i32, %c0_i32_0 : i32, i32, i32
  }
}

</mosaic_0001>

<llo_original>
// kernel: tpu_custom_call.1
$region0: #{tpu_custom_call.1}
  #allocation0 [shape = 'u32[]', space=smem, size = 0x4, offset = 0x4, fixed_abs, tag = 'smem constant byte address 0x4 - core index']
  #allocation1 [shape = 'u32[144,128]{1,0:T(1,128)}', space=vmem, size = 0x12000, scoped, tag = 'internal scratch']
  #allocation2 [shape = 'f32[1,18,18,16]{3,2,1,0:T(8,128)}', space=vmem, size = 0x36000, scoped, tag = 'scratch operand']
  #allocation3 [shape = 'f32[1,18,18,8]{3,2,1,0:T(8,128)}', space=vmem, size = 0x36000, scoped, tag = 'scratch operand']
  %s0 = inlined_call_operand.vmem [shape: f32[2,256,16], index: 0, kind: input, shape index: {}]
  %s1 = inlined_call_operand.vmem [shape: f32[16,32], index: 1, kind: input, shape index: {}]
  %s2 = inlined_call_operand.vmem [shape: f32[1,24], index: 2, kind: input, shape index: {}]
  %s3 = inlined_call_operand.vmem [shape: f32[9,16,32], index: 3, kind: input, shape index: {}]
  %s4 = inlined_call_operand.vmem [shape: f32[1,32], index: 4, kind: input, shape index: {}]
  %s5 = inlined_call_operand.vmem [shape: f32[9,16,16], index: 5, kind: input, shape index: {}]
  %s6 = inlined_call_operand.vmem [shape: f32[1,16], index: 6, kind: input, shape index: {}]
  %s7 = inlined_call_operand.vmem [shape: f32[1,8], index: 7, kind: input, shape index: {}]
  %s8 = inlined_call_operand.vmem [shape: f32[2,256,48], index: 8, kind: output, shape index: {}]
  %s9 = sld [smem:[#allocation0]]
  $region65: #{tpu_custom_call.1} parent=0
    _
  %s11 = ssub.s32 1, %s9
  %s12 = scalar_select 0, %s11, %s9
  loop: start=0, step=1, limit=4
  $region2: #{tpu_custom_call.1} parent=0 // loop_pre_header
    _
  $region3: #{tpu_custom_call.1} parent=0 // loop_header
    %s14 = sphi 0, %s18
    %p15 = scmp.ge.s32.totalorder %s14, 4
    %s24 = sphi 0, %s26
    %s27 = sphi 0, %s24
    %s28 = sphi 0, %s27
    %s44 = sphi 0, %s28
    %s48 = sphi 0, %s48
    %s50 = sphi 0, %s48
    %s51 = sphi 0, %s50
    %s65 = sphi 0, %s51
    %s69 = sphi 0, %s69
    %s71 = sphi 0, %s69
    %s72 = sphi 0, %s71
    %s86 = sphi 0, %s72
    %s90 = sphi 0, %s90
    %s92 = sphi 0, %s90
    %s93 = sphi 0, %s92
    %s107 = sphi 0, %s93
    %s111 = sphi 0, %s111
    %s113 = sphi 0, %s111
    %s114 = sphi 0, %s113
    %s128 = sphi 0, %s114
    %s132 = sphi 0, %s132
    %s134 = sphi 0, %s132
    %s135 = sphi 0, %s134
    %s149 = sphi 0, %s135
    %s153 = sphi 0, %s153
    %s155 = sphi 0, %s153
    %s156 = sphi 0, %s155
    %s170 = sphi 0, %s156
    %s174 = sphi 0, %s174
    %s176 = sphi 0, %s174
    %s177 = sphi 0, %s176
    %s191 = sphi 0, %s177
    %s197 = sphi 0, %s199
    %s200 = sphi 0, %s197
    %s201 = sphi 0, %s200
    %s217 = sphi 0, %s201
  $region4: #{tpu_custom_call.1} parent=0 // loop_header_branch
    %17 = sbr.rel (%p15) target = $region8
  $region5: #{tpu_custom_call.1} parent=0 // loop_body
    %s19 = ssub.s32 %s14, 1
    %s20 = ssub.s32 %s14, 2
    %s21 = sadd.s32 %s14, 1
    %s22 = ssub.s32 %s14, %s21
    %p23 = scmp.eq.s32.totalorder %s22, 0
    %s25 = sadd.s32 %s24, 1
    %s26 = scalar_select %p23, %s24, %s25
    %p29 = pneg %p23
    %p30 = scmp.eq.s32.totalorder %s14, 1
    %p31 = por %p29, %p30
    %p32 = scmp.ne.s32.totalorder %s24, %s27
    %p33 = scmp.eq.s32.totalorder %s14, 0
    %p34 = por %p32, %p33
    %p35 = scmp.ne.s32.totalorder %s24, %s27
    %p36 = scmp.eq.s32.totalorder %s19, 1
    %p37 = por %p35, %p36
    %p38 = scmp.ne.s32.totalorder %s27, %s28
    %p39 = scmp.eq.s32.totalorder %s19, 0
    %p40 = por %p38, %p39
    %p41 = scmp.ne.s32.totalorder %s27, %s28
    %p42 = scmp.eq.s32.totalorder %s20, 1
    %p43 = por %p41, %p42
    %p45 = scmp.ne.s32.totalorder %s28, %s44
    %p46 = scmp.eq.s32.totalorder %s20, 0
    %p47 = por %p45, %p46
    %s49 = sadd.s32 %s48, 1
    %p52 = scmp.eq.s32.totalorder %s14, 1
    %p53 = scmp.ne.s32.totalorder %s48, %s50
    %p54 = scmp.eq.s32.totalorder %s14, 0
    %p55 = por %p53, %p54
    %p56 = scmp.ne.s32.totalorder %s48, %s50
    %p57 = scmp.eq.s32.totalorder %s19, 1
    %p58 = por %p56, %p57
    %p59 = scmp.ne.s32.totalorder %s50, %s51
    %p60 = scmp.eq.s32.totalorder %s19, 0
    %p61 = por %p59, %p60
    %p62 = scmp.ne.s32.totalorder %s50, %s51
    %p63 = scmp.eq.s32.totalorder %s20, 1
    %p64 = por %p62, %p63
    %p66 = scmp.ne.s32.totalorder %s51, %s65
    %p67 = scmp.eq.s32.totalorder %s20, 0
    %p68 = por %p66, %p67
    %s70 = sadd.s32 %s69, 1
    %p73 = scmp.eq.s32.totalorder %s14, 1
    %p74 = scmp.ne.s32.totalorder %s69, %s71
    %p75 = scmp.eq.s32.totalorder %s14, 0
    %p76 = por %p74, %p75
    %p77 = scmp.ne.s32.totalorder %s69, %s71
    %p78 = scmp.eq.s32.totalorder %s19, 1
    %p79 = por %p77, %p78
    %p80 = scmp.ne.s32.totalorder %s71, %s72
    %p81 = scmp.eq.s32.totalorder %s19, 0
    %p82 = por %p80, %p81
    %p83 = scmp.ne.s32.totalorder %s71, %s72
    %p84 = scmp.eq.s32.totalorder %s20, 1
    %p85 = por %p83, %p84
    %p87 = scmp.ne.s32.totalorder %s72, %s86
    %p88 = scmp.eq.s32.totalorder %s20, 0
    %p89 = por %p87, %p88
    %s91 = sadd.s32 %s90, 1
    %p94 = scmp.eq.s32.totalorder %s14, 1
    %p95 = scmp.ne.s32.totalorder %s90, %s92
    %p96 = scmp.eq.s32.totalorder %s14, 0
    %p97 = por %p95, %p96
    %p98 = scmp.ne.s32.totalorder %s90, %s92
    %p99 = scmp.eq.s32.totalorder %s19, 1
    %p100 = por %p98, %p99
    %p101 = scmp.ne.s32.totalorder %s92, %s93
    %p102 = scmp.eq.s32.totalorder %s19, 0
    %p103 = por %p101, %p102
    %p104 = scmp.ne.s32.totalorder %s92, %s93
    %p105 = scmp.eq.s32.totalorder %s20, 1
    %p106 = por %p104, %p105
    %p108 = scmp.ne.s32.totalorder %s93, %s107
    %p109 = scmp.eq.s32.totalorder %s20, 0
    %p110 = por %p108, %p109
    %s112 = sadd.s32 %s111, 1
    %p115 = scmp.eq.s32.totalorder %s14, 1
    %p116 = scmp.ne.s32.totalorder %s111, %s113
    %p117 = scmp.eq.s32.totalorder %s14, 0
    %p118 = por %p116, %p117
    %p119 = scmp.ne.s32.totalorder %s111, %s113
    %p120 = scmp.eq.s32.totalorder %s19, 1
    %p121 = por %p119, %p120
    %p122 = scmp.ne.s32.totalorder %s113, %s114
    %p123 = scmp.eq.s32.totalorder %s19, 0
    %p124 = por %p122, %p123
    %p125 = scmp.ne.s32.totalorder %s113, %s114
    %p126 = scmp.eq.s32.totalorder %s20, 1
    %p127 = por %p125, %p126
    %p129 = scmp.ne.s32.totalorder %s114, %s128
    %p130 = scmp.eq.s32.totalorder %s20, 0
    %p131 = por %p129, %p130
    %s133 = sadd.s32 %s132, 1
    %p136 = scmp.eq.s32.totalorder %s14, 1
    %p137 = scmp.ne.s32.totalorder %s132, %s134
    %p138 = scmp.eq.s32.totalorder %s14, 0
    %p139 = por %p137, %p138
    %p140 = scmp.ne.s32.totalorder %s132, %s134
    %p141 = scmp.eq.s32.totalorder %s19, 1
    %p142 = por %p140, %p141
    %p143 = scmp.ne.s32.totalorder %s134, %s135
    %p144 = scmp.eq.s32.totalorder %s19, 0
    %p145 = por %p143, %p144
    %p146 = scmp.ne.s32.totalorder %s134, %s135
    %p147 = scmp.eq.s32.totalorder %s20, 1
    %p148 = por %p146, %p147
    %p150 = scmp.ne.s32.totalorder %s135, %s149
    %p151 = scmp.eq.s32.totalorder %s20, 0
    %p152 = por %p150, %p151
    %s154 = sadd.s32 %s153, 1
    %p157 = scmp.eq.s32.totalorder %s14, 1
    %p158 = scmp.ne.s32.totalorder %s153, %s155
    %p159 = scmp.eq.s32.totalorder %s14, 0
    %p160 = por %p158, %p159
    %p161 = scmp.ne.s32.totalorder %s153, %s155
    %p162 = scmp.eq.s32.totalorder %s19, 1
    %p163 = por %p161, %p162
    %p164 = scmp.ne.s32.totalorder %s155, %s156
    %p165 = scmp.eq.s32.totalorder %s19, 0
    %p166 = por %p164, %p165
    %p167 = scmp.ne.s32.totalorder %s155, %s156
    %p168 = scmp.eq.s32.totalorder %s20, 1
    %p169 = por %p167, %p168
    %p171 = scmp.ne.s32.totalorder %s156, %s170
    %p172 = scmp.eq.s32.totalorder %s20, 0
    %p173 = por %p171, %p172
    %s175 = sadd.s32 %s174, 1
    %p178 = scmp.eq.s32.totalorder %s14, 1
    %p179 = scmp.ne.s32.totalorder %s174, %s176
    %p180 = scmp.eq.s32.totalorder %s14, 0
    %p181 = por %p179, %p180
    %p182 = scmp.ne.s32.totalorder %s174, %s176
    %p183 = scmp.eq.s32.totalorder %s19, 1
    %p184 = por %p182, %p183
    %p185 = scmp.ne.s32.totalorder %s176, %s177
    %p186 = scmp.eq.s32.totalorder %s19, 0
    %p187 = por %p185, %p186
    %p188 = scmp.ne.s32.totalorder %s176, %s177
    %p189 = scmp.eq.s32.totalorder %s20, 1
    %p190 = por %p188, %p189
    %p192 = scmp.ne.s32.totalorder %s177, %s191
    %p193 = scmp.eq.s32.totalorder %s20, 0
    %p194 = por %p192, %p193
    %s195 = ssub.s32 %s14, %s21
    %p196 = scmp.eq.s32.totalorder %s195, 0
    %s198 = sadd.s32 %s197, 1
    %s199 = scalar_select %p196, %s197, %s198
    %p202 = pneg %p196
    %p203 = scmp.eq.s32.totalorder %s14, 1
    %p204 = por %p202, %p203
    %p205 = scmp.ne.s32.totalorder %s197, %s200
    %p206 = scmp.eq.s32.totalorder %s14, 0
    %p207 = por %p205, %p206
    %p208 = scmp.ne.s32.totalorder %s197, %s200
    %p209 = scmp.eq.s32.totalorder %s19, 1
    %p210 = por %p208, %p209
    %p211 = scmp.ne.s32.totalorder %s200, %s201
    %p212 = scmp.eq.s32.totalorder %s19, 0
    %p213 = por %p211, %p212
    %p214 = scmp.ne.s32.totalorder %s200, %s201
    %p215 = scmp.eq.s32.totalorder %s20, 1
    %p216 = por %p214, %p215
    %p218 = scmp.ne.s32.totalorder %s201, %s217
    %p219 = scmp.eq.s32.totalorder %s20, 0
    %p220 = por %p218, %p219
    %p221 = scmp.le.s32.totalorder 1, %s14
    %p222 = scmp.lt.s32.totalorder %s14, 3
    %p223 = pnand %p221, %p222
    %p224 = pneg %p223
    // Predicated region
    $region9: #{tpu_custom_call.1} parent=5 // pred_check
      _
    $region10: #{tpu_custom_call.1} parent=5 // pred_check_branch
      %226 = sbr.rel (%p223) target = $region12
    $region11: #{tpu_custom_call.1} parent=5 // pred_region
      %s227 = ssub.s32 %s14, 1
      // Predicated region
      $region13: #{tpu_custom_call.1} parent=11 // pred_check
        %p228 = pneg %p61
      $region14: #{tpu_custom_call.1} parent=11 // pred_check_branch
        %230 = sbr.rel (%p228) target = $region16
      $region15: #{tpu_custom_call.1} parent=11 // pred_region
        _
      $region16: #{tpu_custom_call.1} parent=11 // pred_fallthru
        _
      // Predicated region
      $region17: #{tpu_custom_call.1} parent=11 // pred_check
        %p231 = pneg %p82
      $region18: #{tpu_custom_call.1} parent=11 // pred_check_branch
        %233 = sbr.rel (%p231) target = $region20
      $region19: #{tpu_custom_call.1} parent=11 // pred_region
        _
      $region20: #{tpu_custom_call.1} parent=11 // pred_fallthru
        _
      // Predicated region
      $region21: #{tpu_custom_call.1} parent=11 // pred_check
        %p234 = pneg %p103
      $region22: #{tpu_custom_call.1} parent=11 // pred_check_branch
        %236 = sbr.rel (%p234) target = $region24
      $region23: #{tpu_custom_call.1} parent=11 // pred_region
        _
      $region24: #{tpu_custom_call.1} parent=11 // pred_fallthru
        _
      // Predicated region
      $region25: #{tpu_custom_call.1} parent=11 // pred_check
        %p237 = pneg %p124
      $region26: #{tpu_custom_call.1} parent=11 // pred_check_branch
        %239 = sbr.rel (%p237) target = $region28
      $region27: #{tpu_custom_call.1} parent=11 // pred_region
        _
      $region28: #{tpu_custom_call.1} parent=11 // pred_fallthru
        _
      // Predicated region
      $region29: #{tpu_custom_call.1} parent=11 // pred_check
        %p240 = pneg %p145
      $region30: #{tpu_custom_call.1} parent=11 // pred_check_branch
        %242 = sbr.rel (%p240) target = $region32
      $region31: #{tpu_custom_call.1} parent=11 // pred_region
        _
      $region32: #{tpu_custom_call.1} parent=11 // pred_fallthru
        _
      // Predicated region
      $region33: #{tpu_custom_call.1} parent=11 // pred_check
        %p243 = pneg %p166
      $region34: #{tpu_custom_call.1} parent=11 // pred_check_branch
        %245 = sbr.rel (%p243) target = $region36
      $region35: #{tpu_custom_call.1} parent=11 // pred_region
        _
      $region36: #{tpu_custom_call.1} parent=11 // pred_fallthru
        _
      // Predicated region
      $region37: #{tpu_custom_call.1} parent=11 // pred_check
        %p246 = pneg %p187
      $region38: #{tpu_custom_call.1} parent=11 // pred_check_branch
        %248 = sbr.rel (%p246) target = $region40
      $region39: #{tpu_custom_call.1} parent=11 // pred_region
        _
      $region40: #{tpu_custom_call.1} parent=11 // pred_fallthru
        _
    $region12: #{tpu_custom_call.1} parent=5 // pred_fallthru
      _
    %p249 = scmp.lt.s32.totalorder %s14, 2
    // Predicated region
    $region41: #{tpu_custom_call.1} parent=5 // pred_check
      %p250 = pneg %p249
    $region42: #{tpu_custom_call.1} parent=5 // pred_check_branch
      %252 = sbr.rel (%p250) target = $region44
    $region43: #{tpu_custom_call.1} parent=5 // pred_region
      // Predicated region
      $region45: #{tpu_custom_call.1} parent=43 // pred_check
        %p253 = pneg %p34
      $region46: #{tpu_custom_call.1} parent=43 // pred_check_branch
        %255 = sbr.rel (%p253) target = $region48
      $region47: #{tpu_custom_call.1} parent=43 // pred_region
        %p256 = scmp.lt.s32.totalorder %s14, 1
        %s257 = scalar_select %p256, %s14, 1
        %s258 = smul.addr %s257, 32
        %s259 = smul.addr %s258, 8
        %s260 = scalar_lea.vmem %s0, %s259
      $region48: #{tpu_custom_call.1} parent=43 // pred_fallthru
        _
    $region44: #{tpu_custom_call.1} parent=5 // pred_fallthru
      _
    %p261 = scmp.le.s32.totalorder 1, %s14
    %p262 = scmp.lt.s32.totalorder %s14, 3
    %p263 = pnand %p261, %p262
    %p264 = pneg %p263
    // Predicated region
    $region49: #{tpu_custom_call.1} parent=5 // pred_check
      _
    $region50: #{tpu_custom_call.1} parent=5 // pred_check_branch
      %266 = sbr.rel (%p263) target = $region52
    $region51: #{tpu_custom_call.1} parent=5 // pred_region
      %s267 = ssub.s32 %s14, 1
      %p268 = scmp.lt.s32.totalorder %s19, 1
      %s269 = scalar_select %p268, %s19, 1
      %s270 = smul.addr %s269, 32
      %s271 = smul.addr %s270, 8
      %s272 = scalar_lea.vmem %s0, %s271
      %p273 = pneg %p40
      %p274 = pneg %p37
      %p275 = pneg %p61
      %p276 = pneg %p58
      %p277 = pneg %p82
      %p278 = pneg %p79
      %p279 = pneg %p103
      %p280 = pneg %p100
      %p281 = pneg %p124
      %p282 = pneg %p121
      %p283 = pneg %p145
      %p284 = pneg %p142
      %p285 = pneg %p166
      %p286 = pneg %p163
      %p287 = pneg %p187
      %p288 = pneg %p184
      %p289 = pneg %p213
      %p290 = pneg %p210
      %p291 = scmp.lt.s32.totalorder %s19, 1
      %s292 = scalar_select %p291, %s19, 1
      %s293 = smul.addr %s292, 32
      %s294 = smul.addr %s293, 8
      %s295 = scalar_lea.vmem %s8, %s294
      %p296 = scmp.lt.s32.totalorder %s19, 1
      %s297 = scalar_select %p296, %s19, 1
      %s298 = smul.addr %s297, 32
      %s299 = smul.addr %s298, 8
      %s300 = scalar_lea.vmem %s0, %s299
      %p301 = scmp.lt.s32.totalorder %s19, 1
      %s302 = scalar_select %p301, %s19, 1
      %s303 = smul.addr %s302, 32
      %s304 = smul.addr %s303, 8
      %s305 = scalar_lea.vmem %s8, %s304
      %vm306 = vcmask 130048
      %307 = vst.msk [vmem:[#allocation2] sm:$0xff] %vm306, 0.0
      %308 = vst.msk [vmem:[#allocation2 + $0x8] sm:$0xff] %vm306, 0.0
      %vm309 = vcmask 123904
      %310 = vst.msk [vmem:[#allocation2 + $0x10] sm:$0x3] %vm309, 0.0
      %s311 = scalar_lea.vmem [#allocation2], 408
      %312 = vst.msk [vmem:[%s311] sm:$0xff] %vm306, 0.0
      %313 = vst.msk [vmem:[%s311 + $0x8] sm:$0xff] %vm306, 0.0
      %314 = vst.msk [vmem:[%s311 + $0x10] sm:$0x3] %vm309, 0.0
      %vm315 = vcmask 122880
      %316 = vst.msk [vmem:[#allocation2] sm:$0x1] %vm315, 0.0
      %317 = vst.msk [vmem:[#allocation2 + $0x18] sm:$0x1] %vm315, 0.0
      %318 = vst.msk [vmem:[#allocation2 + $0x30] sm:$0x1] %vm315, 0.0
      %319 = vst.msk [vmem:[#allocation2 + $0x48] sm:$0x1] %vm315, 0.0
      %320 = vst.msk [vmem:[#allocation2 + $0x60] sm:$0x1] %vm315, 0.0
      %321 = vst.msk [vmem:[#allocation2 + $0x78] sm:$0x1] %vm315, 0.0
      %322 = vst.msk [vmem:[#allocation2 + $0x90] sm:$0x1] %vm315, 0.0
      %323 = vst.msk [vmem:[#allocation2 + $0xa8] sm:$0x1] %vm315, 0.0
      %324 = vst.msk [vmem:[#allocation2 + $0xc0] sm:$0x1] %vm315, 0.0
      %325 = vst.msk [vmem:[#allocation2 + $0xd8] sm:$0x1] %vm315, 0.0
      %326 = vst.msk [vmem:[#allocation2 + $0xf0] sm:$0x1] %vm315, 0.0
      %327 = vst.msk [vmem:[#allocation2 + $0x108] sm:$0x1] %vm315, 0.0
      %328 = vst.msk [vmem:[#allocation2 + $0x120] sm:$0x1] %vm315, 0.0
      %329 = vst.msk [vmem:[#allocation2 + $0x138] sm:$0x1] %vm315, 0.0
      %330 = vst.msk [vmem:[#allocation2 + $0x150] sm:$0x1] %vm315, 0.0
      %331 = vst.msk [vmem:[#allocation2 + $0x168] sm:$0x1] %vm315, 0.0
      %332 = vst.msk [vmem:[#allocation2 + $0x180] sm:$0x1] %vm315, 0.0
      %333 = vst.msk [vmem:[#allocation2 + $0x198] sm:$0x1] %vm315, 0.0
      %334 = vst.msk [vmem:[#allocation2 + $0x11] sm:$0x1] %vm315, 0.0
      %335 = vst.msk [vmem:[#allocation2 + $0x29] sm:$0x1] %vm315, 0.0
      %336 = vst.msk [vmem:[#allocation2 + $0x41] sm:$0x1] %vm315, 0.0
      %337 = vst.msk [vmem:[#allocation2 + $0x59] sm:$0x1] %vm315, 0.0
      %338 = vst.msk [vmem:[#allocation2 + $0x71] sm:$0x1] %vm315, 0.0
      %339 = vst.msk [vmem:[#allocation2 + $0x89] sm:$0x1] %vm315, 0.0
      %340 = vst.msk [vmem:[#allocation2 + $0xa1] sm:$0x1] %vm315, 0.0
      %341 = vst.msk [vmem:[#allocation2 + $0xb9] sm:$0x1] %vm315, 0.0
      %342 = vst.msk [vmem:[#allocation2 + $0xd1] sm:$0x1] %vm315, 0.0
      %343 = vst.msk [vmem:[#allocation2 + $0xe9] sm:$0x1] %vm315, 0.0
      %344 = vst.msk [vmem:[#allocation2 + $0x101] sm:$0x1] %vm315, 0.0
      %345 = vst.msk [vmem:[#allocation2 + $0x119] sm:$0x1] %vm315, 0.0
      %346 = vst.msk [vmem:[#allocation2 + $0x131] sm:$0x1] %vm315, 0.0
      %347 = vst.msk [vmem:[#allocation2 + $0x149] sm:$0x1] %vm315, 0.0
      %348 = vst.msk [vmem:[#allocation2 + $0x161] sm:$0x1] %vm315, 0.0
      %349 = vst.msk [vmem:[#allocation2 + $0x179] sm:$0x1] %vm315, 0.0
      %350 = vst.msk [vmem:[#allocation2 + $0x191] sm:$0x1] %vm315, 0.0
      %351 = vst.msk [vmem:[#allocation2 + $0x1a9] sm:$0x1] %vm315, 0.0
      %vm352 = vcmask 64512
      %353 = vst.msk [vmem:[#allocation3] sm:$0xff] %vm352, 0.0
      %354 = vst.msk [vmem:[#allocation3 + $0x8] sm:$0xff] %vm352, 0.0
      %vm355 = vcmask 58368
      %356 = vst.msk [vmem:[#allocation3 + $0x10] sm:$0x3] %vm355, 0.0
      %s357 = scalar_lea.vmem [#allocation3], 408
      %358 = vst.msk [vmem:[%s357] sm:$0xff] %vm352, 0.0
      %359 = vst.msk [vmem:[%s357 + $0x8] sm:$0xff] %vm352, 0.0
      %360 = vst.msk [vmem:[%s357 + $0x10] sm:$0x3] %vm355, 0.0
      %vm361 = vcmask 57344
      %362 = vst.msk [vmem:[#allocation3] sm:$0x1] %vm361, 0.0
      %363 = vst.msk [vmem:[#allocation3 + $0x18] sm:$0x1] %vm361, 0.0
      %364 = vst.msk [vmem:[#allocation3 + $0x30] sm:$0x1] %vm361, 0.0
      %365 = vst.msk [vmem:[#allocation3 + $0x48] sm:$0x1] %vm361, 0.0
      %366 = vst.msk [vmem:[#allocation3 + $0x60] sm:$0x1] %vm361, 0.0
      %367 = vst.msk [vmem:[#allocation3 + $0x78] sm:$0x1] %vm361, 0.0
      %368 = vst.msk [vmem:[#allocation3 + $0x90] sm:$0x1] %vm361, 0.0
      %369 = vst.msk [vmem:[#allocation3 + $0xa8] sm:$0x1] %vm361, 0.0
      %370 = vst.msk [vmem:[#allocation3 + $0xc0] sm:$0x1] %vm361, 0.0
      %371 = vst.msk [vmem:[#allocation3 + $0xd8] sm:$0x1] %vm361, 0.0
      %372 = vst.msk [vmem:[#allocation3 + $0xf0] sm:$0x1] %vm361, 0.0
      %373 = vst.msk [vmem:[#allocation3 + $0x108] sm:$0x1] %vm361, 0.0
      %374 = vst.msk [vmem:[#allocation3 + $0x120] sm:$0x1] %vm361, 0.0
      %375 = vst.msk [vmem:[#allocation3 + $0x138] sm:$0x1] %vm361, 0.0
      %376 = vst.msk [vmem:[#allocation3 + $0x150] sm:$0x1] %vm361, 0.0
      %377 = vst.msk [vmem:[#allocation3 + $0x168] sm:$0x1] %vm361, 0.0
      %378 = vst.msk [vmem:[#allocation3 + $0x180] sm:$0x1] %vm361, 0.0
      %379 = vst.msk [vmem:[#allocation3 + $0x198] sm:$0x1] %vm361, 0.0
      %380 = vst.msk [vmem:[#allocation3 + $0x11] sm:$0x1] %vm361, 0.0
      %381 = vst.msk [vmem:[#allocation3 + $0x29] sm:$0x1] %vm361, 0.0
      %382 = vst.msk [vmem:[#allocation3 + $0x41] sm:$0x1] %vm361, 0.0
      %383 = vst.msk [vmem:[#allocation3 + $0x59] sm:$0x1] %vm361, 0.0
      %384 = vst.msk [vmem:[#allocation3 + $0x71] sm:$0x1] %vm361, 0.0
      %385 = vst.msk [vmem:[#allocation3 + $0x89] sm:$0x1] %vm361, 0.0
      %386 = vst.msk [vmem:[#allocation3 + $0xa1] sm:$0x1] %vm361, 0.0
      %387 = vst.msk [vmem:[#allocation3 + $0xb9] sm:$0x1] %vm361, 0.0
      %388 = vst.msk [vmem:[#allocation3 + $0xd1] sm:$0x1] %vm361, 0.0
      %389 = vst.msk [vmem:[#allocation3 + $0xe9] sm:$0x1] %vm361, 0.0
      %390 = vst.msk [vmem:[#allocation3 + $0x101] sm:$0x1] %vm361, 0.0
      %391 = vst.msk [vmem:[#allocation3 + $0x119] sm:$0x1] %vm361, 0.0
      %392 = vst.msk [vmem:[#allocation3 + $0x131] sm:$0x1] %vm361, 0.0
      %393 = vst.msk [vmem:[#allocation3 + $0x149] sm:$0x1] %vm361, 0.0
      %394 = vst.msk [vmem:[#allocation3 + $0x161] sm:$0x1] %vm361, 0.0
      %395 = vst.msk [vmem:[#allocation3 + $0x179] sm:$0x1] %vm361, 0.0
      %396 = vst.msk [vmem:[#allocation3 + $0x191] sm:$0x1] %vm361, 0.0
      %397 = vst.msk [vmem:[#allocation3 + $0x1a9] sm:$0x1] %vm361, 0.0
      %v398 = vld [vmem:[%s300] sm:$0xff]
      %v399 = vld [vmem:[%s300 + $0x8] sm:$0xff]
      %v400 = vld [vmem:[%s300 + $0x10] sm:$0xff]
      %v401 = vld [vmem:[%s300 + $0x18] sm:$0xff]
      %v402 = vld [vmem:[%s300 + $0x20] sm:$0xff]
      %v403 = vld [vmem:[%s300 + $0x28] sm:$0xff]
      %v404 = vld [vmem:[%s300 + $0x30] sm:$0xff]
      %v405 = vld [vmem:[%s300 + $0x38] sm:$0xff]
      %v406 = vld [vmem:[%s300 + $0x40] sm:$0xff]
      %v407 = vld [vmem:[%s300 + $0x48] sm:$0xff]
      %v408 = vld [vmem:[%s300 + $0x50] sm:$0xff]
      %v409 = vld [vmem:[%s300 + $0x58] sm:$0xff]
      %v410 = vld [vmem:[%s300 + $0x60] sm:$0xff]
      %v411 = vld [vmem:[%s300 + $0x68] sm:$0xff]
      %v412 = vld [vmem:[%s300 + $0x70] sm:$0xff]
      %v413 = vld [vmem:[%s300 + $0x78] sm:$0xff]
      %v414 = vld [vmem:[%s300 + $0x80] sm:$0xff]
      %v415 = vld [vmem:[%s300 + $0x88] sm:$0xff]
      %v416 = vld [vmem:[%s300 + $0x90] sm:$0xff]
      %v417 = vld [vmem:[%s300 + $0x98] sm:$0xff]
      %v418 = vld [vmem:[%s300 + $0xa0] sm:$0xff]
      %v419 = vld [vmem:[%s300 + $0xa8] sm:$0xff]
      %v420 = vld [vmem:[%s300 + $0xb0] sm:$0xff]
      %v421 = vld [vmem:[%s300 + $0xb8] sm:$0xff]
      %v422 = vld [vmem:[%s300 + $0xc0] sm:$0xff]
      %v423 = vld [vmem:[%s300 + $0xc8] sm:$0xff]
      %v424 = vld [vmem:[%s300 + $0xd0] sm:$0xff]
      %v425 = vld [vmem:[%s300 + $0xd8] sm:$0xff]
      %v426 = vld [vmem:[%s300 + $0xe0] sm:$0xff]
      %v427 = vld [vmem:[%s300 + $0xe8] sm:$0xff]
      %v428 = vld [vmem:[%s300 + $0xf0] sm:$0xff]
      %v429 = vld [vmem:[%s300 + $0xf8] sm:$0xff]
      %v430 = vld [vmem:[%s1] sm:$0xff]
      %v431 = vld [vmem:[%s1 + $0x8] sm:$0xff]
      %v433 = vsel %vm306, %v398, 0
      %v436 = vsel %vm306, %v399, 0
      %v439 = vsel %vm306, %v400, 0
      %v442 = vsel %vm306, %v401, 0
      %v445 = vsel %vm306, %v402, 0
      %v448 = vsel %vm306, %v403, 0
      %v451 = vsel %vm306, %v404, 0
      %v454 = vsel %vm306, %v405, 0
      %v457 = vsel %vm306, %v406, 0
      %v460 = vsel %vm306, %v407, 0
      %v463 = vsel %vm306, %v408, 0
      %v466 = vsel %vm306, %v409, 0
      %v469 = vsel %vm306, %v410, 0
      %v472 = vsel %vm306, %v411, 0
      %v475 = vsel %vm306, %v412, 0
      %v478 = vsel %vm306, %v413, 0
      %v481 = vsel %vm306, %v414, 0
      %v484 = vsel %vm306, %v415, 0
      %v487 = vsel %vm306, %v416, 0
      %v490 = vsel %vm306, %v417, 0
      %v493 = vsel %vm306, %v418, 0
      %v496 = vsel %vm306, %v419, 0
      %v499 = vsel %vm306, %v420, 0
      %v502 = vsel %vm306, %v421, 0
      %v505 = vsel %vm306, %v422, 0
      %v508 = vsel %vm306, %v423, 0
      %v511 = vsel %vm306, %v424, 0
      %v514 = vsel %vm306, %v425, 0
      %v517 = vsel %vm306, %v426, 0
      %v520 = vsel %vm306, %v427, 0
      %v523 = vsel %vm306, %v428, 0
      %v526 = vsel %vm306, %v429, 0
      %528 = vmatprep.subr.mxu0 0.0
      %529 = vmatpush1.msra.mxu0 %v430
      %530 = vmatprep.subr.mxu0 0.0
      %531 = vmatpush1.msra.mxu0 %v431
      %532 = vmatprep.subr.mxu0 0.0
      %533 = vmatpush1.msra.mxu0 0.0
      %534 = vmatprep.subr.mxu0 0.0
      %535 = vmatpush1.msra.mxu0 0.0
      %536 = vmatprep.subr.mxu0 0.0
      %537 = vmatpush1.msra.mxu0 0.0
      %538 = vmatprep.subr.mxu0 0.0
      %539 = vmatpush1.msra.mxu0 0.0
      %540 = vmatprep.subr.mxu0 0.0
      %541 = vmatpush1.msra.mxu0 0.0
      %542 = vmatprep.subr.mxu0 0.0
      %543 = vmatpush1.msra.mxu0 0.0
      %544 = vmatprep.subr.mxu0 0.0
      %545 = vmatpush1.msra.mxu0 0.0
      %546 = vmatprep.subr.mxu0 0.0
      %547 = vmatpush1.msra.mxu0 0.0
      %548 = vmatprep.subr.mxu0 0.0
      %549 = vmatpush1.msra.mxu0 0.0
      %550 = vmatprep.subr.mxu0 0.0
      %551 = vmatpush1.msra.mxu0 0.0
      %552 = vmatprep.subr.mxu0 0.0
      %553 = vmatpush1.msra.mxu0 0.0
      %554 = vmatprep.subr.mxu0 0.0
      %555 = vmatpush1.msra.mxu0 0.0
      %556 = vmatprep.subr.mxu0 0.0
      %557 = vmatpush1.msra.mxu0 0.0
      %558 = vmatprep.subr.mxu0 0.0
      %559 = vmatpush1.msra.mxu0 0.0
      %560 = vmatprep.subr.mxu0 0.0
      %561 = vmatpush1.msra.mxu0 0.0
      %562 = vmatprep.subr.mxu0 0.0
      %563 = vmatpush1.msra.mxu0 0.0
      %564 = vmatprep.subr.mxu0 0.0
      %565 = vmatpush1.msra.mxu0 0.0
      %566 = vmatprep.subr.mxu0 0.0
      %567 = vmatpush1.msra.mxu0 0.0
      %568 = vmatprep.subr.mxu0 0.0
      %569 = vmatpush1.msra.mxu0 0.0
      %570 = vmatprep.subr.mxu0 0.0
      %571 = vmatpush1.msra.mxu0 0.0
      %572 = vmatprep.subr.mxu0 0.0
      %573 = vmatpush1.msra.mxu0 0.0
      %574 = vmatprep.subr.mxu0 0.0
      %575 = vmatpush1.msra.mxu0 0.0
      %576 = vmatprep.subr.mxu0 0.0
      %577 = vmatpush1.msra.mxu0 0.0
      %578 = vmatprep.subr.mxu0 0.0
      %579 = vmatpush1.msra.mxu0 0.0
      %580 = vmatprep.subr.mxu0 0.0
      %581 = vmatpush1.msra.mxu0 0.0
      %582 = vmatprep.subr.mxu0 0.0
      %583 = vmatpush1.msra.mxu0 0.0
      %584 = vmatprep.subr.mxu0 0.0
      %585 = vmatpush1.msra.mxu0 0.0
      %586 = vmatprep.subr.mxu0 0.0
      %587 = vmatpush1.msra.mxu0 0.0
      %588 = vmatprep.subr.mxu0 0.0
      %589 = vmatpush1.msra.mxu0 0.0
      %590 = vmatprep.subr.mxu0 0.0
      %591 = vmatpush1.msra.mxu0 0.0
      %592 = vmatprep.mubr.f32.mxu0 0.0
      %593 = vmatmul.mubr.f32.gmra.mrb[0].mxu0 %v433
      %v594 = vpop.f32.mrb[0].mxu0
      %v595 = vadd.f32 0.0, %v594
      %v596 = vpop.f32.mrb[0].mxu0
      %597 = vmatprep.mubr.f32.mxu0 0.0
      %598 = vmatmul.mubr.f32.gmra.mrb[0].mxu0 %v436
      %v599 = vpop.f32.mrb[0].mxu0
      %v600 = vadd.f32 0.0, %v599
      %v601 = vpop.f32.mrb[0].mxu0
      %602 = vmatprep.mubr.f32.mxu0 0.0
      %603 = vmatmul.mubr.f32.gmra.mrb[0].mxu0 %v439
      %v604 = vpop.f32.mrb[0].mxu0
      %v605 = vadd.f32 0.0, %v604
      %v606 = vpop.f32.mrb[0].mxu0
      %607 = vmatprep.mubr.f32.mxu0 0.0
      %608 = vmatmul.mubr.f32.gmra.mrb[0].mxu0 %v442
      %v609 = vpop.f32.mrb[0].mxu0
      %v610 = vadd.f32 0.0, %v609
      %v611 = vpop.f32.mrb[0].mxu0
      %612 = vmatprep.mubr.f32.mxu0 0.0
      %613 = vmatmul.mubr.f32.gmra.mrb[0].mxu0 %v445
      %v614 = vpop.f32.mrb[0].mxu0
      %v615 = vadd.f32 0.0, %v614
      %v616 = vpop.f32.mrb[0].mxu0
      %617 = vmatprep.mubr.f32.mxu0 0.0
      %618 = vmatmul.mubr.f32.gmra.mrb[0].mxu0 %v448
      %v619 = vpop.f32.mrb[0].mxu0
      %v620 = vadd.f32 0.0, %v619
      %v621 = vpop.f32.mrb[0].mxu0
      %622 = vmatprep.mubr.f32.mxu0 0.0
      %623 = vmatmul.mubr.f32.gmra.mrb[0].mxu0 %v451
      %v624 = vpop.f32.mrb[0].mxu0
      %v625 = vadd.f32 0.0, %v624
      %v626 = vpop.f32.mrb[0].mxu0
      %627 = vmatprep.mubr.f32.mxu0 0.0
      %628 = vmatmul.mubr.f32.gmra.mrb[0].mxu0 %v454
      %v629 = vpop.f32.mrb[0].mxu0
      %v630 = vadd.f32 0.0, %v629
      %v631 = vpop.f32.mrb[0].mxu0
      %632 = vmatprep.mubr.f32.mxu0 0.0
      %633 = vmatmul.mubr.f32.gmra.mrb[0].mxu0 %v457
      %v634 = vpop.f32.mrb[0].mxu0
      %v635 = vadd.f32 0.0, %v634
      %v636 = vpop.f32.mrb[0].mxu0
      %637 = vmatprep.mubr.f32.mxu0 0.0
      %638 = vmatmul.mubr.f32.gmra.mrb[0].mxu0 %v460
      %v639 = vpop.f32.mrb[0].mxu0
      %v640 = vadd.f32 0.0, %v639
      %v641 = vpop.f32.mrb[0].mxu0
      %642 = vmatprep.mubr.f32.mxu0 0.0
      %643 = vmatmul.mubr.f32.gmra.mrb[0].mxu0 %v463
      %v644 = vpop.f32.mrb[0].mxu0
      %v645 = vadd.f32 0.0, %v644
      %v646 = vpop.f32.mrb[0].mxu0
      %647 = vmatprep.mubr.f32.mxu0 0.0
      %648 = vmatmul.mubr.f32.gmra.mrb[0].mxu0 %v466
      %v649 = vpop.f32.mrb[0].mxu0
      %v650 = vadd.f32 0.0, %v649
      %v651 = vpop.f32.mrb[0].mxu0
      %652 = vmatprep.mubr.f32.mxu0 0.0
      %653 = vmatmul.mubr.f32.gmra.mrb[0].mxu0 %v469
      %v654 = vpop.f32.mrb[0].mxu0
      %v655 = vadd.f32 0.0, %v654
      %v656 = vpop.f32.mrb[0].mxu0
      %657 = vmatprep.mubr.f32.mxu0 0.0
      %658 = vmatmul.mubr.f32.gmra.mrb[0].mxu0 %v472
      %v659 = vpop.f32.mrb[0].mxu0
      %v660 = vadd.f32 0.0, %v659
      %v661 = vpop.f32.mrb[0].mxu0
      %662 = vmatprep.mubr.f32.mxu0 0.0
      %663 = vmatmul.mubr.f32.gmra.mrb[0].mxu0 %v475
      %v664 = vpop.f32.mrb[0].mxu0
      %v665 = vadd.f32 0.0, %v664
      %v666 = vpop.f32.mrb[0].mxu0
      %667 = vmatprep.mubr.f32.mxu0 0.0
      %668 = vmatmul.mubr.f32.gmra.mrb[0].mxu0 %v478
      %v669 = vpop.f32.mrb[0].mxu0
      %v670 = vadd.f32 0.0, %v669
      %v671 = vpop.f32.mrb[0].mxu0
      %672 = vmatprep.mubr.f32.mxu0 0.0
      %673 = vmatmul.mubr.f32.gmra.mrb[0].mxu0 %v481
      %v674 = vpop.f32.mrb[0].mxu0
      %v675 = vadd.f32 0.0, %v674
      %v676 = vpop.f32.mrb[0].mxu0
      %677 = vmatprep.mubr.f32.mxu0 0.0
      %678 = vmatmul.mubr.f32.gmra.mrb[0].mxu0 %v484
      %v679 = vpop.f32.mrb[0].mxu0
      %v680 = vadd.f32 0.0, %v679
      %v681 = vpop.f32.mrb[0].mxu0
      %682 = vmatprep.mubr.f32.mxu0 0.0
      %683 = vmatmul.mubr.f32.gmra.mrb[0].mxu0 %v487
      %v684 = vpop.f32.mrb[0].mxu0
      %v685 = vadd.f32 0.0, %v684
      %v686 = vpop.f32.mrb[0].mxu0
      %687 = vmatprep.mubr.f32.mxu0 0.0
      %688 = vmatmul.mubr.f32.gmra.mrb[0].mxu0 %v490
      %v689 = vpop.f32.mrb[0].mxu0
      %v690 = vadd.f32 0.0, %v689
      %v691 = vpop.f32.mrb[0].mxu0
      %692 = vmatprep.mubr.f32.mxu0 0.0
      %693 = vmatmul.mubr.f32.gmra.mrb[0].mxu0 %v493
      %v694 = vpop.f32.mrb[0].mxu0
      %v695 = vadd.f32 0.0, %v694
      %v696 = vpop.f32.mrb[0].mxu0
      %697 = vmatprep.mubr.f32.mxu0 0.0
      %698 = vmatmul.mubr.f32.gmra.mrb[0].mxu0 %v496
      %v699 = vpop.f32.mrb[0].mxu0
      %v700 = vadd.f32 0.0, %v699
      %v701 = vpop.f32.mrb[0].mxu0
      %702 = vmatprep.mubr.f32.mxu0 0.0
      %703 = vmatmul.mubr.f32.gmra.mrb[0].mxu0 %v499
      %v704 = vpop.f32.mrb[0].mxu0
      %v705 = vadd.f32 0.0, %v704
      %v706 = vpop.f32.mrb[0].mxu0
      %707 = vmatprep.mubr.f32.mxu0 0.0
      %708 = vmatmul.mubr.f32.gmra.mrb[0].mxu0 %v502
      %v709 = vpop.f32.mrb[0].mxu0
      %v710 = vadd.f32 0.0, %v709
      %v711 = vpop.f32.mrb[0].mxu0
      %712 = vmatprep.mubr.f32.mxu0 0.0
      %713 = vmatmul.mubr.f32.gmra.mrb[0].mxu0 %v505
      %v714 = vpop.f32.mrb[0].mxu0
      %v715 = vadd.f32 0.0, %v714
      %v716 = vpop.f32.mrb[0].mxu0
      %717 = vmatprep.mubr.f32.mxu0 0.0
      %718 = vmatmul.mubr.f32.gmra.mrb[0].mxu0 %v508
      %v719 = vpop.f32.mrb[0].mxu0
      %v720 = vadd.f32 0.0, %v719
      %v721 = vpop.f32.mrb[0].mxu0
      %722 = vmatprep.mubr.f32.mxu0 0.0
      %723 = vmatmul.mubr.f32.gmra.mrb[0].mxu0 %v511
      %v724 = vpop.f32.mrb[0].mxu0
      %v725 = vadd.f32 0.0, %v724
      %v726 = vpop.f32.mrb[0].mxu0
      %727 = vmatprep.mubr.f32.mxu0 0.0
      %728 = vmatmul.mubr.f32.gmra.mrb[0].mxu0 %v514
      %v729 = vpop.f32.mrb[0].mxu0
      %v730 = vadd.f32 0.0, %v729
      %v731 = vpop.f32.mrb[0].mxu0
      %732 = vmatprep.mubr.f32.mxu0 0.0
      %733 = vmatmul.mubr.f32.gmra.mrb[0].mxu0 %v517
      %v734 = vpop.f32.mrb[0].mxu0
      %v735 = vadd.f32 0.0, %v734
      %v736 = vpop.f32.mrb[0].mxu0
      %737 = vmatprep.mubr.f32.mxu0 0.0
      %738 = vmatmul.mubr.f32.gmra.mrb[0].mxu0 %v520
      %v739 = vpop.f32.mrb[0].mxu0
      %v740 = vadd.f32 0.0, %v739
      %v741 = vpop.f32.mrb[0].mxu0
      %742 = vmatprep.mubr.f32.mxu0 0.0
      %743 = vmatmul.mubr.f32.gmra.mrb[0].mxu0 %v523
      %v744 = vpop.f32.mrb[0].mxu0
      %v745 = vadd.f32 0.0, %v744
      %v746 = vpop.f32.mrb[0].mxu0
      %747 = vmatprep.mubr.f32.mxu0 0.0
      %748 = vmatmul.mubr.f32.gmra.mrb[0].mxu0 %v526
      %v749 = vpop.f32.mrb[0].mxu0
      %v750 = vadd.f32 0.0, %v749
      %v751 = vpop.f32.mrb[0].mxu0
      %752 = vdwg.mxu0
      %v753 = vld [vmem:[%s2] sm:$0x1]
      %v755 = vlaneseq
      %v756 = vshrl.u32 %v755, 7
      %v757 = vsub.s32 0, %v756
      %v758 = vrot.slane %v753, %v757
      %v760 = vadd.f32 %v595, %v758
      %v761 = vadd.f32 %v600, %v758
      %v762 = vadd.f32 %v605, %v758
      %v763 = vadd.f32 %v610, %v758
      %v764 = vadd.f32 %v615, %v758
      %v765 = vadd.f32 %v620, %v758
      %v766 = vadd.f32 %v625, %v758
      %v767 = vadd.f32 %v630, %v758
      %v768 = vadd.f32 %v635, %v758
      %v769 = vadd.f32 %v640, %v758
      %v770 = vadd.f32 %v645, %v758
      %v771 = vadd.f32 %v650, %v758
      %v772 = vadd.f32 %v655, %v758
      %v773 = vadd.f32 %v660, %v758
      %v774 = vadd.f32 %v665, %v758
      %v775 = vadd.f32 %v670, %v758
      %v776 = vadd.f32 %v675, %v758
      %v777 = vadd.f32 %v680, %v758
      %v778 = vadd.f32 %v685, %v758
      %v779 = vadd.f32 %v690, %v758
      %v780 = vadd.f32 %v695, %v758
      %v781 = vadd.f32 %v700, %v758
      %v782 = vadd.f32 %v705, %v758
      %v783 = vadd.f32 %v710, %v758
      %v784 = vadd.f32 %v715, %v758
      %v785 = vadd.f32 %v720, %v758
      %v786 = vadd.f32 %v725, %v758
      %v787 = vadd.f32 %v730, %v758
      %v788 = vadd.f32 %v735, %v758
      %v789 = vadd.f32 %v740, %v758
      %v790 = vadd.f32 %v745, %v758
      %v791 = vadd.f32 %v750, %v758
      %v792 = vmax.f32 %v760, 0.0
      %v793 = vmax.f32 %v761, 0.0
      %v794 = vmax.f32 %v762, 0.0
      %v795 = vmax.f32 %v763, 0.0
      %v796 = vmax.f32 %v764, 0.0
      %v797 = vmax.f32 %v765, 0.0
      %v798 = vmax.f32 %v766, 0.0
      %v799 = vmax.f32 %v767, 0.0
      %v800 = vmax.f32 %v768, 0.0
      %v801 = vmax.f32 %v769, 0.0
      %v802 = vmax.f32 %v770, 0.0
      %v803 = vmax.f32 %v771, 0.0
      %v804 = vmax.f32 %v772, 0.0
      %v805 = vmax.f32 %v773, 0.0
      %v806 = vmax.f32 %v774, 0.0
      %v807 = vmax.f32 %v775, 0.0
      %v808 = vmax.f32 %v776, 0.0
      %v809 = vmax.f32 %v777, 0.0
      %v810 = vmax.f32 %v778, 0.0
      %v811 = vmax.f32 %v779, 0.0
      %v812 = vmax.f32 %v780, 0.0
      %v813 = vmax.f32 %v781, 0.0
      %v814 = vmax.f32 %v782, 0.0
      %v815 = vmax.f32 %v783, 0.0
      %v816 = vmax.f32 %v784, 0.0
      %v817 = vmax.f32 %v785, 0.0
      %v818 = vmax.f32 %v786, 0.0
      %v819 = vmax.f32 %v787, 0.0
      %v820 = vmax.f32 %v788, 0.0
      %v821 = vmax.f32 %v789, 0.0
      %v822 = vmax.f32 %v790, 0.0
      %v823 = vmax.f32 %v791, 0.0
      %856 = vrot.lane.b32.xlu0 %v595, 104
      %v857 = vpop.permute.xlu0 %856
      %858 = vrot.lane.b32.xlu0 %v600, 104
      %v859 = vpop.permute.xlu0 %858
      %860 = vrot.lane.b32.xlu0 %v605, 104
      %v861 = vpop.permute.xlu0 %860
      %862 = vrot.lane.b32.xlu0 %v610, 104
      %v863 = vpop.permute.xlu0 %862
      %864 = vrot.lane.b32.xlu0 %v615, 104
      %v865 = vpop.permute.xlu0 %864
      %866 = vrot.lane.b32.xlu0 %v620, 104
      %v867 = vpop.permute.xlu0 %866
      %868 = vrot.lane.b32.xlu0 %v625, 104
      %v869 = vpop.permute.xlu0 %868
      %870 = vrot.lane.b32.xlu0 %v630, 104
      %v871 = vpop.permute.xlu0 %870
      %872 = vrot.lane.b32.xlu0 %v635, 104
      %v873 = vpop.permute.xlu0 %872
      %874 = vrot.lane.b32.xlu0 %v640, 104
      %v875 = vpop.permute.xlu0 %874
      %876 = vrot.lane.b32.xlu0 %v645, 104
      %v877 = vpop.permute.xlu0 %876
      %878 = vrot.lane.b32.xlu0 %v650, 104
      %v879 = vpop.permute.xlu0 %878
      %880 = vrot.lane.b32.xlu0 %v655, 104
      %v881 = vpop.permute.xlu0 %880
      %882 = vrot.lane.b32.xlu0 %v660, 104
      %v883 = vpop.permute.xlu0 %882
      %884 = vrot.lane.b32.xlu0 %v665, 104
      %v885 = vpop.permute.xlu0 %884
      %886 = vrot.lane.b32.xlu0 %v670, 104
      %v887 = vpop.permute.xlu0 %886
      %888 = vrot.lane.b32.xlu0 %v675, 104
      %v889 = vpop.permute.xlu0 %888
      %890 = vrot.lane.b32.xlu0 %v680, 104
      %v891 = vpop.permute.xlu0 %890
      %892 = vrot.lane.b32.xlu0 %v685, 104
      %v893 = vpop.permute.xlu0 %892
      %894 = vrot.lane.b32.xlu0 %v690, 104
      %v895 = vpop.permute.xlu0 %894
      %896 = vrot.lane.b32.xlu0 %v695, 104
      %v897 = vpop.permute.xlu0 %896
      %898 = vrot.lane.b32.xlu0 %v700, 104
      %v899 = vpop.permute.xlu0 %898
      %900 = vrot.lane.b32.xlu0 %v705, 104
      %v901 = vpop.permute.xlu0 %900
      %902 = vrot.lane.b32.xlu0 %v710, 104
      %v903 = vpop.permute.xlu0 %902
      %904 = vrot.lane.b32.xlu0 %v715, 104
      %v905 = vpop.permute.xlu0 %904
      %906 = vrot.lane.b32.xlu0 %v720, 104
      %v907 = vpop.permute.xlu0 %906
      %908 = vrot.lane.b32.xlu0 %v725, 104
      %v909 = vpop.permute.xlu0 %908
      %910 = vrot.lane.b32.xlu0 %v730, 104
      %v911 = vpop.permute.xlu0 %910
      %912 = vrot.lane.b32.xlu0 %v735, 104
      %v913 = vpop.permute.xlu0 %912
      %914 = vrot.lane.b32.xlu0 %v740, 104
      %v915 = vpop.permute.xlu0 %914
      %916 = vrot.lane.b32.xlu0 %v745, 104
      %v917 = vpop.permute.xlu0 %916
      %918 = vrot.lane.b32.xlu0 %v750, 104
      %v919 = vpop.permute.xlu0 %918
      %s952 = scalar_lea.vmem [#allocation3], 24
      %953 = vst.msk [vmem:[%s952 + $0x1] sm:$0xff] %vm352, %v857
      %954 = vst.msk [vmem:[%s952 + $0x9] sm:$0xff] %vm352, %v859
      %955 = vst.msk [vmem:[%s952 + $0x19] sm:$0xff] %vm352, %v861
      %956 = vst.msk [vmem:[%s952 + $0x21] sm:$0xff] %vm352, %v863
      %957 = vst.msk [vmem:[%s952 + $0x31] sm:$0xff] %vm352, %v865
      %958 = vst.msk [vmem:[%s952 + $0x39] sm:$0xff] %vm352, %v867
      %959 = vst.msk [vmem:[%s952 + $0x49] sm:$0xff] %vm352, %v869
      %960 = vst.msk [vmem:[%s952 + $0x51] sm:$0xff] %vm352, %v871
      %961 = vst.msk [vmem:[%s952 + $0x61] sm:$0xff] %vm352, %v873
      %962 = vst.msk [vmem:[%s952 + $0x69] sm:$0xff] %vm352, %v875
      %963 = vst.msk [vmem:[%s952 + $0x79] sm:$0xff] %vm352, %v877
      %964 = vst.msk [vmem:[%s952 + $0x81] sm:$0xff] %vm352, %v879
      %965 = vst.msk [vmem:[%s952 + $0x91] sm:$0xff] %vm352, %v881
      %966 = vst.msk [vmem:[%s952 + $0x99] sm:$0xff] %vm352, %v883
      %967 = vst.msk [vmem:[%s952 + $0xa9] sm:$0xff] %vm352, %v885
      %968 = vst.msk [vmem:[%s952 + $0xb1] sm:$0xff] %vm352, %v887
      %969 = vst.msk [vmem:[%s952 + $0xc1] sm:$0xff] %vm352, %v889
      %970 = vst.msk [vmem:[%s952 + $0xc9] sm:$0xff] %vm352, %v891
      %971 = vst.msk [vmem:[%s952 + $0xd9] sm:$0xff] %vm352, %v893
      %972 = vst.msk [vmem:[%s952 + $0xe1] sm:$0xff] %vm352, %v895
      %973 = vst.msk [vmem:[%s952 + $0xf1] sm:$0xff] %vm352, %v897
      %974 = vst.msk [vmem:[%s952 + $0xf9] sm:$0xff] %vm352, %v899
      %975 = vst.msk [vmem:[%s952 + $0x109] sm:$0xff] %vm352, %v901
      %976 = vst.msk [vmem:[%s952 + $0x111] sm:$0xff] %vm352, %v903
      %977 = vst.msk [vmem:[%s952 + $0x121] sm:$0xff] %vm352, %v905
      %978 = vst.msk [vmem:[%s952 + $0x129] sm:$0xff] %vm352, %v907
      %979 = vst.msk [vmem:[%s952 + $0x139] sm:$0xff] %vm352, %v909
      %980 = vst.msk [vmem:[%s952 + $0x141] sm:$0xff] %vm352, %v911
      %981 = vst.msk [vmem:[%s952 + $0x151] sm:$0xff] %vm352, %v913
      %982 = vst.msk [vmem:[%s952 + $0x159] sm:$0xff] %vm352, %v915
      %983 = vst.msk [vmem:[%s952 + $0x169] sm:$0xff] %vm352, %v917
      %984 = vst.msk [vmem:[%s952 + $0x171] sm:$0xff] %vm352, %v919
      %v985 = vld [vmem:[#allocation3] sm:$0xff]
      %v986 = vld [vmem:[#allocation3 + $0x8] sm:$0xff]
      %v987 = vld [vmem:[#allocation3 + $0x10] sm:$0x3]
      %v988 = vld [vmem:[#allocation3 + $0x18] sm:$0xff]
      %v989 = vld [vmem:[#allocation3 + $0x20] sm:$0xff]
      %v990 = vld [vmem:[#allocation3 + $0x28] sm:$0x3]
      %v991 = vld [vmem:[#allocation3 + $0x30] sm:$0xff]
      %v992 = vld [vmem:[#allocation3 + $0x38] sm:$0xff]
      %v993 = vld [vmem:[#allocation3 + $0x40] sm:$0x3]
      %v994 = vld [vmem:[#allocation3 + $0x48] sm:$0xff]
      %v995 = vld [vmem:[#allocation3 + $0x50] sm:$0xff]
      %v996 = vld [vmem:[#allocation3 + $0x58] sm:$0x3]
      %v997 = vld [vmem:[#allocation3 + $0x60] sm:$0xff]
      %v998 = vld [vmem:[#allocation3 + $0x68] sm:$0xff]
      %v999 = vld [vmem:[#allocation3 + $0x70] sm:$0x3]
      %v1000 = vld [vmem:[#allocation3 + $0x78] sm:$0xff]
      %v1001 = vld [vmem:[#allocation3 + $0x80] sm:$0xff]
      %v1002 = vld [vmem:[#allocation3 + $0x88] sm:$0x3]
      %v1003 = vld [vmem:[#allocation3 + $0x90] sm:$0xff]
      %v1004 = vld [vmem:[#allocation3 + $0x98] sm:$0xff]
      %v1005 = vld [vmem:[#allocation3 + $0xa0] sm:$0x3]
      %v1006 = vld [vmem:[#allocation3 + $0xa8] sm:$0xff]
      %v1007 = vld [vmem:[#allocation3 + $0xb0] sm:$0xff]
      %v1008 = vld [vmem:[#allocation3 + $0xb8] sm:$0x3]
      %v1009 = vld [vmem:[#allocation3 + $0xc0] sm:$0xff]
      %v1010 = vld [vmem:[#allocation3 + $0xc8] sm:$0xff]
      %v1011 = vld [vmem:[#allocation3 + $0xd0] sm:$0x3]
      %v1012 = vld [vmem:[#allocation3 + $0xd8] sm:$0xff]
      %v1013 = vld [vmem:[#allocation3 + $0xe0] sm:$0xff]
      %v1014 = vld [vmem:[#allocation3 + $0xe8] sm:$0x3]
      %v1015 = vld [vmem:[#allocation3 + $0xf0] sm:$0xff]
      %v1016 = vld [vmem:[#allocation3 + $0xf8] sm:$0xff]
      %v1017 = vld [vmem:[#allocation3 + $0x100] sm:$0x3]
      %v1018 = vld [vmem:[#allocation3 + $0x108] sm:$0xff]
      %v1019 = vld [vmem:[#allocation3 + $0x110] sm:$0xff]
      %v1020 = vld [vmem:[#allocation3 + $0x118] sm:$0x3]
      %v1021 = vld [vmem:[#allocation3 + $0x120] sm:$0xff]
      %v1022 = vld [vmem:[#allocation3 + $0x128] sm:$0xff]
      %v1023 = vld [vmem:[#allocation3 + $0x130] sm:$0x3]
      %v1024 = vld [vmem:[#allocation3 + $0x138] sm:$0xff]
      %v1025 = vld [vmem:[#allocation3 + $0x140] sm:$0xff]
      %v1026 = vld [vmem:[#allocation3 + $0x148] sm:$0x3]
      %v1027 = vld [vmem:[#allocation3 + $0x150] sm:$0xff]
      %v1028 = vld [vmem:[#allocation3 + $0x158] sm:$0xff]
      %v1029 = vld [vmem:[#allocation3 + $0x160] sm:$0x3]
      %v1030 = vld [vmem:[#allocation3 + $0x168] sm:$0xff]
      %v1031 = vld [vmem:[#allocation3 + $0x170] sm:$0xff]
      %v1032 = vld [vmem:[#allocation3 + $0x178] sm:$0x3]
      %v1033 = vld [vmem:[#allocation3 + $0x180] sm:$0xff]
      %v1034 = vld [vmem:[#allocation3 + $0x188] sm:$0xff]
      %v1035 = vld [vmem:[#allocation3 + $0x190] sm:$0x3]
      %v1036 = vld [vmem:[#allocation3 + $0x198] sm:$0xff]
      %v1037 = vld [vmem:[#allocation3 + $0x1a0] sm:$0xff]
      %v1038 = vld [vmem:[#allocation3 + $0x1a8] sm:$0x3]
      %v1039 = vadd.f32 %v985, %v988
      %v1040 = vadd.f32 %v986, %v989
      %v1041 = vadd.f32 %v987, %v990
      %v1042 = vadd.f32 %v988, %v991
      %v1043 = vadd.f32 %v989, %v992
      %v1044 = vadd.f32 %v990, %v993
      %v1045 = vadd.f32 %v991, %v994
      %v1046 = vadd.f32 %v992, %v995
      %v1047 = vadd.f32 %v993, %v996
      %v1048 = vadd.f32 %v994, %v997
      %v1049 = vadd.f32 %v995, %v998
      %v1050 = vadd.f32 %v996, %v999
      %v1051 = vadd.f32 %v997, %v1000
      %v1052 = vadd.f32 %v998, %v1001
      %v1053 = vadd.f32 %v999, %v1002
      %v1054 = vadd.f32 %v1000, %v1003
      %v1055 = vadd.f32 %v1001, %v1004
      %v1056 = vadd.f32 %v1002, %v1005
      %v1057 = vadd.f32 %v1003, %v1006
      %v1058 = vadd.f32 %v1004, %v1007
      %v1059 = vadd.f32 %v1005, %v1008
      %v1060 = vadd.f32 %v1006, %v1009
      %v1061 = vadd.f32 %v1007, %v1010
      %v1062 = vadd.f32 %v1008, %v1011
      %v1063 = vadd.f32 %v1009, %v1012
      %v1064 = vadd.f32 %v1010, %v1013
      %v1065 = vadd.f32 %v1011, %v1014
      %v1066 = vadd.f32 %v1012, %v1015
      %v1067 = vadd.f32 %v1013, %v1016
      %v1068 = vadd.f32 %v1014, %v1017
      %v1069 = vadd.f32 %v1015, %v1018
      %v1070 = vadd.f32 %v1016, %v1019
      %v1071 = vadd.f32 %v1017, %v1020
      %v1072 = vadd.f32 %v1018, %v1021
      %v1073 = vadd.f32 %v1019, %v1022
      %v1074 = vadd.f32 %v1020, %v1023
      %v1075 = vadd.f32 %v1021, %v1024
      %v1076 = vadd.f32 %v1022, %v1025
      %v1077 = vadd.f32 %v1023, %v1026
      %v1078 = vadd.f32 %v1024, %v1027
      %v1079 = vadd.f32 %v1025, %v1028
      %v1080 = vadd.f32 %v1026, %v1029
      %v1081 = vadd.f32 %v1027, %v1030
      %v1082 = vadd.f32 %v1028, %v1031
      %v1083 = vadd.f32 %v1029, %v1032
      %v1084 = vadd.f32 %v1030, %v1033
      %v1085 = vadd.f32 %v1031, %v1034
      %v1086 = vadd.f32 %v1032, %v1035
      %v1087 = vadd.f32 %v1039, %v991
      %v1088 = vadd.f32 %v1040, %v992
      %v1089 = vadd.f32 %v1041, %v993
      %v1090 = vadd.f32 %v1042, %v994
      %v1091 = vadd.f32 %v1043, %v995
      %v1092 = vadd.f32 %v1044, %v996
      %v1093 = vadd.f32 %v1045, %v997
      %v1094 = vadd.f32 %v1046, %v998
      %v1095 = vadd.f32 %v1047, %v999
      %v1096 = vadd.f32 %v1048, %v1000
      %v1097 = vadd.f32 %v1049, %v1001
      %v1098 = vadd.f32 %v1050, %v1002
      %v1099 = vadd.f32 %v1051, %v1003
      %v1100 = vadd.f32 %v1052, %v1004
      %v1101 = vadd.f32 %v1053, %v1005
      %v1102 = vadd.f32 %v1054, %v1006
      %v1103 = vadd.f32 %v1055, %v1007
      %v1104 = vadd.f32 %v1056, %v1008
      %v1105 = vadd.f32 %v1057, %v1009
      %v1106 = vadd.f32 %v1058, %v1010
      %v1107 = vadd.f32 %v1059, %v1011
      %v1108 = vadd.f32 %v1060, %v1012
      %v1109 = vadd.f32 %v1061, %v1013
      %v1110 = vadd.f32 %v1062, %v1014
      %v1111 = vadd.f32 %v1063, %v1015
      %v1112 = vadd.f32 %v1064, %v1016
      %v1113 = vadd.f32 %v1065, %v1017
      %v1114 = vadd.f32 %v1066, %v1018
      %v1115 = vadd.f32 %v1067, %v1019
      %v1116 = vadd.f32 %v1068, %v1020
      %v1117 = vadd.f32 %v1069, %v1021
      %v1118 = vadd.f32 %v1070, %v1022
      %v1119 = vadd.f32 %v1071, %v1023
      %v1120 = vadd.f32 %v1072, %v1024
      %v1121 = vadd.f32 %v1073, %v1025
      %v1122 = vadd.f32 %v1074, %v1026
      %v1123 = vadd.f32 %v1075, %v1027
      %v1124 = vadd.f32 %v1076, %v1028
      %v1125 = vadd.f32 %v1077, %v1029
      %v1126 = vadd.f32 %v1078, %v1030
      %v1127 = vadd.f32 %v1079, %v1031
      %v1128 = vadd.f32 %v1080, %v1032
      %v1129 = vadd.f32 %v1081, %v1033
      %v1130 = vadd.f32 %v1082, %v1034
      %v1131 = vadd.f32 %v1083, %v1035
      %v1132 = vadd.f32 %v1084, %v1036
      %v1133 = vadd.f32 %v1085, %v1037
      %v1134 = vadd.f32 %v1086, %v1038
      %vm1183 = vcmask 1046528
      %v1184 = vrot.slane %v1087, 1
      %v1185 = vrot.slane %v1088, 1
      %v1186 = vsel %vm1183, %v1184, %v1185
      %v1187 = vrot.slane %v1089, 1
      %v1188 = vsel %vm1183, %v1185, %v1187
      %v1189 = vrot.slane %v1090, 1
      %v1190 = vrot.slane %v1091, 1
      %v1191 = vsel %vm1183, %v1189, %v1190
      %v1192 = vrot.slane %v1092, 1
      %v1193 = vsel %vm1183, %v1190, %v1192
      %v1194 = vrot.slane %v1093, 1
      %v1195 = vrot.slane %v1094, 1
      %v1196 = vsel %vm1183, %v1194, %v1195
      %v1197 = vrot.slane %v1095, 1
      %v1198 = vsel %vm1183, %v1195, %v1197
      %v1199 = vrot.slane %v1096, 1
      %v1200 = vrot.slane %v1097, 1
      %v1201 = vsel %vm1183, %v1199, %v1200
      %v1202 = vrot.slane %v1098, 1
      %v1203 = vsel %vm1183, %v1200, %v1202
      %v1204 = vrot.slane %v1099, 1
      %v1205 = vrot.slane %v1100, 1
      %v1206 = vsel %vm1183, %v1204, %v1205
      %v1207 = vrot.slane %v1101, 1
      %v1208 = vsel %vm1183, %v1205, %v1207
      %v1209 = vrot.slane %v1102, 1
      %v1210 = vrot.slane %v1103, 1
      %v1211 = vsel %vm1183, %v1209, %v1210
      %v1212 = vrot.slane %v1104, 1
      %v1213 = vsel %vm1183, %v1210, %v1212
      %v1214 = vrot.slane %v1105, 1
      %v1215 = vrot.slane %v1106, 1
      %v1216 = vsel %vm1183, %v1214, %v1215
      %v1217 = vrot.slane %v1107, 1
      %v1218 = vsel %vm1183, %v1215, %v1217
      %v1219 = vrot.slane %v1108, 1
      %v1220 = vrot.slane %v1109, 1
      %v1221 = vsel %vm1183, %v1219, %v1220
      %v1222 = vrot.slane %v1110, 1
      %v1223 = vsel %vm1183, %v1220, %v1222
      %v1224 = vrot.slane %v1111, 1
      %v1225 = vrot.slane %v1112, 1
      %v1226 = vsel %vm1183, %v1224, %v1225
      %v1227 = vrot.slane %v1113, 1
      %v1228 = vsel %vm1183, %v1225, %v1227
      %v1229 = vrot.slane %v1114, 1
      %v1230 = vrot.slane %v1115, 1
      %v1231 = vsel %vm1183, %v1229, %v1230
      %v1232 = vrot.slane %v1116, 1
      %v1233 = vsel %vm1183, %v1230, %v1232
      %v1234 = vrot.slane %v1117, 1
      %v1235 = vrot.slane %v1118, 1
      %v1236 = vsel %vm1183, %v1234, %v1235
      %v1237 = vrot.slane %v1119, 1
      %v1238 = vsel %vm1183, %v1235, %v1237
      %v1239 = vrot.slane %v1120, 1
      %v1240 = vrot.slane %v1121, 1
      %v1241 = vsel %vm1183, %v1239, %v1240
      %v1242 = vrot.slane %v1122, 1
      %v1243 = vsel %vm1183, %v1240, %v1242
      %v1244 = vrot.slane %v1123, 1
      %v1245 = vrot.slane %v1124, 1
      %v1246 = vsel %vm1183, %v1244, %v1245
      %v1247 = vrot.slane %v1125, 1
      %v1248 = vsel %vm1183, %v1245, %v1247
      %v1249 = vrot.slane %v1126, 1
      %v1250 = vrot.slane %v1127, 1
      %v1251 = vsel %vm1183, %v1249, %v1250
      %v1252 = vrot.slane %v1128, 1
      %v1253 = vsel %vm1183, %v1250, %v1252
      %v1254 = vrot.slane %v1129, 1
      %v1255 = vrot.slane %v1130, 1
      %v1256 = vsel %vm1183, %v1254, %v1255
      %v1257 = vrot.slane %v1131, 1
      %v1258 = vsel %vm1183, %v1255, %v1257
      %v1259 = vrot.slane %v1132, 1
      %v1260 = vrot.slane %v1133, 1
      %v1261 = vsel %vm1183, %v1259, %v1260
      %v1262 = vrot.slane %v1134, 1
      %v1263 = vsel %vm1183, %v1260, %v1262
      %v1296 = vadd.f32 %v1087, %v1186
      %v1297 = vadd.f32 %v1088, %v1188
      %v1298 = vadd.f32 %v1090, %v1191
      %v1299 = vadd.f32 %v1091, %v1193
      %v1300 = vadd.f32 %v1093, %v1196
      %v1301 = vadd.f32 %v1094, %v1198
      %v1302 = vadd.f32 %v1096, %v1201
      %v1303 = vadd.f32 %v1097, %v1203
      %v1304 = vadd.f32 %v1099, %v1206
      %v1305 = vadd.f32 %v1100, %v1208
      %v1306 = vadd.f32 %v1102, %v1211
      %v1307 = vadd.f32 %v1103, %v1213
      %v1308 = vadd.f32 %v1105, %v1216
      %v1309 = vadd.f32 %v1106, %v1218
      %v1310 = vadd.f32 %v1108, %v1221
      %v1311 = vadd.f32 %v1109, %v1223
      %v1312 = vadd.f32 %v1111, %v1226
      %v1313 = vadd.f32 %v1112, %v1228
      %v1314 = vadd.f32 %v1114, %v1231
      %v1315 = vadd.f32 %v1115, %v1233
      %v1316 = vadd.f32 %v1117, %v1236
      %v1317 = vadd.f32 %v1118, %v1238
      %v1318 = vadd.f32 %v1120, %v1241
      %v1319 = vadd.f32 %v1121, %v1243
      %v1320 = vadd.f32 %v1123, %v1246
      %v1321 = vadd.f32 %v1124, %v1248
      %v1322 = vadd.f32 %v1126, %v1251
      %v1323 = vadd.f32 %v1127, %v1253
      %v1324 = vadd.f32 %v1129, %v1256
      %v1325 = vadd.f32 %v1130, %v1258
      %v1326 = vadd.f32 %v1132, %v1261
      %v1327 = vadd.f32 %v1133, %v1263
      %vm1328 = vcmask 1045504
      %v1329 = vrot.slane %v1087, 2
      %v1330 = vrot.slane %v1088, 2
      %v1331 = vsel %vm1328, %v1329, %v1330
      %v1332 = vrot.slane %v1089, 2
      %v1333 = vsel %vm1328, %v1330, %v1332
      %v1334 = vrot.slane %v1090, 2
      %v1335 = vrot.slane %v1091, 2
      %v1336 = vsel %vm1328, %v1334, %v1335
      %v1337 = vrot.slane %v1092, 2
      %v1338 = vsel %vm1328, %v1335, %v1337
      %v1339 = vrot.slane %v1093, 2
      %v1340 = vrot.slane %v1094, 2
      %v1341 = vsel %vm1328, %v1339, %v1340
      %v1342 = vrot.slane %v1095, 2
      %v1343 = vsel %vm1328, %v1340, %v1342
      %v1344 = vrot.slane %v1096, 2
      %v1345 = vrot.slane %v1097, 2
      %v1346 = vsel %vm1328, %v1344, %v1345
      %v1347 = vrot.slane %v1098, 2
      %v1348 = vsel %vm1328, %v1345, %v1347
      %v1349 = vrot.slane %v1099, 2
      %v1350 = vrot.slane %v1100, 2
      %v1351 = vsel %vm1328, %v1349, %v1350
      %v1352 = vrot.slane %v1101, 2
      %v1353 = vsel %vm1328, %v1350, %v1352
      %v1354 = vrot.slane %v1102, 2
      %v1355 = vrot.slane %v1103, 2
      %v1356 = vsel %vm1328, %v1354, %v1355
      %v1357 = vrot.slane %v1104, 2
      %v1358 = vsel %vm1328, %v1355, %v1357
      %v1359 = vrot.slane %v1105, 2
      %v1360 = vrot.slane %v1106, 2
      %v1361 = vsel %vm1328, %v1359, %v1360
      %v1362 = vrot.slane %v1107, 2
      %v1363 = vsel %vm1328, %v1360, %v1362
      %v1364 = vrot.slane %v1108, 2
      %v1365 = vrot.slane %v1109, 2
      %v1366 = vsel %vm1328, %v1364, %v1365
      %v1367 = vrot.slane %v1110, 2
      %v1368 = vsel %vm1328, %v1365, %v1367
      %v1369 = vrot.slane %v1111, 2
      %v1370 = vrot.slane %v1112, 2
      %v1371 = vsel %vm1328, %v1369, %v1370
      %v1372 = vrot.slane %v1113, 2
      %v1373 = vsel %vm1328, %v1370, %v1372
      %v1374 = vrot.slane %v1114, 2
      %v1375 = vrot.slane %v1115, 2
      %v1376 = vsel %vm1328, %v1374, %v1375
      %v1377 = vrot.slane %v1116, 2
      %v1378 = vsel %vm1328, %v1375, %v1377
      %v1379 = vrot.slane %v1117, 2
      %v1380 = vrot.slane %v1118, 2
      %v1381 = vsel %vm1328, %v1379, %v1380
      %v1382 = vrot.slane %v1119, 2
      %v1383 = vsel %vm1328, %v1380, %v1382
      %v1384 = vrot.slane %v1120, 2
      %v1385 = vrot.slane %v1121, 2
      %v1386 = vsel %vm1328, %v1384, %v1385
      %v1387 = vrot.slane %v1122, 2
      %v1388 = vsel %vm1328, %v1385, %v1387
      %v1389 = vrot.slane %v1123, 2
      %v1390 = vrot.slane %v1124, 2
      %v1391 = vsel %vm1328, %v1389, %v1390
      %v1392 = vrot.slane %v1125, 2
      %v1393 = vsel %vm1328, %v1390, %v1392
      %v1394 = vrot.slane %v1126, 2
      %v1395 = vrot.slane %v1127, 2
      %v1396 = vsel %vm1328, %v1394, %v1395
      %v1397 = vrot.slane %v1128, 2
      %v1398 = vsel %vm1328, %v1395, %v1397
      %v1399 = vrot.slane %v1129, 2
      %v1400 = vrot.slane %v1130, 2
      %v1401 = vsel %vm1328, %v1399, %v1400
      %v1402 = vrot.slane %v1131, 2
      %v1403 = vsel %vm1328, %v1400, %v1402
      %v1404 = vrot.slane %v1132, 2
      %v1405 = vrot.slane %v1133, 2
      %v1406 = vsel %vm1328, %v1404, %v1405
      %v1407 = vrot.slane %v1134, 2
      %v1408 = vsel %vm1328, %v1405, %v1407
      %v1441 = vadd.f32 %v1296, %v1331
      %v1442 = vadd.f32 %v1297, %v1333
      %v1443 = vadd.f32 %v1298, %v1336
      %v1444 = vadd.f32 %v1299, %v1338
      %v1445 = vadd.f32 %v1300, %v1341
      %v1446 = vadd.f32 %v1301, %v1343
      %v1447 = vadd.f32 %v1302, %v1346
      %v1448 = vadd.f32 %v1303, %v1348
      %v1449 = vadd.f32 %v1304, %v1351
      %v1450 = vadd.f32 %v1305, %v1353
      %v1451 = vadd.f32 %v1306, %v1356
      %v1452 = vadd.f32 %v1307, %v1358
      %v1453 = vadd.f32 %v1308, %v1361
      %v1454 = vadd.f32 %v1309, %v1363
      %v1455 = vadd.f32 %v1310, %v1366
      %v1456 = vadd.f32 %v1311, %v1368
      %v1457 = vadd.f32 %v1312, %v1371
      %v1458 = vadd.f32 %v1313, %v1373
      %v1459 = vadd.f32 %v1314, %v1376
      %v1460 = vadd.f32 %v1315, %v1378
      %v1461 = vadd.f32 %v1316, %v1381
      %v1462 = vadd.f32 %v1317, %v1383
      %v1463 = vadd.f32 %v1318, %v1386
      %v1464 = vadd.f32 %v1319, %v1388
      %v1465 = vadd.f32 %v1320, %v1391
      %v1466 = vadd.f32 %v1321, %v1393
      %v1467 = vadd.f32 %v1322, %v1396
      %v1468 = vadd.f32 %v1323, %v1398
      %v1469 = vadd.f32 %v1324, %v1401
      %v1470 = vadd.f32 %v1325, %v1403
      %v1471 = vadd.f32 %v1326, %v1406
      %v1472 = vadd.f32 %v1327, %v1408
      %v1473 = vld [vmem:[%s7] sm:$0x1]
      %v1475 = vlaneseq
      %v1476 = vshrl.u32 %v1475, 7
      %v1477 = vsub.s32 0, %v1476
      %v1478 = vrot.slane %v1473, %v1477
      %v1480 = vadd.f32 %v1441, %v1478
      %v1481 = vadd.f32 %v1442, %v1478
      %v1482 = vadd.f32 %v1443, %v1478
      %v1483 = vadd.f32 %v1444, %v1478
      %v1484 = vadd.f32 %v1445, %v1478
      %v1485 = vadd.f32 %v1446, %v1478
      %v1486 = vadd.f32 %v1447, %v1478
      %v1487 = vadd.f32 %v1448, %v1478
      %v1488 = vadd.f32 %v1449, %v1478
      %v1489 = vadd.f32 %v1450, %v1478
      %v1490 = vadd.f32 %v1451, %v1478
      %v1491 = vadd.f32 %v1452, %v1478
      %v1492 = vadd.f32 %v1453, %v1478
      %v1493 = vadd.f32 %v1454, %v1478
      %v1494 = vadd.f32 %v1455, %v1478
      %v1495 = vadd.f32 %v1456, %v1478
      %v1496 = vadd.f32 %v1457, %v1478
      %v1497 = vadd.f32 %v1458, %v1478
      %v1498 = vadd.f32 %v1459, %v1478
      %v1499 = vadd.f32 %v1460, %v1478
      %v1500 = vadd.f32 %v1461, %v1478
      %v1501 = vadd.f32 %v1462, %v1478
      %v1502 = vadd.f32 %v1463, %v1478
      %v1503 = vadd.f32 %v1464, %v1478
      %v1504 = vadd.f32 %v1465, %v1478
      %v1505 = vadd.f32 %v1466, %v1478
      %v1506 = vadd.f32 %v1467, %v1478
      %v1507 = vadd.f32 %v1468, %v1478
      %v1508 = vadd.f32 %v1469, %v1478
      %v1509 = vadd.f32 %v1470, %v1478
      %v1510 = vadd.f32 %v1471, %v1478
      %v1511 = vadd.f32 %v1472, %v1478
      %v1512 = vmax.f32 %v1480, 0.0
      %v1513 = vmax.f32 %v1481, 0.0
      %v1514 = vmax.f32 %v1482, 0.0
      %v1515 = vmax.f32 %v1483, 0.0
      %v1516 = vmax.f32 %v1484, 0.0
      %v1517 = vmax.f32 %v1485, 0.0
      %v1518 = vmax.f32 %v1486, 0.0
      %v1519 = vmax.f32 %v1487, 0.0
      %v1520 = vmax.f32 %v1488, 0.0
      %v1521 = vmax.f32 %v1489, 0.0
      %v1522 = vmax.f32 %v1490, 0.0
      %v1523 = vmax.f32 %v1491, 0.0
      %v1524 = vmax.f32 %v1492, 0.0
      %v1525 = vmax.f32 %v1493, 0.0
      %v1526 = vmax.f32 %v1494, 0.0
      %v1527 = vmax.f32 %v1495, 0.0
      %v1528 = vmax.f32 %v1496, 0.0
      %v1529 = vmax.f32 %v1497, 0.0
      %v1530 = vmax.f32 %v1498, 0.0
      %v1531 = vmax.f32 %v1499, 0.0
      %v1532 = vmax.f32 %v1500, 0.0
      %v1533 = vmax.f32 %v1501, 0.0
      %v1534 = vmax.f32 %v1502, 0.0
      %v1535 = vmax.f32 %v1503, 0.0
      %v1536 = vmax.f32 %v1504, 0.0
      %v1537 = vmax.f32 %v1505, 0.0
      %v1538 = vmax.f32 %v1506, 0.0
      %v1539 = vmax.f32 %v1507, 0.0
      %v1540 = vmax.f32 %v1508, 0.0
      %v1541 = vmax.f32 %v1509, 0.0
      %v1542 = vmax.f32 %v1510, 0.0
      %v1543 = vmax.f32 %v1511, 0.0
      %s1544 = scalar_lea.vmem [#allocation2], 24
      %1545 = vst.msk [vmem:[%s1544 + $0x1] sm:$0xff] %vm306, %v792
      %1546 = vst.msk [vmem:[%s1544 + $0x9] sm:$0xff] %vm306, %v793
      %1547 = vst.msk [vmem:[%s1544 + $0x19] sm:$0xff] %vm306, %v794
      %1548 = vst.msk [vmem:[%s1544 + $0x21] sm:$0xff] %vm306, %v795
      %1549 = vst.msk [vmem:[%s1544 + $0x31] sm:$0xff] %vm306, %v796
      %1550 = vst.msk [vmem:[%s1544 + $0x39] sm:$0xff] %vm306, %v797
      %1551 = vst.msk [vmem:[%s1544 + $0x49] sm:$0xff] %vm306, %v798
      %1552 = vst.msk [vmem:[%s1544 + $0x51] sm:$0xff] %vm306, %v799
      %1553 = vst.msk [vmem:[%s1544 + $0x61] sm:$0xff] %vm306, %v800
      %1554 = vst.msk [vmem:[%s1544 + $0x69] sm:$0xff] %vm306, %v801
      %1555 = vst.msk [vmem:[%s1544 + $0x79] sm:$0xff] %vm306, %v802
      %1556 = vst.msk [vmem:[%s1544 + $0x81] sm:$0xff] %vm306, %v803
      %1557 = vst.msk [vmem:[%s1544 + $0x91] sm:$0xff] %vm306, %v804
      %1558 = vst.msk [vmem:[%s1544 + $0x99] sm:$0xff] %vm306, %v805
      %1559 = vst.msk [vmem:[%s1544 + $0xa9] sm:$0xff] %vm306, %v806
      %1560 = vst.msk [vmem:[%s1544 + $0xb1] sm:$0xff] %vm306, %v807
      %1561 = vst.msk [vmem:[%s1544 + $0xc1] sm:$0xff] %vm306, %v808
      %1562 = vst.msk [vmem:[%s1544 + $0xc9] sm:$0xff] %vm306, %v809
      %1563 = vst.msk [vmem:[%s1544 + $0xd9] sm:$0xff] %vm306, %v810
      %1564 = vst.msk [vmem:[%s1544 + $0xe1] sm:$0xff] %vm306, %v811
      %1565 = vst.msk [vmem:[%s1544 + $0xf1] sm:$0xff] %vm306, %v812
      %1566 = vst.msk [vmem:[%s1544 + $0xf9] sm:$0xff] %vm306, %v813
      %1567 = vst.msk [vmem:[%s1544 + $0x109] sm:$0xff] %vm306, %v814
      %1568 = vst.msk [vmem:[%s1544 + $0x111] sm:$0xff] %vm306, %v815
      %1569 = vst.msk [vmem:[%s1544 + $0x121] sm:$0xff] %vm306, %v816
      %1570 = vst.msk [vmem:[%s1544 + $0x129] sm:$0xff] %vm306, %v817
      %1571 = vst.msk [vmem:[%s1544 + $0x139] sm:$0xff] %vm306, %v818
      %1572 = vst.msk [vmem:[%s1544 + $0x141] sm:$0xff] %vm306, %v819
      %1573 = vst.msk [vmem:[%s1544 + $0x151] sm:$0xff] %vm306, %v820
      %1574 = vst.msk [vmem:[%s1544 + $0x159] sm:$0xff] %vm306, %v821
      %1575 = vst.msk [vmem:[%s1544 + $0x169] sm:$0xff] %vm306, %v822
      %1576 = vst.msk [vmem:[%s1544 + $0x171] sm:$0xff] %vm306, %v823
      %v1577 = vld [vmem:[#allocation2] sm:$0xff]
      %v1578 = vld [vmem:[#allocation2 + $0x8] sm:$0xff]
      %v1579 = vld [vmem:[#allocation2 + $0x10] sm:$0x3]
      %v1580 = vld [vmem:[#allocation2 + $0x18] sm:$0xff]
      %v1581 = vld [vmem:[#allocation2 + $0x20] sm:$0xff]
      %v1582 = vld [vmem:[#allocation2 + $0x28] sm:$0x3]
      %v1583 = vld [vmem:[#allocation2 + $0x30] sm:$0xff]
      %v1584 = vld [vmem:[#allocation2 + $0x38] sm:$0xff]
      %v1585 = vld [vmem:[#allocation2 + $0x40] sm:$0x3]
      %v1586 = vld [vmem:[#allocation2 + $0x48] sm:$0xff]
      %v1587 = vld [vmem:[#allocation2 + $0x50] sm:$0xff]
      %v1588 = vld [vmem:[#allocation2 + $0x58] sm:$0x3]
      %v1589 = vld [vmem:[#allocation2 + $0x60] sm:$0xff]
      %v1590 = vld [vmem:[#allocation2 + $0x68] sm:$0xff]
      %v1591 = vld [vmem:[#allocation2 + $0x70] sm:$0x3]
      %v1592 = vld [vmem:[#allocation2 + $0x78] sm:$0xff]
      %v1593 = vld [vmem:[#allocation2 + $0x80] sm:$0xff]
      %v1594 = vld [vmem:[#allocation2 + $0x88] sm:$0x3]
      %v1595 = vld [vmem:[#allocation2 + $0x90] sm:$0xff]
      %v1596 = vld [vmem:[#allocation2 + $0x98] sm:$0xff]
      %v1597 = vld [vmem:[#allocation2 + $0xa0] sm:$0x3]
      %v1598 = vld [vmem:[#allocation2 + $0xa8] sm:$0xff]
      %v1599 = vld [vmem:[#allocation2 + $0xb0] sm:$0xff]
      %v1600 = vld [vmem:[#allocation2 + $0xb8] sm:$0x3]
      %v1601 = vld [vmem:[#allocation2 + $0xc0] sm:$0xff]
      %v1602 = vld [vmem:[#allocation2 + $0xc8] sm:$0xff]
      %v1603 = vld [vmem:[#allocation2 + $0xd0] sm:$0x3]
      %v1604 = vld [vmem:[#allocation2 + $0xd8] sm:$0xff]
      %v1605 = vld [vmem:[#allocation2 + $0xe0] sm:$0xff]
      %v1606 = vld [vmem:[#allocation2 + $0xe8] sm:$0x3]
      %v1607 = vld [vmem:[#allocation2 + $0xf0] sm:$0xff]
      %v1608 = vld [vmem:[#allocation2 + $0xf8] sm:$0xff]
      %v1609 = vld [vmem:[#allocation2 + $0x100] sm:$0x3]
      %v1610 = vld [vmem:[#allocation2 + $0x108] sm:$0xff]
      %v1611 = vld [vmem:[#allocation2 + $0x110] sm:$0xff]
      %v1612 = vld [vmem:[#allocation2 + $0x118] sm:$0x3]
      %v1613 = vld [vmem:[#allocation2 + $0x120] sm:$0xff]
      %v1614 = vld [vmem:[#allocation2 + $0x128] sm:$0xff]
      %v1615 = vld [vmem:[#allocation2 + $0x130] sm:$0x3]
      %v1616 = vld [vmem:[#allocation2 + $0x138] sm:$0xff]
      %v1617 = vld [vmem:[#allocation2 + $0x140] sm:$0xff]
      %v1618 = vld [vmem:[#allocation2 + $0x148] sm:$0x3]
      %v1619 = vld [vmem:[#allocation2 + $0x150] sm:$0xff]
      %v1620 = vld [vmem:[#allocation2 + $0x158] sm:$0xff]
      %v1621 = vld [vmem:[#allocation2 + $0x160] sm:$0x3]
      %v1622 = vld [vmem:[#allocation2 + $0x168] sm:$0xff]
      %v1623 = vld [vmem:[#allocation2 + $0x170] sm:$0xff]
      %v1624 = vld [vmem:[#allocation2 + $0x178] sm:$0x3]
      %v1625 = vld [vmem:[#allocation2 + $0x180] sm:$0xff]
      %v1626 = vld [vmem:[#allocation2 + $0x188] sm:$0xff]
      %v1627 = vld [vmem:[#allocation2 + $0x190] sm:$0x3]
      %v1628 = vld [vmem:[#allocation2 + $0x198] sm:$0xff]
      %v1629 = vld [vmem:[#allocation2 + $0x1a0] sm:$0xff]
      %v1630 = vld [vmem:[#allocation2 + $0x1a8] sm:$0x3]
      %v1631 = vld [vmem:[%s3] sm:$0xff]
      %v1632 = vld [vmem:[%s3 + $0x8] sm:$0xff]
      %v1681 = vrot.slane %v1577, 1
      %v1682 = vrot.slane %v1578, 1
      %v1683 = vsel %vm1183, %v1681, %v1682
      %v1684 = vrot.slane %v1579, 1
      %v1685 = vsel %vm1183, %v1682, %v1684
      %v1686 = vrot.slane %v1580, 1
      %v1687 = vrot.slane %v1581, 1
      %v1688 = vsel %vm1183, %v1686, %v1687
      %v1689 = vrot.slane %v1582, 1
      %v1690 = vsel %vm1183, %v1687, %v1689
      %v1691 = vrot.slane %v1583, 1
      %v1692 = vrot.slane %v1584, 1
      %v1693 = vsel %vm1183, %v1691, %v1692
      %v1694 = vrot.slane %v1585, 1
      %v1695 = vsel %vm1183, %v1692, %v1694
      %v1696 = vrot.slane %v1586, 1
      %v1697 = vrot.slane %v1587, 1
      %v1698 = vsel %vm1183, %v1696, %v1697
      %v1699 = vrot.slane %v1588, 1
      %v1700 = vsel %vm1183, %v1697, %v1699
      %v1701 = vrot.slane %v1589, 1
      %v1702 = vrot.slane %v1590, 1
      %v1703 = vsel %vm1183, %v1701, %v1702
      %v1704 = vrot.slane %v1591, 1
      %v1705 = vsel %vm1183, %v1702, %v1704
      %v1706 = vrot.slane %v1592, 1
      %v1707 = vrot.slane %v1593, 1
      %v1708 = vsel %vm1183, %v1706, %v1707
      %v1709 = vrot.slane %v1594, 1
      %v1710 = vsel %vm1183, %v1707, %v1709
      %v1711 = vrot.slane %v1595, 1
      %v1712 = vrot.slane %v1596, 1
      %v1713 = vsel %vm1183, %v1711, %v1712
      %v1714 = vrot.slane %v1597, 1
      %v1715 = vsel %vm1183, %v1712, %v1714
      %v1716 = vrot.slane %v1598, 1
      %v1717 = vrot.slane %v1599, 1
      %v1718 = vsel %vm1183, %v1716, %v1717
      %v1719 = vrot.slane %v1600, 1
      %v1720 = vsel %vm1183, %v1717, %v1719
      %v1721 = vrot.slane %v1601, 1
      %v1722 = vrot.slane %v1602, 1
      %v1723 = vsel %vm1183, %v1721, %v1722
      %v1724 = vrot.slane %v1603, 1
      %v1725 = vsel %vm1183, %v1722, %v1724
      %v1726 = vrot.slane %v1604, 1
      %v1727 = vrot.slane %v1605, 1
      %v1728 = vsel %vm1183, %v1726, %v1727
      %v1729 = vrot.slane %v1606, 1
      %v1730 = vsel %vm1183, %v1727, %v1729
      %v1731 = vrot.slane %v1607, 1
      %v1732 = vrot.slane %v1608, 1
      %v1733 = vsel %vm1183, %v1731, %v1732
      %v1734 = vrot.slane %v1609, 1
      %v1735 = vsel %vm1183, %v1732, %v1734
      %v1736 = vrot.slane %v1610, 1
      %v1737 = vrot.slane %v1611, 1
      %v1738 = vsel %vm1183, %v1736, %v1737
      %v1739 = vrot.slane %v1612, 1
      %v1740 = vsel %vm1183, %v1737, %v1739
      %v1741 = vrot.slane %v1613, 1
      %v1742 = vrot.slane %v1614, 1
      %v1743 = vsel %vm1183, %v1741, %v1742
      %v1744 = vrot.slane %v1615, 1
      %v1745 = vsel %vm1183, %v1742, %v1744
      %v1746 = vrot.slane %v1616, 1
      %v1747 = vrot.slane %v1617, 1
      %v1748 = vsel %vm1183, %v1746, %v1747
      %v1749 = vrot.slane %v1618, 1
      %v1750 = vsel %vm1183, %v1747, %v1749
      %v1751 = vrot.slane %v1619, 1
      %v1752 = vrot.slane %v1620, 1
      %v1753 = vsel %vm1183, %v1751, %v1752
      %v1754 = vrot.slane %v1621, 1
      %v1755 = vsel %vm1183, %v1752, %v1754
      %v1756 = vrot.slane %v1622, 1
      %v1757 = vrot.slane %v1623, 1
      %v1758 = vsel %vm1183, %v1756, %v1757
      %v1759 = vrot.slane %v1624, 1
      %v1760 = vsel %vm1183, %v1757, %v1759
      %s1761 = scalar_lea.vmem %s3, 16
      %v1762 = vld [vmem:[%s1761] sm:$0xff]
      %v1763 = vld [vmem:[%s1761 + $0x8] sm:$0xff]
      %v1764 = vsel %vm306, %v1683, 0
      %v1766 = vsel %vm306, %v1685, 0
      %v1768 = vsel %vm306, %v1688, 0
      %v1770 = vsel %vm306, %v1690, 0
      %v1772 = vsel %vm306, %v1693, 0
      %v1774 = vsel %vm306, %v1695, 0
      %v1776 = vsel %vm306, %v1698, 0
      %v1778 = vsel %vm306, %v1700, 0
      %v1780 = vsel %vm306, %v1703, 0
      %v1782 = vsel %vm306, %v1705, 0
      %v1784 = vsel %vm306, %v1708, 0
      %v1786 = vsel %vm306, %v1710, 0
      %v1788 = vsel %vm306, %v1713, 0
      %v1790 = vsel %vm306, %v1715, 0
      %v1792 = vsel %vm306, %v1718, 0
      %v1794 = vsel %vm306, %v1720, 0
      %v1796 = vsel %vm306, %v1723, 0
      %v1798 = vsel %vm306, %v1725, 0
      %v1800 = vsel %vm306, %v1728, 0
      %v1802 = vsel %vm306, %v1730, 0
      %v1804 = vsel %vm306, %v1733, 0
      %v1806 = vsel %vm306, %v1735, 0
      %v1808 = vsel %vm306, %v1738, 0
      %v1810 = vsel %vm306, %v1740, 0
      %v1812 = vsel %vm306, %v1743, 0
      %v1814 = vsel %vm306, %v1745, 0
      %v1816 = vsel %vm306, %v1748, 0
      %v1818 = vsel %vm306, %v1750, 0
      %v1820 = vsel %vm306, %v1753, 0
      %v1822 = vsel %vm306, %v1755, 0
      %v1824 = vsel %vm306, %v1758, 0
      %v1826 = vsel %vm306, %v1760, 0
      %1828 = vmatprep.subr.mxu0 0.0
      %1829 = vmatpush1.msra.mxu0 %v1762
      %1830 = vmatprep.subr.mxu0 0.0
      %1831 = vmatpush1.msra.mxu0 %v1763
      %1832 = vmatprep.subr.mxu0 0.0
      %1833 = vmatpush1.msra.mxu0 0.0
      %1834 = vmatprep.subr.mxu0 0.0
      %1835 = vmatpush1.msra.mxu0 0.0
      %1836 = vmatprep.subr.mxu0 0.0
      %1837 = vmatpush1.msra.mxu0 0.0
      %1838 = vmatprep.subr.mxu0 0.0
      %1839 = vmatpush1.msra.mxu0 0.0
      %1840 = vmatprep.subr.mxu0 0.0
      %1841 = vmatpush1.msra.mxu0 0.0
      %1842 = vmatprep.subr.mxu0 0.0
      %1843 = vmatpush1.msra.mxu0 0.0
      %1844 = vmatprep.subr.mxu0 0.0
      %1845 = vmatpush1.msra.mxu0 0.0
      %1846 = vmatprep.subr.mxu0 0.0
      %1847 = vmatpush1.msra.mxu0 0.0
      %1848 = vmatprep.subr.mxu0 0.0
      %1849 = vmatpush1.msra.mxu0 0.0
      %1850 = vmatprep.subr.mxu0 0.0
      %1851 = vmatpush1.msra.mxu0 0.0
      %1852 = vmatprep.subr.mxu0 0.0
      %1853 = vmatpush1.msra.mxu0 0.0
      %1854 = vmatprep.subr.mxu0 0.0
      %1855 = vmatpush1.msra.mxu0 0.0
      %1856 = vmatprep.subr.mxu0 0.0
      %1857 = vmatpush1.msra.mxu0 0.0
      %1858 = vmatprep.subr.mxu0 0.0
      %1859 = vmatpush1.msra.mxu0 0.0
      %1860 = vmatprep.subr.mxu0 0.0
      %1861 = vmatpush1.msra.mxu0 0.0
      %1862 = vmatprep.subr.mxu0 0.0
      %1863 = vmatpush1.msra.mxu0 0.0
      %1864 = vmatprep.subr.mxu0 0.0
      %1865 = vmatpush1.msra.mxu0 0.0
      %1866 = vmatprep.subr.mxu0 0.0
      %1867 = vmatpush1.msra.mxu0 0.0
      %1868 = vmatprep.subr.mxu0 0.0
      %1869 = vmatpush1.msra.mxu0 0.0
      %1870 = vmatprep.subr.mxu0 0.0
      %1871 = vmatpush1.msra.mxu0 0.0
      %1872 = vmatprep.subr.mxu0 0.0
      %1873 = vmatpush1.msra.mxu0 0.0
      %1874 = vmatprep.subr.mxu0 0.0
      %1875 = vmatpush1.msra.mxu0 0.0
      %1876 = vmatprep.subr.mxu0 0.0
      %1877 = vmatpush1.msra.mxu0 0.0
      %1878 = vmatprep.subr.mxu0 0.0
      %1879 = vmatpush1.msra.mxu0 0.0
      %1880 = vmatprep.subr.mxu0 0.0
      %1881 = vmatpush1.msra.mxu0 0.0
      %1882 = vmatprep.subr.mxu0 0.0
      %1883 = vmatpush1.msra.mxu0 0.0
      %1884 = vmatprep.subr.mxu0 0.0
      %1885 = vmatpush1.msra.mxu0 0.0
      %1886 = vmatprep.subr.mxu0 0.0
      %1887 = vmatpush1.msra.mxu0 0.0
      %1888 = vmatprep.subr.mxu0 0.0
      %1889 = vmatpush1.msra.mxu0 0.0
      %1890 = vmatprep.subr.mxu0 0.0
      %1891 = vmatpush1.msra.mxu0 0.0
      %1892 = vmatprep.mubr.f32.mxu0 0.0
      %1893 = vmatmul.mubr.f32.gmra.mrb[0].mxu0 %v1764
      %v1894 = vpop.f32.mrb[0].mxu0
      %v1895 = vadd.f32 0.0, %v1894
      %v1896 = vpop.f32.mrb[0].mxu0
      %1897 = vmatprep.mubr.f32.mxu0 0.0
      %1898 = vmatmul.mubr.f32.gmra.mrb[0].mxu0 %v1766
      %v1899 = vpop.f32.mrb[0].mxu0
      %v1900 = vadd.f32 0.0, %v1899
      %v1901 = vpop.f32.mrb[0].mxu0
      %1902 = vmatprep.mubr.f32.mxu0 0.0
      %1903 = vmatmul.mubr.f32.gmra.mrb[0].mxu0 %v1768
      %v1904 = vpop.f32.mrb[0].mxu0
      %v1905 = vadd.f32 0.0, %v1904
      %v1906 = vpop.f32.mrb[0].mxu0
      %1907 = vmatprep.mubr.f32.mxu0 0.0
      %1908 = vmatmul.mubr.f32.gmra.mrb[0].mxu0 %v1770
      %v1909 = vpop.f32.mrb[0].mxu0
      %v1910 = vadd.f32 0.0, %v1909
      %v1911 = vpop.f32.mrb[0].mxu0
      %1912 = vmatprep.mubr.f32.mxu0 0.0
      %1913 = vmatmul.mubr.f32.gmra.mrb[0].mxu0 %v1772
      %v1914 = vpop.f32.mrb[0].mxu0
      %v1915 = vadd.f32 0.0, %v1914
      %v1916 = vpop.f32.mrb[0].mxu0
      %1917 = vmatprep.mubr.f32.mxu0 0.0
      %1918 = vmatmul.mubr.f32.gmra.mrb[0].mxu0 %v1774
      %v1919 = vpop.f32.mrb[0].mxu0
      %v1920 = vadd.f32 0.0, %v1919
      %v1921 = vpop.f32.mrb[0].mxu0
      %1922 = vmatprep.mubr.f32.mxu0 0.0
      %1923 = vmatmul.mubr.f32.gmra.mrb[0].mxu0 %v1776
      %v1924 = vpop.f32.mrb[0].mxu0
      %v1925 = vadd.f32 0.0, %v1924
      %v1926 = vpop.f32.mrb[0].mxu0
      %1927 = vmatprep.mubr.f32.mxu0 0.0
      %1928 = vmatmul.mubr.f32.gmra.mrb[0].mxu0 %v1778
      %v1929 = vpop.f32.mrb[0].mxu0
      %v1930 = vadd.f32 0.0, %v1929
      %v1931 = vpop.f32.mrb[0].mxu0
      %1932 = vmatprep.mubr.f32.mxu0 0.0
      %1933 = vmatmul.mubr.f32.gmra.mrb[0].mxu0 %v1780
      %v1934 = vpop.f32.mrb[0].mxu0
      %v1935 = vadd.f32 0.0, %v1934
      %v1936 = vpop.f32.mrb[0].mxu0
      %1937 = vmatprep.mubr.f32.mxu0 0.0
      %1938 = vmatmul.mubr.f32.gmra.mrb[0].mxu0 %v1782
      %v1939 = vpop.f32.mrb[0].mxu0
      %v1940 = vadd.f32 0.0, %v1939
      %v1941 = vpop.f32.mrb[0].mxu0
      %1942 = vmatprep.mubr.f32.mxu0 0.0
      %1943 = vmatmul.mubr.f32.gmra.mrb[0].mxu0 %v1784
      %v1944 = vpop.f32.mrb[0].mxu0
      %v1945 = vadd.f32 0.0, %v1944
      %v1946 = vpop.f32.mrb[0].mxu0
      %1947 = vmatprep.mubr.f32.mxu0 0.0
      %1948 = vmatmul.mubr.f32.gmra.mrb[0].mxu0 %v1786
      %v1949 = vpop.f32.mrb[0].mxu0
      %v1950 = vadd.f32 0.0, %v1949
      %v1951 = vpop.f32.mrb[0].mxu0
      %1952 = vmatprep.mubr.f32.mxu0 0.0
      %1953 = vmatmul.mubr.f32.gmra.mrb[0].mxu0 %v1788
      %v1954 = vpop.f32.mrb[0].mxu0
      %v1955 = vadd.f32 0.0, %v1954
      %v1956 = vpop.f32.mrb[0].mxu0
      %1957 = vmatprep.mubr.f32.mxu0 0.0
      %1958 = vmatmul.mubr.f32.gmra.mrb[0].mxu0 %v1790
      %v1959 = vpop.f32.mrb[0].mxu0
      %v1960 = vadd.f32 0.0, %v1959
      %v1961 = vpop.f32.mrb[0].mxu0
      %1962 = vmatprep.mubr.f32.mxu0 0.0
      %1963 = vmatmul.mubr.f32.gmra.mrb[0].mxu0 %v1792
      %v1964 = vpop.f32.mrb[0].mxu0
      %v1965 = vadd.f32 0.0, %v1964
      %v1966 = vpop.f32.mrb[0].mxu0
      %1967 = vmatprep.mubr.f32.mxu0 0.0
      %1968 = vmatmul.mubr.f32.gmra.mrb[0].mxu0 %v1794
      %v1969 = vpop.f32.mrb[0].mxu0
      %v1970 = vadd.f32 0.0, %v1969
      %v1971 = vpop.f32.mrb[0].mxu0
      %1972 = vmatprep.mubr.f32.mxu0 0.0
      %1973 = vmatmul.mubr.f32.gmra.mrb[0].mxu0 %v1796
      %v1974 = vpop.f32.mrb[0].mxu0
      %v1975 = vadd.f32 0.0, %v1974
      %v1976 = vpop.f32.mrb[0].mxu0
      %1977 = vmatprep.mubr.f32.mxu0 0.0
      %1978 = vmatmul.mubr.f32.gmra.mrb[0].mxu0 %v1798
      %v1979 = vpop.f32.mrb[0].mxu0
      %v1980 = vadd.f32 0.0, %v1979
      %v1981 = vpop.f32.mrb[0].mxu0
      %1982 = vmatprep.mubr.f32.mxu0 0.0
      %1983 = vmatmul.mubr.f32.gmra.mrb[0].mxu0 %v1800
      %v1984 = vpop.f32.mrb[0].mxu0
      %v1985 = vadd.f32 0.0, %v1984
      %v1986 = vpop.f32.mrb[0].mxu0
      %1987 = vmatprep.mubr.f32.mxu0 0.0
      %1988 = vmatmul.mubr.f32.gmra.mrb[0].mxu0 %v1802
      %v1989 = vpop.f32.mrb[0].mxu0
      %v1990 = vadd.f32 0.0, %v1989
      %v1991 = vpop.f32.mrb[0].mxu0
      %1992 = vmatprep.mubr.f32.mxu0 0.0
      %1993 = vmatmul.mubr.f32.gmra.mrb[0].mxu0 %v1804
      %v1994 = vpop.f32.mrb[0].mxu0
      %v1995 = vadd.f32 0.0, %v1994
      %v1996 = vpop.f32.mrb[0].mxu0
      %1997 = vmatprep.mubr.f32.mxu0 0.0
      %1998 = vmatmul.mubr.f32.gmra.mrb[0].mxu0 %v1806
      %v1999 = vpop.f32.mrb[0].mxu0
      %v2000 = vadd.f32 0.0, %v1999
      %v2001 = vpop.f32.mrb[0].mxu0
      %2002 = vmatprep.mubr.f32.mxu0 0.0
      %2003 = vmatmul.mubr.f32.gmra.mrb[0].mxu0 %v1808
      %v2004 = vpop.f32.mrb[0].mxu0
      %v2005 = vadd.f32 0.0, %v2004
      %v2006 = vpop.f32.mrb[0].mxu0
      %2007 = vmatprep.mubr.f32.mxu0 0.0
      %2008 = vmatmul.mubr.f32.gmra.mrb[0].mxu0 %v1810
      %v2009 = vpop.f32.mrb[0].mxu0
      %v2010 = vadd.f32 0.0, %v2009
      %v2011 = vpop.f32.mrb[0].mxu0
      %2012 = vmatprep.mubr.f32.mxu0 0.0
      %2013 = vmatmul.mubr.f32.gmra.mrb[0].mxu0 %v1812
      %v2014 = vpop.f32.mrb[0].mxu0
      %v2015 = vadd.f32 0.0, %v2014
      %v2016 = vpop.f32.mrb[0].mxu0
      %2017 = vmatprep.mubr.f32.mxu0 0.0
      %2018 = vmatmul.mubr.f32.gmra.mrb[0].mxu0 %v1814
      %v2019 = vpop.f32.mrb[0].mxu0
      %v2020 = vadd.f32 0.0, %v2019
      %v2021 = vpop.f32.mrb[0].mxu0
      %2022 = vmatprep.mubr.f32.mxu0 0.0
      %2023 = vmatmul.mubr.f32.gmra.mrb[0].mxu0 %v1816
      %v2024 = vpop.f32.mrb[0].mxu0
      %v2025 = vadd.f32 0.0, %v2024
      %v2026 = vpop.f32.mrb[0].mxu0
      %2027 = vmatprep.mubr.f32.mxu0 0.0
      %2028 = vmatmul.mubr.f32.gmra.mrb[0].mxu0 %v1818
      %v2029 = vpop.f32.mrb[0].mxu0
      %v2030 = vadd.f32 0.0, %v2029
      %v2031 = vpop.f32.mrb[0].mxu0
      %2032 = vmatprep.mubr.f32.mxu0 0.0
      %2033 = vmatmul.mubr.f32.gmra.mrb[0].mxu0 %v1820
      %v2034 = vpop.f32.mrb[0].mxu0
      %v2035 = vadd.f32 0.0, %v2034
      %v2036 = vpop.f32.mrb[0].mxu0
      %2037 = vmatprep.mubr.f32.mxu0 0.0
      %2038 = vmatmul.mubr.f32.gmra.mrb[0].mxu0 %v1822
      %v2039 = vpop.f32.mrb[0].mxu0
      %v2040 = vadd.f32 0.0, %v2039
      %v2041 = vpop.f32.mrb[0].mxu0
      %2042 = vmatprep.mubr.f32.mxu0 0.0
      %2043 = vmatmul.mubr.f32.gmra.mrb[0].mxu0 %v1824
      %v2044 = vpop.f32.mrb[0].mxu0
      %v2045 = vadd.f32 0.0, %v2044
      %v2046 = vpop.f32.mrb[0].mxu0
      %2047 = vmatprep.mubr.f32.mxu0 0.0
      %2048 = vmatmul.mubr.f32.gmra.mrb[0].mxu0 %v1826
      %v2049 = vpop.f32.mrb[0].mxu0
      %v2050 = vadd.f32 0.0, %v2049
      %v2051 = vpop.f32.mrb[0].mxu0
      %2052 = vdwg.mxu0
      %v2053 = vsel %vm306, %v1577, 0
      %v2055 = vsel %vm306, %v1578, 0
      %v2057 = vsel %vm306, %v1580, 0
      %v2059 = vsel %vm306, %v1581, 0
      %v2061 = vsel %vm306, %v1583, 0
      %v2063 = vsel %vm306, %v1584, 0
      %v2065 = vsel %vm306, %v1586, 0
      %v2067 = vsel %vm306, %v1587, 0
      %v2069 = vsel %vm306, %v1589, 0
      %v2071 = vsel %vm306, %v1590, 0
      %v2073 = vsel %vm306, %v1592, 0
      %v2075 = vsel %vm306, %v1593, 0
      %v2077 = vsel %vm306, %v1595, 0
      %v2079 = vsel %vm306, %v1596, 0
      %v2081 = vsel %vm306, %v1598, 0
      %v2083 = vsel %vm306, %v1599, 0
      %v2085 = vsel %vm306, %v1601, 0
      %v2087 = vsel %vm306, %v1602, 0
      %v2089 = vsel %vm306, %v1604, 0
      %v2091 = vsel %vm306, %v1605, 0
      %v2093 = vsel %vm306, %v1607, 0
      %v2095 = vsel %vm306, %v1608, 0
      %v2097 = vsel %vm306, %v1610, 0
      %v2099 = vsel %vm306, %v1611, 0
      %v2101 = vsel %vm306, %v1613, 0
      %v2103 = vsel %vm306, %v1614, 0
      %v2105 = vsel %vm306, %v1616, 0
      %v2107 = vsel %vm306, %v1617, 0
      %v2109 = vsel %vm306, %v1619, 0
      %v2111 = vsel %vm306, %v1620, 0
      %v2113 = vsel %vm306, %v1622, 0
      %v2115 = vsel %vm306, %v1623, 0
      %2117 = vmatprep.subr.mxu0 0.0
      %2118 = vmatpush1.msra.mxu0 %v1631
      %2119 = vmatprep.subr.mxu0 0.0
      %2120 = vmatpush1.msra.mxu0 %v1632
      %2121 = vmatprep.subr.mxu0 0.0
      %2122 = vmatpush1.msra.mxu0 0.0
      %2123 = vmatprep.subr.mxu0 0.0
      %2124 = vmatpush1.msra.mxu0 0.0
      %2125 = vmatprep.subr.mxu0 0.0
      %2126 = vmatpush1.msra.mxu0 0.0
      %2127 = vmatprep.subr.mxu0 0.0
      %2128 = vmatpush1.msra.mxu0 0.0
      %2129 = vmatprep.subr.mxu0 0.0
      %2130 = vmatpush1.msra.mxu0 0.0
      %2131 = vmatprep.subr.mxu0 0.0
      %2132 = vmatpush1.msra.mxu0 0.0
      %2133 = vmatprep.subr.mxu0 0.0
      %2134 = vmatpush1.msra.mxu0 0.0
      %2135 = vmatprep.subr.mxu0 0.0
      %2136 = vmatpush1.msra.mxu0 0.0
      %2137 = vmatprep.subr.mxu0 0.0
      %2138 = vmatpush1.msra.mxu0 0.0
      %2139 = vmatprep.subr.mxu0 0.0
      %2140 = vmatpush1.msra.mxu0 0.0
      %2141 = vmatprep.subr.mxu0 0.0
      %2142 = vmatpush1.msra.mxu0 0.0
      %2143 = vmatprep.subr.mxu0 0.0
      %2144 = vmatpush1.msra.mxu0 0.0
      %2145 = vmatprep.subr.mxu0 0.0
      %2146 = vmatpush1.msra.mxu0 0.0
      %2147 = vmatprep.subr.mxu0 0.0
      %2148 = vmatpush1.msra.mxu0 0.0
      %2149 = vmatprep.subr.mxu0 0.0
      %2150 = vmatpush1.msra.mxu0 0.0
      %2151 = vmatprep.subr.mxu0 0.0
      %2152 = vmatpush1.msra.mxu0 0.0
      %2153 = vmatprep.subr.mxu0 0.0
      %2154 = vmatpush1.msra.mxu0 0.0
      %2155 = vmatprep.subr.mxu0 0.0
      %2156 = vmatpush1.msra.mxu0 0.0
      %2157 = vmatprep.subr.mxu0 0.0
      %2158 = vmatpush1.msra.mxu0 0.0
      %2159 = vmatprep.subr.mxu0 0.0
      %2160 = vmatpush1.msra.mxu0 0.0
      %2161 = vmatprep.subr.mxu0 0.0
      %2162 = vmatpush1.msra.mxu0 0.0
      %2163 = vmatprep.subr.mxu0 0.0
      %2164 = vmatpush1.msra.mxu0 0.0
      %2165 = vmatprep.subr.mxu0 0.0
      %2166 = vmatpush1.msra.mxu0 0.0
      %2167 = vmatprep.subr.mxu0 0.0
      %2168 = vmatpush1.msra.mxu0 0.0
      %2169 = vmatprep.subr.mxu0 0.0
      %2170 = vmatpush1.msra.mxu0 0.0
      %2171 = vmatprep.subr.mxu0 0.0
      %2172 = vmatpush1.msra.mxu0 0.0
      %2173 = vmatprep.subr.mxu0 0.0
      %2174 = vmatpush1.msra.mxu0 0.0
      %2175 = vmatprep.subr.mxu0 0.0
      %2176 = vmatpush1.msra.mxu0 0.0
      %2177 = vmatprep.subr.mxu0 0.0
      %2178 = vmatpush1.msra.mxu0 0.0
      %2179 = vmatprep.subr.mxu0 0.0
      %2180 = vmatpush1.msra.mxu0 0.0
      %2181 = vmatprep.mubr.f32.mxu0 0.0
      %2182 = vmatmul.mubr.f32.gmra.mrb[0].mxu0 %v2053
      %v2183 = vpop.f32.mrb[0].mxu0
      %v2184 = vadd.f32 %v1895, %v2183
      %v2185 = vpop.f32.mrb[0].mxu0
      %2186 = vmatprep.mubr.f32.mxu0 0.0
      %2187 = vmatmul.mubr.f32.gmra.mrb[0].mxu0 %v2055
      %v2188 = vpop.f32.mrb[0].mxu0
      %v2189 = vadd.f32 %v1900, %v2188
      %v2190 = vpop.f32.mrb[0].mxu0
      %2191 = vmatprep.mubr.f32.mxu0 0.0
      %2192 = vmatmul.mubr.f32.gmra.mrb[0].mxu0 %v2057
      %v2193 = vpop.f32.mrb[0].mxu0
      %v2194 = vadd.f32 %v1905, %v2193
      %v2195 = vpop.f32.mrb[0].mxu0
      %2196 = vmatprep.mubr.f32.mxu0 0.0
      %2197 = vmatmul.mubr.f32.gmra.mrb[0].mxu0 %v2059
      %v2198 = vpop.f32.mrb[0].mxu0
      %v2199 = vadd.f32 %v1910, %v2198
      %v2200 = vpop.f32.mrb[0].mxu0
      %2201 = vmatprep.mubr.f32.mxu0 0.0
      %2202 = vmatmul.mubr.f32.gmra.mrb[0].mxu0 %v2061
      %v2203 = vpop.f32.mrb[0].mxu0
      %v2204 = vadd.f32 %v1915, %v2203
      %v2205 = vpop.f32.mrb[0].mxu0
      %2206 = vmatprep.mubr.f32.mxu0 0.0
      %2207 = vmatmul.mubr.f32.gmra.mrb[0].mxu0 %v2063
      %v2208 = vpop.f32.mrb[0].mxu0
      %v2209 = vadd.f32 %v1920, %v2208
      %v2210 = vpop.f32.mrb[0].mxu0
      %2211 = vmatprep.mubr.f32.mxu0 0.0
      %2212 = vmatmul.mubr.f32.gmra.mrb[0].mxu0 %v2065
      %v2213 = vpop.f32.mrb[0].mxu0
      %v2214 = vadd.f32 %v1925, %v2213
      %v2215 = vpop.f32.mrb[0].mxu0
      %2216 = vmatprep.mubr.f32.mxu0 0.0
      %2217 = vmatmul.mubr.f32.gmra.mrb[0].mxu0 %v2067
      %v2218 = vpop.f32.mrb[0].mxu0
      %v2219 = vadd.f32 %v1930, %v2218
      %v2220 = vpop.f32.mrb[0].mxu0
      %2221 = vmatprep.mubr.f32.mxu0 0.0
      %2222 = vmatmul.mubr.f32.gmra.mrb[0].mxu0 %v2069
      %v2223 = vpop.f32.mrb[0].mxu0
      %v2224 = vadd.f32 %v1935, %v2223
      %v2225 = vpop.f32.mrb[0].mxu0
      %2226 = vmatprep.mubr.f32.mxu0 0.0
      %2227 = vmatmul.mubr.f32.gmra.mrb[0].mxu0 %v2071
      %v2228 = vpop.f32.mrb[0].mxu0
      %v2229 = vadd.f32 %v1940, %v2228
      %v2230 = vpop.f32.mrb[0].mxu0
      %2231 = vmatprep.mubr.f32.mxu0 0.0
      %2232 = vmatmul.mubr.f32.gmra.mrb[0].mxu0 %v2073
      %v2233 = vpop.f32.mrb[0].mxu0
      %v2234 = vadd.f32 %v1945, %v2233
      %v2235 = vpop.f32.mrb[0].mxu0
      %2236 = vmatprep.mubr.f32.mxu0 0.0
      %2237 = vmatmul.mubr.f32.gmra.mrb[0].mxu0 %v2075
      %v2238 = vpop.f32.mrb[0].mxu0
      %v2239 = vadd.f32 %v1950, %v2238
      %v2240 = vpop.f32.mrb[0].mxu0
      %2241 = vmatprep.mubr.f32.mxu0 0.0
      %2242 = vmatmul.mubr.f32.gmra.mrb[0].mxu0 %v2077
      %v2243 = vpop.f32.mrb[0].mxu0
      %v2244 = vadd.f32 %v1955, %v2243
      %v2245 = vpop.f32.mrb[0].mxu0
      %2246 = vmatprep.mubr.f32.mxu0 0.0
      %2247 = vmatmul.mubr.f32.gmra.mrb[0].mxu0 %v2079
      %v2248 = vpop.f32.mrb[0].mxu0
      %v2249 = vadd.f32 %v1960, %v2248
      %v2250 = vpop.f32.mrb[0].mxu0
      %2251 = vmatprep.mubr.f32.mxu0 0.0
      %2252 = vmatmul.mubr.f32.gmra.mrb[0].mxu0 %v2081
      %v2253 = vpop.f32.mrb[0].mxu0
      %v2254 = vadd.f32 %v1965, %v2253
      %v2255 = vpop.f32.mrb[0].mxu0
      %2256 = vmatprep.mubr.f32.mxu0 0.0
      %2257 = vmatmul.mubr.f32.gmra.mrb[0].mxu0 %v2083
      %v2258 = vpop.f32.mrb[0].mxu0
      %v2259 = vadd.f32 %v1970, %v2258
      %v2260 = vpop.f32.mrb[0].mxu0
      %2261 = vmatprep.mubr.f32.mxu0 0.0
      %2262 = vmatmul.mubr.f32.gmra.mrb[0].mxu0 %v2085
      %v2263 = vpop.f32.mrb[0].mxu0
      %v2264 = vadd.f32 %v1975, %v2263
      %v2265 = vpop.f32.mrb[0].mxu0
      %2266 = vmatprep.mubr.f32.mxu0 0.0
      %2267 = vmatmul.mubr.f32.gmra.mrb[0].mxu0 %v2087
      %v2268 = vpop.f32.mrb[0].mxu0
      %v2269 = vadd.f32 %v1980, %v2268
      %v2270 = vpop.f32.mrb[0].mxu0
      %2271 = vmatprep.mubr.f32.mxu0 0.0
      %2272 = vmatmul.mubr.f32.gmra.mrb[0].mxu0 %v2089
      %v2273 = vpop.f32.mrb[0].mxu0
      %v2274 = vadd.f32 %v1985, %v2273
      %v2275 = vpop.f32.mrb[0].mxu0
      %2276 = vmatprep.mubr.f32.mxu0 0.0
      %2277 = vmatmul.mubr.f32.gmra.mrb[0].mxu0 %v2091
      %v2278 = vpop.f32.mrb[0].mxu0
      %v2279 = vadd.f32 %v1990, %v2278
      %v2280 = vpop.f32.mrb[0].mxu0
      %2281 = vmatprep.mubr.f32.mxu0 0.0
      %2282 = vmatmul.mubr.f32.gmra.mrb[0].mxu0 %v2093
      %v2283 = vpop.f32.mrb[0].mxu0
      %v2284 = vadd.f32 %v1995, %v2283
      %v2285 = vpop.f32.mrb[0].mxu0
      %2286 = vmatprep.mubr.f32.mxu0 0.0
      %2287 = vmatmul.mubr.f32.gmra.mrb[0].mxu0 %v2095
      %v2288 = vpop.f32.mrb[0].mxu0
      %v2289 = vadd.f32 %v2000, %v2288
      %v2290 = vpop.f32.mrb[0].mxu0
      %2291 = vmatprep.mubr.f32.mxu0 0.0
      %2292 = vmatmul.mubr.f32.gmra.mrb[0].mxu0 %v2097
      %v2293 = vpop.f32.mrb[0].mxu0
      %v2294 = vadd.f32 %v2005, %v2293
      %v2295 = vpop.f32.mrb[0].mxu0
      %2296 = vmatprep.mubr.f32.mxu0 0.0
      %2297 = vmatmul.mubr.f32.gmra.mrb[0].mxu0 %v2099
      %v2298 = vpop.f32.mrb[0].mxu0
      %v2299 = vadd.f32 %v2010, %v2298
      %v2300 = vpop.f32.mrb[0].mxu0
      %2301 = vmatprep.mubr.f32.mxu0 0.0
      %2302 = vmatmul.mubr.f32.gmra.mrb[0].mxu0 %v2101
      %v2303 = vpop.f32.mrb[0].mxu0
      %v2304 = vadd.f32 %v2015, %v2303
      %v2305 = vpop.f32.mrb[0].mxu0
      %2306 = vmatprep.mubr.f32.mxu0 0.0
      %2307 = vmatmul.mubr.f32.gmra.mrb[0].mxu0 %v2103
      %v2308 = vpop.f32.mrb[0].mxu0
      %v2309 = vadd.f32 %v2020, %v2308
      %v2310 = vpop.f32.mrb[0].mxu0
      %2311 = vmatprep.mubr.f32.mxu0 0.0
      %2312 = vmatmul.mubr.f32.gmra.mrb[0].mxu0 %v2105
      %v2313 = vpop.f32.mrb[0].mxu0
      %v2314 = vadd.f32 %v2025, %v2313
      %v2315 = vpop.f32.mrb[0].mxu0
      %2316 = vmatprep.mubr.f32.mxu0 0.0
      %2317 = vmatmul.mubr.f32.gmra.mrb[0].mxu0 %v2107
      %v2318 = vpop.f32.mrb[0].mxu0
      %v2319 = vadd.f32 %v2030, %v2318
      %v2320 = vpop.f32.mrb[0].mxu0
      %2321 = vmatprep.mubr.f32.mxu0 0.0
      %2322 = vmatmul.mubr.f32.gmra.mrb[0].mxu0 %v2109
      %v2323 = vpop.f32.mrb[0].mxu0
      %v2324 = vadd.f32 %v2035, %v2323
      %v2325 = vpop.f32.mrb[0].mxu0
      %2326 = vmatprep.mubr.f32.mxu0 0.0
      %2327 = vmatmul.mubr.f32.gmra.mrb[0].mxu0 %v2111
      %v2328 = vpop.f32.mrb[0].mxu0
      %v2329 = vadd.f32 %v2040, %v2328
      %v2330 = vpop.f32.mrb[0].mxu0
      %2331 = vmatprep.mubr.f32.mxu0 0.0
      %2332 = vmatmul.mubr.f32.gmra.mrb[0].mxu0 %v2113
      %v2333 = vpop.f32.mrb[0].mxu0
      %v2334 = vadd.f32 %v2045, %v2333
      %v2335 = vpop.f32.mrb[0].mxu0
      %2336 = vmatprep.mubr.f32.mxu0 0.0
      %2337 = vmatmul.mubr.f32.gmra.mrb[0].mxu0 %v2115
      %v2338 = vpop.f32.mrb[0].mxu0
      %v2339 = vadd.f32 %v2050, %v2338
      %v2340 = vpop.f32.mrb[0].mxu0
      %2341 = vdwg.mxu0
      %v2342 = vrot.slane %v1577, 2
      %v2343 = vrot.slane %v1578, 2
      %v2344 = vsel %vm1328, %v2342, %v2343
      %v2345 = vrot.slane %v1579, 2
      %v2346 = vsel %vm1328, %v2343, %v2345
      %v2347 = vrot.slane %v1580, 2
      %v2348 = vrot.slane %v1581, 2
      %v2349 = vsel %vm1328, %v2347, %v2348
      %v2350 = vrot.slane %v1582, 2
      %v2351 = vsel %vm1328, %v2348, %v2350
      %v2352 = vrot.slane %v1583, 2
      %v2353 = vrot.slane %v1584, 2
      %v2354 = vsel %vm1328, %v2352, %v2353
      %v2355 = vrot.slane %v1585, 2
      %v2356 = vsel %vm1328, %v2353, %v2355
      %v2357 = vrot.slane %v1586, 2
      %v2358 = vrot.slane %v1587, 2
      %v2359 = vsel %vm1328, %v2357, %v2358
      %v2360 = vrot.slane %v1588, 2
      %v2361 = vsel %vm1328, %v2358, %v2360
      %v2362 = vrot.slane %v1589, 2
      %v2363 = vrot.slane %v1590, 2
      %v2364 = vsel %vm1328, %v2362, %v2363
      %v2365 = vrot.slane %v1591, 2
      %v2366 = vsel %vm1328, %v2363, %v2365
      %v2367 = vrot.slane %v1592, 2
      %v2368 = vrot.slane %v1593, 2
      %v2369 = vsel %vm1328, %v2367, %v2368
      %v2370 = vrot.slane %v1594, 2
      %v2371 = vsel %vm1328, %v2368, %v2370
      %v2372 = vrot.slane %v1595, 2
      %v2373 = vrot.slane %v1596, 2
      %v2374 = vsel %vm1328, %v2372, %v2373
      %v2375 = vrot.slane %v1597, 2
      %v2376 = vsel %vm1328, %v2373, %v2375
      %v2377 = vrot.slane %v1598, 2
      %v2378 = vrot.slane %v1599, 2
      %v2379 = vsel %vm1328, %v2377, %v2378
      %v2380 = vrot.slane %v1600, 2
      %v2381 = vsel %vm1328, %v2378, %v2380
      %v2382 = vrot.slane %v1601, 2
      %v2383 = vrot.slane %v1602, 2
      %v2384 = vsel %vm1328, %v2382, %v2383
      %v2385 = vrot.slane %v1603, 2
      %v2386 = vsel %vm1328, %v2383, %v2385
      %v2387 = vrot.slane %v1604, 2
      %v2388 = vrot.slane %v1605, 2
      %v2389 = vsel %vm1328, %v2387, %v2388
      %v2390 = vrot.slane %v1606, 2
      %v2391 = vsel %vm1328, %v2388, %v2390
      %v2392 = vrot.slane %v1607, 2
      %v2393 = vrot.slane %v1608, 2
      %v2394 = vsel %vm1328, %v2392, %v2393
      %v2395 = vrot.slane %v1609, 2
      %v2396 = vsel %vm1328, %v2393, %v2395
      %v2397 = vrot.slane %v1610, 2
      %v2398 = vrot.slane %v1611, 2
      %v2399 = vsel %vm1328, %v2397, %v2398
      %v2400 = vrot.slane %v1612, 2
      %v2401 = vsel %vm1328, %v2398, %v2400
      %v2402 = vrot.slane %v1613, 2
      %v2403 = vrot.slane %v1614, 2
      %v2404 = vsel %vm1328, %v2402, %v2403
      %v2405 = vrot.slane %v1615, 2
      %v2406 = vsel %vm1328, %v2403, %v2405
      %v2407 = vrot.slane %v1616, 2
      %v2408 = vrot.slane %v1617, 2
      %v2409 = vsel %vm1328, %v2407, %v2408
      %v2410 = vrot.slane %v1618, 2
      %v2411 = vsel %vm1328, %v2408, %v2410
      %v2412 = vrot.slane %v1619, 2
      %v2413 = vrot.slane %v1620, 2
      %v2414 = vsel %vm1328, %v2412, %v2413
      %v2415 = vrot.slane %v1621, 2
      %v2416 = vsel %vm1328, %v2413, %v2415
      %v2417 = vrot.slane %v1622, 2
      %v2418 = vrot.slane %v1623, 2
      %v2419 = vsel %vm1328, %v2417, %v2418
      %v2420 = vrot.slane %v1624, 2
      %v2421 = vsel %vm1328, %v2418, %v2420
      %s2422 = scalar_lea.vmem %s3, 32
      %v2423 = vld [vmem:[%s2422] sm:$0xff]
      %v2424 = vld [vmem:[%s2422 + $0x8] sm:$0xff]
      %v2425 = vsel %vm306, %v2344, 0
      %v2427 = vsel %vm306, %v2346, 0
      %v2429 = vsel %vm306, %v2349, 0
      %v2431 = vsel %vm306, %v2351, 0
      %v2433 = vsel %vm306, %v2354, 0
      %v2435 = vsel %vm306, %v2356, 0
      %v2437 = vsel %vm306, %v2359, 0
      %v2439 = vsel %vm306, %v2361, 0
      %v2441 = vsel %vm306, %v2364, 0
      %v2443 = vsel %vm306, %v2366, 0
      %v2445 = vsel %vm306, %v2369, 0
      %v2447 = vsel %vm306, %v2371, 0
      %v2449 = vsel %vm306, %v2374, 0
      %v2451 = vsel %vm306, %v2376, 0
      %v2453 = vsel %vm306, %v2379, 0
      %v2455 = vsel %vm306, %v2381, 0
      %v2457 = vsel %vm306, %v2384, 0
      %v2459 = vsel %vm306, %v2386, 0
      %v2461 = vsel %vm306, %v2389, 0
      %v2463 = vsel %vm306, %v2391, 0
      %v2465 = vsel %vm306, %v2394, 0
      %v2467 = vsel %vm306, %v2396, 0
      %v2469 = vsel %vm306, %v2399, 0
      %v2471 = vsel %vm306, %v2401, 0
      %v2473 = vsel %vm306, %v2404, 0
      %v2475 = vsel %vm306, %v2406, 0
      %v2477 = vsel %vm306, %v2409, 0
      %v2479 = vsel %vm306, %v2411, 0
      %v2481 = vsel %vm306, %v2414, 0
      %v2483 = vsel %vm306, %v2416, 0
      %v2485 = vsel %vm306, %v2419, 0
      %v2487 = vsel %vm306, %v2421, 0
      %2489 = vmatprep.subr.mxu0 0.0
      %2490 = vmatpush1.msra.mxu0 %v2423
      %2491 = vmatprep.subr.mxu0 0.0
      %2492 = vmatpush1.msra.mxu0 %v2424
      %2493 = vmatprep.subr.mxu0 0.0
      %2494 = vmatpush1.msra.mxu0 0.0
      %2495 = vmatprep.subr.mxu0 0.0
      %2496 = vmatpush1.msra.mxu0 0.0
      %2497 = vmatprep.subr.mxu0 0.0
      %2498 = vmatpush1.msra.mxu0 0.0
      %2499 = vmatprep.subr.mxu0 0.0
      %2500 = vmatpush1.msra.mxu0 0.0
      %2501 = vmatprep.subr.mxu0 0.0
      %2502 = vmatpush1.msra.mxu0 0.0
      %2503 = vmatprep.subr.mxu0 0.0
      %2504 = vmatpush1.msra.mxu0 0.0
      %2505 = vmatprep.subr.mxu0 0.0
      %2506 = vmatpush1.msra.mxu0 0.0
      %2507 = vmatprep.subr.mxu0 0.0
      %2508 = vmatpush1.msra.mxu0 0.0
      %2509 = vmatprep.subr.mxu0 0.0
      %2510 = vmatpush1.msra.mxu0 0.0
      %2511 = vmatprep.subr.mxu0 0.0
      %2512 = vmatpush1.msra.mxu0 0.0
      %2513 = vmatprep.subr.mxu0 0.0
      %2514 = vmatpush1.msra.mxu0 0.0
      %2515 = vmatprep.subr.mxu0 0.0
      %2516 = vmatpush1.msra.mxu0 0.0
      %2517 = vmatprep.subr.mxu0 0.0
      %2518 = vmatpush1.msra.mxu0 0.0
      %2519 = vmatprep.subr.mxu0 0.0
      %2520 = vmatpush1.msra.mxu0 0.0
      %2521 = vmatprep.subr.mxu0 0.0
      %2522 = vmatpush1.msra.mxu0 0.0
      %2523 = vmatprep.subr.mxu0 0.0
      %2524 = vmatpush1.msra.mxu0 0.0
      %2525 = vmatprep.subr.mxu0 0.0
      %2526 = vmatpush1.msra.mxu0 0.0
      %2527 = vmatprep.subr.mxu0 0.0
      %2528 = vmatpush1.msra.mxu0 0.0
      %2529 = vmatprep.subr.mxu0 0.0
      %2530 = vmatpush1.msra.mxu0 0.0
      %2531 = vmatprep.subr.mxu0 0.0
      %2532 = vmatpush1.msra.mxu0 0.0
      %2533 = vmatprep.subr.mxu0 0.0
      %2534 = vmatpush1.msra.mxu0 0.0
      %2535 = vmatprep.subr.mxu0 0.0
      %2536 = vmatpush1.msra.mxu0 0.0
      %2537 = vmatprep.subr.mxu0 0.0
      %2538 = vmatpush1.msra.mxu0 0.0
      %2539 = vmatprep.subr.mxu0 0.0
      %2540 = vmatpush1.msra.mxu0 0.0
      %2541 = vmatprep.subr.mxu0 0.0
      %2542 = vmatpush1.msra.mxu0 0.0
      %2543 = vmatprep.subr.mxu0 0.0
      %2544 = vmatpush1.msra.mxu0 0.0
      %2545 = vmatprep.subr.mxu0 0.0
      %2546 = vmatpush1.msra.mxu0 0.0
      %2547 = vmatprep.subr.mxu0 0.0
      %2548 = vmatpush1.msra.mxu0 0.0
      %2549 = vmatprep.subr.mxu0 0.0
      %2550 = vmatpush1.msra.mxu0 0.0
      %2551 = vmatprep.subr.mxu0 0.0
      %2552 = vmatpush1.msra.mxu0 0.0
      %2553 = vmatprep.mubr.f32.mxu0 0.0
      %2554 = vmatmul.mubr.f32.gmra.mrb[0].mxu0 %v2425
      %v2555 = vpop.f32.mrb[0].mxu0
      %v2556 = vadd.f32 0.0, %v2555
      %v2557 = vpop.f32.mrb[0].mxu0
      %2558 = vmatprep.mubr.f32.mxu0 0.0
      %2559 = vmatmul.mubr.f32.gmra.mrb[0].mxu0 %v2427
      %v2560 = vpop.f32.mrb[0].mxu0
      %v2561 = vadd.f32 0.0, %v2560
      %v2562 = vpop.f32.mrb[0].mxu0
      %2563 = vmatprep.mubr.f32.mxu0 0.0
      %2564 = vmatmul.mubr.f32.gmra.mrb[0].mxu0 %v2429
      %v2565 = vpop.f32.mrb[0].mxu0
      %v2566 = vadd.f32 0.0, %v2565
      %v2567 = vpop.f32.mrb[0].mxu0
      %2568 = vmatprep.mubr.f32.mxu0 0.0
      %2569 = vmatmul.mubr.f32.gmra.mrb[0].mxu0 %v2431
      %v2570 = vpop.f32.mrb[0].mxu0
      %v2571 = vadd.f32 0.0, %v2570
      %v2572 = vpop.f32.mrb[0].mxu0
      %2573 = vmatprep.mubr.f32.mxu0 0.0
      %2574 = vmatmul.mubr.f32.gmra.mrb[0].mxu0 %v2433
      %v2575 = vpop.f32.mrb[0].mxu0
      %v2576 = vadd.f32 0.0, %v2575
      %v2577 = vpop.f32.mrb[0].mxu0
      %2578 = vmatprep.mubr.f32.mxu0 0.0
      %2579 = vmatmul.mubr.f32.gmra.mrb[0].mxu0 %v2435
      %v2580 = vpop.f32.mrb[0].mxu0
      %v2581 = vadd.f32 0.0, %v2580
      %v2582 = vpop.f32.mrb[0].mxu0
      %2583 = vmatprep.mubr.f32.mxu0 0.0
      %2584 = vmatmul.mubr.f32.gmra.mrb[0].mxu0 %v2437
      %v2585 = vpop.f32.mrb[0].mxu0
      %v2586 = vadd.f32 0.0, %v2585
      %v2587 = vpop.f32.mrb[0].mxu0
      %2588 = vmatprep.mubr.f32.mxu0 0.0
      %2589 = vmatmul.mubr.f32.gmra.mrb[0].mxu0 %v2439
      %v2590 = vpop.f32.mrb[0].mxu0
      %v2591 = vadd.f32 0.0, %v2590
      %v2592 = vpop.f32.mrb[0].mxu0
      %2593 = vmatprep.mubr.f32.mxu0 0.0
      %2594 = vmatmul.mubr.f32.gmra.mrb[0].mxu0 %v2441
      %v2595 = vpop.f32.mrb[0].mxu0
      %v2596 = vadd.f32 0.0, %v2595
      %v2597 = vpop.f32.mrb[0].mxu0
      %2598 = vmatprep.mubr.f32.mxu0 0.0
      %2599 = vmatmul.mubr.f32.gmra.mrb[0].mxu0 %v2443
      %v2600 = vpop.f32.mrb[0].mxu0
      %v2601 = vadd.f32 0.0, %v2600
      %v2602 = vpop.f32.mrb[0].mxu0
      %2603 = vmatprep.mubr.f32.mxu0 0.0
      %2604 = vmatmul.mubr.f32.gmra.mrb[0].mxu0 %v2445
      %v2605 = vpop.f32.mrb[0].mxu0
      %v2606 = vadd.f32 0.0, %v2605
      %v2607 = vpop.f32.mrb[0].mxu0
      %2608 = vmatprep.mubr.f32.mxu0 0.0
      %2609 = vmatmul.mubr.f32.gmra.mrb[0].mxu0 %v2447
      %v2610 = vpop.f32.mrb[0].mxu0
      %v2611 = vadd.f32 0.0, %v2610
      %v2612 = vpop.f32.mrb[0].mxu0
      %2613 = vmatprep.mubr.f32.mxu0 0.0
      %2614 = vmatmul.mubr.f32.gmra.mrb[0].mxu0 %v2449
      %v2615 = vpop.f32.mrb[0].mxu0
      %v2616 = vadd.f32 0.0, %v2615
      %v2617 = vpop.f32.mrb[0].mxu0
      %2618 = vmatprep.mubr.f32.mxu0 0.0
      %2619 = vmatmul.mubr.f32.gmra.mrb[0].mxu0 %v2451
      %v2620 = vpop.f32.mrb[0].mxu0
      %v2621 = vadd.f32 0.0, %v2620
      %v2622 = vpop.f32.mrb[0].mxu0
      %2623 = vmatprep.mubr.f32.mxu0 0.0
      %2624 = vmatmul.mubr.f32.gmra.mrb[0].mxu0 %v2453
      %v2625 = vpop.f32.mrb[0].mxu0
      %v2626 = vadd.f32 0.0, %v2625
      %v2627 = vpop.f32.mrb[0].mxu0
      %2628 = vmatprep.mubr.f32.mxu0 0.0
      %2629 = vmatmul.mubr.f32.gmra.mrb[0].mxu0 %v2455
      %v2630 = vpop.f32.mrb[0].mxu0
      %v2631 = vadd.f32 0.0, %v2630
      %v2632 = vpop.f32.mrb[0].mxu0
      %2633 = vmatprep.mubr.f32.mxu0 0.0
      %2634 = vmatmul.mubr.f32.gmra.mrb[0].mxu0 %v2457
      %v2635 = vpop.f32.mrb[0].mxu0
      %v2636 = vadd.f32 0.0, %v2635
      %v2637 = vpop.f32.mrb[0].mxu0
      %2638 = vmatprep.mubr.f32.mxu0 0.0
      %2639 = vmatmul.mubr.f32.gmra.mrb[0].mxu0 %v2459
      %v2640 = vpop.f32.mrb[0].mxu0
      %v2641 = vadd.f32 0.0, %v2640
      %v2642 = vpop.f32.mrb[0].mxu0
      %2643 = vmatprep.mubr.f32.mxu0 0.0
      %2644 = vmatmul.mubr.f32.gmra.mrb[0].mxu0 %v2461
      %v2645 = vpop.f32.mrb[0].mxu0
      %v2646 = vadd.f32 0.0, %v2645
      %v2647 = vpop.f32.mrb[0].mxu0
      %2648 = vmatprep.mubr.f32.mxu0 0.0
      %2649 = vmatmul.mubr.f32.gmra.mrb[0].mxu0 %v2463
      %v2650 = vpop.f32.mrb[0].mxu0
      %v2651 = vadd.f32 0.0, %v2650
      %v2652 = vpop.f32.mrb[0].mxu0
      %2653 = vmatprep.mubr.f32.mxu0 0.0
      %2654 = vmatmul.mubr.f32.gmra.mrb[0].mxu0 %v2465
      %v2655 = vpop.f32.mrb[0].mxu0
      %v2656 = vadd.f32 0.0, %v2655
      %v2657 = vpop.f32.mrb[0].mxu0
      %2658 = vmatprep.mubr.f32.mxu0 0.0
      %2659 = vmatmul.mubr.f32.gmra.mrb[0].mxu0 %v2467
      %v2660 = vpop.f32.mrb[0].mxu0
      %v2661 = vadd.f32 0.0, %v2660
      %v2662 = vpop.f32.mrb[0].mxu0
      %2663 = vmatprep.mubr.f32.mxu0 0.0
      %2664 = vmatmul.mubr.f32.gmra.mrb[0].mxu0 %v2469
      %v2665 = vpop.f32.mrb[0].mxu0
      %v2666 = vadd.f32 0.0, %v2665
      %v2667 = vpop.f32.mrb[0].mxu0
      %2668 = vmatprep.mubr.f32.mxu0 0.0
      %2669 = vmatmul.mubr.f32.gmra.mrb[0].mxu0 %v2471
      %v2670 = vpop.f32.mrb[0].mxu0
      %v2671 = vadd.f32 0.0, %v2670
      %v2672 = vpop.f32.mrb[0].mxu0
      %2673 = vmatprep.mubr.f32.mxu0 0.0
      %2674 = vmatmul.mubr.f32.gmra.mrb[0].mxu0 %v2473
      %v2675 = vpop.f32.mrb[0].mxu0
      %v2676 = vadd.f32 0.0, %v2675
      %v2677 = vpop.f32.mrb[0].mxu0
      %2678 = vmatprep.mubr.f32.mxu0 0.0
      %2679 = vmatmul.mubr.f32.gmra.mrb[0].mxu0 %v2475
      %v2680 = vpop.f32.mrb[0].mxu0
      %v2681 = vadd.f32 0.0, %v2680
      %v2682 = vpop.f32.mrb[0].mxu0
      %2683 = vmatprep.mubr.f32.mxu0 0.0
      %2684 = vmatmul.mubr.f32.gmra.mrb[0].mxu0 %v2477
      %v2685 = vpop.f32.mrb[0].mxu0
      %v2686 = vadd.f32 0.0, %v2685
      %v2687 = vpop.f32.mrb[0].mxu0
      %2688 = vmatprep.mubr.f32.mxu0 0.0
      %2689 = vmatmul.mubr.f32.gmra.mrb[0].mxu0 %v2479
      %v2690 = vpop.f32.mrb[0].mxu0
      %v2691 = vadd.f32 0.0, %v2690
      %v2692 = vpop.f32.mrb[0].mxu0
      %2693 = vmatprep.mubr.f32.mxu0 0.0
      %2694 = vmatmul.mubr.f32.gmra.mrb[0].mxu0 %v2481
      %v2695 = vpop.f32.mrb[0].mxu0
      %v2696 = vadd.f32 0.0, %v2695
      %v2697 = vpop.f32.mrb[0].mxu0
      %2698 = vmatprep.mubr.f32.mxu0 0.0
      %2699 = vmatmul.mubr.f32.gmra.mrb[0].mxu0 %v2483
      %v2700 = vpop.f32.mrb[0].mxu0
      %v2701 = vadd.f32 0.0, %v2700
      %v2702 = vpop.f32.mrb[0].mxu0
      %2703 = vmatprep.mubr.f32.mxu0 0.0
      %2704 = vmatmul.mubr.f32.gmra.mrb[0].mxu0 %v2485
      %v2705 = vpop.f32.mrb[0].mxu0
      %v2706 = vadd.f32 0.0, %v2705
      %v2707 = vpop.f32.mrb[0].mxu0
      %2708 = vmatprep.mubr.f32.mxu0 0.0
      %2709 = vmatmul.mubr.f32.gmra.mrb[0].mxu0 %v2487
      %v2710 = vpop.f32.mrb[0].mxu0
      %v2711 = vadd.f32 0.0, %v2710
      %v2712 = vpop.f32.mrb[0].mxu0
      %2713 = vdwg.mxu0
      %v2714 = vadd.f32 %v2184, %v2556
      %v2715 = vadd.f32 %v2189, %v2561
      %v2716 = vadd.f32 %v2194, %v2566
      %v2717 = vadd.f32 %v2199, %v2571
      %v2718 = vadd.f32 %v2204, %v2576
      %v2719 = vadd.f32 %v2209, %v2581
      %v2720 = vadd.f32 %v2214, %v2586
      %v2721 = vadd.f32 %v2219, %v2591
      %v2722 = vadd.f32 %v2224, %v2596
      %v2723 = vadd.f32 %v2229, %v2601
      %v2724 = vadd.f32 %v2234, %v2606
      %v2725 = vadd.f32 %v2239, %v2611
      %v2726 = vadd.f32 %v2244, %v2616
      %v2727 = vadd.f32 %v2249, %v2621
      %v2728 = vadd.f32 %v2254, %v2626
      %v2729 = vadd.f32 %v2259, %v2631
      %v2730 = vadd.f32 %v2264, %v2636
      %v2731 = vadd.f32 %v2269, %v2641
      %v2732 = vadd.f32 %v2274, %v2646
      %v2733 = vadd.f32 %v2279, %v2651
      %v2734 = vadd.f32 %v2284, %v2656
      %v2735 = vadd.f32 %v2289, %v2661
      %v2736 = vadd.f32 %v2294, %v2666
      %v2737 = vadd.f32 %v2299, %v2671
      %v2738 = vadd.f32 %v2304, %v2676
      %v2739 = vadd.f32 %v2309, %v2681
      %v2740 = vadd.f32 %v2314, %v2686
      %v2741 = vadd.f32 %v2319, %v2691
      %v2742 = vadd.f32 %v2324, %v2696
      %v2743 = vadd.f32 %v2329, %v2701
      %v2744 = vadd.f32 %v2334, %v2706
      %v2745 = vadd.f32 %v2339, %v2711
      %s2746 = scalar_lea.vmem %s3, 48
      %v2747 = vld [vmem:[%s2746] sm:$0xff]
      %v2748 = vld [vmem:[%s2746 + $0x8] sm:$0xff]
      %v2750 = vsel %vm306, %v1625, 0
      %v2753 = vsel %vm306, %v1626, 0
      %2755 = vmatprep.subr.mxu0 0.0
      %2756 = vmatpush1.msra.mxu0 %v2747
      %2757 = vmatprep.subr.mxu0 0.0
      %2758 = vmatpush1.msra.mxu0 %v2748
      %2759 = vmatprep.subr.mxu0 0.0
      %2760 = vmatpush1.msra.mxu0 0.0
      %2761 = vmatprep.subr.mxu0 0.0
      %2762 = vmatpush1.msra.mxu0 0.0
      %2763 = vmatprep.subr.mxu0 0.0
      %2764 = vmatpush1.msra.mxu0 0.0
      %2765 = vmatprep.subr.mxu0 0.0
      %2766 = vmatpush1.msra.mxu0 0.0
      %2767 = vmatprep.subr.mxu0 0.0
      %2768 = vmatpush1.msra.mxu0 0.0
      %2769 = vmatprep.subr.mxu0 0.0
      %2770 = vmatpush1.msra.mxu0 0.0
      %2771 = vmatprep.subr.mxu0 0.0
      %2772 = vmatpush1.msra.mxu0 0.0
      %2773 = vmatprep.subr.mxu0 0.0
      %2774 = vmatpush1.msra.mxu0 0.0
      %2775 = vmatprep.subr.mxu0 0.0
      %2776 = vmatpush1.msra.mxu0 0.0
      %2777 = vmatprep.subr.mxu0 0.0
      %2778 = vmatpush1.msra.mxu0 0.0
      %2779 = vmatprep.subr.mxu0 0.0
      %2780 = vmatpush1.msra.mxu0 0.0
      %2781 = vmatprep.subr.mxu0 0.0
      %2782 = vmatpush1.msra.mxu0 0.0
      %2783 = vmatprep.subr.mxu0 0.0
      %2784 = vmatpush1.msra.mxu0 0.0
      %2785 = vmatprep.subr.mxu0 0.0
      %2786 = vmatpush1.msra.mxu0 0.0
      %2787 = vmatprep.subr.mxu0 0.0
      %2788 = vmatpush1.msra.mxu0 0.0
      %2789 = vmatprep.subr.mxu0 0.0
      %2790 = vmatpush1.msra.mxu0 0.0
      %2791 = vmatprep.subr.mxu0 0.0
      %2792 = vmatpush1.msra.mxu0 0.0
      %2793 = vmatprep.subr.mxu0 0.0
      %2794 = vmatpush1.msra.mxu0 0.0
      %2795 = vmatprep.subr.mxu0 0.0
      %2796 = vmatpush1.msra.mxu0 0.0
      %2797 = vmatprep.subr.mxu0 0.0
      %2798 = vmatpush1.msra.mxu0 0.0
      %2799 = vmatprep.subr.mxu0 0.0
      %2800 = vmatpush1.msra.mxu0 0.0
      %2801 = vmatprep.subr.mxu0 0.0
      %2802 = vmatpush1.msra.mxu0 0.0
      %2803 = vmatprep.subr.mxu0 0.0
      %2804 = vmatpush1.msra.mxu0 0.0
      %2805 = vmatprep.subr.mxu0 0.0
      %2806 = vmatpush1.msra.mxu0 0.0
      %2807 = vmatprep.subr.mxu0 0.0
      %2808 = vmatpush1.msra.mxu0 0.0
      %2809 = vmatprep.subr.mxu0 0.0
      %2810 = vmatpush1.msra.mxu0 0.0
      %2811 = vmatprep.subr.mxu0 0.0
      %2812 = vmatpush1.msra.mxu0 0.0
      %2813 = vmatprep.subr.mxu0 0.0
      %2814 = vmatpush1.msra.mxu0 0.0
      %2815 = vmatprep.subr.mxu0 0.0
      %2816 = vmatpush1.msra.mxu0 0.0
      %2817 = vmatprep.subr.mxu0 0.0
      %2818 = vmatpush1.msra.mxu0 0.0
      %2819 = vmatprep.mubr.f32.mxu0 0.0
      %2820 = vmatmul.mubr.f32.gmra.mrb[0].mxu0 %v2057
      %v2821 = vpop.f32.mrb[0].mxu0
      %v2822 = vadd.f32 0.0, %v2821
      %v2823 = vpop.f32.mrb[0].mxu0
      %2824 = vmatprep.mubr.f32.mxu0 0.0
      %2825 = vmatmul.mubr.f32.gmra.mrb[0].mxu0 %v2059
      %v2826 = vpop.f32.mrb[0].mxu0
      %v2827 = vadd.f32 0.0, %v2826
      %v2828 = vpop.f32.mrb[0].mxu0
      %2829 = vmatprep.mubr.f32.mxu0 0.0
      %2830 = vmatmul.mubr.f32.gmra.mrb[0].mxu0 %v2061
      %v2831 = vpop.f32.mrb[0].mxu0
      %v2832 = vadd.f32 0.0, %v2831
      %v2833 = vpop.f32.mrb[0].mxu0
      %2834 = vmatprep.mubr.f32.mxu0 0.0
      %2835 = vmatmul.mubr.f32.gmra.mrb[0].mxu0 %v2063
      %v2836 = vpop.f32.mrb[0].mxu0
      %v2837 = vadd.f32 0.0, %v2836
      %v2838 = vpop.f32.mrb[0].mxu0
      %2839 = vmatprep.mubr.f32.mxu0 0.0
      %2840 = vmatmul.mubr.f32.gmra.mrb[0].mxu0 %v2065
      %v2841 = vpop.f32.mrb[0].mxu0
      %v2842 = vadd.f32 0.0, %v2841
      %v2843 = vpop.f32.mrb[0].mxu0
      %2844 = vmatprep.mubr.f32.mxu0 0.0
      %2845 = vmatmul.mubr.f32.gmra.mrb[0].mxu0 %v2067
      %v2846 = vpop.f32.mrb[0].mxu0
      %v2847 = vadd.f32 0.0, %v2846
      %v2848 = vpop.f32.mrb[0].mxu0
      %2849 = vmatprep.mubr.f32.mxu0 0.0
      %2850 = vmatmul.mubr.f32.gmra.mrb[0].mxu0 %v2069
      %v2851 = vpop.f32.mrb[0].mxu0
      %v2852 = vadd.f32 0.0, %v2851
      %v2853 = vpop.f32.mrb[0].mxu0
      %2854 = vmatprep.mubr.f32.mxu0 0.0
      %2855 = vmatmul.mubr.f32.gmra.mrb[0].mxu0 %v2071
      %v2856 = vpop.f32.mrb[0].mxu0
      %v2857 = vadd.f32 0.0, %v2856
      %v2858 = vpop.f32.mrb[0].mxu0
      %2859 = vmatprep.mubr.f32.mxu0 0.0
      %2860 = vmatmul.mubr.f32.gmra.mrb[0].mxu0 %v2073
      %v2861 = vpop.f32.mrb[0].mxu0
      %v2862 = vadd.f32 0.0, %v2861
      %v2863 = vpop.f32.mrb[0].mxu0
      %2864 = vmatprep.mubr.f32.mxu0 0.0
      %2865 = vmatmul.mubr.f32.gmra.mrb[0].mxu0 %v2075
      %v2866 = vpop.f32.mrb[0].mxu0
      %v2867 = vadd.f32 0.0, %v2866
      %v2868 = vpop.f32.mrb[0].mxu0
      %2869 = vmatprep.mubr.f32.mxu0 0.0
      %2870 = vmatmul.mubr.f32.gmra.mrb[0].mxu0 %v2077
      %v2871 = vpop.f32.mrb[0].mxu0
      %v2872 = vadd.f32 0.0, %v2871
      %v2873 = vpop.f32.mrb[0].mxu0
      %2874 = vmatprep.mubr.f32.mxu0 0.0
      %2875 = vmatmul.mubr.f32.gmra.mrb[0].mxu0 %v2079
      %v2876 = vpop.f32.mrb[0].mxu0
      %v2877 = vadd.f32 0.0, %v2876
      %v2878 = vpop.f32.mrb[0].mxu0
      %2879 = vmatprep.mubr.f32.mxu0 0.0
      %2880 = vmatmul.mubr.f32.gmra.mrb[0].mxu0 %v2081
      %v2881 = vpop.f32.mrb[0].mxu0
      %v2882 = vadd.f32 0.0, %v2881
      %v2883 = vpop.f32.mrb[0].mxu0
      %2884 = vmatprep.mubr.f32.mxu0 0.0
      %2885 = vmatmul.mubr.f32.gmra.mrb[0].mxu0 %v2083
      %v2886 = vpop.f32.mrb[0].mxu0
      %v2887 = vadd.f32 0.0, %v2886
      %v2888 = vpop.f32.mrb[0].mxu0
      %2889 = vmatprep.mubr.f32.mxu0 0.0
      %2890 = vmatmul.mubr.f32.gmra.mrb[0].mxu0 %v2085
      %v2891 = vpop.f32.mrb[0].mxu0
      %v2892 = vadd.f32 0.0, %v2891
      %v2893 = vpop.f32.mrb[0].mxu0
      %2894 = vmatprep.mubr.f32.mxu0 0.0
      %2895 = vmatmul.mubr.f32.gmra.mrb[0].mxu0 %v2087
      %v2896 = vpop.f32.mrb[0].mxu0
      %v2897 = vadd.f32 0.0, %v2896
      %v2898 = vpop.f32.mrb[0].mxu0
      %2899 = vmatprep.mubr.f32.mxu0 0.0
      %2900 = vmatmul.mubr.f32.gmra.mrb[0].mxu0 %v2089
      %v2901 = vpop.f32.mrb[0].mxu0
      %v2902 = vadd.f32 0.0, %v2901
      %v2903 = vpop.f32.mrb[0].mxu0
      %2904 = vmatprep.mubr.f32.mxu0 0.0
      %2905 = vmatmul.mubr.f32.gmra.mrb[0].mxu0 %v2091
      %v2906 = vpop.f32.mrb[0].mxu0
      %v2907 = vadd.f32 0.0, %v2906
      %v2908 = vpop.f32.mrb[0].mxu0
      %2909 = vmatprep.mubr.f32.mxu0 0.0
      %2910 = vmatmul.mubr.f32.gmra.mrb[0].mxu0 %v2093
      %v2911 = vpop.f32.mrb[0].mxu0
      %v2912 = vadd.f32 0.0, %v2911
      %v2913 = vpop.f32.mrb[0].mxu0
      %2914 = vmatprep.mubr.f32.mxu0 0.0
      %2915 = vmatmul.mubr.f32.gmra.mrb[0].mxu0 %v2095
      %v2916 = vpop.f32.mrb[0].mxu0
      %v2917 = vadd.f32 0.0, %v2916
      %v2918 = vpop.f32.mrb[0].mxu0
      %2919 = vmatprep.mubr.f32.mxu0 0.0
      %2920 = vmatmul.mubr.f32.gmra.mrb[0].mxu0 %v2097
      %v2921 = vpop.f32.mrb[0].mxu0
      %v2922 = vadd.f32 0.0, %v2921
      %v2923 = vpop.f32.mrb[0].mxu0
      %2924 = vmatprep.mubr.f32.mxu0 0.0
      %2925 = vmatmul.mubr.f32.gmra.mrb[0].mxu0 %v2099
      %v2926 = vpop.f32.mrb[0].mxu0
      %v2927 = vadd.f32 0.0, %v2926
      %v2928 = vpop.f32.mrb[0].mxu0
      %2929 = vmatprep.mubr.f32.mxu0 0.0
      %2930 = vmatmul.mubr.f32.gmra.mrb[0].mxu0 %v2101
      %v2931 = vpop.f32.mrb[0].mxu0
      %v2932 = vadd.f32 0.0, %v2931
      %v2933 = vpop.f32.mrb[0].mxu0
      %2934 = vmatprep.mubr.f32.mxu0 0.0
      %2935 = vmatmul.mubr.f32.gmra.mrb[0].mxu0 %v2103
      %v2936 = vpop.f32.mrb[0].mxu0
      %v2937 = vadd.f32 0.0, %v2936
      %v2938 = vpop.f32.mrb[0].mxu0
      %2939 = vmatprep.mubr.f32.mxu0 0.0
      %2940 = vmatmul.mubr.f32.gmra.mrb[0].mxu0 %v2105
      %v2941 = vpop.f32.mrb[0].mxu0
      %v2942 = vadd.f32 0.0, %v2941
      %v2943 = vpop.f32.mrb[0].mxu0
      %2944 = vmatprep.mubr.f32.mxu0 0.0
      %2945 = vmatmul.mubr.f32.gmra.mrb[0].mxu0 %v2107
      %v2946 = vpop.f32.mrb[0].mxu0
      %v2947 = vadd.f32 0.0, %v2946
      %v2948 = vpop.f32.mrb[0].mxu0
      %2949 = vmatprep.mubr.f32.mxu0 0.0
      %2950 = vmatmul.mubr.f32.gmra.mrb[0].mxu0 %v2109
      %v2951 = vpop.f32.mrb[0].mxu0
      %v2952 = vadd.f32 0.0, %v2951
      %v2953 = vpop.f32.mrb[0].mxu0
      %2954 = vmatprep.mubr.f32.mxu0 0.0
      %2955 = vmatmul.mubr.f32.gmra.mrb[0].mxu0 %v2111
      %v2956 = vpop.f32.mrb[0].mxu0
      %v2957 = vadd.f32 0.0, %v2956
      %v2958 = vpop.f32.mrb[0].mxu0
      %2959 = vmatprep.mubr.f32.mxu0 0.0
      %2960 = vmatmul.mubr.f32.gmra.mrb[0].mxu0 %v2113
      %v2961 = vpop.f32.mrb[0].mxu0
      %v2962 = vadd.f32 0.0, %v2961
      %v2963 = vpop.f32.mrb[0].mxu0
      %2964 = vmatprep.mubr.f32.mxu0 0.0
      %2965 = vmatmul.mubr.f32.gmra.mrb[0].mxu0 %v2115
      %v2966 = vpop.f32.mrb[0].mxu0
      %v2967 = vadd.f32 0.0, %v2966
      %v2968 = vpop.f32.mrb[0].mxu0
      %2969 = vmatprep.mubr.f32.mxu0 0.0
      %2970 = vmatmul.mubr.f32.gmra.mrb[0].mxu0 %v2750
      %v2971 = vpop.f32.mrb[0].mxu0
      %v2972 = vadd.f32 0.0, %v2971
      %v2973 = vpop.f32.mrb[0].mxu0
      %2974 = vmatprep.mubr.f32.mxu0 0.0
      %2975 = vmatmul.mubr.f32.gmra.mrb[0].mxu0 %v2753
      %v2976 = vpop.f32.mrb[0].mxu0
      %v2977 = vadd.f32 0.0, %v2976
      %v2978 = vpop.f32.mrb[0].mxu0
      %2979 = vdwg.mxu0
      %v2980 = vadd.f32 %v2714, %v2822
      %v2981 = vadd.f32 %v2715, %v2827
      %v2982 = vadd.f32 %v2716, %v2832
      %v2983 = vadd.f32 %v2717, %v2837
      %v2984 = vadd.f32 %v2718, %v2842
      %v2985 = vadd.f32 %v2719, %v2847
      %v2986 = vadd.f32 %v2720, %v2852
      %v2987 = vadd.f32 %v2721, %v2857
      %v2988 = vadd.f32 %v2722, %v2862
      %v2989 = vadd.f32 %v2723, %v2867
      %v2990 = vadd.f32 %v2724, %v2872
      %v2991 = vadd.f32 %v2725, %v2877
      %v2992 = vadd.f32 %v2726, %v2882
      %v2993 = vadd.f32 %v2727, %v2887
      %v2994 = vadd.f32 %v2728, %v2892
      %v2995 = vadd.f32 %v2729, %v2897
      %v2996 = vadd.f32 %v2730, %v2902
      %v2997 = vadd.f32 %v2731, %v2907
      %v2998 = vadd.f32 %v2732, %v2912
      %v2999 = vadd.f32 %v2733, %v2917
      %v3000 = vadd.f32 %v2734, %v2922
      %v3001 = vadd.f32 %v2735, %v2927
      %v3002 = vadd.f32 %v2736, %v2932
      %v3003 = vadd.f32 %v2737, %v2937
      %v3004 = vadd.f32 %v2738, %v2942
      %v3005 = vadd.f32 %v2739, %v2947
      %v3006 = vadd.f32 %v2740, %v2952
      %v3007 = vadd.f32 %v2741, %v2957
      %v3008 = vadd.f32 %v2742, %v2962
      %v3009 = vadd.f32 %v2743, %v2967
      %v3010 = vadd.f32 %v2744, %v2972
      %v3011 = vadd.f32 %v2745, %v2977
      %v3013 = vrot.slane %v1625, 1
      %v3014 = vrot.slane %v1626, 1
      %v3015 = vsel %vm1183, %v3013, %v3014
      %v3016 = vrot.slane %v1627, 1
      %v3017 = vsel %vm1183, %v3014, %v3016
      %s3018 = scalar_lea.vmem %s3, 64
      %v3019 = vld [vmem:[%s3018] sm:$0xff]
      %v3020 = vld [vmem:[%s3018 + $0x8] sm:$0xff]
      %v3021 = vsel %vm306, %v3015, 0
      %v3023 = vsel %vm306, %v3017, 0
      %3025 = vmatprep.subr.mxu0 0.0
      %3026 = vmatpush1.msra.mxu0 %v3019
      %3027 = vmatprep.subr.mxu0 0.0
      %3028 = vmatpush1.msra.mxu0 %v3020
      %3029 = vmatprep.subr.mxu0 0.0
      %3030 = vmatpush1.msra.mxu0 0.0
      %3031 = vmatprep.subr.mxu0 0.0
      %3032 = vmatpush1.msra.mxu0 0.0
      %3033 = vmatprep.subr.mxu0 0.0
      %3034 = vmatpush1.msra.mxu0 0.0
      %3035 = vmatprep.subr.mxu0 0.0
      %3036 = vmatpush1.msra.mxu0 0.0
      %3037 = vmatprep.subr.mxu0 0.0
      %3038 = vmatpush1.msra.mxu0 0.0
      %3039 = vmatprep.subr.mxu0 0.0
      %3040 = vmatpush1.msra.mxu0 0.0
      %3041 = vmatprep.subr.mxu0 0.0
      %3042 = vmatpush1.msra.mxu0 0.0
      %3043 = vmatprep.subr.mxu0 0.0
      %3044 = vmatpush1.msra.mxu0 0.0
      %3045 = vmatprep.subr.mxu0 0.0
      %3046 = vmatpush1.msra.mxu0 0.0
      %3047 = vmatprep.subr.mxu0 0.0
      %3048 = vmatpush1.msra.mxu0 0.0
      %3049 = vmatprep.subr.mxu0 0.0
      %3050 = vmatpush1.msra.mxu0 0.0
      %3051 = vmatprep.subr.mxu0 0.0
      %3052 = vmatpush1.msra.mxu0 0.0
      %3053 = vmatprep.subr.mxu0 0.0
      %3054 = vmatpush1.msra.mxu0 0.0
      %3055 = vmatprep.subr.mxu0 0.0
      %3056 = vmatpush1.msra.mxu0 0.0
      %3057 = vmatprep.subr.mxu0 0.0
      %3058 = vmatpush1.msra.mxu0 0.0
      %3059 = vmatprep.subr.mxu0 0.0
      %3060 = vmatpush1.msra.mxu0 0.0
      %3061 = vmatprep.subr.mxu0 0.0
      %3062 = vmatpush1.msra.mxu0 0.0
      %3063 = vmatprep.subr.mxu0 0.0
      %3064 = vmatpush1.msra.mxu0 0.0
      %3065 = vmatprep.subr.mxu0 0.0
      %3066 = vmatpush1.msra.mxu0 0.0
      %3067 = vmatprep.subr.mxu0 0.0
      %3068 = vmatpush1.msra.mxu0 0.0
      %3069 = vmatprep.subr.mxu0 0.0
      %3070 = vmatpush1.msra.mxu0 0.0
      %3071 = vmatprep.subr.mxu0 0.0
      %3072 = vmatpush1.msra.mxu0 0.0
      %3073 = vmatprep.subr.mxu0 0.0
      %3074 = vmatpush1.msra.mxu0 0.0
      %3075 = vmatprep.subr.mxu0 0.0
      %3076 = vmatpush1.msra.mxu0 0.0
      %3077 = vmatprep.subr.mxu0 0.0
      %3078 = vmatpush1.msra.mxu0 0.0
      %3079 = vmatprep.subr.mxu0 0.0
      %3080 = vmatpush1.msra.mxu0 0.0
      %3081 = vmatprep.subr.mxu0 0.0
      %3082 = vmatpush1.msra.mxu0 0.0
      %3083 = vmatprep.subr.mxu0 0.0
      %3084 = vmatpush1.msra.mxu0 0.0
      %3085 = vmatprep.subr.mxu0 0.0
      %3086 = vmatpush1.msra.mxu0 0.0
      %3087 = vmatprep.subr.mxu0 0.0
      %3088 = vmatpush1.msra.mxu0 0.0
      %3089 = vmatprep.mubr.f32.mxu0 0.0
      %3090 = vmatmul.mubr.f32.gmra.mrb[0].mxu0 %v1768
      %v3091 = vpop.f32.mrb[0].mxu0
      %v3092 = vadd.f32 0.0, %v3091
      %v3093 = vpop.f32.mrb[0].mxu0
      %3094 = vmatprep.mubr.f32.mxu0 0.0
      %3095 = vmatmul.mubr.f32.gmra.mrb[0].mxu0 %v1770
      %v3096 = vpop.f32.mrb[0].mxu0
      %v3097 = vadd.f32 0.0, %v3096
      %v3098 = vpop.f32.mrb[0].mxu0
      %3099 = vmatprep.mubr.f32.mxu0 0.0
      %3100 = vmatmul.mubr.f32.gmra.mrb[0].mxu0 %v1772
      %v3101 = vpop.f32.mrb[0].mxu0
      %v3102 = vadd.f32 0.0, %v3101
      %v3103 = vpop.f32.mrb[0].mxu0
      %3104 = vmatprep.mubr.f32.mxu0 0.0
      %3105 = vmatmul.mubr.f32.gmra.mrb[0].mxu0 %v1774
      %v3106 = vpop.f32.mrb[0].mxu0
      %v3107 = vadd.f32 0.0, %v3106
      %v3108 = vpop.f32.mrb[0].mxu0
      %3109 = vmatprep.mubr.f32.mxu0 0.0
      %3110 = vmatmul.mubr.f32.gmra.mrb[0].mxu0 %v1776
      %v3111 = vpop.f32.mrb[0].mxu0
      %v3112 = vadd.f32 0.0, %v3111
      %v3113 = vpop.f32.mrb[0].mxu0
      %3114 = vmatprep.mubr.f32.mxu0 0.0
      %3115 = vmatmul.mubr.f32.gmra.mrb[0].mxu0 %v1778
      %v3116 = vpop.f32.mrb[0].mxu0
      %v3117 = vadd.f32 0.0, %v3116
      %v3118 = vpop.f32.mrb[0].mxu0
      %3119 = vmatprep.mubr.f32.mxu0 0.0
      %3120 = vmatmul.mubr.f32.gmra.mrb[0].mxu0 %v1780
      %v3121 = vpop.f32.mrb[0].mxu0
      %v3122 = vadd.f32 0.0, %v3121
      %v3123 = vpop.f32.mrb[0].mxu0
      %3124 = vmatprep.mubr.f32.mxu0 0.0
      %3125 = vmatmul.mubr.f32.gmra.mrb[0].mxu0 %v1782
      %v3126 = vpop.f32.mrb[0].mxu0
      %v3127 = vadd.f32 0.0, %v3126
      %v3128 = vpop.f32.mrb[0].mxu0
      %3129 = vmatprep.mubr.f32.mxu0 0.0
      %3130 = vmatmul.mubr.f32.gmra.mrb[0].mxu0 %v1784
      %v3131 = vpop.f32.mrb[0].mxu0
      %v3132 = vadd.f32 0.0, %v3131
      %v3133 = vpop.f32.mrb[0].mxu0
      %3134 = vmatprep.mubr.f32.mxu0 0.0
      %3135 = vmatmul.mubr.f32.gmra.mrb[0].mxu0 %v1786
      %v3136 = vpop.f32.mrb[0].mxu0
      %v3137 = vadd.f32 0.0, %v3136
      %v3138 = vpop.f32.mrb[0].mxu0
      %3139 = vmatprep.mubr.f32.mxu0 0.0
      %3140 = vmatmul.mubr.f32.gmra.mrb[0].mxu0 %v1788
      %v3141 = vpop.f32.mrb[0].mxu0
      %v3142 = vadd.f32 0.0, %v3141
      %v3143 = vpop.f32.mrb[0].mxu0
      %3144 = vmatprep.mubr.f32.mxu0 0.0
      %3145 = vmatmul.mubr.f32.gmra.mrb[0].mxu0 %v1790
      %v3146 = vpop.f32.mrb[0].mxu0
      %v3147 = vadd.f32 0.0, %v3146
      %v3148 = vpop.f32.mrb[0].mxu0
      %3149 = vmatprep.mubr.f32.mxu0 0.0
      %3150 = vmatmul.mubr.f32.gmra.mrb[0].mxu0 %v1792
      %v3151 = vpop.f32.mrb[0].mxu0
      %v3152 = vadd.f32 0.0, %v3151
      %v3153 = vpop.f32.mrb[0].mxu0
      %3154 = vmatprep.mubr.f32.mxu0 0.0
      %3155 = vmatmul.mubr.f32.gmra.mrb[0].mxu0 %v1794
      %v3156 = vpop.f32.mrb[0].mxu0
      %v3157 = vadd.f32 0.0, %v3156
      %v3158 = vpop.f32.mrb[0].mxu0
      %3159 = vmatprep.mubr.f32.mxu0 0.0
      %3160 = vmatmul.mubr.f32.gmra.mrb[0].mxu0 %v1796
      %v3161 = vpop.f32.mrb[0].mxu0
      %v3162 = vadd.f32 0.0, %v3161
      %v3163 = vpop.f32.mrb[0].mxu0
      %3164 = vmatprep.mubr.f32.mxu0 0.0
      %3165 = vmatmul.mubr.f32.gmra.mrb[0].mxu0 %v1798
      %v3166 = vpop.f32.mrb[0].mxu0
      %v3167 = vadd.f32 0.0, %v3166
      %v3168 = vpop.f32.mrb[0].mxu0
      %3169 = vmatprep.mubr.f32.mxu0 0.0
      %3170 = vmatmul.mubr.f32.gmra.mrb[0].mxu0 %v1800
      %v3171 = vpop.f32.mrb[0].mxu0
      %v3172 = vadd.f32 0.0, %v3171
      %v3173 = vpop.f32.mrb[0].mxu0
      %3174 = vmatprep.mubr.f32.mxu0 0.0
      %3175 = vmatmul.mubr.f32.gmra.mrb[0].mxu0 %v1802
      %v3176 = vpop.f32.mrb[0].mxu0
      %v3177 = vadd.f32 0.0, %v3176
      %v3178 = vpop.f32.mrb[0].mxu0
      %3179 = vmatprep.mubr.f32.mxu0 0.0
      %3180 = vmatmul.mubr.f32.gmra.mrb[0].mxu0 %v1804
      %v3181 = vpop.f32.mrb[0].mxu0
      %v3182 = vadd.f32 0.0, %v3181
      %v3183 = vpop.f32.mrb[0].mxu0
      %3184 = vmatprep.mubr.f32.mxu0 0.0
      %3185 = vmatmul.mubr.f32.gmra.mrb[0].mxu0 %v1806
      %v3186 = vpop.f32.mrb[0].mxu0
      %v3187 = vadd.f32 0.0, %v3186
      %v3188 = vpop.f32.mrb[0].mxu0
      %3189 = vmatprep.mubr.f32.mxu0 0.0
      %3190 = vmatmul.mubr.f32.gmra.mrb[0].mxu0 %v1808
      %v3191 = vpop.f32.mrb[0].mxu0
      %v3192 = vadd.f32 0.0, %v3191
      %v3193 = vpop.f32.mrb[0].mxu0
      %3194 = vmatprep.mubr.f32.mxu0 0.0
      %3195 = vmatmul.mubr.f32.gmra.mrb[0].mxu0 %v1810
      %v3196 = vpop.f32.mrb[0].mxu0
      %v3197 = vadd.f32 0.0, %v3196
      %v3198 = vpop.f32.mrb[0].mxu0
      %3199 = vmatprep.mubr.f32.mxu0 0.0
      %3200 = vmatmul.mubr.f32.gmra.mrb[0].mxu0 %v1812
      %v3201 = vpop.f32.mrb[0].mxu0
      %v3202 = vadd.f32 0.0, %v3201
      %v3203 = vpop.f32.mrb[0].mxu0
      %3204 = vmatprep.mubr.f32.mxu0 0.0
      %3205 = vmatmul.mubr.f32.gmra.mrb[0].mxu0 %v1814
      %v3206 = vpop.f32.mrb[0].mxu0
      %v3207 = vadd.f32 0.0, %v3206
      %v3208 = vpop.f32.mrb[0].mxu0
      %3209 = vmatprep.mubr.f32.mxu0 0.0
      %3210 = vmatmul.mubr.f32.gmra.mrb[0].mxu0 %v1816
      %v3211 = vpop.f32.mrb[0].mxu0
      %v3212 = vadd.f32 0.0, %v3211
      %v3213 = vpop.f32.mrb[0].mxu0
      %3214 = vmatprep.mubr.f32.mxu0 0.0
      %3215 = vmatmul.mubr.f32.gmra.mrb[0].mxu0 %v1818
      %v3216 = vpop.f32.mrb[0].mxu0
      %v3217 = vadd.f32 0.0, %v3216
      %v3218 = vpop.f32.mrb[0].mxu0
      %3219 = vmatprep.mubr.f32.mxu0 0.0
      %3220 = vmatmul.mubr.f32.gmra.mrb[0].mxu0 %v1820
      %v3221 = vpop.f32.mrb[0].mxu0
      %v3222 = vadd.f32 0.0, %v3221
      %v3223 = vpop.f32.mrb[0].mxu0
      %3224 = vmatprep.mubr.f32.mxu0 0.0
      %3225 = vmatmul.mubr.f32.gmra.mrb[0].mxu0 %v1822
      %v3226 = vpop.f32.mrb[0].mxu0
      %v3227 = vadd.f32 0.0, %v3226
      %v3228 = vpop.f32.mrb[0].mxu0
      %3229 = vmatprep.mubr.f32.mxu0 0.0
      %3230 = vmatmul.mubr.f32.gmra.mrb[0].mxu0 %v1824
      %v3231 = vpop.f32.mrb[0].mxu0
      %v3232 = vadd.f32 0.0, %v3231
      %v3233 = vpop.f32.mrb[0].mxu0
      %3234 = vmatprep.mubr.f32.mxu0 0.0
      %3235 = vmatmul.mubr.f32.gmra.mrb[0].mxu0 %v1826
      %v3236 = vpop.f32.mrb[0].mxu0
      %v3237 = vadd.f32 0.0, %v3236
      %v3238 = vpop.f32.mrb[0].mxu0
      %3239 = vmatprep.mubr.f32.mxu0 0.0
      %3240 = vmatmul.mubr.f32.gmra.mrb[0].mxu0 %v3021
      %v3241 = vpop.f32.mrb[0].mxu0
      %v3242 = vadd.f32 0.0, %v3241
      %v3243 = vpop.f32.mrb[0].mxu0
      %3244 = vmatprep.mubr.f32.mxu0 0.0
      %3245 = vmatmul.mubr.f32.gmra.mrb[0].mxu0 %v3023
      %v3246 = vpop.f32.mrb[0].mxu0
      %v3247 = vadd.f32 0.0, %v3246
      %v3248 = vpop.f32.mrb[0].mxu0
      %3249 = vdwg.mxu0
      %v3250 = vadd.f32 %v2980, %v3092
      %v3251 = vadd.f32 %v2981, %v3097
      %v3252 = vadd.f32 %v2982, %v3102
      %v3253 = vadd.f32 %v2983, %v3107
      %v3254 = vadd.f32 %v2984, %v3112
      %v3255 = vadd.f32 %v2985, %v3117
      %v3256 = vadd.f32 %v2986, %v3122
      %v3257 = vadd.f32 %v2987, %v3127
      %v3258 = vadd.f32 %v2988, %v3132
      %v3259 = vadd.f32 %v2989, %v3137
      %v3260 = vadd.f32 %v2990, %v3142
      %v3261 = vadd.f32 %v2991, %v3147
      %v3262 = vadd.f32 %v2992, %v3152
      %v3263 = vadd.f32 %v2993, %v3157
      %v3264 = vadd.f32 %v2994, %v3162
      %v3265 = vadd.f32 %v2995, %v3167
      %v3266 = vadd.f32 %v2996, %v3172
      %v3267 = vadd.f32 %v2997, %v3177
      %v3268 = vadd.f32 %v2998, %v3182
      %v3269 = vadd.f32 %v2999, %v3187
      %v3270 = vadd.f32 %v3000, %v3192
      %v3271 = vadd.f32 %v3001, %v3197
      %v3272 = vadd.f32 %v3002, %v3202
      %v3273 = vadd.f32 %v3003, %v3207
      %v3274 = vadd.f32 %v3004, %v3212
      %v3275 = vadd.f32 %v3005, %v3217
      %v3276 = vadd.f32 %v3006, %v3222
      %v3277 = vadd.f32 %v3007, %v3227
      %v3278 = vadd.f32 %v3008, %v3232
      %v3279 = vadd.f32 %v3009, %v3237
      %v3280 = vadd.f32 %v3010, %v3242
      %v3281 = vadd.f32 %v3011, %v3247
      %v3282 = vrot.slane %v1625, 2
      %v3283 = vrot.slane %v1626, 2
      %v3284 = vsel %vm1328, %v3282, %v3283
      %v3285 = vrot.slane %v1627, 2
      %v3286 = vsel %vm1328, %v3283, %v3285
      %s3287 = scalar_lea.vmem %s3, 80
      %v3288 = vld [vmem:[%s3287] sm:$0xff]
      %v3289 = vld [vmem:[%s3287 + $0x8] sm:$0xff]
      %v3290 = vsel %vm306, %v3284, 0
      %v3292 = vsel %vm306, %v3286, 0
      %3294 = vmatprep.subr.mxu0 0.0
      %3295 = vmatpush1.msra.mxu0 %v3288
      %3296 = vmatprep.subr.mxu0 0.0
      %3297 = vmatpush1.msra.mxu0 %v3289
      %3298 = vmatprep.subr.mxu0 0.0
      %3299 = vmatpush1.msra.mxu0 0.0
      %3300 = vmatprep.subr.mxu0 0.0
      %3301 = vmatpush1.msra.mxu0 0.0
      %3302 = vmatprep.subr.mxu0 0.0
      %3303 = vmatpush1.msra.mxu0 0.0
      %3304 = vmatprep.subr.mxu0 0.0
      %3305 = vmatpush1.msra.mxu0 0.0
      %3306 = vmatprep.subr.mxu0 0.0
      %3307 = vmatpush1.msra.mxu0 0.0
      %3308 = vmatprep.subr.mxu0 0.0
      %3309 = vmatpush1.msra.mxu0 0.0
      %3310 = vmatprep.subr.mxu0 0.0
      %3311 = vmatpush1.msra.mxu0 0.0
      %3312 = vmatprep.subr.mxu0 0.0
      %3313 = vmatpush1.msra.mxu0 0.0
      %3314 = vmatprep.subr.mxu0 0.0
      %3315 = vmatpush1.msra.mxu0 0.0
      %3316 = vmatprep.subr.mxu0 0.0
      %3317 = vmatpush1.msra.mxu0 0.0
      %3318 = vmatprep.subr.mxu0 0.0
      %3319 = vmatpush1.msra.mxu0 0.0
      %3320 = vmatprep.subr.mxu0 0.0
      %3321 = vmatpush1.msra.mxu0 0.0
      %3322 = vmatprep.subr.mxu0 0.0
      %3323 = vmatpush1.msra.mxu0 0.0
      %3324 = vmatprep.subr.mxu0 0.0
      %3325 = vmatpush1.msra.mxu0 0.0
      %3326 = vmatprep.subr.mxu0 0.0
      %3327 = vmatpush1.msra.mxu0 0.0
      %3328 = vmatprep.subr.mxu0 0.0
      %3329 = vmatpush1.msra.mxu0 0.0
      %3330 = vmatprep.subr.mxu0 0.0
      %3331 = vmatpush1.msra.mxu0 0.0
      %3332 = vmatprep.subr.mxu0 0.0
      %3333 = vmatpush1.msra.mxu0 0.0
      %3334 = vmatprep.subr.mxu0 0.0
      %3335 = vmatpush1.msra.mxu0 0.0
      %3336 = vmatprep.subr.mxu0 0.0
      %3337 = vmatpush1.msra.mxu0 0.0
      %3338 = vmatprep.subr.mxu0 0.0
      %3339 = vmatpush1.msra.mxu0 0.0
      %3340 = vmatprep.subr.mxu0 0.0
      %3341 = vmatpush1.msra.mxu0 0.0
      %3342 = vmatprep.subr.mxu0 0.0
      %3343 = vmatpush1.msra.mxu0 0.0
      %3344 = vmatprep.subr.mxu0 0.0
      %3345 = vmatpush1.msra.mxu0 0.0
      %3346 = vmatprep.subr.mxu0 0.0
      %3347 = vmatpush1.msra.mxu0 0.0
      %3348 = vmatprep.subr.mxu0 0.0
      %3349 = vmatpush1.msra.mxu0 0.0
      %3350 = vmatprep.subr.mxu0 0.0
      %3351 = vmatpush1.msra.mxu0 0.0
      %3352 = vmatprep.subr.mxu0 0.0
      %3353 = vmatpush1.msra.mxu0 0.0
      %3354 = vmatprep.subr.mxu0 0.0
      %3355 = vmatpush1.msra.mxu0 0.0
      %3356 = vmatprep.subr.mxu0 0.0
      %3357 = vmatpush1.msra.mxu0 0.0
      %3358 = vmatprep.mubr.f32.mxu0 0.0
      %3359 = vmatmul.mubr.f32.gmra.mrb[0].mxu0 %v2429
      %v3360 = vpop.f32.mrb[0].mxu0
      %v3361 = vadd.f32 0.0, %v3360
      %v3362 = vpop.f32.mrb[0].mxu0
      %3363 = vmatprep.mubr.f32.mxu0 0.0
      %3364 = vmatmul.mubr.f32.gmra.mrb[0].mxu0 %v2431
      %v3365 = vpop.f32.mrb[0].mxu0
      %v3366 = vadd.f32 0.0, %v3365
      %v3367 = vpop.f32.mrb[0].mxu0
      %3368 = vmatprep.mubr.f32.mxu0 0.0
      %3369 = vmatmul.mubr.f32.gmra.mrb[0].mxu0 %v2433
      %v3370 = vpop.f32.mrb[0].mxu0
      %v3371 = vadd.f32 0.0, %v3370
      %v3372 = vpop.f32.mrb[0].mxu0
      %3373 = vmatprep.mubr.f32.mxu0 0.0
      %3374 = vmatmul.mubr.f32.gmra.mrb[0].mxu0 %v2435
      %v3375 = vpop.f32.mrb[0].mxu0
      %v3376 = vadd.f32 0.0, %v3375
      %v3377 = vpop.f32.mrb[0].mxu0
      %3378 = vmatprep.mubr.f32.mxu0 0.0
      %3379 = vmatmul.mubr.f32.gmra.mrb[0].mxu0 %v2437
      %v3380 = vpop.f32.mrb[0].mxu0
      %v3381 = vadd.f32 0.0, %v3380
      %v3382 = vpop.f32.mrb[0].mxu0
      %3383 = vmatprep.mubr.f32.mxu0 0.0
      %3384 = vmatmul.mubr.f32.gmra.mrb[0].mxu0 %v2439
      %v3385 = vpop.f32.mrb[0].mxu0
      %v3386 = vadd.f32 0.0, %v3385
      %v3387 = vpop.f32.mrb[0].mxu0
      %3388 = vmatprep.mubr.f32.mxu0 0.0
      %3389 = vmatmul.mubr.f32.gmra.mrb[0].mxu0 %v2441
      %v3390 = vpop.f32.mrb[0].mxu0
      %v3391 = vadd.f32 0.0, %v3390
      %v3392 = vpop.f32.mrb[0].mxu0
      %3393 = vmatprep.mubr.f32.mxu0 0.0
      %3394 = vmatmul.mubr.f32.gmra.mrb[0].mxu0 %v2443
      %v3395 = vpop.f32.mrb[0].mxu0
      %v3396 = vadd.f32 0.0, %v3395
      %v3397 = vpop.f32.mrb[0].mxu0
      %3398 = vmatprep.mubr.f32.mxu0 0.0
      %3399 = vmatmul.mubr.f32.gmra.mrb[0].mxu0 %v2445
      %v3400 = vpop.f32.mrb[0].mxu0
      %v3401 = vadd.f32 0.0, %v3400
      %v3402 = vpop.f32.mrb[0].mxu0
      %3403 = vmatprep.mubr.f32.mxu0 0.0
      %3404 = vmatmul.mubr.f32.gmra.mrb[0].mxu0 %v2447
      %v3405 = vpop.f32.mrb[0].mxu0
      %v3406 = vadd.f32 0.0, %v3405
      %v3407 = vpop.f32.mrb[0].mxu0
      %3408 = vmatprep.mubr.f32.mxu0 0.0
      %3409 = vmatmul.mubr.f32.gmra.mrb[0].mxu0 %v2449
      %v3410 = vpop.f32.mrb[0].mxu0
      %v3411 = vadd.f32 0.0, %v3410
      %v3412 = vpop.f32.mrb[0].mxu0
      %3413 = vmatprep.mubr.f32.mxu0 0.0
      %3414 = vmatmul.mubr.f32.gmra.mrb[0].mxu0 %v2451
      %v3415 = vpop.f32.mrb[0].mxu0
      %v3416 = vadd.f32 0.0, %v3415
      %v3417 = vpop.f32.mrb[0].mxu0
      %3418 = vmatprep.mubr.f32.mxu0 0.0
      %3419 = vmatmul.mubr.f32.gmra.mrb[0].mxu0 %v2453
      %v3420 = vpop.f32.mrb[0].mxu0
      %v3421 = vadd.f32 0.0, %v3420
      %v3422 = vpop.f32.mrb[0].mxu0
      %3423 = vmatprep.mubr.f32.mxu0 0.0
      %3424 = vmatmul.mubr.f32.gmra.mrb[0].mxu0 %v2455
      %v3425 = vpop.f32.mrb[0].mxu0
      %v3426 = vadd.f32 0.0, %v3425
      %v3427 = vpop.f32.mrb[0].mxu0
      %3428 = vmatprep.mubr.f32.mxu0 0.0
      %3429 = vmatmul.mubr.f32.gmra.mrb[0].mxu0 %v2457
      %v3430 = vpop.f32.mrb[0].mxu0
      %v3431 = vadd.f32 0.0, %v3430
      %v3432 = vpop.f32.mrb[0].mxu0
      %3433 = vmatprep.mubr.f32.mxu0 0.0
      %3434 = vmatmul.mubr.f32.gmra.mrb[0].mxu0 %v2459
      %v3435 = vpop.f32.mrb[0].mxu0
      %v3436 = vadd.f32 0.0, %v3435
      %v3437 = vpop.f32.mrb[0].mxu0
      %3438 = vmatprep.mubr.f32.mxu0 0.0
      %3439 = vmatmul.mubr.f32.gmra.mrb[0].mxu0 %v2461
      %v3440 = vpop.f32.mrb[0].mxu0
      %v3441 = vadd.f32 0.0, %v3440
      %v3442 = vpop.f32.mrb[0].mxu0
      %3443 = vmatprep.mubr.f32.mxu0 0.0
      %3444 = vmatmul.mubr.f32.gmra.mrb[0].mxu0 %v2463
      %v3445 = vpop.f32.mrb[0].mxu0
      %v3446 = vadd.f32 0.0, %v3445
      %v3447 = vpop.f32.mrb[0].mxu0
      %3448 = vmatprep.mubr.f32.mxu0 0.0
      %3449 = vmatmul.mubr.f32.gmra.mrb[0].mxu0 %v2465
      %v3450 = vpop.f32.mrb[0].mxu0
      %v3451 = vadd.f32 0.0, %v3450
      %v3452 = vpop.f32.mrb[0].mxu0
      %3453 = vmatprep.mubr.f32.mxu0 0.0
      %3454 = vmatmul.mubr.f32.gmra.mrb[0].mxu0 %v2467
      %v3455 = vpop.f32.mrb[0].mxu0
      %v3456 = vadd.f32 0.0, %v3455
      %v3457 = vpop.f32.mrb[0].mxu0
      %3458 = vmatprep.mubr.f32.mxu0 0.0
      %3459 = vmatmul.mubr.f32.gmra.mrb[0].mxu0 %v2469
      %v3460 = vpop.f32.mrb[0].mxu0
      %v3461 = vadd.f32 0.0, %v3460
      %v3462 = vpop.f32.mrb[0].mxu0
      %3463 = vmatprep.mubr.f32.mxu0 0.0
      %3464 = vmatmul.mubr.f32.gmra.mrb[0].mxu0 %v2471
      %v3465 = vpop.f32.mrb[0].mxu0
      %v3466 = vadd.f32 0.0, %v3465
      %v3467 = vpop.f32.mrb[0].mxu0
      %3468 = vmatprep.mubr.f32.mxu0 0.0
      %3469 = vmatmul.mubr.f32.gmra.mrb[0].mxu0 %v2473
      %v3470 = vpop.f32.mrb[0].mxu0
      %v3471 = vadd.f32 0.0, %v3470
      %v3472 = vpop.f32.mrb[0].mxu0
      %3473 = vmatprep.mubr.f32.mxu0 0.0
      %3474 = vmatmul.mubr.f32.gmra.mrb[0].mxu0 %v2475
      %v3475 = vpop.f32.mrb[0].mxu0
      %v3476 = vadd.f32 0.0, %v3475
      %v3477 = vpop.f32.mrb[0].mxu0
      %3478 = vmatprep.mubr.f32.mxu0 0.0
      %3479 = vmatmul.mubr.f32.gmra.mrb[0].mxu0 %v2477
      %v3480 = vpop.f32.mrb[0].mxu0
      %v3481 = vadd.f32 0.0, %v3480
      %v3482 = vpop.f32.mrb[0].mxu0
      %3483 = vmatprep.mubr.f32.mxu0 0.0
      %3484 = vmatmul.mubr.f32.gmra.mrb[0].mxu0 %v2479
      %v3485 = vpop.f32.mrb[0].mxu0
      %v3486 = vadd.f32 0.0, %v3485
      %v3487 = vpop.f32.mrb[0].mxu0
      %3488 = vmatprep.mubr.f32.mxu0 0.0
      %3489 = vmatmul.mubr.f32.gmra.mrb[0].mxu0 %v2481
      %v3490 = vpop.f32.mrb[0].mxu0
      %v3491 = vadd.f32 0.0, %v3490
      %v3492 = vpop.f32.mrb[0].mxu0
      %3493 = vmatprep.mubr.f32.mxu0 0.0
      %3494 = vmatmul.mubr.f32.gmra.mrb[0].mxu0 %v2483
      %v3495 = vpop.f32.mrb[0].mxu0
      %v3496 = vadd.f32 0.0, %v3495
      %v3497 = vpop.f32.mrb[0].mxu0
      %3498 = vmatprep.mubr.f32.mxu0 0.0
      %3499 = vmatmul.mubr.f32.gmra.mrb[0].mxu0 %v2485
      %v3500 = vpop.f32.mrb[0].mxu0
      %v3501 = vadd.f32 0.0, %v3500
      %v3502 = vpop.f32.mrb[0].mxu0
      %3503 = vmatprep.mubr.f32.mxu0 0.0
      %3504 = vmatmul.mubr.f32.gmra.mrb[0].mxu0 %v2487
      %v3505 = vpop.f32.mrb[0].mxu0
      %v3506 = vadd.f32 0.0, %v3505
      %v3507 = vpop.f32.mrb[0].mxu0
      %3508 = vmatprep.mubr.f32.mxu0 0.0
      %3509 = vmatmul.mubr.f32.gmra.mrb[0].mxu0 %v3290
      %v3510 = vpop.f32.mrb[0].mxu0
      %v3511 = vadd.f32 0.0, %v3510
      %v3512 = vpop.f32.mrb[0].mxu0
      %3513 = vmatprep.mubr.f32.mxu0 0.0
      %3514 = vmatmul.mubr.f32.gmra.mrb[0].mxu0 %v3292
      %v3515 = vpop.f32.mrb[0].mxu0
      %v3516 = vadd.f32 0.0, %v3515
      %v3517 = vpop.f32.mrb[0].mxu0
      %3518 = vdwg.mxu0
      %v3519 = vadd.f32 %v3250, %v3361
      %v3520 = vadd.f32 %v3251, %v3366
      %v3521 = vadd.f32 %v3252, %v3371
      %v3522 = vadd.f32 %v3253, %v3376
      %v3523 = vadd.f32 %v3254, %v3381
      %v3524 = vadd.f32 %v3255, %v3386
      %v3525 = vadd.f32 %v3256, %v3391
      %v3526 = vadd.f32 %v3257, %v3396
      %v3527 = vadd.f32 %v3258, %v3401
      %v3528 = vadd.f32 %v3259, %v3406
      %v3529 = vadd.f32 %v3260, %v3411
      %v3530 = vadd.f32 %v3261, %v3416
      %v3531 = vadd.f32 %v3262, %v3421
      %v3532 = vadd.f32 %v3263, %v3426
      %v3533 = vadd.f32 %v3264, %v3431
      %v3534 = vadd.f32 %v3265, %v3436
      %v3535 = vadd.f32 %v3266, %v3441
      %v3536 = vadd.f32 %v3267, %v3446
      %v3537 = vadd.f32 %v3268, %v3451
      %v3538 = vadd.f32 %v3269, %v3456
      %v3539 = vadd.f32 %v3270, %v3461
      %v3540 = vadd.f32 %v3271, %v3466
      %v3541 = vadd.f32 %v3272, %v3471
      %v3542 = vadd.f32 %v3273, %v3476
      %v3543 = vadd.f32 %v3274, %v3481
      %v3544 = vadd.f32 %v3275, %v3486
      %v3545 = vadd.f32 %v3276, %v3491
      %v3546 = vadd.f32 %v3277, %v3496
      %v3547 = vadd.f32 %v3278, %v3501
      %v3548 = vadd.f32 %v3279, %v3506
      %v3549 = vadd.f32 %v3280, %v3511
      %v3550 = vadd.f32 %v3281, %v3516
      %s3551 = scalar_lea.vmem %s3, 96
      %v3552 = vld [vmem:[%s3551] sm:$0xff]
      %v3553 = vld [vmem:[%s3551 + $0x8] sm:$0xff]
      %v3555 = vsel %vm306, %v1628, 0
      %v3558 = vsel %vm306, %v1629, 0
      %3560 = vmatprep.subr.mxu0 0.0
      %3561 = vmatpush1.msra.mxu0 %v3552
      %3562 = vmatprep.subr.mxu0 0.0
      %3563 = vmatpush1.msra.mxu0 %v3553
      %3564 = vmatprep.subr.mxu0 0.0
      %3565 = vmatpush1.msra.mxu0 0.0
      %3566 = vmatprep.subr.mxu0 0.0
      %3567 = vmatpush1.msra.mxu0 0.0
      %3568 = vmatprep.subr.mxu0 0.0
      %3569 = vmatpush1.msra.mxu0 0.0
      %3570 = vmatprep.subr.mxu0 0.0
      %3571 = vmatpush1.msra.mxu0 0.0
      %3572 = vmatprep.subr.mxu0 0.0
      %3573 = vmatpush1.msra.mxu0 0.0
      %3574 = vmatprep.subr.mxu0 0.0
      %3575 = vmatpush1.msra.mxu0 0.0
      %3576 = vmatprep.subr.mxu0 0.0
      %3577 = vmatpush1.msra.mxu0 0.0
      %3578 = vmatprep.subr.mxu0 0.0
      %3579 = vmatpush1.msra.mxu0 0.0
      %3580 = vmatprep.subr.mxu0 0.0
      %3581 = vmatpush1.msra.mxu0 0.0
      %3582 = vmatprep.subr.mxu0 0.0
      %3583 = vmatpush1.msra.mxu0 0.0
      %3584 = vmatprep.subr.mxu0 0.0
      %3585 = vmatpush1.msra.mxu0 0.0
      %3586 = vmatprep.subr.mxu0 0.0
      %3587 = vmatpush1.msra.mxu0 0.0
      %3588 = vmatprep.subr.mxu0 0.0
      %3589 = vmatpush1.msra.mxu0 0.0
      %3590 = vmatprep.subr.mxu0 0.0
      %3591 = vmatpush1.msra.mxu0 0.0
      %3592 = vmatprep.subr.mxu0 0.0
      %3593 = vmatpush1.msra.mxu0 0.0
      %3594 = vmatprep.subr.mxu0 0.0
      %3595 = vmatpush1.msra.mxu0 0.0
      %3596 = vmatprep.subr.mxu0 0.0
      %3597 = vmatpush1.msra.mxu0 0.0
      %3598 = vmatprep.subr.mxu0 0.0
      %3599 = vmatpush1.msra.mxu0 0.0
      %3600 = vmatprep.subr.mxu0 0.0
      %3601 = vmatpush1.msra.mxu0 0.0
      %3602 = vmatprep.subr.mxu0 0.0
      %3603 = vmatpush1.msra.mxu0 0.0
      %3604 = vmatprep.subr.mxu0 0.0
      %3605 = vmatpush1.msra.mxu0 0.0
      %3606 = vmatprep.subr.mxu0 0.0
      %3607 = vmatpush1.msra.mxu0 0.0
      %3608 = vmatprep.subr.mxu0 0.0
      %3609 = vmatpush1.msra.mxu0 0.0
      %3610 = vmatprep.subr.mxu0 0.0
      %3611 = vmatpush1.msra.mxu0 0.0
      %3612 = vmatprep.subr.mxu0 0.0
      %3613 = vmatpush1.msra.mxu0 0.0
      %3614 = vmatprep.subr.mxu0 0.0
      %3615 = vmatpush1.msra.mxu0 0.0
      %3616 = vmatprep.subr.mxu0 0.0
      %3617 = vmatpush1.msra.mxu0 0.0
      %3618 = vmatprep.subr.mxu0 0.0
      %3619 = vmatpush1.msra.mxu0 0.0
      %3620 = vmatprep.subr.mxu0 0.0
      %3621 = vmatpush1.msra.mxu0 0.0
      %3622 = vmatprep.subr.mxu0 0.0
      %3623 = vmatpush1.msra.mxu0 0.0
      %3624 = vmatprep.mubr.f32.mxu0 0.0
      %3625 = vmatmul.mubr.f32.gmra.mrb[0].mxu0 %v2061
      %v3626 = vpop.f32.mrb[0].mxu0
      %v3627 = vadd.f32 0.0, %v3626
      %v3628 = vpop.f32.mrb[0].mxu0
      %3629 = vmatprep.mubr.f32.mxu0 0.0
      %3630 = vmatmul.mubr.f32.gmra.mrb[0].mxu0 %v2063
      %v3631 = vpop.f32.mrb[0].mxu0
      %v3632 = vadd.f32 0.0, %v3631
      %v3633 = vpop.f32.mrb[0].mxu0
      %3634 = vmatprep.mubr.f32.mxu0 0.0
      %3635 = vmatmul.mubr.f32.gmra.mrb[0].mxu0 %v2065
      %v3636 = vpop.f32.mrb[0].mxu0
      %v3637 = vadd.f32 0.0, %v3636
      %v3638 = vpop.f32.mrb[0].mxu0
      %3639 = vmatprep.mubr.f32.mxu0 0.0
      %3640 = vmatmul.mubr.f32.gmra.mrb[0].mxu0 %v2067
      %v3641 = vpop.f32.mrb[0].mxu0
      %v3642 = vadd.f32 0.0, %v3641
      %v3643 = vpop.f32.mrb[0].mxu0
      %3644 = vmatprep.mubr.f32.mxu0 0.0
      %3645 = vmatmul.mubr.f32.gmra.mrb[0].mxu0 %v2069
      %v3646 = vpop.f32.mrb[0].mxu0
      %v3647 = vadd.f32 0.0, %v3646
      %v3648 = vpop.f32.mrb[0].mxu0
      %3649 = vmatprep.mubr.f32.mxu0 0.0
      %3650 = vmatmul.mubr.f32.gmra.mrb[0].mxu0 %v2071
      %v3651 = vpop.f32.mrb[0].mxu0
      %v3652 = vadd.f32 0.0, %v3651
      %v3653 = vpop.f32.mrb[0].mxu0
      %3654 = vmatprep.mubr.f32.mxu0 0.0
      %3655 = vmatmul.mubr.f32.gmra.mrb[0].mxu0 %v2073
      %v3656 = vpop.f32.mrb[0].mxu0
      %v3657 = vadd.f32 0.0, %v3656
      %v3658 = vpop.f32.mrb[0].mxu0
      %3659 = vmatprep.mubr.f32.mxu0 0.0
      %3660 = vmatmul.mubr.f32.gmra.mrb[0].mxu0 %v2075
      %v3661 = vpop.f32.mrb[0].mxu0
      %v3662 = vadd.f32 0.0, %v3661
      %v3663 = vpop.f32.mrb[0].mxu0
      %3664 = vmatprep.mubr.f32.mxu0 0.0
      %3665 = vmatmul.mubr.f32.gmra.mrb[0].mxu0 %v2077
      %v3666 = vpop.f32.mrb[0].mxu0
      %v3667 = vadd.f32 0.0, %v3666
      %v3668 = vpop.f32.mrb[0].mxu0
      %3669 = vmatprep.mubr.f32.mxu0 0.0
      %3670 = vmatmul.mubr.f32.gmra.mrb[0].mxu0 %v2079
      %v3671 = vpop.f32.mrb[0].mxu0
      %v3672 = vadd.f32 0.0, %v3671
      %v3673 = vpop.f32.mrb[0].mxu0
      %3674 = vmatprep.mubr.f32.mxu0 0.0
      %3675 = vmatmul.mubr.f32.gmra.mrb[0].mxu0 %v2081
      %v3676 = vpop.f32.mrb[0].mxu0
      %v3677 = vadd.f32 0.0, %v3676
      %v3678 = vpop.f32.mrb[0].mxu0
      %3679 = vmatprep.mubr.f32.mxu0 0.0
      %3680 = vmatmul.mubr.f32.gmra.mrb[0].mxu0 %v2083
      %v3681 = vpop.f32.mrb[0].mxu0
      %v3682 = vadd.f32 0.0, %v3681
      %v3683 = vpop.f32.mrb[0].mxu0
      %3684 = vmatprep.mubr.f32.mxu0 0.0
      %3685 = vmatmul.mubr.f32.gmra.mrb[0].mxu0 %v2085
      %v3686 = vpop.f32.mrb[0].mxu0
      %v3687 = vadd.f32 0.0, %v3686
      %v3688 = vpop.f32.mrb[0].mxu0
      %3689 = vmatprep.mubr.f32.mxu0 0.0
      %3690 = vmatmul.mubr.f32.gmra.mrb[0].mxu0 %v2087
      %v3691 = vpop.f32.mrb[0].mxu0
      %v3692 = vadd.f32 0.0, %v3691
      %v3693 = vpop.f32.mrb[0].mxu0
      %3694 = vmatprep.mubr.f32.mxu0 0.0
      %3695 = vmatmul.mubr.f32.gmra.mrb[0].mxu0 %v2089
      %v3696 = vpop.f32.mrb[0].mxu0
      %v3697 = vadd.f32 0.0, %v3696
      %v3698 = vpop.f32.mrb[0].mxu0
      %3699 = vmatprep.mubr.f32.mxu0 0.0
      %3700 = vmatmul.mubr.f32.gmra.mrb[0].mxu0 %v2091
      %v3701 = vpop.f32.mrb[0].mxu0
      %v3702 = vadd.f32 0.0, %v3701
      %v3703 = vpop.f32.mrb[0].mxu0
      %3704 = vmatprep.mubr.f32.mxu0 0.0
      %3705 = vmatmul.mubr.f32.gmra.mrb[0].mxu0 %v2093
      %v3706 = vpop.f32.mrb[0].mxu0
      %v3707 = vadd.f32 0.0, %v3706
      %v3708 = vpop.f32.mrb[0].mxu0
      %3709 = vmatprep.mubr.f32.mxu0 0.0
      %3710 = vmatmul.mubr.f32.gmra.mrb[0].mxu0 %v2095
      %v3711 = vpop.f32.mrb[0].mxu0
      %v3712 = vadd.f32 0.0, %v3711
      %v3713 = vpop.f32.mrb[0].mxu0
      %3714 = vmatprep.mubr.f32.mxu0 0.0
      %3715 = vmatmul.mubr.f32.gmra.mrb[0].mxu0 %v2097
      %v3716 = vpop.f32.mrb[0].mxu0
      %v3717 = vadd.f32 0.0, %v3716
      %v3718 = vpop.f32.mrb[0].mxu0
      %3719 = vmatprep.mubr.f32.mxu0 0.0
      %3720 = vmatmul.mubr.f32.gmra.mrb[0].mxu0 %v2099
      %v3721 = vpop.f32.mrb[0].mxu0
      %v3722 = vadd.f32 0.0, %v3721
      %v3723 = vpop.f32.mrb[0].mxu0
      %3724 = vmatprep.mubr.f32.mxu0 0.0
      %3725 = vmatmul.mubr.f32.gmra.mrb[0].mxu0 %v2101
      %v3726 = vpop.f32.mrb[0].mxu0
      %v3727 = vadd.f32 0.0, %v3726
      %v3728 = vpop.f32.mrb[0].mxu0
      %3729 = vmatprep.mubr.f32.mxu0 0.0
      %3730 = vmatmul.mubr.f32.gmra.mrb[0].mxu0 %v2103
      %v3731 = vpop.f32.mrb[0].mxu0
      %v3732 = vadd.f32 0.0, %v3731
      %v3733 = vpop.f32.mrb[0].mxu0
      %3734 = vmatprep.mubr.f32.mxu0 0.0
      %3735 = vmatmul.mubr.f32.gmra.mrb[0].mxu0 %v2105
      %v3736 = vpop.f32.mrb[0].mxu0
      %v3737 = vadd.f32 0.0, %v3736
      %v3738 = vpop.f32.mrb[0].mxu0
      %3739 = vmatprep.mubr.f32.mxu0 0.0
      %3740 = vmatmul.mubr.f32.gmra.mrb[0].mxu0 %v2107
      %v3741 = vpop.f32.mrb[0].mxu0
      %v3742 = vadd.f32 0.0, %v3741
      %v3743 = vpop.f32.mrb[0].mxu0
      %3744 = vmatprep.mubr.f32.mxu0 0.0
      %3745 = vmatmul.mubr.f32.gmra.mrb[0].mxu0 %v2109
      %v3746 = vpop.f32.mrb[0].mxu0
      %v3747 = vadd.f32 0.0, %v3746
      %v3748 = vpop.f32.mrb[0].mxu0
      %3749 = vmatprep.mubr.f32.mxu0 0.0
      %3750 = vmatmul.mubr.f32.gmra.mrb[0].mxu0 %v2111
      %v3751 = vpop.f32.mrb[0].mxu0
      %v3752 = vadd.f32 0.0, %v3751
      %v3753 = vpop.f32.mrb[0].mxu0
      %3754 = vmatprep.mubr.f32.mxu0 0.0
      %3755 = vmatmul.mubr.f32.gmra.mrb[0].mxu0 %v2113
      %v3756 = vpop.f32.mrb[0].mxu0
      %v3757 = vadd.f32 0.0, %v3756
      %v3758 = vpop.f32.mrb[0].mxu0
      %3759 = vmatprep.mubr.f32.mxu0 0.0
      %3760 = vmatmul.mubr.f32.gmra.mrb[0].mxu0 %v2115
      %v3761 = vpop.f32.mrb[0].mxu0
      %v3762 = vadd.f32 0.0, %v3761
      %v3763 = vpop.f32.mrb[0].mxu0
      %3764 = vmatprep.mubr.f32.mxu0 0.0
      %3765 = vmatmul.mubr.f32.gmra.mrb[0].mxu0 %v2750
      %v3766 = vpop.f32.mrb[0].mxu0
      %v3767 = vadd.f32 0.0, %v3766
      %v3768 = vpop.f32.mrb[0].mxu0
      %3769 = vmatprep.mubr.f32.mxu0 0.0
      %3770 = vmatmul.mubr.f32.gmra.mrb[0].mxu0 %v2753
      %v3771 = vpop.f32.mrb[0].mxu0
      %v3772 = vadd.f32 0.0, %v3771
      %v3773 = vpop.f32.mrb[0].mxu0
      %3774 = vmatprep.mubr.f32.mxu0 0.0
      %3775 = vmatmul.mubr.f32.gmra.mrb[0].mxu0 %v3555
      %v3776 = vpop.f32.mrb[0].mxu0
      %v3777 = vadd.f32 0.0, %v3776
      %v3778 = vpop.f32.mrb[0].mxu0
      %3779 = vmatprep.mubr.f32.mxu0 0.0
      %3780 = vmatmul.mubr.f32.gmra.mrb[0].mxu0 %v3558
      %v3781 = vpop.f32.mrb[0].mxu0
      %v3782 = vadd.f32 0.0, %v3781
      %v3783 = vpop.f32.mrb[0].mxu0
      %3784 = vdwg.mxu0
      %v3785 = vadd.f32 %v3519, %v3627
      %v3786 = vadd.f32 %v3520, %v3632
      %v3787 = vadd.f32 %v3521, %v3637
      %v3788 = vadd.f32 %v3522, %v3642
      %v3789 = vadd.f32 %v3523, %v3647
      %v3790 = vadd.f32 %v3524, %v3652
      %v3791 = vadd.f32 %v3525, %v3657
      %v3792 = vadd.f32 %v3526, %v3662
      %v3793 = vadd.f32 %v3527, %v3667
      %v3794 = vadd.f32 %v3528, %v3672
      %v3795 = vadd.f32 %v3529, %v3677
      %v3796 = vadd.f32 %v3530, %v3682
      %v3797 = vadd.f32 %v3531, %v3687
      %v3798 = vadd.f32 %v3532, %v3692
      %v3799 = vadd.f32 %v3533, %v3697
      %v3800 = vadd.f32 %v3534, %v3702
      %v3801 = vadd.f32 %v3535, %v3707
      %v3802 = vadd.f32 %v3536, %v3712
      %v3803 = vadd.f32 %v3537, %v3717
      %v3804 = vadd.f32 %v3538, %v3722
      %v3805 = vadd.f32 %v3539, %v3727
      %v3806 = vadd.f32 %v3540, %v3732
      %v3807 = vadd.f32 %v3541, %v3737
      %v3808 = vadd.f32 %v3542, %v3742
      %v3809 = vadd.f32 %v3543, %v3747
      %v3810 = vadd.f32 %v3544, %v3752
      %v3811 = vadd.f32 %v3545, %v3757
      %v3812 = vadd.f32 %v3546, %v3762
      %v3813 = vadd.f32 %v3547, %v3767
      %v3814 = vadd.f32 %v3548, %v3772
      %v3815 = vadd.f32 %v3549, %v3777
      %v3816 = vadd.f32 %v3550, %v3782
      %v3818 = vrot.slane %v1628, 1
      %v3819 = vrot.slane %v1629, 1
      %v3820 = vsel %vm1183, %v3818, %v3819
      %v3821 = vrot.slane %v1630, 1
      %v3822 = vsel %vm1183, %v3819, %v3821
      %s3823 = scalar_lea.vmem %s3, 112
      %v3824 = vld [vmem:[%s3823] sm:$0xff]
      %v3825 = vld [vmem:[%s3823 + $0x8] sm:$0xff]
      %v3826 = vsel %vm306, %v3820, 0
      %v3828 = vsel %vm306, %v3822, 0
      %3830 = vmatprep.subr.mxu0 0.0
      %3831 = vmatpush1.msra.mxu0 %v3824
      %3832 = vmatprep.subr.mxu0 0.0
      %3833 = vmatpush1.msra.mxu0 %v3825
      %3834 = vmatprep.subr.mxu0 0.0
      %3835 = vmatpush1.msra.mxu0 0.0
      %3836 = vmatprep.subr.mxu0 0.0
      %3837 = vmatpush1.msra.mxu0 0.0
      %3838 = vmatprep.subr.mxu0 0.0
      %3839 = vmatpush1.msra.mxu0 0.0
      %3840 = vmatprep.subr.mxu0 0.0
      %3841 = vmatpush1.msra.mxu0 0.0
      %3842 = vmatprep.subr.mxu0 0.0
      %3843 = vmatpush1.msra.mxu0 0.0
      %3844 = vmatprep.subr.mxu0 0.0
      %3845 = vmatpush1.msra.mxu0 0.0
      %3846 = vmatprep.subr.mxu0 0.0
      %3847 = vmatpush1.msra.mxu0 0.0
      %3848 = vmatprep.subr.mxu0 0.0
      %3849 = vmatpush1.msra.mxu0 0.0
      %3850 = vmatprep.subr.mxu0 0.0
      %3851 = vmatpush1.msra.mxu0 0.0
      %3852 = vmatprep.subr.mxu0 0.0
      %3853 = vmatpush1.msra.mxu0 0.0
      %3854 = vmatprep.subr.mxu0 0.0
      %3855 = vmatpush1.msra.mxu0 0.0
      %3856 = vmatprep.subr.mxu0 0.0
      %3857 = vmatpush1.msra.mxu0 0.0
      %3858 = vmatprep.subr.mxu0 0.0
      %3859 = vmatpush1.msra.mxu0 0.0
      %3860 = vmatprep.subr.mxu0 0.0
      %3861 = vmatpush1.msra.mxu0 0.0
      %3862 = vmatprep.subr.mxu0 0.0
      %3863 = vmatpush1.msra.mxu0 0.0
      %3864 = vmatprep.subr.mxu0 0.0
      %3865 = vmatpush1.msra.mxu0 0.0
      %3866 = vmatprep.subr.mxu0 0.0
      %3867 = vmatpush1.msra.mxu0 0.0
      %3868 = vmatprep.subr.mxu0 0.0
      %3869 = vmatpush1.msra.mxu0 0.0
      %3870 = vmatprep.subr.mxu0 0.0
      %3871 = vmatpush1.msra.mxu0 0.0
      %3872 = vmatprep.subr.mxu0 0.0
      %3873 = vmatpush1.msra.mxu0 0.0
      %3874 = vmatprep.subr.mxu0 0.0
      %3875 = vmatpush1.msra.mxu0 0.0
      %3876 = vmatprep.subr.mxu0 0.0
      %3877 = vmatpush1.msra.mxu0 0.0
      %3878 = vmatprep.subr.mxu0 0.0
      %3879 = vmatpush1.msra.mxu0 0.0
      %3880 = vmatprep.subr.mxu0 0.0
      %3881 = vmatpush1.msra.mxu0 0.0
      %3882 = vmatprep.subr.mxu0 0.0
      %3883 = vmatpush1.msra.mxu0 0.0
      %3884 = vmatprep.subr.mxu0 0.0
      %3885 = vmatpush1.msra.mxu0 0.0
      %3886 = vmatprep.subr.mxu0 0.0
      %3887 = vmatpush1.msra.mxu0 0.0
      %3888 = vmatprep.subr.mxu0 0.0
      %3889 = vmatpush1.msra.mxu0 0.0
      %3890 = vmatprep.subr.mxu0 0.0
      %3891 = vmatpush1.msra.mxu0 0.0
      %3892 = vmatprep.subr.mxu0 0.0
      %3893 = vmatpush1.msra.mxu0 0.0
      %3894 = vmatprep.mubr.f32.mxu0 0.0
      %3895 = vmatmul.mubr.f32.gmra.mrb[0].mxu0 %v1772
      %v3896 = vpop.f32.mrb[0].mxu0
      %v3897 = vadd.f32 0.0, %v3896
      %v3898 = vpop.f32.mrb[0].mxu0
      %3899 = vmatprep.mubr.f32.mxu0 0.0
      %3900 = vmatmul.mubr.f32.gmra.mrb[0].mxu0 %v1774
      %v3901 = vpop.f32.mrb[0].mxu0
      %v3902 = vadd.f32 0.0, %v3901
      %v3903 = vpop.f32.mrb[0].mxu0
      %3904 = vmatprep.mubr.f32.mxu0 0.0
      %3905 = vmatmul.mubr.f32.gmra.mrb[0].mxu0 %v1776
      %v3906 = vpop.f32.mrb[0].mxu0
      %v3907 = vadd.f32 0.0, %v3906
      %v3908 = vpop.f32.mrb[0].mxu0
      %3909 = vmatprep.mubr.f32.mxu0 0.0
      %3910 = vmatmul.mubr.f32.gmra.mrb[0].mxu0 %v1778
      %v3911 = vpop.f32.mrb[0].mxu0
      %v3912 = vadd.f32 0.0, %v3911
      %v3913 = vpop.f32.mrb[0].mxu0
      %3914 = vmatprep.mubr.f32.mxu0 0.0
      %3915 = vmatmul.mubr.f32.gmra.mrb[0].mxu0 %v1780
      %v3916 = vpop.f32.mrb[0].mxu0
      %v3917 = vadd.f32 0.0, %v3916
      %v3918 = vpop.f32.mrb[0].mxu0
      %3919 = vmatprep.mubr.f32.mxu0 0.0
      %3920 = vmatmul.mubr.f32.gmra.mrb[0].mxu0 %v1782
      %v3921 = vpop.f32.mrb[0].mxu0
      %v3922 = vadd.f32 0.0, %v3921
      %v3923 = vpop.f32.mrb[0].mxu0
      %3924 = vmatprep.mubr.f32.mxu0 0.0
      %3925 = vmatmul.mubr.f32.gmra.mrb[0].mxu0 %v1784
      %v3926 = vpop.f32.mrb[0].mxu0
      %v3927 = vadd.f32 0.0, %v3926
      %v3928 = vpop.f32.mrb[0].mxu0
      %3929 = vmatprep.mubr.f32.mxu0 0.0
      %3930 = vmatmul.mubr.f32.gmra.mrb[0].mxu0 %v1786
      %v3931 = vpop.f32.mrb[0].mxu0
      %v3932 = vadd.f32 0.0, %v3931
      %v3933 = vpop.f32.mrb[0].mxu0
      %3934 = vmatprep.mubr.f32.mxu0 0.0
      %3935 = vmatmul.mubr.f32.gmra.mrb[0].mxu0 %v1788
      %v3936 = vpop.f32.mrb[0].mxu0
      %v3937 = vadd.f32 0.0, %v3936
      %v3938 = vpop.f32.mrb[0].mxu0
      %3939 = vmatprep.mubr.f32.mxu0 0.0
      %3940 = vmatmul.mubr.f32.gmra.mrb[0].mxu0 %v1790
      %v3941 = vpop.f32.mrb[0].mxu0
      %v3942 = vadd.f32 0.0, %v3941
      %v3943 = vpop.f32.mrb[0].mxu0
      %3944 = vmatprep.mubr.f32.mxu0 0.0
      %3945 = vmatmul.mubr.f32.gmra.mrb[0].mxu0 %v1792
      %v3946 = vpop.f32.mrb[0].mxu0
      %v3947 = vadd.f32 0.0, %v3946
      %v3948 = vpop.f32.mrb[0].mxu0
      %3949 = vmatprep.mubr.f32.mxu0 0.0
      %3950 = vmatmul.mubr.f32.gmra.mrb[0].mxu0 %v1794
      %v3951 = vpop.f32.mrb[0].mxu0
      %v3952 = vadd.f32 0.0, %v3951
      %v3953 = vpop.f32.mrb[0].mxu0
      %3954 = vmatprep.mubr.f32.mxu0 0.0
      %3955 = vmatmul.mubr.f32.gmra.mrb[0].mxu0 %v1796
      %v3956 = vpop.f32.mrb[0].mxu0
      %v3957 = vadd.f32 0.0, %v3956
      %v3958 = vpop.f32.mrb[0].mxu0
      %3959 = vmatprep.mubr.f32.mxu0 0.0
      %3960 = vmatmul.mubr.f32.gmra.mrb[0].mxu0 %v1798
      %v3961 = vpop.f32.mrb[0].mxu0
      %v3962 = vadd.f32 0.0, %v3961
      %v3963 = vpop.f32.mrb[0].mxu0
      %3964 = vmatprep.mubr.f32.mxu0 0.0
      %3965 = vmatmul.mubr.f32.gmra.mrb[0].mxu0 %v1800
      %v3966 = vpop.f32.mrb[0].mxu0
      %v3967 = vadd.f32 0.0, %v3966
      %v3968 = vpop.f32.mrb[0].mxu0
      %3969 = vmatprep.mubr.f32.mxu0 0.0
      %3970 = vmatmul.mubr.f32.gmra.mrb[0].mxu0 %v1802
      %v3971 = vpop.f32.mrb[0].mxu0
      %v3972 = vadd.f32 0.0, %v3971
      %v3973 = vpop.f32.mrb[0].mxu0
      %3974 = vmatprep.mubr.f32.mxu0 0.0
      %3975 = vmatmul.mubr.f32.gmra.mrb[0].mxu0 %v1804
      %v3976 = vpop.f32.mrb[0].mxu0
      %v3977 = vadd.f32 0.0, %v3976
      %v3978 = vpop.f32.mrb[0].mxu0
      %3979 = vmatprep.mubr.f32.mxu0 0.0
      %3980 = vmatmul.mubr.f32.gmra.mrb[0].mxu0 %v1806
      %v3981 = vpop.f32.mrb[0].mxu0
      %v3982 = vadd.f32 0.0, %v3981
      %v3983 = vpop.f32.mrb[0].mxu0
      %3984 = vmatprep.mubr.f32.mxu0 0.0
      %3985 = vmatmul.mubr.f32.gmra.mrb[0].mxu0 %v1808
      %v3986 = vpop.f32.mrb[0].mxu0
      %v3987 = vadd.f32 0.0, %v3986
      %v3988 = vpop.f32.mrb[0].mxu0
      %3989 = vmatprep.mubr.f32.mxu0 0.0
      %3990 = vmatmul.mubr.f32.gmra.mrb[0].mxu0 %v1810
      %v3991 = vpop.f32.mrb[0].mxu0
      %v3992 = vadd.f32 0.0, %v3991
      %v3993 = vpop.f32.mrb[0].mxu0
      %3994 = vmatprep.mubr.f32.mxu0 0.0
      %3995 = vmatmul.mubr.f32.gmra.mrb[0].mxu0 %v1812
      %v3996 = vpop.f32.mrb[0].mxu0
      %v3997 = vadd.f32 0.0, %v3996
      %v3998 = vpop.f32.mrb[0].mxu0
      %3999 = vmatprep.mubr.f32.mxu0 0.0
      %4000 = vmatmul.mubr.f32.gmra.mrb[0].mxu0 %v1814
      %v4001 = vpop.f32.mrb[0].mxu0
      %v4002 = vadd.f32 0.0, %v4001
      %v4003 = vpop.f32.mrb[0].mxu0
      %4004 = vmatprep.mubr.f32.mxu0 0.0
      %4005 = vmatmul.mubr.f32.gmra.mrb[0].mxu0 %v1816
      %v4006 = vpop.f32.mrb[0].mxu0
      %v4007 = vadd.f32 0.0, %v4006
      %v4008 = vpop.f32.mrb[0].mxu0
      %4009 = vmatprep.mubr.f32.mxu0 0.0
      %4010 = vmatmul.mubr.f32.gmra.mrb[0].mxu0 %v1818
      %v4011 = vpop.f32.mrb[0].mxu0
      %v4012 = vadd.f32 0.0, %v4011
      %v4013 = vpop.f32.mrb[0].mxu0
      %4014 = vmatprep.mubr.f32.mxu0 0.0
      %4015 = vmatmul.mubr.f32.gmra.mrb[0].mxu0 %v1820
      %v4016 = vpop.f32.mrb[0].mxu0
      %v4017 = vadd.f32 0.0, %v4016
      %v4018 = vpop.f32.mrb[0].mxu0
      %4019 = vmatprep.mubr.f32.mxu0 0.0
      %4020 = vmatmul.mubr.f32.gmra.mrb[0].mxu0 %v1822
      %v4021 = vpop.f32.mrb[0].mxu0
      %v4022 = vadd.f32 0.0, %v4021
      %v4023 = vpop.f32.mrb[0].mxu0
      %4024 = vmatprep.mubr.f32.mxu0 0.0
      %4025 = vmatmul.mubr.f32.gmra.mrb[0].mxu0 %v1824
      %v4026 = vpop.f32.mrb[0].mxu0
      %v4027 = vadd.f32 0.0, %v4026
      %v4028 = vpop.f32.mrb[0].mxu0
      %4029 = vmatprep.mubr.f32.mxu0 0.0
      %4030 = vmatmul.mubr.f32.gmra.mrb[0].mxu0 %v1826
      %v4031 = vpop.f32.mrb[0].mxu0
      %v4032 = vadd.f32 0.0, %v4031
      %v4033 = vpop.f32.mrb[0].mxu0
      %4034 = vmatprep.mubr.f32.mxu0 0.0
      %4035 = vmatmul.mubr.f32.gmra.mrb[0].mxu0 %v3021
      %v4036 = vpop.f32.mrb[0].mxu0
      %v4037 = vadd.f32 0.0, %v4036
      %v4038 = vpop.f32.mrb[0].mxu0
      %4039 = vmatprep.mubr.f32.mxu0 0.0
      %4040 = vmatmul.mubr.f32.gmra.mrb[0].mxu0 %v3023
      %v4041 = vpop.f32.mrb[0].mxu0
      %v4042 = vadd.f32 0.0, %v4041
      %v4043 = vpop.f32.mrb[0].mxu0
      %4044 = vmatprep.mubr.f32.mxu0 0.0
      %4045 = vmatmul.mubr.f32.gmra.mrb[0].mxu0 %v3826
      %v4046 = vpop.f32.mrb[0].mxu0
      %v4047 = vadd.f32 0.0, %v4046
      %v4048 = vpop.f32.mrb[0].mxu0
      %4049 = vmatprep.mubr.f32.mxu0 0.0
      %4050 = vmatmul.mubr.f32.gmra.mrb[0].mxu0 %v3828
      %v4051 = vpop.f32.mrb[0].mxu0
      %v4052 = vadd.f32 0.0, %v4051
      %v4053 = vpop.f32.mrb[0].mxu0
      %4054 = vdwg.mxu0
      %v4055 = vadd.f32 %v3785, %v3897
      %v4056 = vadd.f32 %v3786, %v3902
      %v4057 = vadd.f32 %v3787, %v3907
      %v4058 = vadd.f32 %v3788, %v3912
      %v4059 = vadd.f32 %v3789, %v3917
      %v4060 = vadd.f32 %v3790, %v3922
      %v4061 = vadd.f32 %v3791, %v3927
      %v4062 = vadd.f32 %v3792, %v3932
      %v4063 = vadd.f32 %v3793, %v3937
      %v4064 = vadd.f32 %v3794, %v3942
      %v4065 = vadd.f32 %v3795, %v3947
      %v4066 = vadd.f32 %v3796, %v3952
      %v4067 = vadd.f32 %v3797, %v3957
      %v4068 = vadd.f32 %v3798, %v3962
      %v4069 = vadd.f32 %v3799, %v3967
      %v4070 = vadd.f32 %v3800, %v3972
      %v4071 = vadd.f32 %v3801, %v3977
      %v4072 = vadd.f32 %v3802, %v3982
      %v4073 = vadd.f32 %v3803, %v3987
      %v4074 = vadd.f32 %v3804, %v3992
      %v4075 = vadd.f32 %v3805, %v3997
      %v4076 = vadd.f32 %v3806, %v4002
      %v4077 = vadd.f32 %v3807, %v4007
      %v4078 = vadd.f32 %v3808, %v4012
      %v4079 = vadd.f32 %v3809, %v4017
      %v4080 = vadd.f32 %v3810, %v4022
      %v4081 = vadd.f32 %v3811, %v4027
      %v4082 = vadd.f32 %v3812, %v4032
      %v4083 = vadd.f32 %v3813, %v4037
      %v4084 = vadd.f32 %v3814, %v4042
      %v4085 = vadd.f32 %v3815, %v4047
      %v4086 = vadd.f32 %v3816, %v4052
      %v4087 = vrot.slane %v1628, 2
      %v4088 = vrot.slane %v1629, 2
      %v4089 = vsel %vm1328, %v4087, %v4088
      %v4090 = vrot.slane %v1630, 2
      %v4091 = vsel %vm1328, %v4088, %v4090
      %s4092 = scalar_lea.vmem %s3, 128
      %v4093 = vld [vmem:[%s4092] sm:$0xff]
      %v4094 = vld [vmem:[%s4092 + $0x8] sm:$0xff]
      %v4095 = vsel %vm306, %v4089, 0
      %v4097 = vsel %vm306, %v4091, 0
      %4099 = vmatprep.subr.mxu0 0.0
      %4100 = vmatpush1.msra.mxu0 %v4093
      %4101 = vmatprep.subr.mxu0 0.0
      %4102 = vmatpush1.msra.mxu0 %v4094
      %4103 = vmatprep.subr.mxu0 0.0
      %4104 = vmatpush1.msra.mxu0 0.0
      %4105 = vmatprep.subr.mxu0 0.0
      %4106 = vmatpush1.msra.mxu0 0.0
      %4107 = vmatprep.subr.mxu0 0.0
      %4108 = vmatpush1.msra.mxu0 0.0
      %4109 = vmatprep.subr.mxu0 0.0
      %4110 = vmatpush1.msra.mxu0 0.0
      %4111 = vmatprep.subr.mxu0 0.0
      %4112 = vmatpush1.msra.mxu0 0.0
      %4113 = vmatprep.subr.mxu0 0.0
      %4114 = vmatpush1.msra.mxu0 0.0
      %4115 = vmatprep.subr.mxu0 0.0
      %4116 = vmatpush1.msra.mxu0 0.0
      %4117 = vmatprep.subr.mxu0 0.0
      %4118 = vmatpush1.msra.mxu0 0.0
      %4119 = vmatprep.subr.mxu0 0.0
      %4120 = vmatpush1.msra.mxu0 0.0
      %4121 = vmatprep.subr.mxu0 0.0
      %4122 = vmatpush1.msra.mxu0 0.0
      %4123 = vmatprep.subr.mxu0 0.0
      %4124 = vmatpush1.msra.mxu0 0.0
      %4125 = vmatprep.subr.mxu0 0.0
      %4126 = vmatpush1.msra.mxu0 0.0
      %4127 = vmatprep.subr.mxu0 0.0
      %4128 = vmatpush1.msra.mxu0 0.0
      %4129 = vmatprep.subr.mxu0 0.0
      %4130 = vmatpush1.msra.mxu0 0.0
      %4131 = vmatprep.subr.mxu0 0.0
      %4132 = vmatpush1.msra.mxu0 0.0
      %4133 = vmatprep.subr.mxu0 0.0
      %4134 = vmatpush1.msra.mxu0 0.0
      %4135 = vmatprep.subr.mxu0 0.0
      %4136 = vmatpush1.msra.mxu0 0.0
      %4137 = vmatprep.subr.mxu0 0.0
      %4138 = vmatpush1.msra.mxu0 0.0
      %4139 = vmatprep.subr.mxu0 0.0
      %4140 = vmatpush1.msra.mxu0 0.0
      %4141 = vmatprep.subr.mxu0 0.0
      %4142 = vmatpush1.msra.mxu0 0.0
      %4143 = vmatprep.subr.mxu0 0.0
      %4144 = vmatpush1.msra.mxu0 0.0
      %4145 = vmatprep.subr.mxu0 0.0
      %4146 = vmatpush1.msra.mxu0 0.0
      %4147 = vmatprep.subr.mxu0 0.0
      %4148 = vmatpush1.msra.mxu0 0.0
      %4149 = vmatprep.subr.mxu0 0.0
      %4150 = vmatpush1.msra.mxu0 0.0
      %4151 = vmatprep.subr.mxu0 0.0
      %4152 = vmatpush1.msra.mxu0 0.0
      %4153 = vmatprep.subr.mxu0 0.0
      %4154 = vmatpush1.msra.mxu0 0.0
      %4155 = vmatprep.subr.mxu0 0.0
      %4156 = vmatpush1.msra.mxu0 0.0
      %4157 = vmatprep.subr.mxu0 0.0
      %4158 = vmatpush1.msra.mxu0 0.0
      %4159 = vmatprep.subr.mxu0 0.0
      %4160 = vmatpush1.msra.mxu0 0.0
      %4161 = vmatprep.subr.mxu0 0.0
      %4162 = vmatpush1.msra.mxu0 0.0
      %4163 = vmatprep.mubr.f32.mxu0 0.0
      %4164 = vmatmul.mubr.f32.gmra.mrb[0].mxu0 %v2433
      %v4165 = vpop.f32.mrb[0].mxu0
      %v4166 = vadd.f32 0.0, %v4165
      %v4167 = vpop.f32.mrb[0].mxu0
      %4168 = vmatprep.mubr.f32.mxu0 0.0
      %4169 = vmatmul.mubr.f32.gmra.mrb[0].mxu0 %v2435
      %v4170 = vpop.f32.mrb[0].mxu0
      %v4171 = vadd.f32 0.0, %v4170
      %v4172 = vpop.f32.mrb[0].mxu0
      %4173 = vmatprep.mubr.f32.mxu0 0.0
      %4174 = vmatmul.mubr.f32.gmra.mrb[0].mxu0 %v2437
      %v4175 = vpop.f32.mrb[0].mxu0
      %v4176 = vadd.f32 0.0, %v4175
      %v4177 = vpop.f32.mrb[0].mxu0
      %4178 = vmatprep.mubr.f32.mxu0 0.0
      %4179 = vmatmul.mubr.f32.gmra.mrb[0].mxu0 %v2439
      %v4180 = vpop.f32.mrb[0].mxu0
      %v4181 = vadd.f32 0.0, %v4180
      %v4182 = vpop.f32.mrb[0].mxu0
      %4183 = vmatprep.mubr.f32.mxu0 0.0
      %4184 = vmatmul.mubr.f32.gmra.mrb[0].mxu0 %v2441
      %v4185 = vpop.f32.mrb[0].mxu0
      %v4186 = vadd.f32 0.0, %v4185
      %v4187 = vpop.f32.mrb[0].mxu0
      %4188 = vmatprep.mubr.f32.mxu0 0.0
      %4189 = vmatmul.mubr.f32.gmra.mrb[0].mxu0 %v2443
      %v4190 = vpop.f32.mrb[0].mxu0
      %v4191 = vadd.f32 0.0, %v4190
      %v4192 = vpop.f32.mrb[0].mxu0
      %4193 = vmatprep.mubr.f32.mxu0 0.0
      %4194 = vmatmul.mubr.f32.gmra.mrb[0].mxu0 %v2445
      %v4195 = vpop.f32.mrb[0].mxu0
      %v4196 = vadd.f32 0.0, %v4195
      %v4197 = vpop.f32.mrb[0].mxu0
      %4198 = vmatprep.mubr.f32.mxu0 0.0
      %4199 = vmatmul.mubr.f32.gmra.mrb[0].mxu0 %v2447
      %v4200 = vpop.f32.mrb[0].mxu0
      %v4201 = vadd.f32 0.0, %v4200
      %v4202 = vpop.f32.mrb[0].mxu0
      %4203 = vmatprep.mubr.f32.mxu0 0.0
      %4204 = vmatmul.mubr.f32.gmra.mrb[0].mxu0 %v2449
      %v4205 = vpop.f32.mrb[0].mxu0
      %v4206 = vadd.f32 0.0, %v4205
      %v4207 = vpop.f32.mrb[0].mxu0
      %4208 = vmatprep.mubr.f32.mxu0 0.0
      %4209 = vmatmul.mubr.f32.gmra.mrb[0].mxu0 %v2451
      %v4210 = vpop.f32.mrb[0].mxu0
      %v4211 = vadd.f32 0.0, %v4210
      %v4212 = vpop.f32.mrb[0].mxu0
      %4213 = vmatprep.mubr.f32.mxu0 0.0
      %4214 = vmatmul.mubr.f32.gmra.mrb[0].mxu0 %v2453
      %v4215 = vpop.f32.mrb[0].mxu0
      %v4216 = vadd.f32 0.0, %v4215
      %v4217 = vpop.f32.mrb[0].mxu0
      %4218 = vmatprep.mubr.f32.mxu0 0.0
      %4219 = vmatmul.mubr.f32.gmra.mrb[0].mxu0 %v2455
      %v4220 = vpop.f32.mrb[0].mxu0
      %v4221 = vadd.f32 0.0, %v4220
      %v4222 = vpop.f32.mrb[0].mxu0
      %4223 = vmatprep.mubr.f32.mxu0 0.0
      %4224 = vmatmul.mubr.f32.gmra.mrb[0].mxu0 %v2457
      %v4225 = vpop.f32.mrb[0].mxu0
      %v4226 = vadd.f32 0.0, %v4225
      %v4227 = vpop.f32.mrb[0].mxu0
      %4228 = vmatprep.mubr.f32.mxu0 0.0
      %4229 = vmatmul.mubr.f32.gmra.mrb[0].mxu0 %v2459
      %v4230 = vpop.f32.mrb[0].mxu0
      %v4231 = vadd.f32 0.0, %v4230
      %v4232 = vpop.f32.mrb[0].mxu0
      %4233 = vmatprep.mubr.f32.mxu0 0.0
      %4234 = vmatmul.mubr.f32.gmra.mrb[0].mxu0 %v2461
      %v4235 = vpop.f32.mrb[0].mxu0
      %v4236 = vadd.f32 0.0, %v4235
      %v4237 = vpop.f32.mrb[0].mxu0
      %4238 = vmatprep.mubr.f32.mxu0 0.0
      %4239 = vmatmul.mubr.f32.gmra.mrb[0].mxu0 %v2463
      %v4240 = vpop.f32.mrb[0].mxu0
      %v4241 = vadd.f32 0.0, %v4240
      %v4242 = vpop.f32.mrb[0].mxu0
      %4243 = vmatprep.mubr.f32.mxu0 0.0
      %4244 = vmatmul.mubr.f32.gmra.mrb[0].mxu0 %v2465
      %v4245 = vpop.f32.mrb[0].mxu0
      %v4246 = vadd.f32 0.0, %v4245
      %v4247 = vpop.f32.mrb[0].mxu0
      %4248 = vmatprep.mubr.f32.mxu0 0.0
      %4249 = vmatmul.mubr.f32.gmra.mrb[0].mxu0 %v2467
      %v4250 = vpop.f32.mrb[0].mxu0
      %v4251 = vadd.f32 0.0, %v4250
      %v4252 = vpop.f32.mrb[0].mxu0
      %4253 = vmatprep.mubr.f32.mxu0 0.0
      %4254 = vmatmul.mubr.f32.gmra.mrb[0].mxu0 %v2469
      %v4255 = vpop.f32.mrb[0].mxu0
      %v4256 = vadd.f32 0.0, %v4255
      %v4257 = vpop.f32.mrb[0].mxu0
      %4258 = vmatprep.mubr.f32.mxu0 0.0
      %4259 = vmatmul.mubr.f32.gmra.mrb[0].mxu0 %v2471
      %v4260 = vpop.f32.mrb[0].mxu0
      %v4261 = vadd.f32 0.0, %v4260
      %v4262 = vpop.f32.mrb[0].mxu0
      %4263 = vmatprep.mubr.f32.mxu0 0.0
      %4264 = vmatmul.mubr.f32.gmra.mrb[0].mxu0 %v2473
      %v4265 = vpop.f32.mrb[0].mxu0
      %v4266 = vadd.f32 0.0, %v4265
      %v4267 = vpop.f32.mrb[0].mxu0
      %4268 = vmatprep.mubr.f32.mxu0 0.0
      %4269 = vmatmul.mubr.f32.gmra.mrb[0].mxu0 %v2475
      %v4270 = vpop.f32.mrb[0].mxu0
      %v4271 = vadd.f32 0.0, %v4270
      %v4272 = vpop.f32.mrb[0].mxu0
      %4273 = vmatprep.mubr.f32.mxu0 0.0
      %4274 = vmatmul.mubr.f32.gmra.mrb[0].mxu0 %v2477
      %v4275 = vpop.f32.mrb[0].mxu0
      %v4276 = vadd.f32 0.0, %v4275
      %v4277 = vpop.f32.mrb[0].mxu0
      %4278 = vmatprep.mubr.f32.mxu0 0.0
      %4279 = vmatmul.mubr.f32.gmra.mrb[0].mxu0 %v2479
      %v4280 = vpop.f32.mrb[0].mxu0
      %v4281 = vadd.f32 0.0, %v4280
      %v4282 = vpop.f32.mrb[0].mxu0
      %4283 = vmatprep.mubr.f32.mxu0 0.0
      %4284 = vmatmul.mubr.f32.gmra.mrb[0].mxu0 %v2481
      %v4285 = vpop.f32.mrb[0].mxu0
      %v4286 = vadd.f32 0.0, %v4285
      %v4287 = vpop.f32.mrb[0].mxu0
      %4288 = vmatprep.mubr.f32.mxu0 0.0
      %4289 = vmatmul.mubr.f32.gmra.mrb[0].mxu0 %v2483
      %v4290 = vpop.f32.mrb[0].mxu0
      %v4291 = vadd.f32 0.0, %v4290
      %v4292 = vpop.f32.mrb[0].mxu0
      %4293 = vmatprep.mubr.f32.mxu0 0.0
      %4294 = vmatmul.mubr.f32.gmra.mrb[0].mxu0 %v2485
      %v4295 = vpop.f32.mrb[0].mxu0
      %v4296 = vadd.f32 0.0, %v4295
      %v4297 = vpop.f32.mrb[0].mxu0
      %4298 = vmatprep.mubr.f32.mxu0 0.0
      %4299 = vmatmul.mubr.f32.gmra.mrb[0].mxu0 %v2487
      %v4300 = vpop.f32.mrb[0].mxu0
      %v4301 = vadd.f32 0.0, %v4300
      %v4302 = vpop.f32.mrb[0].mxu0
      %4303 = vmatprep.mubr.f32.mxu0 0.0
      %4304 = vmatmul.mubr.f32.gmra.mrb[0].mxu0 %v3290
      %v4305 = vpop.f32.mrb[0].mxu0
      %v4306 = vadd.f32 0.0, %v4305
      %v4307 = vpop.f32.mrb[0].mxu0
      %4308 = vmatprep.mubr.f32.mxu0 0.0
      %4309 = vmatmul.mubr.f32.gmra.mrb[0].mxu0 %v3292
      %v4310 = vpop.f32.mrb[0].mxu0
      %v4311 = vadd.f32 0.0, %v4310
      %v4312 = vpop.f32.mrb[0].mxu0
      %4313 = vmatprep.mubr.f32.mxu0 0.0
      %4314 = vmatmul.mubr.f32.gmra.mrb[0].mxu0 %v4095
      %v4315 = vpop.f32.mrb[0].mxu0
      %v4316 = vadd.f32 0.0, %v4315
      %v4317 = vpop.f32.mrb[0].mxu0
      %4318 = vmatprep.mubr.f32.mxu0 0.0
      %4319 = vmatmul.mubr.f32.gmra.mrb[0].mxu0 %v4097
      %v4320 = vpop.f32.mrb[0].mxu0
      %v4321 = vadd.f32 0.0, %v4320
      %v4322 = vpop.f32.mrb[0].mxu0
      %4323 = vdwg.mxu0
      %v4324 = vadd.f32 %v4055, %v4166
      %v4325 = vadd.f32 %v4056, %v4171
      %v4326 = vadd.f32 %v4057, %v4176
      %v4327 = vadd.f32 %v4058, %v4181
      %v4328 = vadd.f32 %v4059, %v4186
      %v4329 = vadd.f32 %v4060, %v4191
      %v4330 = vadd.f32 %v4061, %v4196
      %v4331 = vadd.f32 %v4062, %v4201
      %v4332 = vadd.f32 %v4063, %v4206
      %v4333 = vadd.f32 %v4064, %v4211
      %v4334 = vadd.f32 %v4065, %v4216
      %v4335 = vadd.f32 %v4066, %v4221
      %v4336 = vadd.f32 %v4067, %v4226
      %v4337 = vadd.f32 %v4068, %v4231
      %v4338 = vadd.f32 %v4069, %v4236
      %v4339 = vadd.f32 %v4070, %v4241
      %v4340 = vadd.f32 %v4071, %v4246
      %v4341 = vadd.f32 %v4072, %v4251
      %v4342 = vadd.f32 %v4073, %v4256
      %v4343 = vadd.f32 %v4074, %v4261
      %v4344 = vadd.f32 %v4075, %v4266
      %v4345 = vadd.f32 %v4076, %v4271
      %v4346 = vadd.f32 %v4077, %v4276
      %v4347 = vadd.f32 %v4078, %v4281
      %v4348 = vadd.f32 %v4079, %v4286
      %v4349 = vadd.f32 %v4080, %v4291
      %v4350 = vadd.f32 %v4081, %v4296
      %v4351 = vadd.f32 %v4082, %v4301
      %v4352 = vadd.f32 %v4083, %v4306
      %v4353 = vadd.f32 %v4084, %v4311
      %v4354 = vadd.f32 %v4085, %v4316
      %v4355 = vadd.f32 %v4086, %v4321
      %v4356 = vld [vmem:[%s4] sm:$0x1]
      %v4358 = vlaneseq
      %v4359 = vshrl.u32 %v4358, 7
      %v4360 = vsub.s32 0, %v4359
      %v4361 = vrot.slane %v4356, %v4360
      %v4363 = vadd.f32 %v4324, %v4361
      %v4364 = vadd.f32 %v4325, %v4361
      %v4365 = vadd.f32 %v4326, %v4361
      %v4366 = vadd.f32 %v4327, %v4361
      %v4367 = vadd.f32 %v4328, %v4361
      %v4368 = vadd.f32 %v4329, %v4361
      %v4369 = vadd.f32 %v4330, %v4361
      %v4370 = vadd.f32 %v4331, %v4361
      %v4371 = vadd.f32 %v4332, %v4361
      %v4372 = vadd.f32 %v4333, %v4361
      %v4373 = vadd.f32 %v4334, %v4361
      %v4374 = vadd.f32 %v4335, %v4361
      %v4375 = vadd.f32 %v4336, %v4361
      %v4376 = vadd.f32 %v4337, %v4361
      %v4377 = vadd.f32 %v4338, %v4361
      %v4378 = vadd.f32 %v4339, %v4361
      %v4379 = vadd.f32 %v4340, %v4361
      %v4380 = vadd.f32 %v4341, %v4361
      %v4381 = vadd.f32 %v4342, %v4361
      %v4382 = vadd.f32 %v4343, %v4361
      %v4383 = vadd.f32 %v4344, %v4361
      %v4384 = vadd.f32 %v4345, %v4361
      %v4385 = vadd.f32 %v4346, %v4361
      %v4386 = vadd.f32 %v4347, %v4361
      %v4387 = vadd.f32 %v4348, %v4361
      %v4388 = vadd.f32 %v4349, %v4361
      %v4389 = vadd.f32 %v4350, %v4361
      %v4390 = vadd.f32 %v4351, %v4361
      %v4391 = vadd.f32 %v4352, %v4361
      %v4392 = vadd.f32 %v4353, %v4361
      %v4393 = vadd.f32 %v4354, %v4361
      %v4394 = vadd.f32 %v4355, %v4361
      %v4395 = vmax.f32 %v4363, 0.0
      %v4396 = vmax.f32 %v4364, 0.0
      %v4397 = vmax.f32 %v4365, 0.0
      %v4398 = vmax.f32 %v4366, 0.0
      %v4399 = vmax.f32 %v4367, 0.0
      %v4400 = vmax.f32 %v4368, 0.0
      %v4401 = vmax.f32 %v4369, 0.0
      %v4402 = vmax.f32 %v4370, 0.0
      %v4403 = vmax.f32 %v4371, 0.0
      %v4404 = vmax.f32 %v4372, 0.0
      %v4405 = vmax.f32 %v4373, 0.0
      %v4406 = vmax.f32 %v4374, 0.0
      %v4407 = vmax.f32 %v4375, 0.0
      %v4408 = vmax.f32 %v4376, 0.0
      %v4409 = vmax.f32 %v4377, 0.0
      %v4410 = vmax.f32 %v4378, 0.0
      %v4411 = vmax.f32 %v4379, 0.0
      %v4412 = vmax.f32 %v4380, 0.0
      %v4413 = vmax.f32 %v4381, 0.0
      %v4414 = vmax.f32 %v4382, 0.0
      %v4415 = vmax.f32 %v4383, 0.0
      %v4416 = vmax.f32 %v4384, 0.0
      %v4417 = vmax.f32 %v4385, 0.0
      %v4418 = vmax.f32 %v4386, 0.0
      %v4419 = vmax.f32 %v4387, 0.0
      %v4420 = vmax.f32 %v4388, 0.0
      %v4421 = vmax.f32 %v4389, 0.0
      %v4422 = vmax.f32 %v4390, 0.0
      %v4423 = vmax.f32 %v4391, 0.0
      %v4424 = vmax.f32 %v4392, 0.0
      %v4425 = vmax.f32 %v4393, 0.0
      %v4426 = vmax.f32 %v4394, 0.0
      %4459 = vrot.lane.b32.xlu0 %v4395, 112
      %v4460 = vpop.permute.xlu0 %4459
      %4461 = vrot.lane.b32.xlu0 %v4396, 112
      %v4462 = vpop.permute.xlu0 %4461
      %4463 = vrot.lane.b32.xlu0 %v4397, 112
      %v4464 = vpop.permute.xlu0 %4463
      %4465 = vrot.lane.b32.xlu0 %v4398, 112
      %v4466 = vpop.permute.xlu0 %4465
      %4467 = vrot.lane.b32.xlu0 %v4399, 112
      %v4468 = vpop.permute.xlu0 %4467
      %4469 = vrot.lane.b32.xlu0 %v4400, 112
      %v4470 = vpop.permute.xlu0 %4469
      %4471 = vrot.lane.b32.xlu0 %v4401, 112
      %v4472 = vpop.permute.xlu0 %4471
      %4473 = vrot.lane.b32.xlu0 %v4402, 112
      %v4474 = vpop.permute.xlu0 %4473
      %4475 = vrot.lane.b32.xlu0 %v4403, 112
      %v4476 = vpop.permute.xlu0 %4475
      %4477 = vrot.lane.b32.xlu0 %v4404, 112
      %v4478 = vpop.permute.xlu0 %4477
      %4479 = vrot.lane.b32.xlu0 %v4405, 112
      %v4480 = vpop.permute.xlu0 %4479
      %4481 = vrot.lane.b32.xlu0 %v4406, 112
      %v4482 = vpop.permute.xlu0 %4481
      %4483 = vrot.lane.b32.xlu0 %v4407, 112
      %v4484 = vpop.permute.xlu0 %4483
      %4485 = vrot.lane.b32.xlu0 %v4408, 112
      %v4486 = vpop.permute.xlu0 %4485
      %4487 = vrot.lane.b32.xlu0 %v4409, 112
      %v4488 = vpop.permute.xlu0 %4487
      %4489 = vrot.lane.b32.xlu0 %v4410, 112
      %v4490 = vpop.permute.xlu0 %4489
      %4491 = vrot.lane.b32.xlu0 %v4411, 112
      %v4492 = vpop.permute.xlu0 %4491
      %4493 = vrot.lane.b32.xlu0 %v4412, 112
      %v4494 = vpop.permute.xlu0 %4493
      %4495 = vrot.lane.b32.xlu0 %v4413, 112
      %v4496 = vpop.permute.xlu0 %4495
      %4497 = vrot.lane.b32.xlu0 %v4414, 112
      %v4498 = vpop.permute.xlu0 %4497
      %4499 = vrot.lane.b32.xlu0 %v4415, 112
      %v4500 = vpop.permute.xlu0 %4499
      %4501 = vrot.lane.b32.xlu0 %v4416, 112
      %v4502 = vpop.permute.xlu0 %4501
      %4503 = vrot.lane.b32.xlu0 %v4417, 112
      %v4504 = vpop.permute.xlu0 %4503
      %4505 = vrot.lane.b32.xlu0 %v4418, 112
      %v4506 = vpop.permute.xlu0 %4505
      %4507 = vrot.lane.b32.xlu0 %v4419, 112
      %v4508 = vpop.permute.xlu0 %4507
      %4509 = vrot.lane.b32.xlu0 %v4420, 112
      %v4510 = vpop.permute.xlu0 %4509
      %4511 = vrot.lane.b32.xlu0 %v4421, 112
      %v4512 = vpop.permute.xlu0 %4511
      %4513 = vrot.lane.b32.xlu0 %v4422, 112
      %v4514 = vpop.permute.xlu0 %4513
      %4515 = vrot.lane.b32.xlu0 %v4423, 112
      %v4516 = vpop.permute.xlu0 %4515
      %4517 = vrot.lane.b32.xlu0 %v4424, 112
      %v4518 = vpop.permute.xlu0 %4517
      %4519 = vrot.lane.b32.xlu0 %v4425, 112
      %v4520 = vpop.permute.xlu0 %4519
      %4521 = vrot.lane.b32.xlu0 %v4426, 112
      %v4522 = vpop.permute.xlu0 %4521
      %4555 = vst.msk [vmem:[%s1544 + $0x1] sm:$0xff] %vm306, %v4460
      %4556 = vst.msk [vmem:[%s1544 + $0x9] sm:$0xff] %vm306, %v4462
      %4557 = vst.msk [vmem:[%s1544 + $0x19] sm:$0xff] %vm306, %v4464
      %4558 = vst.msk [vmem:[%s1544 + $0x21] sm:$0xff] %vm306, %v4466
      %4559 = vst.msk [vmem:[%s1544 + $0x31] sm:$0xff] %vm306, %v4468
      %4560 = vst.msk [vmem:[%s1544 + $0x39] sm:$0xff] %vm306, %v4470
      %4561 = vst.msk [vmem:[%s1544 + $0x49] sm:$0xff] %vm306, %v4472
      %4562 = vst.msk [vmem:[%s1544 + $0x51] sm:$0xff] %vm306, %v4474
      %4563 = vst.msk [vmem:[%s1544 + $0x61] sm:$0xff] %vm306, %v4476
      %4564 = vst.msk [vmem:[%s1544 + $0x69] sm:$0xff] %vm306, %v4478
      %4565 = vst.msk [vmem:[%s1544 + $0x79] sm:$0xff] %vm306, %v4480
      %4566 = vst.msk [vmem:[%s1544 + $0x81] sm:$0xff] %vm306, %v4482
      %4567 = vst.msk [vmem:[%s1544 + $0x91] sm:$0xff] %vm306, %v4484
      %4568 = vst.msk [vmem:[%s1544 + $0x99] sm:$0xff] %vm306, %v4486
      %4569 = vst.msk [vmem:[%s1544 + $0xa9] sm:$0xff] %vm306, %v4488
      %4570 = vst.msk [vmem:[%s1544 + $0xb1] sm:$0xff] %vm306, %v4490
      %4571 = vst.msk [vmem:[%s1544 + $0xc1] sm:$0xff] %vm306, %v4492
      %4572 = vst.msk [vmem:[%s1544 + $0xc9] sm:$0xff] %vm306, %v4494
      %4573 = vst.msk [vmem:[%s1544 + $0xd9] sm:$0xff] %vm306, %v4496
      %4574 = vst.msk [vmem:[%s1544 + $0xe1] sm:$0xff] %vm306, %v4498
      %4575 = vst.msk [vmem:[%s1544 + $0xf1] sm:$0xff] %vm306, %v4500
      %4576 = vst.msk [vmem:[%s1544 + $0xf9] sm:$0xff] %vm306, %v4502
      %4577 = vst.msk [vmem:[%s1544 + $0x109] sm:$0xff] %vm306, %v4504
      %4578 = vst.msk [vmem:[%s1544 + $0x111] sm:$0xff] %vm306, %v4506
      %4579 = vst.msk [vmem:[%s1544 + $0x121] sm:$0xff] %vm306, %v4508
      %4580 = vst.msk [vmem:[%s1544 + $0x129] sm:$0xff] %vm306, %v4510
      %4581 = vst.msk [vmem:[%s1544 + $0x139] sm:$0xff] %vm306, %v4512
      %4582 = vst.msk [vmem:[%s1544 + $0x141] sm:$0xff] %vm306, %v4514
      %4583 = vst.msk [vmem:[%s1544 + $0x151] sm:$0xff] %vm306, %v4516
      %4584 = vst.msk [vmem:[%s1544 + $0x159] sm:$0xff] %vm306, %v4518
      %4585 = vst.msk [vmem:[%s1544 + $0x169] sm:$0xff] %vm306, %v4520
      %4586 = vst.msk [vmem:[%s1544 + $0x171] sm:$0xff] %vm306, %v4522
      %v4587 = vld [vmem:[#allocation2] sm:$0xff]
      %v4588 = vld [vmem:[#allocation2 + $0x8] sm:$0xff]
      %v4589 = vld [vmem:[#allocation2 + $0x10] sm:$0x3]
      %v4590 = vld [vmem:[#allocation2 + $0x18] sm:$0xff]
      %v4591 = vld [vmem:[#allocation2 + $0x20] sm:$0xff]
      %v4592 = vld [vmem:[#allocation2 + $0x28] sm:$0x3]
      %v4593 = vld [vmem:[#allocation2 + $0x30] sm:$0xff]
      %v4594 = vld [vmem:[#allocation2 + $0x38] sm:$0xff]
      %v4595 = vld [vmem:[#allocation2 + $0x40] sm:$0x3]
      %v4596 = vld [vmem:[#allocation2 + $0x48] sm:$0xff]
      %v4597 = vld [vmem:[#allocation2 + $0x50] sm:$0xff]
      %v4598 = vld [vmem:[#allocation2 + $0x58] sm:$0x3]
      %v4599 = vld [vmem:[#allocation2 + $0x60] sm:$0xff]
      %v4600 = vld [vmem:[#allocation2 + $0x68] sm:$0xff]
      %v4601 = vld [vmem:[#allocation2 + $0x70] sm:$0x3]
      %v4602 = vld [vmem:[#allocation2 + $0x78] sm:$0xff]
      %v4603 = vld [vmem:[#allocation2 + $0x80] sm:$0xff]
      %v4604 = vld [vmem:[#allocation2 + $0x88] sm:$0x3]
      %v4605 = vld [vmem:[#allocation2 + $0x90] sm:$0xff]
      %v4606 = vld [vmem:[#allocation2 + $0x98] sm:$0xff]
      %v4607 = vld [vmem:[#allocation2 + $0xa0] sm:$0x3]
      %v4608 = vld [vmem:[#allocation2 + $0xa8] sm:$0xff]
      %v4609 = vld [vmem:[#allocation2 + $0xb0] sm:$0xff]
      %v4610 = vld [vmem:[#allocation2 + $0xb8] sm:$0x3]
      %v4611 = vld [vmem:[#allocation2 + $0xc0] sm:$0xff]
      %v4612 = vld [vmem:[#allocation2 + $0xc8] sm:$0xff]
      %v4613 = vld [vmem:[#allocation2 + $0xd0] sm:$0x3]
      %v4614 = vld [vmem:[#allocation2 + $0xd8] sm:$0xff]
      %v4615 = vld [vmem:[#allocation2 + $0xe0] sm:$0xff]
      %v4616 = vld [vmem:[#allocation2 + $0xe8] sm:$0x3]
      %v4617 = vld [vmem:[#allocation2 + $0xf0] sm:$0xff]
      %v4618 = vld [vmem:[#allocation2 + $0xf8] sm:$0xff]
      %v4619 = vld [vmem:[#allocation2 + $0x100] sm:$0x3]
      %v4620 = vld [vmem:[#allocation2 + $0x108] sm:$0xff]
      %v4621 = vld [vmem:[#allocation2 + $0x110] sm:$0xff]
      %v4622 = vld [vmem:[#allocation2 + $0x118] sm:$0x3]
      %v4623 = vld [vmem:[#allocation2 + $0x120] sm:$0xff]
      %v4624 = vld [vmem:[#allocation2 + $0x128] sm:$0xff]
      %v4625 = vld [vmem:[#allocation2 + $0x130] sm:$0x3]
      %v4626 = vld [vmem:[#allocation2 + $0x138] sm:$0xff]
      %v4627 = vld [vmem:[#allocation2 + $0x140] sm:$0xff]
      %v4628 = vld [vmem:[#allocation2 + $0x148] sm:$0x3]
      %v4629 = vld [vmem:[#allocation2 + $0x150] sm:$0xff]
      %v4630 = vld [vmem:[#allocation2 + $0x158] sm:$0xff]
      %v4631 = vld [vmem:[#allocation2 + $0x160] sm:$0x3]
      %v4632 = vld [vmem:[#allocation2 + $0x168] sm:$0xff]
      %v4633 = vld [vmem:[#allocation2 + $0x170] sm:$0xff]
      %v4634 = vld [vmem:[#allocation2 + $0x178] sm:$0x3]
      %v4635 = vld [vmem:[#allocation2 + $0x180] sm:$0xff]
      %v4636 = vld [vmem:[#allocation2 + $0x188] sm:$0xff]
      %v4637 = vld [vmem:[#allocation2 + $0x190] sm:$0x3]
      %v4638 = vld [vmem:[#allocation2 + $0x198] sm:$0xff]
      %v4639 = vld [vmem:[#allocation2 + $0x1a0] sm:$0xff]
      %v4640 = vld [vmem:[#allocation2 + $0x1a8] sm:$0x3]
      %v4641 = vld [vmem:[%s5] sm:$0xff]
      %v4642 = vld [vmem:[%s5 + $0x8] sm:$0xff]
      %v4691 = vrot.slane %v4587, 1
      %v4692 = vrot.slane %v4588, 1
      %v4693 = vsel %vm1183, %v4691, %v4692
      %v4694 = vrot.slane %v4589, 1
      %v4695 = vsel %vm1183, %v4692, %v4694
      %v4696 = vrot.slane %v4590, 1
      %v4697 = vrot.slane %v4591, 1
      %v4698 = vsel %vm1183, %v4696, %v4697
      %v4699 = vrot.slane %v4592, 1
      %v4700 = vsel %vm1183, %v4697, %v4699
      %v4701 = vrot.slane %v4593, 1
      %v4702 = vrot.slane %v4594, 1
      %v4703 = vsel %vm1183, %v4701, %v4702
      %v4704 = vrot.slane %v4595, 1
      %v4705 = vsel %vm1183, %v4702, %v4704
      %v4706 = vrot.slane %v4596, 1
      %v4707 = vrot.slane %v4597, 1
      %v4708 = vsel %vm1183, %v4706, %v4707
      %v4709 = vrot.slane %v4598, 1
      %v4710 = vsel %vm1183, %v4707, %v4709
      %v4711 = vrot.slane %v4599, 1
      %v4712 = vrot.slane %v4600, 1
      %v4713 = vsel %vm1183, %v4711, %v4712
      %v4714 = vrot.slane %v4601, 1
      %v4715 = vsel %vm1183, %v4712, %v4714
      %v4716 = vrot.slane %v4602, 1
      %v4717 = vrot.slane %v4603, 1
      %v4718 = vsel %vm1183, %v4716, %v4717
      %v4719 = vrot.slane %v4604, 1
      %v4720 = vsel %vm1183, %v4717, %v4719
      %v4721 = vrot.slane %v4605, 1
      %v4722 = vrot.slane %v4606, 1
      %v4723 = vsel %vm1183, %v4721, %v4722
      %v4724 = vrot.slane %v4607, 1
      %v4725 = vsel %vm1183, %v4722, %v4724
      %v4726 = vrot.slane %v4608, 1
      %v4727 = vrot.slane %v4609, 1
      %v4728 = vsel %vm1183, %v4726, %v4727
      %v4729 = vrot.slane %v4610, 1
      %v4730 = vsel %vm1183, %v4727, %v4729
      %v4731 = vrot.slane %v4611, 1
      %v4732 = vrot.slane %v4612, 1
      %v4733 = vsel %vm1183, %v4731, %v4732
      %v4734 = vrot.slane %v4613, 1
      %v4735 = vsel %vm1183, %v4732, %v4734
      %v4736 = vrot.slane %v4614, 1
      %v4737 = vrot.slane %v4615, 1
      %v4738 = vsel %vm1183, %v4736, %v4737
      %v4739 = vrot.slane %v4616, 1
      %v4740 = vsel %vm1183, %v4737, %v4739
      %v4741 = vrot.slane %v4617, 1
      %v4742 = vrot.slane %v4618, 1
      %v4743 = vsel %vm1183, %v4741, %v4742
      %v4744 = vrot.slane %v4619, 1
      %v4745 = vsel %vm1183, %v4742, %v4744
      %v4746 = vrot.slane %v4620, 1
      %v4747 = vrot.slane %v4621, 1
      %v4748 = vsel %vm1183, %v4746, %v4747
      %v4749 = vrot.slane %v4622, 1
      %v4750 = vsel %vm1183, %v4747, %v4749
      %v4751 = vrot.slane %v4623, 1
      %v4752 = vrot.slane %v4624, 1
      %v4753 = vsel %vm1183, %v4751, %v4752
      %v4754 = vrot.slane %v4625, 1
      %v4755 = vsel %vm1183, %v4752, %v4754
      %v4756 = vrot.slane %v4626, 1
      %v4757 = vrot.slane %v4627, 1
      %v4758 = vsel %vm1183, %v4756, %v4757
      %v4759 = vrot.slane %v4628, 1
      %v4760 = vsel %vm1183, %v4757, %v4759
      %v4761 = vrot.slane %v4629, 1
      %v4762 = vrot.slane %v4630, 1
      %v4763 = vsel %vm1183, %v4761, %v4762
      %v4764 = vrot.slane %v4631, 1
      %v4765 = vsel %vm1183, %v4762, %v4764
      %v4766 = vrot.slane %v4632, 1
      %v4767 = vrot.slane %v4633, 1
      %v4768 = vsel %vm1183, %v4766, %v4767
      %v4769 = vrot.slane %v4634, 1
      %v4770 = vsel %vm1183, %v4767, %v4769
      %s4771 = scalar_lea.vmem %s5, 16
      %v4772 = vld [vmem:[%s4771] sm:$0xff]
      %v4773 = vld [vmem:[%s4771 + $0x8] sm:$0xff]
      %v4774 = vsel %vm306, %v4693, 0
      %v4776 = vsel %vm306, %v4695, 0
      %v4778 = vsel %vm306, %v4698, 0
      %v4780 = vsel %vm306, %v4700, 0
      %v4782 = vsel %vm306, %v4703, 0
      %v4784 = vsel %vm306, %v4705, 0
      %v4786 = vsel %vm306, %v4708, 0
      %v4788 = vsel %vm306, %v4710, 0
      %v4790 = vsel %vm306, %v4713, 0
      %v4792 = vsel %vm306, %v4715, 0
      %v4794 = vsel %vm306, %v4718, 0
      %v4796 = vsel %vm306, %v4720, 0
      %v4798 = vsel %vm306, %v4723, 0
      %v4800 = vsel %vm306, %v4725, 0
      %v4802 = vsel %vm306, %v4728, 0
      %v4804 = vsel %vm306, %v4730, 0
      %v4806 = vsel %vm306, %v4733, 0
      %v4808 = vsel %vm306, %v4735, 0
      %v4810 = vsel %vm306, %v4738, 0
      %v4812 = vsel %vm306, %v4740, 0
      %v4814 = vsel %vm306, %v4743, 0
      %v4816 = vsel %vm306, %v4745, 0
      %v4818 = vsel %vm306, %v4748, 0
      %v4820 = vsel %vm306, %v4750, 0
      %v4822 = vsel %vm306, %v4753, 0
      %v4824 = vsel %vm306, %v4755, 0
      %v4826 = vsel %vm306, %v4758, 0
      %v4828 = vsel %vm306, %v4760, 0
      %v4830 = vsel %vm306, %v4763, 0
      %v4832 = vsel %vm306, %v4765, 0
      %v4834 = vsel %vm306, %v4768, 0
      %v4836 = vsel %vm306, %v4770, 0
      %4838 = vmatprep.subr.mxu0 0.0
      %4839 = vmatpush1.msra.mxu0 %v4772
      %4840 = vmatprep.subr.mxu0 0.0
      %4841 = vmatpush1.msra.mxu0 %v4773
      %4842 = vmatprep.subr.mxu0 0.0
      %4843 = vmatpush1.msra.mxu0 0.0
      %4844 = vmatprep.subr.mxu0 0.0
      %4845 = vmatpush1.msra.mxu0 0.0
      %4846 = vmatprep.subr.mxu0 0.0
      %4847 = vmatpush1.msra.mxu0 0.0
      %4848 = vmatprep.subr.mxu0 0.0
      %4849 = vmatpush1.msra.mxu0 0.0
      %4850 = vmatprep.subr.mxu0 0.0
      %4851 = vmatpush1.msra.mxu0 0.0
      %4852 = vmatprep.subr.mxu0 0.0
      %4853 = vmatpush1.msra.mxu0 0.0
      %4854 = vmatprep.subr.mxu0 0.0
      %4855 = vmatpush1.msra.mxu0 0.0
      %4856 = vmatprep.subr.mxu0 0.0
      %4857 = vmatpush1.msra.mxu0 0.0
      %4858 = vmatprep.subr.mxu0 0.0
      %4859 = vmatpush1.msra.mxu0 0.0
      %4860 = vmatprep.subr.mxu0 0.0
      %4861 = vmatpush1.msra.mxu0 0.0
      %4862 = vmatprep.subr.mxu0 0.0
      %4863 = vmatpush1.msra.mxu0 0.0
      %4864 = vmatprep.subr.mxu0 0.0
      %4865 = vmatpush1.msra.mxu0 0.0
      %4866 = vmatprep.subr.mxu0 0.0
      %4867 = vmatpush1.msra.mxu0 0.0
      %4868 = vmatprep.subr.mxu0 0.0
      %4869 = vmatpush1.msra.mxu0 0.0
      %4870 = vmatprep.subr.mxu0 0.0
      %4871 = vmatpush1.msra.mxu0 0.0
      %4872 = vmatprep.subr.mxu0 0.0
      %4873 = vmatpush1.msra.mxu0 0.0
      %4874 = vmatprep.subr.mxu0 0.0
      %4875 = vmatpush1.msra.mxu0 0.0
      %4876 = vmatprep.subr.mxu0 0.0
      %4877 = vmatpush1.msra.mxu0 0.0
      %4878 = vmatprep.subr.mxu0 0.0
      %4879 = vmatpush1.msra.mxu0 0.0
      %4880 = vmatprep.subr.mxu0 0.0
      %4881 = vmatpush1.msra.mxu0 0.0
      %4882 = vmatprep.subr.mxu0 0.0
      %4883 = vmatpush1.msra.mxu0 0.0
      %4884 = vmatprep.subr.mxu0 0.0
      %4885 = vmatpush1.msra.mxu0 0.0
      %4886 = vmatprep.subr.mxu0 0.0
      %4887 = vmatpush1.msra.mxu0 0.0
      %4888 = vmatprep.subr.mxu0 0.0
      %4889 = vmatpush1.msra.mxu0 0.0
      %4890 = vmatprep.subr.mxu0 0.0
      %4891 = vmatpush1.msra.mxu0 0.0
      %4892 = vmatprep.subr.mxu0 0.0
      %4893 = vmatpush1.msra.mxu0 0.0
      %4894 = vmatprep.subr.mxu0 0.0
      %4895 = vmatpush1.msra.mxu0 0.0
      %4896 = vmatprep.subr.mxu0 0.0
      %4897 = vmatpush1.msra.mxu0 0.0
      %4898 = vmatprep.subr.mxu0 0.0
      %4899 = vmatpush1.msra.mxu0 0.0
      %4900 = vmatprep.subr.mxu0 0.0
      %4901 = vmatpush1.msra.mxu0 0.0
      %4902 = vmatprep.mubr.f32.mxu0 0.0
      %4903 = vmatmul.mubr.f32.gmra.mrb[0].mxu0 %v4774
      %v4904 = vpop.f32.mrb[0].mxu0
      %v4905 = vadd.f32 0.0, %v4904
      %v4906 = vpop.f32.mrb[0].mxu0
      %4907 = vmatprep.mubr.f32.mxu0 0.0
      %4908 = vmatmul.mubr.f32.gmra.mrb[0].mxu0 %v4776
      %v4909 = vpop.f32.mrb[0].mxu0
      %v4910 = vadd.f32 0.0, %v4909
      %v4911 = vpop.f32.mrb[0].mxu0
      %4912 = vmatprep.mubr.f32.mxu0 0.0
      %4913 = vmatmul.mubr.f32.gmra.mrb[0].mxu0 %v4778
      %v4914 = vpop.f32.mrb[0].mxu0
      %v4915 = vadd.f32 0.0, %v4914
      %v4916 = vpop.f32.mrb[0].mxu0
      %4917 = vmatprep.mubr.f32.mxu0 0.0
      %4918 = vmatmul.mubr.f32.gmra.mrb[0].mxu0 %v4780
      %v4919 = vpop.f32.mrb[0].mxu0
      %v4920 = vadd.f32 0.0, %v4919
      %v4921 = vpop.f32.mrb[0].mxu0
      %4922 = vmatprep.mubr.f32.mxu0 0.0
      %4923 = vmatmul.mubr.f32.gmra.mrb[0].mxu0 %v4782
      %v4924 = vpop.f32.mrb[0].mxu0
      %v4925 = vadd.f32 0.0, %v4924
      %v4926 = vpop.f32.mrb[0].mxu0
      %4927 = vmatprep.mubr.f32.mxu0 0.0
      %4928 = vmatmul.mubr.f32.gmra.mrb[0].mxu0 %v4784
      %v4929 = vpop.f32.mrb[0].mxu0
      %v4930 = vadd.f32 0.0, %v4929
      %v4931 = vpop.f32.mrb[0].mxu0
      %4932 = vmatprep.mubr.f32.mxu0 0.0
      %4933 = vmatmul.mubr.f32.gmra.mrb[0].mxu0 %v4786
      %v4934 = vpop.f32.mrb[0].mxu0
      %v4935 = vadd.f32 0.0, %v4934
      %v4936 = vpop.f32.mrb[0].mxu0
      %4937 = vmatprep.mubr.f32.mxu0 0.0
      %4938 = vmatmul.mubr.f32.gmra.mrb[0].mxu0 %v4788
      %v4939 = vpop.f32.mrb[0].mxu0
      %v4940 = vadd.f32 0.0, %v4939
      %v4941 = vpop.f32.mrb[0].mxu0
      %4942 = vmatprep.mubr.f32.mxu0 0.0
      %4943 = vmatmul.mubr.f32.gmra.mrb[0].mxu0 %v4790
      %v4944 = vpop.f32.mrb[0].mxu0
      %v4945 = vadd.f32 0.0, %v4944
      %v4946 = vpop.f32.mrb[0].mxu0
      %4947 = vmatprep.mubr.f32.mxu0 0.0
      %4948 = vmatmul.mubr.f32.gmra.mrb[0].mxu0 %v4792
      %v4949 = vpop.f32.mrb[0].mxu0
      %v4950 = vadd.f32 0.0, %v4949
      %v4951 = vpop.f32.mrb[0].mxu0
      %4952 = vmatprep.mubr.f32.mxu0 0.0
      %4953 = vmatmul.mubr.f32.gmra.mrb[0].mxu0 %v4794
      %v4954 = vpop.f32.mrb[0].mxu0
      %v4955 = vadd.f32 0.0, %v4954
      %v4956 = vpop.f32.mrb[0].mxu0
      %4957 = vmatprep.mubr.f32.mxu0 0.0
      %4958 = vmatmul.mubr.f32.gmra.mrb[0].mxu0 %v4796
      %v4959 = vpop.f32.mrb[0].mxu0
      %v4960 = vadd.f32 0.0, %v4959
      %v4961 = vpop.f32.mrb[0].mxu0
      %4962 = vmatprep.mubr.f32.mxu0 0.0
      %4963 = vmatmul.mubr.f32.gmra.mrb[0].mxu0 %v4798
      %v4964 = vpop.f32.mrb[0].mxu0
      %v4965 = vadd.f32 0.0, %v4964
      %v4966 = vpop.f32.mrb[0].mxu0
      %4967 = vmatprep.mubr.f32.mxu0 0.0
      %4968 = vmatmul.mubr.f32.gmra.mrb[0].mxu0 %v4800
      %v4969 = vpop.f32.mrb[0].mxu0
      %v4970 = vadd.f32 0.0, %v4969
      %v4971 = vpop.f32.mrb[0].mxu0
      %4972 = vmatprep.mubr.f32.mxu0 0.0
      %4973 = vmatmul.mubr.f32.gmra.mrb[0].mxu0 %v4802
      %v4974 = vpop.f32.mrb[0].mxu0
      %v4975 = vadd.f32 0.0, %v4974
      %v4976 = vpop.f32.mrb[0].mxu0
      %4977 = vmatprep.mubr.f32.mxu0 0.0
      %4978 = vmatmul.mubr.f32.gmra.mrb[0].mxu0 %v4804
      %v4979 = vpop.f32.mrb[0].mxu0
      %v4980 = vadd.f32 0.0, %v4979
      %v4981 = vpop.f32.mrb[0].mxu0
      %4982 = vmatprep.mubr.f32.mxu0 0.0
      %4983 = vmatmul.mubr.f32.gmra.mrb[0].mxu0 %v4806
      %v4984 = vpop.f32.mrb[0].mxu0
      %v4985 = vadd.f32 0.0, %v4984
      %v4986 = vpop.f32.mrb[0].mxu0
      %4987 = vmatprep.mubr.f32.mxu0 0.0
      %4988 = vmatmul.mubr.f32.gmra.mrb[0].mxu0 %v4808
      %v4989 = vpop.f32.mrb[0].mxu0
      %v4990 = vadd.f32 0.0, %v4989
      %v4991 = vpop.f32.mrb[0].mxu0
      %4992 = vmatprep.mubr.f32.mxu0 0.0
      %4993 = vmatmul.mubr.f32.gmra.mrb[0].mxu0 %v4810
      %v4994 = vpop.f32.mrb[0].mxu0
      %v4995 = vadd.f32 0.0, %v4994
      %v4996 = vpop.f32.mrb[0].mxu0
      %4997 = vmatprep.mubr.f32.mxu0 0.0
      %4998 = vmatmul.mubr.f32.gmra.mrb[0].mxu0 %v4812
      %v4999 = vpop.f32.mrb[0].mxu0
      %v5000 = vadd.f32 0.0, %v4999
      %v5001 = vpop.f32.mrb[0].mxu0
      %5002 = vmatprep.mubr.f32.mxu0 0.0
      %5003 = vmatmul.mubr.f32.gmra.mrb[0].mxu0 %v4814
      %v5004 = vpop.f32.mrb[0].mxu0
      %v5005 = vadd.f32 0.0, %v5004
      %v5006 = vpop.f32.mrb[0].mxu0
      %5007 = vmatprep.mubr.f32.mxu0 0.0
      %5008 = vmatmul.mubr.f32.gmra.mrb[0].mxu0 %v4816
      %v5009 = vpop.f32.mrb[0].mxu0
      %v5010 = vadd.f32 0.0, %v5009
      %v5011 = vpop.f32.mrb[0].mxu0
      %5012 = vmatprep.mubr.f32.mxu0 0.0
      %5013 = vmatmul.mubr.f32.gmra.mrb[0].mxu0 %v4818
      %v5014 = vpop.f32.mrb[0].mxu0
      %v5015 = vadd.f32 0.0, %v5014
      %v5016 = vpop.f32.mrb[0].mxu0
      %5017 = vmatprep.mubr.f32.mxu0 0.0
      %5018 = vmatmul.mubr.f32.gmra.mrb[0].mxu0 %v4820
      %v5019 = vpop.f32.mrb[0].mxu0
      %v5020 = vadd.f32 0.0, %v5019
      %v5021 = vpop.f32.mrb[0].mxu0
      %5022 = vmatprep.mubr.f32.mxu0 0.0
      %5023 = vmatmul.mubr.f32.gmra.mrb[0].mxu0 %v4822
      %v5024 = vpop.f32.mrb[0].mxu0
      %v5025 = vadd.f32 0.0, %v5024
      %v5026 = vpop.f32.mrb[0].mxu0
      %5027 = vmatprep.mubr.f32.mxu0 0.0
      %5028 = vmatmul.mubr.f32.gmra.mrb[0].mxu0 %v4824
      %v5029 = vpop.f32.mrb[0].mxu0
      %v5030 = vadd.f32 0.0, %v5029
      %v5031 = vpop.f32.mrb[0].mxu0
      %5032 = vmatprep.mubr.f32.mxu0 0.0
      %5033 = vmatmul.mubr.f32.gmra.mrb[0].mxu0 %v4826
      %v5034 = vpop.f32.mrb[0].mxu0
      %v5035 = vadd.f32 0.0, %v5034
      %v5036 = vpop.f32.mrb[0].mxu0
      %5037 = vmatprep.mubr.f32.mxu0 0.0
      %5038 = vmatmul.mubr.f32.gmra.mrb[0].mxu0 %v4828
      %v5039 = vpop.f32.mrb[0].mxu0
      %v5040 = vadd.f32 0.0, %v5039
      %v5041 = vpop.f32.mrb[0].mxu0
      %5042 = vmatprep.mubr.f32.mxu0 0.0
      %5043 = vmatmul.mubr.f32.gmra.mrb[0].mxu0 %v4830
      %v5044 = vpop.f32.mrb[0].mxu0
      %v5045 = vadd.f32 0.0, %v5044
      %v5046 = vpop.f32.mrb[0].mxu0
      %5047 = vmatprep.mubr.f32.mxu0 0.0
      %5048 = vmatmul.mubr.f32.gmra.mrb[0].mxu0 %v4832
      %v5049 = vpop.f32.mrb[0].mxu0
      %v5050 = vadd.f32 0.0, %v5049
      %v5051 = vpop.f32.mrb[0].mxu0
      %5052 = vmatprep.mubr.f32.mxu0 0.0
      %5053 = vmatmul.mubr.f32.gmra.mrb[0].mxu0 %v4834
      %v5054 = vpop.f32.mrb[0].mxu0
      %v5055 = vadd.f32 0.0, %v5054
      %v5056 = vpop.f32.mrb[0].mxu0
      %5057 = vmatprep.mubr.f32.mxu0 0.0
      %5058 = vmatmul.mubr.f32.gmra.mrb[0].mxu0 %v4836
      %v5059 = vpop.f32.mrb[0].mxu0
      %v5060 = vadd.f32 0.0, %v5059
      %v5061 = vpop.f32.mrb[0].mxu0
      %5062 = vdwg.mxu0
      %v5063 = vsel %vm306, %v4587, 0
      %v5065 = vsel %vm306, %v4588, 0
      %v5067 = vsel %vm306, %v4590, 0
      %v5069 = vsel %vm306, %v4591, 0
      %v5071 = vsel %vm306, %v4593, 0
      %v5073 = vsel %vm306, %v4594, 0
      %v5075 = vsel %vm306, %v4596, 0
      %v5077 = vsel %vm306, %v4597, 0
      %v5079 = vsel %vm306, %v4599, 0
      %v5081 = vsel %vm306, %v4600, 0
      %v5083 = vsel %vm306, %v4602, 0
      %v5085 = vsel %vm306, %v4603, 0
      %v5087 = vsel %vm306, %v4605, 0
      %v5089 = vsel %vm306, %v4606, 0
      %v5091 = vsel %vm306, %v4608, 0
      %v5093 = vsel %vm306, %v4609, 0
      %v5095 = vsel %vm306, %v4611, 0
      %v5097 = vsel %vm306, %v4612, 0
      %v5099 = vsel %vm306, %v4614, 0
      %v5101 = vsel %vm306, %v4615, 0
      %v5103 = vsel %vm306, %v4617, 0
      %v5105 = vsel %vm306, %v4618, 0
      %v5107 = vsel %vm306, %v4620, 0
      %v5109 = vsel %vm306, %v4621, 0
      %v5111 = vsel %vm306, %v4623, 0
      %v5113 = vsel %vm306, %v4624, 0
      %v5115 = vsel %vm306, %v4626, 0
      %v5117 = vsel %vm306, %v4627, 0
      %v5119 = vsel %vm306, %v4629, 0
      %v5121 = vsel %vm306, %v4630, 0
      %v5123 = vsel %vm306, %v4632, 0
      %v5125 = vsel %vm306, %v4633, 0
      %5127 = vmatprep.subr.mxu0 0.0
      %5128 = vmatpush1.msra.mxu0 %v4641
      %5129 = vmatprep.subr.mxu0 0.0
      %5130 = vmatpush1.msra.mxu0 %v4642
      %5131 = vmatprep.subr.mxu0 0.0
      %5132 = vmatpush1.msra.mxu0 0.0
      %5133 = vmatprep.subr.mxu0 0.0
      %5134 = vmatpush1.msra.mxu0 0.0
      %5135 = vmatprep.subr.mxu0 0.0
      %5136 = vmatpush1.msra.mxu0 0.0
      %5137 = vmatprep.subr.mxu0 0.0
      %5138 = vmatpush1.msra.mxu0 0.0
      %5139 = vmatprep.subr.mxu0 0.0
      %5140 = vmatpush1.msra.mxu0 0.0
      %5141 = vmatprep.subr.mxu0 0.0
      %5142 = vmatpush1.msra.mxu0 0.0
      %5143 = vmatprep.subr.mxu0 0.0
      %5144 = vmatpush1.msra.mxu0 0.0
      %5145 = vmatprep.subr.mxu0 0.0
      %5146 = vmatpush1.msra.mxu0 0.0
      %5147 = vmatprep.subr.mxu0 0.0
      %5148 = vmatpush1.msra.mxu0 0.0
      %5149 = vmatprep.subr.mxu0 0.0
      %5150 = vmatpush1.msra.mxu0 0.0
      %5151 = vmatprep.subr.mxu0 0.0
      %5152 = vmatpush1.msra.mxu0 0.0
      %5153 = vmatprep.subr.mxu0 0.0
      %5154 = vmatpush1.msra.mxu0 0.0
      %5155 = vmatprep.subr.mxu0 0.0
      %5156 = vmatpush1.msra.mxu0 0.0
      %5157 = vmatprep.subr.mxu0 0.0
      %5158 = vmatpush1.msra.mxu0 0.0
      %5159 = vmatprep.subr.mxu0 0.0
      %5160 = vmatpush1.msra.mxu0 0.0
      %5161 = vmatprep.subr.mxu0 0.0
      %5162 = vmatpush1.msra.mxu0 0.0
      %5163 = vmatprep.subr.mxu0 0.0
      %5164 = vmatpush1.msra.mxu0 0.0
      %5165 = vmatprep.subr.mxu0 0.0
      %5166 = vmatpush1.msra.mxu0 0.0
      %5167 = vmatprep.subr.mxu0 0.0
      %5168 = vmatpush1.msra.mxu0 0.0
      %5169 = vmatprep.subr.mxu0 0.0
      %5170 = vmatpush1.msra.mxu0 0.0
      %5171 = vmatprep.subr.mxu0 0.0
      %5172 = vmatpush1.msra.mxu0 0.0
      %5173 = vmatprep.subr.mxu0 0.0
      %5174 = vmatpush1.msra.mxu0 0.0
      %5175 = vmatprep.subr.mxu0 0.0
      %5176 = vmatpush1.msra.mxu0 0.0
      %5177 = vmatprep.subr.mxu0 0.0
      %5178 = vmatpush1.msra.mxu0 0.0
      %5179 = vmatprep.subr.mxu0 0.0
      %5180 = vmatpush1.msra.mxu0 0.0
      %5181 = vmatprep.subr.mxu0 0.0
      %5182 = vmatpush1.msra.mxu0 0.0
      %5183 = vmatprep.subr.mxu0 0.0
      %5184 = vmatpush1.msra.mxu0 0.0
      %5185 = vmatprep.subr.mxu0 0.0
      %5186 = vmatpush1.msra.mxu0 0.0
      %5187 = vmatprep.subr.mxu0 0.0
      %5188 = vmatpush1.msra.mxu0 0.0
      %5189 = vmatprep.subr.mxu0 0.0
      %5190 = vmatpush1.msra.mxu0 0.0
      %5191 = vmatprep.mubr.f32.mxu0 0.0
      %5192 = vmatmul.mubr.f32.gmra.mrb[0].mxu0 %v5063
      %v5193 = vpop.f32.mrb[0].mxu0
      %v5194 = vadd.f32 %v4905, %v5193
      %v5195 = vpop.f32.mrb[0].mxu0
      %5196 = vmatprep.mubr.f32.mxu0 0.0
      %5197 = vmatmul.mubr.f32.gmra.mrb[0].mxu0 %v5065
      %v5198 = vpop.f32.mrb[0].mxu0
      %v5199 = vadd.f32 %v4910, %v5198
      %v5200 = vpop.f32.mrb[0].mxu0
      %5201 = vmatprep.mubr.f32.mxu0 0.0
      %5202 = vmatmul.mubr.f32.gmra.mrb[0].mxu0 %v5067
      %v5203 = vpop.f32.mrb[0].mxu0
      %v5204 = vadd.f32 %v4915, %v5203
      %v5205 = vpop.f32.mrb[0].mxu0
      %5206 = vmatprep.mubr.f32.mxu0 0.0
      %5207 = vmatmul.mubr.f32.gmra.mrb[0].mxu0 %v5069
      %v5208 = vpop.f32.mrb[0].mxu0
      %v5209 = vadd.f32 %v4920, %v5208
      %v5210 = vpop.f32.mrb[0].mxu0
      %5211 = vmatprep.mubr.f32.mxu0 0.0
      %5212 = vmatmul.mubr.f32.gmra.mrb[0].mxu0 %v5071
      %v5213 = vpop.f32.mrb[0].mxu0
      %v5214 = vadd.f32 %v4925, %v5213
      %v5215 = vpop.f32.mrb[0].mxu0
      %5216 = vmatprep.mubr.f32.mxu0 0.0
      %5217 = vmatmul.mubr.f32.gmra.mrb[0].mxu0 %v5073
      %v5218 = vpop.f32.mrb[0].mxu0
      %v5219 = vadd.f32 %v4930, %v5218
      %v5220 = vpop.f32.mrb[0].mxu0
      %5221 = vmatprep.mubr.f32.mxu0 0.0
      %5222 = vmatmul.mubr.f32.gmra.mrb[0].mxu0 %v5075
      %v5223 = vpop.f32.mrb[0].mxu0
      %v5224 = vadd.f32 %v4935, %v5223
      %v5225 = vpop.f32.mrb[0].mxu0
      %5226 = vmatprep.mubr.f32.mxu0 0.0
      %5227 = vmatmul.mubr.f32.gmra.mrb[0].mxu0 %v5077
      %v5228 = vpop.f32.mrb[0].mxu0
      %v5229 = vadd.f32 %v4940, %v5228
      %v5230 = vpop.f32.mrb[0].mxu0
      %5231 = vmatprep.mubr.f32.mxu0 0.0
      %5232 = vmatmul.mubr.f32.gmra.mrb[0].mxu0 %v5079
      %v5233 = vpop.f32.mrb[0].mxu0
      %v5234 = vadd.f32 %v4945, %v5233
      %v5235 = vpop.f32.mrb[0].mxu0
      %5236 = vmatprep.mubr.f32.mxu0 0.0
      %5237 = vmatmul.mubr.f32.gmra.mrb[0].mxu0 %v5081
      %v5238 = vpop.f32.mrb[0].mxu0
      %v5239 = vadd.f32 %v4950, %v5238
      %v5240 = vpop.f32.mrb[0].mxu0
      %5241 = vmatprep.mubr.f32.mxu0 0.0
      %5242 = vmatmul.mubr.f32.gmra.mrb[0].mxu0 %v5083
      %v5243 = vpop.f32.mrb[0].mxu0
      %v5244 = vadd.f32 %v4955, %v5243
      %v5245 = vpop.f32.mrb[0].mxu0
      %5246 = vmatprep.mubr.f32.mxu0 0.0
      %5247 = vmatmul.mubr.f32.gmra.mrb[0].mxu0 %v5085
      %v5248 = vpop.f32.mrb[0].mxu0
      %v5249 = vadd.f32 %v4960, %v5248
      %v5250 = vpop.f32.mrb[0].mxu0
      %5251 = vmatprep.mubr.f32.mxu0 0.0
      %5252 = vmatmul.mubr.f32.gmra.mrb[0].mxu0 %v5087
      %v5253 = vpop.f32.mrb[0].mxu0
      %v5254 = vadd.f32 %v4965, %v5253
      %v5255 = vpop.f32.mrb[0].mxu0
      %5256 = vmatprep.mubr.f32.mxu0 0.0
      %5257 = vmatmul.mubr.f32.gmra.mrb[0].mxu0 %v5089
      %v5258 = vpop.f32.mrb[0].mxu0
      %v5259 = vadd.f32 %v4970, %v5258
      %v5260 = vpop.f32.mrb[0].mxu0
      %5261 = vmatprep.mubr.f32.mxu0 0.0
      %5262 = vmatmul.mubr.f32.gmra.mrb[0].mxu0 %v5091
      %v5263 = vpop.f32.mrb[0].mxu0
      %v5264 = vadd.f32 %v4975, %v5263
      %v5265 = vpop.f32.mrb[0].mxu0
      %5266 = vmatprep.mubr.f32.mxu0 0.0
      %5267 = vmatmul.mubr.f32.gmra.mrb[0].mxu0 %v5093
      %v5268 = vpop.f32.mrb[0].mxu0
      %v5269 = vadd.f32 %v4980, %v5268
      %v5270 = vpop.f32.mrb[0].mxu0
      %5271 = vmatprep.mubr.f32.mxu0 0.0
      %5272 = vmatmul.mubr.f32.gmra.mrb[0].mxu0 %v5095
      %v5273 = vpop.f32.mrb[0].mxu0
      %v5274 = vadd.f32 %v4985, %v5273
      %v5275 = vpop.f32.mrb[0].mxu0
      %5276 = vmatprep.mubr.f32.mxu0 0.0
      %5277 = vmatmul.mubr.f32.gmra.mrb[0].mxu0 %v5097
      %v5278 = vpop.f32.mrb[0].mxu0
      %v5279 = vadd.f32 %v4990, %v5278
      %v5280 = vpop.f32.mrb[0].mxu0
      %5281 = vmatprep.mubr.f32.mxu0 0.0
      %5282 = vmatmul.mubr.f32.gmra.mrb[0].mxu0 %v5099
      %v5283 = vpop.f32.mrb[0].mxu0
      %v5284 = vadd.f32 %v4995, %v5283
      %v5285 = vpop.f32.mrb[0].mxu0
      %5286 = vmatprep.mubr.f32.mxu0 0.0
      %5287 = vmatmul.mubr.f32.gmra.mrb[0].mxu0 %v5101
      %v5288 = vpop.f32.mrb[0].mxu0
      %v5289 = vadd.f32 %v5000, %v5288
      %v5290 = vpop.f32.mrb[0].mxu0
      %5291 = vmatprep.mubr.f32.mxu0 0.0
      %5292 = vmatmul.mubr.f32.gmra.mrb[0].mxu0 %v5103
      %v5293 = vpop.f32.mrb[0].mxu0
      %v5294 = vadd.f32 %v5005, %v5293
      %v5295 = vpop.f32.mrb[0].mxu0
      %5296 = vmatprep.mubr.f32.mxu0 0.0
      %5297 = vmatmul.mubr.f32.gmra.mrb[0].mxu0 %v5105
      %v5298 = vpop.f32.mrb[0].mxu0
      %v5299 = vadd.f32 %v5010, %v5298
      %v5300 = vpop.f32.mrb[0].mxu0
      %5301 = vmatprep.mubr.f32.mxu0 0.0
      %5302 = vmatmul.mubr.f32.gmra.mrb[0].mxu0 %v5107
      %v5303 = vpop.f32.mrb[0].mxu0
      %v5304 = vadd.f32 %v5015, %v5303
      %v5305 = vpop.f32.mrb[0].mxu0
      %5306 = vmatprep.mubr.f32.mxu0 0.0
      %5307 = vmatmul.mubr.f32.gmra.mrb[0].mxu0 %v5109
      %v5308 = vpop.f32.mrb[0].mxu0
      %v5309 = vadd.f32 %v5020, %v5308
      %v5310 = vpop.f32.mrb[0].mxu0
      %5311 = vmatprep.mubr.f32.mxu0 0.0
      %5312 = vmatmul.mubr.f32.gmra.mrb[0].mxu0 %v5111
      %v5313 = vpop.f32.mrb[0].mxu0
      %v5314 = vadd.f32 %v5025, %v5313
      %v5315 = vpop.f32.mrb[0].mxu0
      %5316 = vmatprep.mubr.f32.mxu0 0.0
      %5317 = vmatmul.mubr.f32.gmra.mrb[0].mxu0 %v5113
      %v5318 = vpop.f32.mrb[0].mxu0
      %v5319 = vadd.f32 %v5030, %v5318
      %v5320 = vpop.f32.mrb[0].mxu0
      %5321 = vmatprep.mubr.f32.mxu0 0.0
      %5322 = vmatmul.mubr.f32.gmra.mrb[0].mxu0 %v5115
      %v5323 = vpop.f32.mrb[0].mxu0
      %v5324 = vadd.f32 %v5035, %v5323
      %v5325 = vpop.f32.mrb[0].mxu0
      %5326 = vmatprep.mubr.f32.mxu0 0.0
      %5327 = vmatmul.mubr.f32.gmra.mrb[0].mxu0 %v5117
      %v5328 = vpop.f32.mrb[0].mxu0
      %v5329 = vadd.f32 %v5040, %v5328
      %v5330 = vpop.f32.mrb[0].mxu0
      %5331 = vmatprep.mubr.f32.mxu0 0.0
      %5332 = vmatmul.mubr.f32.gmra.mrb[0].mxu0 %v5119
      %v5333 = vpop.f32.mrb[0].mxu0
      %v5334 = vadd.f32 %v5045, %v5333
      %v5335 = vpop.f32.mrb[0].mxu0
      %5336 = vmatprep.mubr.f32.mxu0 0.0
      %5337 = vmatmul.mubr.f32.gmra.mrb[0].mxu0 %v5121
      %v5338 = vpop.f32.mrb[0].mxu0
      %v5339 = vadd.f32 %v5050, %v5338
      %v5340 = vpop.f32.mrb[0].mxu0
      %5341 = vmatprep.mubr.f32.mxu0 0.0
      %5342 = vmatmul.mubr.f32.gmra.mrb[0].mxu0 %v5123
      %v5343 = vpop.f32.mrb[0].mxu0
      %v5344 = vadd.f32 %v5055, %v5343
      %v5345 = vpop.f32.mrb[0].mxu0
      %5346 = vmatprep.mubr.f32.mxu0 0.0
      %5347 = vmatmul.mubr.f32.gmra.mrb[0].mxu0 %v5125
      %v5348 = vpop.f32.mrb[0].mxu0
      %v5349 = vadd.f32 %v5060, %v5348
      %v5350 = vpop.f32.mrb[0].mxu0
      %5351 = vdwg.mxu0
      %v5352 = vrot.slane %v4587, 2
      %v5353 = vrot.slane %v4588, 2
      %v5354 = vsel %vm1328, %v5352, %v5353
      %v5355 = vrot.slane %v4589, 2
      %v5356 = vsel %vm1328, %v5353, %v5355
      %v5357 = vrot.slane %v4590, 2
      %v5358 = vrot.slane %v4591, 2
      %v5359 = vsel %vm1328, %v5357, %v5358
      %v5360 = vrot.slane %v4592, 2
      %v5361 = vsel %vm1328, %v5358, %v5360
      %v5362 = vrot.slane %v4593, 2
      %v5363 = vrot.slane %v4594, 2
      %v5364 = vsel %vm1328, %v5362, %v5363
      %v5365 = vrot.slane %v4595, 2
      %v5366 = vsel %vm1328, %v5363, %v5365
      %v5367 = vrot.slane %v4596, 2
      %v5368 = vrot.slane %v4597, 2
      %v5369 = vsel %vm1328, %v5367, %v5368
      %v5370 = vrot.slane %v4598, 2
      %v5371 = vsel %vm1328, %v5368, %v5370
      %v5372 = vrot.slane %v4599, 2
      %v5373 = vrot.slane %v4600, 2
      %v5374 = vsel %vm1328, %v5372, %v5373
      %v5375 = vrot.slane %v4601, 2
      %v5376 = vsel %vm1328, %v5373, %v5375
      %v5377 = vrot.slane %v4602, 2
      %v5378 = vrot.slane %v4603, 2
      %v5379 = vsel %vm1328, %v5377, %v5378
      %v5380 = vrot.slane %v4604, 2
      %v5381 = vsel %vm1328, %v5378, %v5380
      %v5382 = vrot.slane %v4605, 2
      %v5383 = vrot.slane %v4606, 2
      %v5384 = vsel %vm1328, %v5382, %v5383
      %v5385 = vrot.slane %v4607, 2
      %v5386 = vsel %vm1328, %v5383, %v5385
      %v5387 = vrot.slane %v4608, 2
      %v5388 = vrot.slane %v4609, 2
      %v5389 = vsel %vm1328, %v5387, %v5388
      %v5390 = vrot.slane %v4610, 2
      %v5391 = vsel %vm1328, %v5388, %v5390
      %v5392 = vrot.slane %v4611, 2
      %v5393 = vrot.slane %v4612, 2
      %v5394 = vsel %vm1328, %v5392, %v5393
      %v5395 = vrot.slane %v4613, 2
      %v5396 = vsel %vm1328, %v5393, %v5395
      %v5397 = vrot.slane %v4614, 2
      %v5398 = vrot.slane %v4615, 2
      %v5399 = vsel %vm1328, %v5397, %v5398
      %v5400 = vrot.slane %v4616, 2
      %v5401 = vsel %vm1328, %v5398, %v5400
      %v5402 = vrot.slane %v4617, 2
      %v5403 = vrot.slane %v4618, 2
      %v5404 = vsel %vm1328, %v5402, %v5403
      %v5405 = vrot.slane %v4619, 2
      %v5406 = vsel %vm1328, %v5403, %v5405
      %v5407 = vrot.slane %v4620, 2
      %v5408 = vrot.slane %v4621, 2
      %v5409 = vsel %vm1328, %v5407, %v5408
      %v5410 = vrot.slane %v4622, 2
      %v5411 = vsel %vm1328, %v5408, %v5410
      %v5412 = vrot.slane %v4623, 2
      %v5413 = vrot.slane %v4624, 2
      %v5414 = vsel %vm1328, %v5412, %v5413
      %v5415 = vrot.slane %v4625, 2
      %v5416 = vsel %vm1328, %v5413, %v5415
      %v5417 = vrot.slane %v4626, 2
      %v5418 = vrot.slane %v4627, 2
      %v5419 = vsel %vm1328, %v5417, %v5418
      %v5420 = vrot.slane %v4628, 2
      %v5421 = vsel %vm1328, %v5418, %v5420
      %v5422 = vrot.slane %v4629, 2
      %v5423 = vrot.slane %v4630, 2
      %v5424 = vsel %vm1328, %v5422, %v5423
      %v5425 = vrot.slane %v4631, 2
      %v5426 = vsel %vm1328, %v5423, %v5425
      %v5427 = vrot.slane %v4632, 2
      %v5428 = vrot.slane %v4633, 2
      %v5429 = vsel %vm1328, %v5427, %v5428
      %v5430 = vrot.slane %v4634, 2
      %v5431 = vsel %vm1328, %v5428, %v5430
      %s5432 = scalar_lea.vmem %s5, 32
      %v5433 = vld [vmem:[%s5432] sm:$0xff]
      %v5434 = vld [vmem:[%s5432 + $0x8] sm:$0xff]
      %v5435 = vsel %vm306, %v5354, 0
      %v5437 = vsel %vm306, %v5356, 0
      %v5439 = vsel %vm306, %v5359, 0
      %v5441 = vsel %vm306, %v5361, 0
      %v5443 = vsel %vm306, %v5364, 0
      %v5445 = vsel %vm306, %v5366, 0
      %v5447 = vsel %vm306, %v5369, 0
      %v5449 = vsel %vm306, %v5371, 0
      %v5451 = vsel %vm306, %v5374, 0
      %v5453 = vsel %vm306, %v5376, 0
      %v5455 = vsel %vm306, %v5379, 0
      %v5457 = vsel %vm306, %v5381, 0
      %v5459 = vsel %vm306, %v5384, 0
      %v5461 = vsel %vm306, %v5386, 0
      %v5463 = vsel %vm306, %v5389, 0
      %v5465 = vsel %vm306, %v5391, 0
      %v5467 = vsel %vm306, %v5394, 0
      %v5469 = vsel %vm306, %v5396, 0
      %v5471 = vsel %vm306, %v5399, 0
      %v5473 = vsel %vm306, %v5401, 0
      %v5475 = vsel %vm306, %v5404, 0
      %v5477 = vsel %vm306, %v5406, 0
      %v5479 = vsel %vm306, %v5409, 0
      %v5481 = vsel %vm306, %v5411, 0
      %v5483 = vsel %vm306, %v5414, 0
      %v5485 = vsel %vm306, %v5416, 0
      %v5487 = vsel %vm306, %v5419, 0
      %v5489 = vsel %vm306, %v5421, 0
      %v5491 = vsel %vm306, %v5424, 0
      %v5493 = vsel %vm306, %v5426, 0
      %v5495 = vsel %vm306, %v5429, 0
      %v5497 = vsel %vm306, %v5431, 0
      %5499 = vmatprep.subr.mxu0 0.0
      %5500 = vmatpush1.msra.mxu0 %v5433
      %5501 = vmatprep.subr.mxu0 0.0
      %5502 = vmatpush1.msra.mxu0 %v5434
      %5503 = vmatprep.subr.mxu0 0.0
      %5504 = vmatpush1.msra.mxu0 0.0
      %5505 = vmatprep.subr.mxu0 0.0
      %5506 = vmatpush1.msra.mxu0 0.0
      %5507 = vmatprep.subr.mxu0 0.0
      %5508 = vmatpush1.msra.mxu0 0.0
      %5509 = vmatprep.subr.mxu0 0.0
      %5510 = vmatpush1.msra.mxu0 0.0
      %5511 = vmatprep.subr.mxu0 0.0
      %5512 = vmatpush1.msra.mxu0 0.0
      %5513 = vmatprep.subr.mxu0 0.0
      %5514 = vmatpush1.msra.mxu0 0.0
      %5515 = vmatprep.subr.mxu0 0.0
      %5516 = vmatpush1.msra.mxu0 0.0
      %5517 = vmatprep.subr.mxu0 0.0
      %5518 = vmatpush1.msra.mxu0 0.0
      %5519 = vmatprep.subr.mxu0 0.0
      %5520 = vmatpush1.msra.mxu0 0.0
      %5521 = vmatprep.subr.mxu0 0.0
      %5522 = vmatpush1.msra.mxu0 0.0
      %5523 = vmatprep.subr.mxu0 0.0
      %5524 = vmatpush1.msra.mxu0 0.0
      %5525 = vmatprep.subr.mxu0 0.0
      %5526 = vmatpush1.msra.mxu0 0.0
      %5527 = vmatprep.subr.mxu0 0.0
      %5528 = vmatpush1.msra.mxu0 0.0
      %5529 = vmatprep.subr.mxu0 0.0
      %5530 = vmatpush1.msra.mxu0 0.0
      %5531 = vmatprep.subr.mxu0 0.0
      %5532 = vmatpush1.msra.mxu0 0.0
      %5533 = vmatprep.subr.mxu0 0.0
      %5534 = vmatpush1.msra.mxu0 0.0
      %5535 = vmatprep.subr.mxu0 0.0
      %5536 = vmatpush1.msra.mxu0 0.0
      %5537 = vmatprep.subr.mxu0 0.0
      %5538 = vmatpush1.msra.mxu0 0.0
      %5539 = vmatprep.subr.mxu0 0.0
      %5540 = vmatpush1.msra.mxu0 0.0
      %5541 = vmatprep.subr.mxu0 0.0
      %5542 = vmatpush1.msra.mxu0 0.0
      %5543 = vmatprep.subr.mxu0 0.0
      %5544 = vmatpush1.msra.mxu0 0.0
      %5545 = vmatprep.subr.mxu0 0.0
      %5546 = vmatpush1.msra.mxu0 0.0
      %5547 = vmatprep.subr.mxu0 0.0
      %5548 = vmatpush1.msra.mxu0 0.0
      %5549 = vmatprep.subr.mxu0 0.0
      %5550 = vmatpush1.msra.mxu0 0.0
      %5551 = vmatprep.subr.mxu0 0.0
      %5552 = vmatpush1.msra.mxu0 0.0
      %5553 = vmatprep.subr.mxu0 0.0
      %5554 = vmatpush1.msra.mxu0 0.0
      %5555 = vmatprep.subr.mxu0 0.0
      %5556 = vmatpush1.msra.mxu0 0.0
      %5557 = vmatprep.subr.mxu0 0.0
      %5558 = vmatpush1.msra.mxu0 0.0
      %5559 = vmatprep.subr.mxu0 0.0
      %5560 = vmatpush1.msra.mxu0 0.0
      %5561 = vmatprep.subr.mxu0 0.0
      %5562 = vmatpush1.msra.mxu0 0.0
      %5563 = vmatprep.mubr.f32.mxu0 0.0
      %5564 = vmatmul.mubr.f32.gmra.mrb[0].mxu0 %v5435
      %v5565 = vpop.f32.mrb[0].mxu0
      %v5566 = vadd.f32 0.0, %v5565
      %v5567 = vpop.f32.mrb[0].mxu0
      %5568 = vmatprep.mubr.f32.mxu0 0.0
      %5569 = vmatmul.mubr.f32.gmra.mrb[0].mxu0 %v5437
      %v5570 = vpop.f32.mrb[0].mxu0
      %v5571 = vadd.f32 0.0, %v5570
      %v5572 = vpop.f32.mrb[0].mxu0
      %5573 = vmatprep.mubr.f32.mxu0 0.0
      %5574 = vmatmul.mubr.f32.gmra.mrb[0].mxu0 %v5439
      %v5575 = vpop.f32.mrb[0].mxu0
      %v5576 = vadd.f32 0.0, %v5575
      %v5577 = vpop.f32.mrb[0].mxu0
      %5578 = vmatprep.mubr.f32.mxu0 0.0
      %5579 = vmatmul.mubr.f32.gmra.mrb[0].mxu0 %v5441
      %v5580 = vpop.f32.mrb[0].mxu0
      %v5581 = vadd.f32 0.0, %v5580
      %v5582 = vpop.f32.mrb[0].mxu0
      %5583 = vmatprep.mubr.f32.mxu0 0.0
      %5584 = vmatmul.mubr.f32.gmra.mrb[0].mxu0 %v5443
      %v5585 = vpop.f32.mrb[0].mxu0
      %v5586 = vadd.f32 0.0, %v5585
      %v5587 = vpop.f32.mrb[0].mxu0
      %5588 = vmatprep.mubr.f32.mxu0 0.0
      %5589 = vmatmul.mubr.f32.gmra.mrb[0].mxu0 %v5445
      %v5590 = vpop.f32.mrb[0].mxu0
      %v5591 = vadd.f32 0.0, %v5590
      %v5592 = vpop.f32.mrb[0].mxu0
      %5593 = vmatprep.mubr.f32.mxu0 0.0
      %5594 = vmatmul.mubr.f32.gmra.mrb[0].mxu0 %v5447
      %v5595 = vpop.f32.mrb[0].mxu0
      %v5596 = vadd.f32 0.0, %v5595
      %v5597 = vpop.f32.mrb[0].mxu0
      %5598 = vmatprep.mubr.f32.mxu0 0.0
      %5599 = vmatmul.mubr.f32.gmra.mrb[0].mxu0 %v5449
      %v5600 = vpop.f32.mrb[0].mxu0
      %v5601 = vadd.f32 0.0, %v5600
      %v5602 = vpop.f32.mrb[0].mxu0
      %5603 = vmatprep.mubr.f32.mxu0 0.0
      %5604 = vmatmul.mubr.f32.gmra.mrb[0].mxu0 %v5451
      %v5605 = vpop.f32.mrb[0].mxu0
      %v5606 = vadd.f32 0.0, %v5605
      %v5607 = vpop.f32.mrb[0].mxu0
      %5608 = vmatprep.mubr.f32.mxu0 0.0
      %5609 = vmatmul.mubr.f32.gmra.mrb[0].mxu0 %v5453
      %v5610 = vpop.f32.mrb[0].mxu0
      %v5611 = vadd.f32 0.0, %v5610
      %v5612 = vpop.f32.mrb[0].mxu0
      %5613 = vmatprep.mubr.f32.mxu0 0.0
      %5614 = vmatmul.mubr.f32.gmra.mrb[0].mxu0 %v5455
      %v5615 = vpop.f32.mrb[0].mxu0
      %v5616 = vadd.f32 0.0, %v5615
      %v5617 = vpop.f32.mrb[0].mxu0
      %5618 = vmatprep.mubr.f32.mxu0 0.0
      %5619 = vmatmul.mubr.f32.gmra.mrb[0].mxu0 %v5457
      %v5620 = vpop.f32.mrb[0].mxu0
      %v5621 = vadd.f32 0.0, %v5620
      %v5622 = vpop.f32.mrb[0].mxu0
      %5623 = vmatprep.mubr.f32.mxu0 0.0
      %5624 = vmatmul.mubr.f32.gmra.mrb[0].mxu0 %v5459
      %v5625 = vpop.f32.mrb[0].mxu0
      %v5626 = vadd.f32 0.0, %v5625
      %v5627 = vpop.f32.mrb[0].mxu0
      %5628 = vmatprep.mubr.f32.mxu0 0.0
      %5629 = vmatmul.mubr.f32.gmra.mrb[0].mxu0 %v5461
      %v5630 = vpop.f32.mrb[0].mxu0
      %v5631 = vadd.f32 0.0, %v5630
      %v5632 = vpop.f32.mrb[0].mxu0
      %5633 = vmatprep.mubr.f32.mxu0 0.0
      %5634 = vmatmul.mubr.f32.gmra.mrb[0].mxu0 %v5463
      %v5635 = vpop.f32.mrb[0].mxu0
      %v5636 = vadd.f32 0.0, %v5635
      %v5637 = vpop.f32.mrb[0].mxu0
      %5638 = vmatprep.mubr.f32.mxu0 0.0
      %5639 = vmatmul.mubr.f32.gmra.mrb[0].mxu0 %v5465
      %v5640 = vpop.f32.mrb[0].mxu0
      %v5641 = vadd.f32 0.0, %v5640
      %v5642 = vpop.f32.mrb[0].mxu0
      %5643 = vmatprep.mubr.f32.mxu0 0.0
      %5644 = vmatmul.mubr.f32.gmra.mrb[0].mxu0 %v5467
      %v5645 = vpop.f32.mrb[0].mxu0
      %v5646 = vadd.f32 0.0, %v5645
      %v5647 = vpop.f32.mrb[0].mxu0
      %5648 = vmatprep.mubr.f32.mxu0 0.0
      %5649 = vmatmul.mubr.f32.gmra.mrb[0].mxu0 %v5469
      %v5650 = vpop.f32.mrb[0].mxu0
      %v5651 = vadd.f32 0.0, %v5650
      %v5652 = vpop.f32.mrb[0].mxu0
      %5653 = vmatprep.mubr.f32.mxu0 0.0
      %5654 = vmatmul.mubr.f32.gmra.mrb[0].mxu0 %v5471
      %v5655 = vpop.f32.mrb[0].mxu0
      %v5656 = vadd.f32 0.0, %v5655
      %v5657 = vpop.f32.mrb[0].mxu0
      %5658 = vmatprep.mubr.f32.mxu0 0.0
      %5659 = vmatmul.mubr.f32.gmra.mrb[0].mxu0 %v5473
      %v5660 = vpop.f32.mrb[0].mxu0
      %v5661 = vadd.f32 0.0, %v5660
      %v5662 = vpop.f32.mrb[0].mxu0
      %5663 = vmatprep.mubr.f32.mxu0 0.0
      %5664 = vmatmul.mubr.f32.gmra.mrb[0].mxu0 %v5475
      %v5665 = vpop.f32.mrb[0].mxu0
      %v5666 = vadd.f32 0.0, %v5665
      %v5667 = vpop.f32.mrb[0].mxu0
      %5668 = vmatprep.mubr.f32.mxu0 0.0
      %5669 = vmatmul.mubr.f32.gmra.mrb[0].mxu0 %v5477
      %v5670 = vpop.f32.mrb[0].mxu0
      %v5671 = vadd.f32 0.0, %v5670
      %v5672 = vpop.f32.mrb[0].mxu0
      %5673 = vmatprep.mubr.f32.mxu0 0.0
      %5674 = vmatmul.mubr.f32.gmra.mrb[0].mxu0 %v5479
      %v5675 = vpop.f32.mrb[0].mxu0
      %v5676 = vadd.f32 0.0, %v5675
      %v5677 = vpop.f32.mrb[0].mxu0
      %5678 = vmatprep.mubr.f32.mxu0 0.0
      %5679 = vmatmul.mubr.f32.gmra.mrb[0].mxu0 %v5481
      %v5680 = vpop.f32.mrb[0].mxu0
      %v5681 = vadd.f32 0.0, %v5680
      %v5682 = vpop.f32.mrb[0].mxu0
      %5683 = vmatprep.mubr.f32.mxu0 0.0
      %5684 = vmatmul.mubr.f32.gmra.mrb[0].mxu0 %v5483
      %v5685 = vpop.f32.mrb[0].mxu0
      %v5686 = vadd.f32 0.0, %v5685
      %v5687 = vpop.f32.mrb[0].mxu0
      %5688 = vmatprep.mubr.f32.mxu0 0.0
      %5689 = vmatmul.mubr.f32.gmra.mrb[0].mxu0 %v5485
      %v5690 = vpop.f32.mrb[0].mxu0
      %v5691 = vadd.f32 0.0, %v5690
      %v5692 = vpop.f32.mrb[0].mxu0
      %5693 = vmatprep.mubr.f32.mxu0 0.0
      %5694 = vmatmul.mubr.f32.gmra.mrb[0].mxu0 %v5487
      %v5695 = vpop.f32.mrb[0].mxu0
      %v5696 = vadd.f32 0.0, %v5695
      %v5697 = vpop.f32.mrb[0].mxu0
      %5698 = vmatprep.mubr.f32.mxu0 0.0
      %5699 = vmatmul.mubr.f32.gmra.mrb[0].mxu0 %v5489
      %v5700 = vpop.f32.mrb[0].mxu0
      %v5701 = vadd.f32 0.0, %v5700
      %v5702 = vpop.f32.mrb[0].mxu0
      %5703 = vmatprep.mubr.f32.mxu0 0.0
      %5704 = vmatmul.mubr.f32.gmra.mrb[0].mxu0 %v5491
      %v5705 = vpop.f32.mrb[0].mxu0
      %v5706 = vadd.f32 0.0, %v5705
      %v5707 = vpop.f32.mrb[0].mxu0
      %5708 = vmatprep.mubr.f32.mxu0 0.0
      %5709 = vmatmul.mubr.f32.gmra.mrb[0].mxu0 %v5493
      %v5710 = vpop.f32.mrb[0].mxu0
      %v5711 = vadd.f32 0.0, %v5710
      %v5712 = vpop.f32.mrb[0].mxu0
      %5713 = vmatprep.mubr.f32.mxu0 0.0
      %5714 = vmatmul.mubr.f32.gmra.mrb[0].mxu0 %v5495
      %v5715 = vpop.f32.mrb[0].mxu0
      %v5716 = vadd.f32 0.0, %v5715
      %v5717 = vpop.f32.mrb[0].mxu0
      %5718 = vmatprep.mubr.f32.mxu0 0.0
      %5719 = vmatmul.mubr.f32.gmra.mrb[0].mxu0 %v5497
      %v5720 = vpop.f32.mrb[0].mxu0
      %v5721 = vadd.f32 0.0, %v5720
      %v5722 = vpop.f32.mrb[0].mxu0
      %5723 = vdwg.mxu0
      %v5724 = vadd.f32 %v5194, %v5566
      %v5725 = vadd.f32 %v5199, %v5571
      %v5726 = vadd.f32 %v5204, %v5576
      %v5727 = vadd.f32 %v5209, %v5581
      %v5728 = vadd.f32 %v5214, %v5586
      %v5729 = vadd.f32 %v5219, %v5591
      %v5730 = vadd.f32 %v5224, %v5596
      %v5731 = vadd.f32 %v5229, %v5601
      %v5732 = vadd.f32 %v5234, %v5606
      %v5733 = vadd.f32 %v5239, %v5611
      %v5734 = vadd.f32 %v5244, %v5616
      %v5735 = vadd.f32 %v5249, %v5621
      %v5736 = vadd.f32 %v5254, %v5626
      %v5737 = vadd.f32 %v5259, %v5631
      %v5738 = vadd.f32 %v5264, %v5636
      %v5739 = vadd.f32 %v5269, %v5641
      %v5740 = vadd.f32 %v5274, %v5646
      %v5741 = vadd.f32 %v5279, %v5651
      %v5742 = vadd.f32 %v5284, %v5656
      %v5743 = vadd.f32 %v5289, %v5661
      %v5744 = vadd.f32 %v5294, %v5666
      %v5745 = vadd.f32 %v5299, %v5671
      %v5746 = vadd.f32 %v5304, %v5676
      %v5747 = vadd.f32 %v5309, %v5681
      %v5748 = vadd.f32 %v5314, %v5686
      %v5749 = vadd.f32 %v5319, %v5691
      %v5750 = vadd.f32 %v5324, %v5696
      %v5751 = vadd.f32 %v5329, %v5701
      %v5752 = vadd.f32 %v5334, %v5706
      %v5753 = vadd.f32 %v5339, %v5711
      %v5754 = vadd.f32 %v5344, %v5716
      %v5755 = vadd.f32 %v5349, %v5721
      %s5756 = scalar_lea.vmem %s5, 48
      %v5757 = vld [vmem:[%s5756] sm:$0xff]
      %v5758 = vld [vmem:[%s5756 + $0x8] sm:$0xff]
      %v5760 = vsel %vm306, %v4635, 0
      %v5763 = vsel %vm306, %v4636, 0
      %5765 = vmatprep.subr.mxu0 0.0
      %5766 = vmatpush1.msra.mxu0 %v5757
      %5767 = vmatprep.subr.mxu0 0.0
      %5768 = vmatpush1.msra.mxu0 %v5758
      %5769 = vmatprep.subr.mxu0 0.0
      %5770 = vmatpush1.msra.mxu0 0.0
      %5771 = vmatprep.subr.mxu0 0.0
      %5772 = vmatpush1.msra.mxu0 0.0
      %5773 = vmatprep.subr.mxu0 0.0
      %5774 = vmatpush1.msra.mxu0 0.0
      %5775 = vmatprep.subr.mxu0 0.0
      %5776 = vmatpush1.msra.mxu0 0.0
      %5777 = vmatprep.subr.mxu0 0.0
      %5778 = vmatpush1.msra.mxu0 0.0
      %5779 = vmatprep.subr.mxu0 0.0
      %5780 = vmatpush1.msra.mxu0 0.0
      %5781 = vmatprep.subr.mxu0 0.0
      %5782 = vmatpush1.msra.mxu0 0.0
      %5783 = vmatprep.subr.mxu0 0.0
      %5784 = vmatpush1.msra.mxu0 0.0
      %5785 = vmatprep.subr.mxu0 0.0
      %5786 = vmatpush1.msra.mxu0 0.0
      %5787 = vmatprep.subr.mxu0 0.0
      %5788 = vmatpush1.msra.mxu0 0.0
      %5789 = vmatprep.subr.mxu0 0.0
      %5790 = vmatpush1.msra.mxu0 0.0
      %5791 = vmatprep.subr.mxu0 0.0
      %5792 = vmatpush1.msra.mxu0 0.0
      %5793 = vmatprep.subr.mxu0 0.0
      %5794 = vmatpush1.msra.mxu0 0.0
      %5795 = vmatprep.subr.mxu0 0.0
      %5796 = vmatpush1.msra.mxu0 0.0
      %5797 = vmatprep.subr.mxu0 0.0
      %5798 = vmatpush1.msra.mxu0 0.0
      %5799 = vmatprep.subr.mxu0 0.0
      %5800 = vmatpush1.msra.mxu0 0.0
      %5801 = vmatprep.subr.mxu0 0.0
      %5802 = vmatpush1.msra.mxu0 0.0
      %5803 = vmatprep.subr.mxu0 0.0
      %5804 = vmatpush1.msra.mxu0 0.0
      %5805 = vmatprep.subr.mxu0 0.0
      %5806 = vmatpush1.msra.mxu0 0.0
      %5807 = vmatprep.subr.mxu0 0.0
      %5808 = vmatpush1.msra.mxu0 0.0
      %5809 = vmatprep.subr.mxu0 0.0
      %5810 = vmatpush1.msra.mxu0 0.0
      %5811 = vmatprep.subr.mxu0 0.0
      %5812 = vmatpush1.msra.mxu0 0.0
      %5813 = vmatprep.subr.mxu0 0.0
      %5814 = vmatpush1.msra.mxu0 0.0
      %5815 = vmatprep.subr.mxu0 0.0
      %5816 = vmatpush1.msra.mxu0 0.0
      %5817 = vmatprep.subr.mxu0 0.0
      %5818 = vmatpush1.msra.mxu0 0.0
      %5819 = vmatprep.subr.mxu0 0.0
      %5820 = vmatpush1.msra.mxu0 0.0
      %5821 = vmatprep.subr.mxu0 0.0
      %5822 = vmatpush1.msra.mxu0 0.0
      %5823 = vmatprep.subr.mxu0 0.0
      %5824 = vmatpush1.msra.mxu0 0.0
      %5825 = vmatprep.subr.mxu0 0.0
      %5826 = vmatpush1.msra.mxu0 0.0
      %5827 = vmatprep.subr.mxu0 0.0
      %5828 = vmatpush1.msra.mxu0 0.0
      %5829 = vmatprep.mubr.f32.mxu0 0.0
      %5830 = vmatmul.mubr.f32.gmra.mrb[0].mxu0 %v5067
      %v5831 = vpop.f32.mrb[0].mxu0
      %v5832 = vadd.f32 0.0, %v5831
      %v5833 = vpop.f32.mrb[0].mxu0
      %5834 = vmatprep.mubr.f32.mxu0 0.0
      %5835 = vmatmul.mubr.f32.gmra.mrb[0].mxu0 %v5069
      %v5836 = vpop.f32.mrb[0].mxu0
      %v5837 = vadd.f32 0.0, %v5836
      %v5838 = vpop.f32.mrb[0].mxu0
      %5839 = vmatprep.mubr.f32.mxu0 0.0
      %5840 = vmatmul.mubr.f32.gmra.mrb[0].mxu0 %v5071
      %v5841 = vpop.f32.mrb[0].mxu0
      %v5842 = vadd.f32 0.0, %v5841
      %v5843 = vpop.f32.mrb[0].mxu0
      %5844 = vmatprep.mubr.f32.mxu0 0.0
      %5845 = vmatmul.mubr.f32.gmra.mrb[0].mxu0 %v5073
      %v5846 = vpop.f32.mrb[0].mxu0
      %v5847 = vadd.f32 0.0, %v5846
      %v5848 = vpop.f32.mrb[0].mxu0
      %5849 = vmatprep.mubr.f32.mxu0 0.0
      %5850 = vmatmul.mubr.f32.gmra.mrb[0].mxu0 %v5075
      %v5851 = vpop.f32.mrb[0].mxu0
      %v5852 = vadd.f32 0.0, %v5851
      %v5853 = vpop.f32.mrb[0].mxu0
      %5854 = vmatprep.mubr.f32.mxu0 0.0
      %5855 = vmatmul.mubr.f32.gmra.mrb[0].mxu0 %v5077
      %v5856 = vpop.f32.mrb[0].mxu0
      %v5857 = vadd.f32 0.0, %v5856
      %v5858 = vpop.f32.mrb[0].mxu0
      %5859 = vmatprep.mubr.f32.mxu0 0.0
      %5860 = vmatmul.mubr.f32.gmra.mrb[0].mxu0 %v5079
      %v5861 = vpop.f32.mrb[0].mxu0
      %v5862 = vadd.f32 0.0, %v5861
      %v5863 = vpop.f32.mrb[0].mxu0
      %5864 = vmatprep.mubr.f32.mxu0 0.0
      %5865 = vmatmul.mubr.f32.gmra.mrb[0].mxu0 %v5081
      %v5866 = vpop.f32.mrb[0].mxu0
      %v5867 = vadd.f32 0.0, %v5866
      %v5868 = vpop.f32.mrb[0].mxu0
      %5869 = vmatprep.mubr.f32.mxu0 0.0
      %5870 = vmatmul.mubr.f32.gmra.mrb[0].mxu0 %v5083
      %v5871 = vpop.f32.mrb[0].mxu0
      %v5872 = vadd.f32 0.0, %v5871
      %v5873 = vpop.f32.mrb[0].mxu0
      %5874 = vmatprep.mubr.f32.mxu0 0.0
      %5875 = vmatmul.mubr.f32.gmra.mrb[0].mxu0 %v5085
      %v5876 = vpop.f32.mrb[0].mxu0
      %v5877 = vadd.f32 0.0, %v5876
      %v5878 = vpop.f32.mrb[0].mxu0
      %5879 = vmatprep.mubr.f32.mxu0 0.0
      %5880 = vmatmul.mubr.f32.gmra.mrb[0].mxu0 %v5087
      %v5881 = vpop.f32.mrb[0].mxu0
      %v5882 = vadd.f32 0.0, %v5881
      %v5883 = vpop.f32.mrb[0].mxu0
      %5884 = vmatprep.mubr.f32.mxu0 0.0
      %5885 = vmatmul.mubr.f32.gmra.mrb[0].mxu0 %v5089
      %v5886 = vpop.f32.mrb[0].mxu0
      %v5887 = vadd.f32 0.0, %v5886
      %v5888 = vpop.f32.mrb[0].mxu0
      %5889 = vmatprep.mubr.f32.mxu0 0.0
      %5890 = vmatmul.mubr.f32.gmra.mrb[0].mxu0 %v5091
      %v5891 = vpop.f32.mrb[0].mxu0
      %v5892 = vadd.f32 0.0, %v5891
      %v5893 = vpop.f32.mrb[0].mxu0
      %5894 = vmatprep.mubr.f32.mxu0 0.0
      %5895 = vmatmul.mubr.f32.gmra.mrb[0].mxu0 %v5093
      %v5896 = vpop.f32.mrb[0].mxu0
      %v5897 = vadd.f32 0.0, %v5896
      %v5898 = vpop.f32.mrb[0].mxu0
      %5899 = vmatprep.mubr.f32.mxu0 0.0
      %5900 = vmatmul.mubr.f32.gmra.mrb[0].mxu0 %v5095
      %v5901 = vpop.f32.mrb[0].mxu0
      %v5902 = vadd.f32 0.0, %v5901
      %v5903 = vpop.f32.mrb[0].mxu0
      %5904 = vmatprep.mubr.f32.mxu0 0.0
      %5905 = vmatmul.mubr.f32.gmra.mrb[0].mxu0 %v5097
      %v5906 = vpop.f32.mrb[0].mxu0
      %v5907 = vadd.f32 0.0, %v5906
      %v5908 = vpop.f32.mrb[0].mxu0
      %5909 = vmatprep.mubr.f32.mxu0 0.0
      %5910 = vmatmul.mubr.f32.gmra.mrb[0].mxu0 %v5099
      %v5911 = vpop.f32.mrb[0].mxu0
      %v5912 = vadd.f32 0.0, %v5911
      %v5913 = vpop.f32.mrb[0].mxu0
      %5914 = vmatprep.mubr.f32.mxu0 0.0
      %5915 = vmatmul.mubr.f32.gmra.mrb[0].mxu0 %v5101
      %v5916 = vpop.f32.mrb[0].mxu0
      %v5917 = vadd.f32 0.0, %v5916
      %v5918 = vpop.f32.mrb[0].mxu0
      %5919 = vmatprep.mubr.f32.mxu0 0.0
      %5920 = vmatmul.mubr.f32.gmra.mrb[0].mxu0 %v5103
      %v5921 = vpop.f32.mrb[0].mxu0
      %v5922 = vadd.f32 0.0, %v5921
      %v5923 = vpop.f32.mrb[0].mxu0
      %5924 = vmatprep.mubr.f32.mxu0 0.0
      %5925 = vmatmul.mubr.f32.gmra.mrb[0].mxu0 %v5105
      %v5926 = vpop.f32.mrb[0].mxu0
      %v5927 = vadd.f32 0.0, %v5926
      %v5928 = vpop.f32.mrb[0].mxu0
      %5929 = vmatprep.mubr.f32.mxu0 0.0
      %5930 = vmatmul.mubr.f32.gmra.mrb[0].mxu0 %v5107
      %v5931 = vpop.f32.mrb[0].mxu0
      %v5932 = vadd.f32 0.0, %v5931
      %v5933 = vpop.f32.mrb[0].mxu0
      %5934 = vmatprep.mubr.f32.mxu0 0.0
      %5935 = vmatmul.mubr.f32.gmra.mrb[0].mxu0 %v5109
      %v5936 = vpop.f32.mrb[0].mxu0
      %v5937 = vadd.f32 0.0, %v5936
      %v5938 = vpop.f32.mrb[0].mxu0
      %5939 = vmatprep.mubr.f32.mxu0 0.0
      %5940 = vmatmul.mubr.f32.gmra.mrb[0].mxu0 %v5111
      %v5941 = vpop.f32.mrb[0].mxu0
      %v5942 = vadd.f32 0.0, %v5941
      %v5943 = vpop.f32.mrb[0].mxu0
      %5944 = vmatprep.mubr.f32.mxu0 0.0
      %5945 = vmatmul.mubr.f32.gmra.mrb[0].mxu0 %v5113
      %v5946 = vpop.f32.mrb[0].mxu0
      %v5947 = vadd.f32 0.0, %v5946
      %v5948 = vpop.f32.mrb[0].mxu0
      %5949 = vmatprep.mubr.f32.mxu0 0.0
      %5950 = vmatmul.mubr.f32.gmra.mrb[0].mxu0 %v5115
      %v5951 = vpop.f32.mrb[0].mxu0
      %v5952 = vadd.f32 0.0, %v5951
      %v5953 = vpop.f32.mrb[0].mxu0
      %5954 = vmatprep.mubr.f32.mxu0 0.0
      %5955 = vmatmul.mubr.f32.gmra.mrb[0].mxu0 %v5117
      %v5956 = vpop.f32.mrb[0].mxu0
      %v5957 = vadd.f32 0.0, %v5956
      %v5958 = vpop.f32.mrb[0].mxu0
      %5959 = vmatprep.mubr.f32.mxu0 0.0
      %5960 = vmatmul.mubr.f32.gmra.mrb[0].mxu0 %v5119
      %v5961 = vpop.f32.mrb[0].mxu0
      %v5962 = vadd.f32 0.0, %v5961
      %v5963 = vpop.f32.mrb[0].mxu0
      %5964 = vmatprep.mubr.f32.mxu0 0.0
      %5965 = vmatmul.mubr.f32.gmra.mrb[0].mxu0 %v5121
      %v5966 = vpop.f32.mrb[0].mxu0
      %v5967 = vadd.f32 0.0, %v5966
      %v5968 = vpop.f32.mrb[0].mxu0
      %5969 = vmatprep.mubr.f32.mxu0 0.0
      %5970 = vmatmul.mubr.f32.gmra.mrb[0].mxu0 %v5123
      %v5971 = vpop.f32.mrb[0].mxu0
      %v5972 = vadd.f32 0.0, %v5971
      %v5973 = vpop.f32.mrb[0].mxu0
      %5974 = vmatprep.mubr.f32.mxu0 0.0
      %5975 = vmatmul.mubr.f32.gmra.mrb[0].mxu0 %v5125
      %v5976 = vpop.f32.mrb[0].mxu0
      %v5977 = vadd.f32 0.0, %v5976
      %v5978 = vpop.f32.mrb[0].mxu0
      %5979 = vmatprep.mubr.f32.mxu0 0.0
      %5980 = vmatmul.mubr.f32.gmra.mrb[0].mxu0 %v5760
      %v5981 = vpop.f32.mrb[0].mxu0
      %v5982 = vadd.f32 0.0, %v5981
      %v5983 = vpop.f32.mrb[0].mxu0
      %5984 = vmatprep.mubr.f32.mxu0 0.0
      %5985 = vmatmul.mubr.f32.gmra.mrb[0].mxu0 %v5763
      %v5986 = vpop.f32.mrb[0].mxu0
      %v5987 = vadd.f32 0.0, %v5986
      %v5988 = vpop.f32.mrb[0].mxu0
      %5989 = vdwg.mxu0
      %v5990 = vadd.f32 %v5724, %v5832
      %v5991 = vadd.f32 %v5725, %v5837
      %v5992 = vadd.f32 %v5726, %v5842
      %v5993 = vadd.f32 %v5727, %v5847
      %v5994 = vadd.f32 %v5728, %v5852
      %v5995 = vadd.f32 %v5729, %v5857
      %v5996 = vadd.f32 %v5730, %v5862
      %v5997 = vadd.f32 %v5731, %v5867
      %v5998 = vadd.f32 %v5732, %v5872
      %v5999 = vadd.f32 %v5733, %v5877
      %v6000 = vadd.f32 %v5734, %v5882
      %v6001 = vadd.f32 %v5735, %v5887
      %v6002 = vadd.f32 %v5736, %v5892
      %v6003 = vadd.f32 %v5737, %v5897
      %v6004 = vadd.f32 %v5738, %v5902
      %v6005 = vadd.f32 %v5739, %v5907
      %v6006 = vadd.f32 %v5740, %v5912
      %v6007 = vadd.f32 %v5741, %v5917
      %v6008 = vadd.f32 %v5742, %v5922
      %v6009 = vadd.f32 %v5743, %v5927
      %v6010 = vadd.f32 %v5744, %v5932
      %v6011 = vadd.f32 %v5745, %v5937
      %v6012 = vadd.f32 %v5746, %v5942
      %v6013 = vadd.f32 %v5747, %v5947
      %v6014 = vadd.f32 %v5748, %v5952
      %v6015 = vadd.f32 %v5749, %v5957
      %v6016 = vadd.f32 %v5750, %v5962
      %v6017 = vadd.f32 %v5751, %v5967
      %v6018 = vadd.f32 %v5752, %v5972
      %v6019 = vadd.f32 %v5753, %v5977
      %v6020 = vadd.f32 %v5754, %v5982
      %v6021 = vadd.f32 %v5755, %v5987
      %v6023 = vrot.slane %v4635, 1
      %v6024 = vrot.slane %v4636, 1
      %v6025 = vsel %vm1183, %v6023, %v6024
      %v6026 = vrot.slane %v4637, 1
      %v6027 = vsel %vm1183, %v6024, %v6026
      %s6028 = scalar_lea.vmem %s5, 64
      %v6029 = vld [vmem:[%s6028] sm:$0xff]
      %v6030 = vld [vmem:[%s6028 + $0x8] sm:$0xff]
      %v6031 = vsel %vm306, %v6025, 0
      %v6033 = vsel %vm306, %v6027, 0
      %6035 = vmatprep.subr.mxu0 0.0
      %6036 = vmatpush1.msra.mxu0 %v6029
      %6037 = vmatprep.subr.mxu0 0.0
      %6038 = vmatpush1.msra.mxu0 %v6030
      %6039 = vmatprep.subr.mxu0 0.0
      %6040 = vmatpush1.msra.mxu0 0.0
      %6041 = vmatprep.subr.mxu0 0.0
      %6042 = vmatpush1.msra.mxu0 0.0
      %6043 = vmatprep.subr.mxu0 0.0
      %6044 = vmatpush1.msra.mxu0 0.0
      %6045 = vmatprep.subr.mxu0 0.0
      %6046 = vmatpush1.msra.mxu0 0.0
      %6047 = vmatprep.subr.mxu0 0.0
      %6048 = vmatpush1.msra.mxu0 0.0
      %6049 = vmatprep.subr.mxu0 0.0
      %6050 = vmatpush1.msra.mxu0 0.0
      %6051 = vmatprep.subr.mxu0 0.0
      %6052 = vmatpush1.msra.mxu0 0.0
      %6053 = vmatprep.subr.mxu0 0.0
      %6054 = vmatpush1.msra.mxu0 0.0
      %6055 = vmatprep.subr.mxu0 0.0
      %6056 = vmatpush1.msra.mxu0 0.0
      %6057 = vmatprep.subr.mxu0 0.0
      %6058 = vmatpush1.msra.mxu0 0.0
      %6059 = vmatprep.subr.mxu0 0.0
      %6060 = vmatpush1.msra.mxu0 0.0
      %6061 = vmatprep.subr.mxu0 0.0
      %6062 = vmatpush1.msra.mxu0 0.0
      %6063 = vmatprep.subr.mxu0 0.0
      %6064 = vmatpush1.msra.mxu0 0.0
      %6065 = vmatprep.subr.mxu0 0.0
      %6066 = vmatpush1.msra.mxu0 0.0
      %6067 = vmatprep.subr.mxu0 0.0
      %6068 = vmatpush1.msra.mxu0 0.0
      %6069 = vmatprep.subr.mxu0 0.0
      %6070 = vmatpush1.msra.mxu0 0.0
      %6071 = vmatprep.subr.mxu0 0.0
      %6072 = vmatpush1.msra.mxu0 0.0
      %6073 = vmatprep.subr.mxu0 0.0
      %6074 = vmatpush1.msra.mxu0 0.0
      %6075 = vmatprep.subr.mxu0 0.0
      %6076 = vmatpush1.msra.mxu0 0.0
      %6077 = vmatprep.subr.mxu0 0.0
      %6078 = vmatpush1.msra.mxu0 0.0
      %6079 = vmatprep.subr.mxu0 0.0
      %6080 = vmatpush1.msra.mxu0 0.0
      %6081 = vmatprep.subr.mxu0 0.0
      %6082 = vmatpush1.msra.mxu0 0.0
      %6083 = vmatprep.subr.mxu0 0.0
      %6084 = vmatpush1.msra.mxu0 0.0
      %6085 = vmatprep.subr.mxu0 0.0
      %6086 = vmatpush1.msra.mxu0 0.0
      %6087 = vmatprep.subr.mxu0 0.0
      %6088 = vmatpush1.msra.mxu0 0.0
      %6089 = vmatprep.subr.mxu0 0.0
      %6090 = vmatpush1.msra.mxu0 0.0
      %6091 = vmatprep.subr.mxu0 0.0
      %6092 = vmatpush1.msra.mxu0 0.0
      %6093 = vmatprep.subr.mxu0 0.0
      %6094 = vmatpush1.msra.mxu0 0.0
      %6095 = vmatprep.subr.mxu0 0.0
      %6096 = vmatpush1.msra.mxu0 0.0
      %6097 = vmatprep.subr.mxu0 0.0
      %6098 = vmatpush1.msra.mxu0 0.0
      %6099 = vmatprep.mubr.f32.mxu0 0.0
      %6100 = vmatmul.mubr.f32.gmra.mrb[0].mxu0 %v4778
      %v6101 = vpop.f32.mrb[0].mxu0
      %v6102 = vadd.f32 0.0, %v6101
      %v6103 = vpop.f32.mrb[0].mxu0
      %6104 = vmatprep.mubr.f32.mxu0 0.0
      %6105 = vmatmul.mubr.f32.gmra.mrb[0].mxu0 %v4780
      %v6106 = vpop.f32.mrb[0].mxu0
      %v6107 = vadd.f32 0.0, %v6106
      %v6108 = vpop.f32.mrb[0].mxu0
      %6109 = vmatprep.mubr.f32.mxu0 0.0
      %6110 = vmatmul.mubr.f32.gmra.mrb[0].mxu0 %v4782
      %v6111 = vpop.f32.mrb[0].mxu0
      %v6112 = vadd.f32 0.0, %v6111
      %v6113 = vpop.f32.mrb[0].mxu0
      %6114 = vmatprep.mubr.f32.mxu0 0.0
      %6115 = vmatmul.mubr.f32.gmra.mrb[0].mxu0 %v4784
      %v6116 = vpop.f32.mrb[0].mxu0
      %v6117 = vadd.f32 0.0, %v6116
      %v6118 = vpop.f32.mrb[0].mxu0
      %6119 = vmatprep.mubr.f32.mxu0 0.0
      %6120 = vmatmul.mubr.f32.gmra.mrb[0].mxu0 %v4786
      %v6121 = vpop.f32.mrb[0].mxu0
      %v6122 = vadd.f32 0.0, %v6121
      %v6123 = vpop.f32.mrb[0].mxu0
      %6124 = vmatprep.mubr.f32.mxu0 0.0
      %6125 = vmatmul.mubr.f32.gmra.mrb[0].mxu0 %v4788
      %v6126 = vpop.f32.mrb[0].mxu0
      %v6127 = vadd.f32 0.0, %v6126
      %v6128 = vpop.f32.mrb[0].mxu0
      %6129 = vmatprep.mubr.f32.mxu0 0.0
      %6130 = vmatmul.mubr.f32.gmra.mrb[0].mxu0 %v4790
      %v6131 = vpop.f32.mrb[0].mxu0
      %v6132 = vadd.f32 0.0, %v6131
      %v6133 = vpop.f32.mrb[0].mxu0
      %6134 = vmatprep.mubr.f32.mxu0 0.0
      %6135 = vmatmul.mubr.f32.gmra.mrb[0].mxu0 %v4792
      %v6136 = vpop.f32.mrb[0].mxu0
      %v6137 = vadd.f32 0.0, %v6136
      %v6138 = vpop.f32.mrb[0].mxu0
      %6139 = vmatprep.mubr.f32.mxu0 0.0
      %6140 = vmatmul.mubr.f32.gmra.mrb[0].mxu0 %v4794
      %v6141 = vpop.f32.mrb[0].mxu0
      %v6142 = vadd.f32 0.0, %v6141
      %v6143 = vpop.f32.mrb[0].mxu0
      %6144 = vmatprep.mubr.f32.mxu0 0.0
      %6145 = vmatmul.mubr.f32.gmra.mrb[0].mxu0 %v4796
      %v6146 = vpop.f32.mrb[0].mxu0
      %v6147 = vadd.f32 0.0, %v6146
      %v6148 = vpop.f32.mrb[0].mxu0
      %6149 = vmatprep.mubr.f32.mxu0 0.0
      %6150 = vmatmul.mubr.f32.gmra.mrb[0].mxu0 %v4798
      %v6151 = vpop.f32.mrb[0].mxu0
      %v6152 = vadd.f32 0.0, %v6151
      %v6153 = vpop.f32.mrb[0].mxu0
      %6154 = vmatprep.mubr.f32.mxu0 0.0
      %6155 = vmatmul.mubr.f32.gmra.mrb[0].mxu0 %v4800
      %v6156 = vpop.f32.mrb[0].mxu0
      %v6157 = vadd.f32 0.0, %v6156
      %v6158 = vpop.f32.mrb[0].mxu0
      %6159 = vmatprep.mubr.f32.mxu0 0.0
      %6160 = vmatmul.mubr.f32.gmra.mrb[0].mxu0 %v4802
      %v6161 = vpop.f32.mrb[0].mxu0
      %v6162 = vadd.f32 0.0, %v6161
      %v6163 = vpop.f32.mrb[0].mxu0
      %6164 = vmatprep.mubr.f32.mxu0 0.0
      %6165 = vmatmul.mubr.f32.gmra.mrb[0].mxu0 %v4804
      %v6166 = vpop.f32.mrb[0].mxu0
      %v6167 = vadd.f32 0.0, %v6166
      %v6168 = vpop.f32.mrb[0].mxu0
      %6169 = vmatprep.mubr.f32.mxu0 0.0
      %6170 = vmatmul.mubr.f32.gmra.mrb[0].mxu0 %v4806
      %v6171 = vpop.f32.mrb[0].mxu0
      %v6172 = vadd.f32 0.0, %v6171
      %v6173 = vpop.f32.mrb[0].mxu0
      %6174 = vmatprep.mubr.f32.mxu0 0.0
      %6175 = vmatmul.mubr.f32.gmra.mrb[0].mxu0 %v4808
      %v6176 = vpop.f32.mrb[0].mxu0
      %v6177 = vadd.f32 0.0, %v6176
      %v6178 = vpop.f32.mrb[0].mxu0
      %6179 = vmatprep.mubr.f32.mxu0 0.0
      %6180 = vmatmul.mubr.f32.gmra.mrb[0].mxu0 %v4810
      %v6181 = vpop.f32.mrb[0].mxu0
      %v6182 = vadd.f32 0.0, %v6181
      %v6183 = vpop.f32.mrb[0].mxu0
      %6184 = vmatprep.mubr.f32.mxu0 0.0
      %6185 = vmatmul.mubr.f32.gmra.mrb[0].mxu0 %v4812
      %v6186 = vpop.f32.mrb[0].mxu0
      %v6187 = vadd.f32 0.0, %v6186
      %v6188 = vpop.f32.mrb[0].mxu0
      %6189 = vmatprep.mubr.f32.mxu0 0.0
      %6190 = vmatmul.mubr.f32.gmra.mrb[0].mxu0 %v4814
      %v6191 = vpop.f32.mrb[0].mxu0
      %v6192 = vadd.f32 0.0, %v6191
      %v6193 = vpop.f32.mrb[0].mxu0
      %6194 = vmatprep.mubr.f32.mxu0 0.0
      %6195 = vmatmul.mubr.f32.gmra.mrb[0].mxu0 %v4816
      %v6196 = vpop.f32.mrb[0].mxu0
      %v6197 = vadd.f32 0.0, %v6196
      %v6198 = vpop.f32.mrb[0].mxu0
      %6199 = vmatprep.mubr.f32.mxu0 0.0
      %6200 = vmatmul.mubr.f32.gmra.mrb[0].mxu0 %v4818
      %v6201 = vpop.f32.mrb[0].mxu0
      %v6202 = vadd.f32 0.0, %v6201
      %v6203 = vpop.f32.mrb[0].mxu0
      %6204 = vmatprep.mubr.f32.mxu0 0.0
      %6205 = vmatmul.mubr.f32.gmra.mrb[0].mxu0 %v4820
      %v6206 = vpop.f32.mrb[0].mxu0
      %v6207 = vadd.f32 0.0, %v6206
      %v6208 = vpop.f32.mrb[0].mxu0
      %6209 = vmatprep.mubr.f32.mxu0 0.0
      %6210 = vmatmul.mubr.f32.gmra.mrb[0].mxu0 %v4822
      %v6211 = vpop.f32.mrb[0].mxu0
      %v6212 = vadd.f32 0.0, %v6211
      %v6213 = vpop.f32.mrb[0].mxu0
      %6214 = vmatprep.mubr.f32.mxu0 0.0
      %6215 = vmatmul.mubr.f32.gmra.mrb[0].mxu0 %v4824
      %v6216 = vpop.f32.mrb[0].mxu0
      %v6217 = vadd.f32 0.0, %v6216
      %v6218 = vpop.f32.mrb[0].mxu0
      %6219 = vmatprep.mubr.f32.mxu0 0.0
      %6220 = vmatmul.mubr.f32.gmra.mrb[0].mxu0 %v4826
      %v6221 = vpop.f32.mrb[0].mxu0
      %v6222 = vadd.f32 0.0, %v6221
      %v6223 = vpop.f32.mrb[0].mxu0
      %6224 = vmatprep.mubr.f32.mxu0 0.0
      %6225 = vmatmul.mubr.f32.gmra.mrb[0].mxu0 %v4828
      %v6226 = vpop.f32.mrb[0].mxu0
      %v6227 = vadd.f32 0.0, %v6226
      %v6228 = vpop.f32.mrb[0].mxu0
      %6229 = vmatprep.mubr.f32.mxu0 0.0
      %6230 = vmatmul.mubr.f32.gmra.mrb[0].mxu0 %v4830
      %v6231 = vpop.f32.mrb[0].mxu0
      %v6232 = vadd.f32 0.0, %v6231
      %v6233 = vpop.f32.mrb[0].mxu0
      %6234 = vmatprep.mubr.f32.mxu0 0.0
      %6235 = vmatmul.mubr.f32.gmra.mrb[0].mxu0 %v4832
      %v6236 = vpop.f32.mrb[0].mxu0
      %v6237 = vadd.f32 0.0, %v6236
      %v6238 = vpop.f32.mrb[0].mxu0
      %6239 = vmatprep.mubr.f32.mxu0 0.0
      %6240 = vmatmul.mubr.f32.gmra.mrb[0].mxu0 %v4834
      %v6241 = vpop.f32.mrb[0].mxu0
      %v6242 = vadd.f32 0.0, %v6241
      %v6243 = vpop.f32.mrb[0].mxu0
      %6244 = vmatprep.mubr.f32.mxu0 0.0
      %6245 = vmatmul.mubr.f32.gmra.mrb[0].mxu0 %v4836
      %v6246 = vpop.f32.mrb[0].mxu0
      %v6247 = vadd.f32 0.0, %v6246
      %v6248 = vpop.f32.mrb[0].mxu0
      %6249 = vmatprep.mubr.f32.mxu0 0.0
      %6250 = vmatmul.mubr.f32.gmra.mrb[0].mxu0 %v6031
      %v6251 = vpop.f32.mrb[0].mxu0
      %v6252 = vadd.f32 0.0, %v6251
      %v6253 = vpop.f32.mrb[0].mxu0
      %6254 = vmatprep.mubr.f32.mxu0 0.0
      %6255 = vmatmul.mubr.f32.gmra.mrb[0].mxu0 %v6033
      %v6256 = vpop.f32.mrb[0].mxu0
      %v6257 = vadd.f32 0.0, %v6256
      %v6258 = vpop.f32.mrb[0].mxu0
      %6259 = vdwg.mxu0
      %v6260 = vadd.f32 %v5990, %v6102
      %v6261 = vadd.f32 %v5991, %v6107
      %v6262 = vadd.f32 %v5992, %v6112
      %v6263 = vadd.f32 %v5993, %v6117
      %v6264 = vadd.f32 %v5994, %v6122
      %v6265 = vadd.f32 %v5995, %v6127
      %v6266 = vadd.f32 %v5996, %v6132
      %v6267 = vadd.f32 %v5997, %v6137
      %v6268 = vadd.f32 %v5998, %v6142
      %v6269 = vadd.f32 %v5999, %v6147
      %v6270 = vadd.f32 %v6000, %v6152
      %v6271 = vadd.f32 %v6001, %v6157
      %v6272 = vadd.f32 %v6002, %v6162
      %v6273 = vadd.f32 %v6003, %v6167
      %v6274 = vadd.f32 %v6004, %v6172
      %v6275 = vadd.f32 %v6005, %v6177
      %v6276 = vadd.f32 %v6006, %v6182
      %v6277 = vadd.f32 %v6007, %v6187
      %v6278 = vadd.f32 %v6008, %v6192
      %v6279 = vadd.f32 %v6009, %v6197
      %v6280 = vadd.f32 %v6010, %v6202
      %v6281 = vadd.f32 %v6011, %v6207
      %v6282 = vadd.f32 %v6012, %v6212
      %v6283 = vadd.f32 %v6013, %v6217
      %v6284 = vadd.f32 %v6014, %v6222
      %v6285 = vadd.f32 %v6015, %v6227
      %v6286 = vadd.f32 %v6016, %v6232
      %v6287 = vadd.f32 %v6017, %v6237
      %v6288 = vadd.f32 %v6018, %v6242
      %v6289 = vadd.f32 %v6019, %v6247
      %v6290 = vadd.f32 %v6020, %v6252
      %v6291 = vadd.f32 %v6021, %v6257
      %v6292 = vrot.slane %v4635, 2
      %v6293 = vrot.slane %v4636, 2
      %v6294 = vsel %vm1328, %v6292, %v6293
      %v6295 = vrot.slane %v4637, 2
      %v6296 = vsel %vm1328, %v6293, %v6295
      %s6297 = scalar_lea.vmem %s5, 80
      %v6298 = vld [vmem:[%s6297] sm:$0xff]
      %v6299 = vld [vmem:[%s6297 + $0x8] sm:$0xff]
      %v6300 = vsel %vm306, %v6294, 0
      %v6302 = vsel %vm306, %v6296, 0
      %6304 = vmatprep.subr.mxu0 0.0
      %6305 = vmatpush1.msra.mxu0 %v6298
      %6306 = vmatprep.subr.mxu0 0.0
      %6307 = vmatpush1.msra.mxu0 %v6299
      %6308 = vmatprep.subr.mxu0 0.0
      %6309 = vmatpush1.msra.mxu0 0.0
      %6310 = vmatprep.subr.mxu0 0.0
      %6311 = vmatpush1.msra.mxu0 0.0
      %6312 = vmatprep.subr.mxu0 0.0
      %6313 = vmatpush1.msra.mxu0 0.0
      %6314 = vmatprep.subr.mxu0 0.0
      %6315 = vmatpush1.msra.mxu0 0.0
      %6316 = vmatprep.subr.mxu0 0.0
      %6317 = vmatpush1.msra.mxu0 0.0
      %6318 = vmatprep.subr.mxu0 0.0
      %6319 = vmatpush1.msra.mxu0 0.0
      %6320 = vmatprep.subr.mxu0 0.0
      %6321 = vmatpush1.msra.mxu0 0.0
      %6322 = vmatprep.subr.mxu0 0.0
      %6323 = vmatpush1.msra.mxu0 0.0
      %6324 = vmatprep.subr.mxu0 0.0
      %6325 = vmatpush1.msra.mxu0 0.0
      %6326 = vmatprep.subr.mxu0 0.0
      %6327 = vmatpush1.msra.mxu0 0.0
      %6328 = vmatprep.subr.mxu0 0.0
      %6329 = vmatpush1.msra.mxu0 0.0
      %6330 = vmatprep.subr.mxu0 0.0
      %6331 = vmatpush1.msra.mxu0 0.0
      %6332 = vmatprep.subr.mxu0 0.0
      %6333 = vmatpush1.msra.mxu0 0.0
      %6334 = vmatprep.subr.mxu0 0.0
      %6335 = vmatpush1.msra.mxu0 0.0
      %6336 = vmatprep.subr.mxu0 0.0
      %6337 = vmatpush1.msra.mxu0 0.0
      %6338 = vmatprep.subr.mxu0 0.0
      %6339 = vmatpush1.msra.mxu0 0.0
      %6340 = vmatprep.subr.mxu0 0.0
      %6341 = vmatpush1.msra.mxu0 0.0
      %6342 = vmatprep.subr.mxu0 0.0
      %6343 = vmatpush1.msra.mxu0 0.0
      %6344 = vmatprep.subr.mxu0 0.0
      %6345 = vmatpush1.msra.mxu0 0.0
      %6346 = vmatprep.subr.mxu0 0.0
      %6347 = vmatpush1.msra.mxu0 0.0
      %6348 = vmatprep.subr.mxu0 0.0
      %6349 = vmatpush1.msra.mxu0 0.0
      %6350 = vmatprep.subr.mxu0 0.0
      %6351 = vmatpush1.msra.mxu0 0.0
      %6352 = vmatprep.subr.mxu0 0.0
      %6353 = vmatpush1.msra.mxu0 0.0
      %6354 = vmatprep.subr.mxu0 0.0
      %6355 = vmatpush1.msra.mxu0 0.0
      %6356 = vmatprep.subr.mxu0 0.0
      %6357 = vmatpush1.msra.mxu0 0.0
      %6358 = vmatprep.subr.mxu0 0.0
      %6359 = vmatpush1.msra.mxu0 0.0
      %6360 = vmatprep.subr.mxu0 0.0
      %6361 = vmatpush1.msra.mxu0 0.0
      %6362 = vmatprep.subr.mxu0 0.0
      %6363 = vmatpush1.msra.mxu0 0.0
      %6364 = vmatprep.subr.mxu0 0.0
      %6365 = vmatpush1.msra.mxu0 0.0
      %6366 = vmatprep.subr.mxu0 0.0
      %6367 = vmatpush1.msra.mxu0 0.0
      %6368 = vmatprep.mubr.f32.mxu0 0.0
      %6369 = vmatmul.mubr.f32.gmra.mrb[0].mxu0 %v5439
      %v6370 = vpop.f32.mrb[0].mxu0
      %v6371 = vadd.f32 0.0, %v6370
      %v6372 = vpop.f32.mrb[0].mxu0
      %6373 = vmatprep.mubr.f32.mxu0 0.0
      %6374 = vmatmul.mubr.f32.gmra.mrb[0].mxu0 %v5441
      %v6375 = vpop.f32.mrb[0].mxu0
      %v6376 = vadd.f32 0.0, %v6375
      %v6377 = vpop.f32.mrb[0].mxu0
      %6378 = vmatprep.mubr.f32.mxu0 0.0
      %6379 = vmatmul.mubr.f32.gmra.mrb[0].mxu0 %v5443
      %v6380 = vpop.f32.mrb[0].mxu0
      %v6381 = vadd.f32 0.0, %v6380
      %v6382 = vpop.f32.mrb[0].mxu0
      %6383 = vmatprep.mubr.f32.mxu0 0.0
      %6384 = vmatmul.mubr.f32.gmra.mrb[0].mxu0 %v5445
      %v6385 = vpop.f32.mrb[0].mxu0
      %v6386 = vadd.f32 0.0, %v6385
      %v6387 = vpop.f32.mrb[0].mxu0
      %6388 = vmatprep.mubr.f32.mxu0 0.0
      %6389 = vmatmul.mubr.f32.gmra.mrb[0].mxu0 %v5447
      %v6390 = vpop.f32.mrb[0].mxu0
      %v6391 = vadd.f32 0.0, %v6390
      %v6392 = vpop.f32.mrb[0].mxu0
      %6393 = vmatprep.mubr.f32.mxu0 0.0
      %6394 = vmatmul.mubr.f32.gmra.mrb[0].mxu0 %v5449
      %v6395 = vpop.f32.mrb[0].mxu0
      %v6396 = vadd.f32 0.0, %v6395
      %v6397 = vpop.f32.mrb[0].mxu0
      %6398 = vmatprep.mubr.f32.mxu0 0.0
      %6399 = vmatmul.mubr.f32.gmra.mrb[0].mxu0 %v5451
      %v6400 = vpop.f32.mrb[0].mxu0
      %v6401 = vadd.f32 0.0, %v6400
      %v6402 = vpop.f32.mrb[0].mxu0
      %6403 = vmatprep.mubr.f32.mxu0 0.0
      %6404 = vmatmul.mubr.f32.gmra.mrb[0].mxu0 %v5453
      %v6405 = vpop.f32.mrb[0].mxu0
      %v6406 = vadd.f32 0.0, %v6405
      %v6407 = vpop.f32.mrb[0].mxu0
      %6408 = vmatprep.mubr.f32.mxu0 0.0
      %6409 = vmatmul.mubr.f32.gmra.mrb[0].mxu0 %v5455
      %v6410 = vpop.f32.mrb[0].mxu0
      %v6411 = vadd.f32 0.0, %v6410
      %v6412 = vpop.f32.mrb[0].mxu0
      %6413 = vmatprep.mubr.f32.mxu0 0.0
      %6414 = vmatmul.mubr.f32.gmra.mrb[0].mxu0 %v5457
      %v6415 = vpop.f32.mrb[0].mxu0
      %v6416 = vadd.f32 0.0, %v6415
      %v6417 = vpop.f32.mrb[0].mxu0
      %6418 = vmatprep.mubr.f32.mxu0 0.0
      %6419 = vmatmul.mubr.f32.gmra.mrb[0].mxu0 %v5459
      %v6420 = vpop.f32.mrb[0].mxu0
      %v6421 = vadd.f32 0.0, %v6420
      %v6422 = vpop.f32.mrb[0].mxu0
      %6423 = vmatprep.mubr.f32.mxu0 0.0
      %6424 = vmatmul.mubr.f32.gmra.mrb[0].mxu0 %v5461
      %v6425 = vpop.f32.mrb[0].mxu0
      %v6426 = vadd.f32 0.0, %v6425
      %v6427 = vpop.f32.mrb[0].mxu0
      %6428 = vmatprep.mubr.f32.mxu0 0.0
      %6429 = vmatmul.mubr.f32.gmra.mrb[0].mxu0 %v5463
      %v6430 = vpop.f32.mrb[0].mxu0
      %v6431 = vadd.f32 0.0, %v6430
      %v6432 = vpop.f32.mrb[0].mxu0
      %6433 = vmatprep.mubr.f32.mxu0 0.0
      %6434 = vmatmul.mubr.f32.gmra.mrb[0].mxu0 %v5465
      %v6435 = vpop.f32.mrb[0].mxu0
      %v6436 = vadd.f32 0.0, %v6435
      %v6437 = vpop.f32.mrb[0].mxu0
      %6438 = vmatprep.mubr.f32.mxu0 0.0
      %6439 = vmatmul.mubr.f32.gmra.mrb[0].mxu0 %v5467
      %v6440 = vpop.f32.mrb[0].mxu0
      %v6441 = vadd.f32 0.0, %v6440
      %v6442 = vpop.f32.mrb[0].mxu0
      %6443 = vmatprep.mubr.f32.mxu0 0.0
      %6444 = vmatmul.mubr.f32.gmra.mrb[0].mxu0 %v5469
      %v6445 = vpop.f32.mrb[0].mxu0
      %v6446 = vadd.f32 0.0, %v6445
      %v6447 = vpop.f32.mrb[0].mxu0
      %6448 = vmatprep.mubr.f32.mxu0 0.0
      %6449 = vmatmul.mubr.f32.gmra.mrb[0].mxu0 %v5471
      %v6450 = vpop.f32.mrb[0].mxu0
      %v6451 = vadd.f32 0.0, %v6450
      %v6452 = vpop.f32.mrb[0].mxu0
      %6453 = vmatprep.mubr.f32.mxu0 0.0
      %6454 = vmatmul.mubr.f32.gmra.mrb[0].mxu0 %v5473
      %v6455 = vpop.f32.mrb[0].mxu0
      %v6456 = vadd.f32 0.0, %v6455
      %v6457 = vpop.f32.mrb[0].mxu0
      %6458 = vmatprep.mubr.f32.mxu0 0.0
      %6459 = vmatmul.mubr.f32.gmra.mrb[0].mxu0 %v5475
      %v6460 = vpop.f32.mrb[0].mxu0
      %v6461 = vadd.f32 0.0, %v6460
      %v6462 = vpop.f32.mrb[0].mxu0
      %6463 = vmatprep.mubr.f32.mxu0 0.0
      %6464 = vmatmul.mubr.f32.gmra.mrb[0].mxu0 %v5477
      %v6465 = vpop.f32.mrb[0].mxu0
      %v6466 = vadd.f32 0.0, %v6465
      %v6467 = vpop.f32.mrb[0].mxu0
      %6468 = vmatprep.mubr.f32.mxu0 0.0
      %6469 = vmatmul.mubr.f32.gmra.mrb[0].mxu0 %v5479
      %v6470 = vpop.f32.mrb[0].mxu0
      %v6471 = vadd.f32 0.0, %v6470
      %v6472 = vpop.f32.mrb[0].mxu0
      %6473 = vmatprep.mubr.f32.mxu0 0.0
      %6474 = vmatmul.mubr.f32.gmra.mrb[0].mxu0 %v5481
      %v6475 = vpop.f32.mrb[0].mxu0
      %v6476 = vadd.f32 0.0, %v6475
      %v6477 = vpop.f32.mrb[0].mxu0
      %6478 = vmatprep.mubr.f32.mxu0 0.0
      %6479 = vmatmul.mubr.f32.gmra.mrb[0].mxu0 %v5483
      %v6480 = vpop.f32.mrb[0].mxu0
      %v6481 = vadd.f32 0.0, %v6480
      %v6482 = vpop.f32.mrb[0].mxu0
      %6483 = vmatprep.mubr.f32.mxu0 0.0
      %6484 = vmatmul.mubr.f32.gmra.mrb[0].mxu0 %v5485
      %v6485 = vpop.f32.mrb[0].mxu0
      %v6486 = vadd.f32 0.0, %v6485
      %v6487 = vpop.f32.mrb[0].mxu0
      %6488 = vmatprep.mubr.f32.mxu0 0.0
      %6489 = vmatmul.mubr.f32.gmra.mrb[0].mxu0 %v5487
      %v6490 = vpop.f32.mrb[0].mxu0
      %v6491 = vadd.f32 0.0, %v6490
      %v6492 = vpop.f32.mrb[0].mxu0
      %6493 = vmatprep.mubr.f32.mxu0 0.0
      %6494 = vmatmul.mubr.f32.gmra.mrb[0].mxu0 %v5489
      %v6495 = vpop.f32.mrb[0].mxu0
      %v6496 = vadd.f32 0.0, %v6495
      %v6497 = vpop.f32.mrb[0].mxu0
      %6498 = vmatprep.mubr.f32.mxu0 0.0
      %6499 = vmatmul.mubr.f32.gmra.mrb[0].mxu0 %v5491
      %v6500 = vpop.f32.mrb[0].mxu0
      %v6501 = vadd.f32 0.0, %v6500
      %v6502 = vpop.f32.mrb[0].mxu0
      %6503 = vmatprep.mubr.f32.mxu0 0.0
      %6504 = vmatmul.mubr.f32.gmra.mrb[0].mxu0 %v5493
      %v6505 = vpop.f32.mrb[0].mxu0
      %v6506 = vadd.f32 0.0, %v6505
      %v6507 = vpop.f32.mrb[0].mxu0
      %6508 = vmatprep.mubr.f32.mxu0 0.0
      %6509 = vmatmul.mubr.f32.gmra.mrb[0].mxu0 %v5495
      %v6510 = vpop.f32.mrb[0].mxu0
      %v6511 = vadd.f32 0.0, %v6510
      %v6512 = vpop.f32.mrb[0].mxu0
      %6513 = vmatprep.mubr.f32.mxu0 0.0
      %6514 = vmatmul.mubr.f32.gmra.mrb[0].mxu0 %v5497
      %v6515 = vpop.f32.mrb[0].mxu0
      %v6516 = vadd.f32 0.0, %v6515
      %v6517 = vpop.f32.mrb[0].mxu0
      %6518 = vmatprep.mubr.f32.mxu0 0.0
      %6519 = vmatmul.mubr.f32.gmra.mrb[0].mxu0 %v6300
      %v6520 = vpop.f32.mrb[0].mxu0
      %v6521 = vadd.f32 0.0, %v6520
      %v6522 = vpop.f32.mrb[0].mxu0
      %6523 = vmatprep.mubr.f32.mxu0 0.0
      %6524 = vmatmul.mubr.f32.gmra.mrb[0].mxu0 %v6302
      %v6525 = vpop.f32.mrb[0].mxu0
      %v6526 = vadd.f32 0.0, %v6525
      %v6527 = vpop.f32.mrb[0].mxu0
      %6528 = vdwg.mxu0
      %v6529 = vadd.f32 %v6260, %v6371
      %v6530 = vadd.f32 %v6261, %v6376
      %v6531 = vadd.f32 %v6262, %v6381
      %v6532 = vadd.f32 %v6263, %v6386
      %v6533 = vadd.f32 %v6264, %v6391
      %v6534 = vadd.f32 %v6265, %v6396
      %v6535 = vadd.f32 %v6266, %v6401
      %v6536 = vadd.f32 %v6267, %v6406
      %v6537 = vadd.f32 %v6268, %v6411
      %v6538 = vadd.f32 %v6269, %v6416
      %v6539 = vadd.f32 %v6270, %v6421
      %v6540 = vadd.f32 %v6271, %v6426
      %v6541 = vadd.f32 %v6272, %v6431
      %v6542 = vadd.f32 %v6273, %v6436
      %v6543 = vadd.f32 %v6274, %v6441
      %v6544 = vadd.f32 %v6275, %v6446
      %v6545 = vadd.f32 %v6276, %v6451
      %v6546 = vadd.f32 %v6277, %v6456
      %v6547 = vadd.f32 %v6278, %v6461
      %v6548 = vadd.f32 %v6279, %v6466
      %v6549 = vadd.f32 %v6280, %v6471
      %v6550 = vadd.f32 %v6281, %v6476
      %v6551 = vadd.f32 %v6282, %v6481
      %v6552 = vadd.f32 %v6283, %v6486
      %v6553 = vadd.f32 %v6284, %v6491
      %v6554 = vadd.f32 %v6285, %v6496
      %v6555 = vadd.f32 %v6286, %v6501
      %v6556 = vadd.f32 %v6287, %v6506
      %v6557 = vadd.f32 %v6288, %v6511
      %v6558 = vadd.f32 %v6289, %v6516
      %v6559 = vadd.f32 %v6290, %v6521
      %v6560 = vadd.f32 %v6291, %v6526
      %s6561 = scalar_lea.vmem %s5, 96
      %v6562 = vld [vmem:[%s6561] sm:$0xff]
      %v6563 = vld [vmem:[%s6561 + $0x8] sm:$0xff]
      %v6565 = vsel %vm306, %v4638, 0
      %v6568 = vsel %vm306, %v4639, 0
      %6570 = vmatprep.subr.mxu0 0.0
      %6571 = vmatpush1.msra.mxu0 %v6562
      %6572 = vmatprep.subr.mxu0 0.0
      %6573 = vmatpush1.msra.mxu0 %v6563
      %6574 = vmatprep.subr.mxu0 0.0
      %6575 = vmatpush1.msra.mxu0 0.0
      %6576 = vmatprep.subr.mxu0 0.0
      %6577 = vmatpush1.msra.mxu0 0.0
      %6578 = vmatprep.subr.mxu0 0.0
      %6579 = vmatpush1.msra.mxu0 0.0
      %6580 = vmatprep.subr.mxu0 0.0
      %6581 = vmatpush1.msra.mxu0 0.0
      %6582 = vmatprep.subr.mxu0 0.0
      %6583 = vmatpush1.msra.mxu0 0.0
      %6584 = vmatprep.subr.mxu0 0.0
      %6585 = vmatpush1.msra.mxu0 0.0
      %6586 = vmatprep.subr.mxu0 0.0
      %6587 = vmatpush1.msra.mxu0 0.0
      %6588 = vmatprep.subr.mxu0 0.0
      %6589 = vmatpush1.msra.mxu0 0.0
      %6590 = vmatprep.subr.mxu0 0.0
      %6591 = vmatpush1.msra.mxu0 0.0
      %6592 = vmatprep.subr.mxu0 0.0
      %6593 = vmatpush1.msra.mxu0 0.0
      %6594 = vmatprep.subr.mxu0 0.0
      %6595 = vmatpush1.msra.mxu0 0.0
      %6596 = vmatprep.subr.mxu0 0.0
      %6597 = vmatpush1.msra.mxu0 0.0
      %6598 = vmatprep.subr.mxu0 0.0
      %6599 = vmatpush1.msra.mxu0 0.0
      %6600 = vmatprep.subr.mxu0 0.0
      %6601 = vmatpush1.msra.mxu0 0.0
      %6602 = vmatprep.subr.mxu0 0.0
      %6603 = vmatpush1.msra.mxu0 0.0
      %6604 = vmatprep.subr.mxu0 0.0
      %6605 = vmatpush1.msra.mxu0 0.0
      %6606 = vmatprep.subr.mxu0 0.0
      %6607 = vmatpush1.msra.mxu0 0.0
      %6608 = vmatprep.subr.mxu0 0.0
      %6609 = vmatpush1.msra.mxu0 0.0
      %6610 = vmatprep.subr.mxu0 0.0
      %6611 = vmatpush1.msra.mxu0 0.0
      %6612 = vmatprep.subr.mxu0 0.0
      %6613 = vmatpush1.msra.mxu0 0.0
      %6614 = vmatprep.subr.mxu0 0.0
      %6615 = vmatpush1.msra.mxu0 0.0
      %6616 = vmatprep.subr.mxu0 0.0
      %6617 = vmatpush1.msra.mxu0 0.0
      %6618 = vmatprep.subr.mxu0 0.0
      %6619 = vmatpush1.msra.mxu0 0.0
      %6620 = vmatprep.subr.mxu0 0.0
      %6621 = vmatpush1.msra.mxu0 0.0
      %6622 = vmatprep.subr.mxu0 0.0
      %6623 = vmatpush1.msra.mxu0 0.0
      %6624 = vmatprep.subr.mxu0 0.0
      %6625 = vmatpush1.msra.mxu0 0.0
      %6626 = vmatprep.subr.mxu0 0.0
      %6627 = vmatpush1.msra.mxu0 0.0
      %6628 = vmatprep.subr.mxu0 0.0
      %6629 = vmatpush1.msra.mxu0 0.0
      %6630 = vmatprep.subr.mxu0 0.0
      %6631 = vmatpush1.msra.mxu0 0.0
      %6632 = vmatprep.subr.mxu0 0.0
      %6633 = vmatpush1.msra.mxu0 0.0
      %6634 = vmatprep.mubr.f32.mxu0 0.0
      %6635 = vmatmul.mubr.f32.gmra.mrb[0].mxu0 %v5071
      %v6636 = vpop.f32.mrb[0].mxu0
      %v6637 = vadd.f32 0.0, %v6636
      %v6638 = vpop.f32.mrb[0].mxu0
      %6639 = vmatprep.mubr.f32.mxu0 0.0
      %6640 = vmatmul.mubr.f32.gmra.mrb[0].mxu0 %v5073
      %v6641 = vpop.f32.mrb[0].mxu0
      %v6642 = vadd.f32 0.0, %v6641
      %v6643 = vpop.f32.mrb[0].mxu0
      %6644 = vmatprep.mubr.f32.mxu0 0.0
      %6645 = vmatmul.mubr.f32.gmra.mrb[0].mxu0 %v5075
      %v6646 = vpop.f32.mrb[0].mxu0
      %v6647 = vadd.f32 0.0, %v6646
      %v6648 = vpop.f32.mrb[0].mxu0
      %6649 = vmatprep.mubr.f32.mxu0 0.0
      %6650 = vmatmul.mubr.f32.gmra.mrb[0].mxu0 %v5077
      %v6651 = vpop.f32.mrb[0].mxu0
      %v6652 = vadd.f32 0.0, %v6651
      %v6653 = vpop.f32.mrb[0].mxu0
      %6654 = vmatprep.mubr.f32.mxu0 0.0
      %6655 = vmatmul.mubr.f32.gmra.mrb[0].mxu0 %v5079
      %v6656 = vpop.f32.mrb[0].mxu0
      %v6657 = vadd.f32 0.0, %v6656
      %v6658 = vpop.f32.mrb[0].mxu0
      %6659 = vmatprep.mubr.f32.mxu0 0.0
      %6660 = vmatmul.mubr.f32.gmra.mrb[0].mxu0 %v5081
      %v6661 = vpop.f32.mrb[0].mxu0
      %v6662 = vadd.f32 0.0, %v6661
      %v6663 = vpop.f32.mrb[0].mxu0
      %6664 = vmatprep.mubr.f32.mxu0 0.0
      %6665 = vmatmul.mubr.f32.gmra.mrb[0].mxu0 %v5083
      %v6666 = vpop.f32.mrb[0].mxu0
      %v6667 = vadd.f32 0.0, %v6666
      %v6668 = vpop.f32.mrb[0].mxu0
      %6669 = vmatprep.mubr.f32.mxu0 0.0
      %6670 = vmatmul.mubr.f32.gmra.mrb[0].mxu0 %v5085
      %v6671 = vpop.f32.mrb[0].mxu0
      %v6672 = vadd.f32 0.0, %v6671
      %v6673 = vpop.f32.mrb[0].mxu0
      %6674 = vmatprep.mubr.f32.mxu0 0.0
      %6675 = vmatmul.mubr.f32.gmra.mrb[0].mxu0 %v5087
      %v6676 = vpop.f32.mrb[0].mxu0
      %v6677 = vadd.f32 0.0, %v6676
      %v6678 = vpop.f32.mrb[0].mxu0
      %6679 = vmatprep.mubr.f32.mxu0 0.0
      %6680 = vmatmul.mubr.f32.gmra.mrb[0].mxu0 %v5089
      %v6681 = vpop.f32.mrb[0].mxu0
      %v6682 = vadd.f32 0.0, %v6681
      %v6683 = vpop.f32.mrb[0].mxu0
      %6684 = vmatprep.mubr.f32.mxu0 0.0
      %6685 = vmatmul.mubr.f32.gmra.mrb[0].mxu0 %v5091
      %v6686 = vpop.f32.mrb[0].mxu0
      %v6687 = vadd.f32 0.0, %v6686
      %v6688 = vpop.f32.mrb[0].mxu0
      %6689 = vmatprep.mubr.f32.mxu0 0.0
      %6690 = vmatmul.mubr.f32.gmra.mrb[0].mxu0 %v5093
      %v6691 = vpop.f32.mrb[0].mxu0
      %v6692 = vadd.f32 0.0, %v6691
      %v6693 = vpop.f32.mrb[0].mxu0
      %6694 = vmatprep.mubr.f32.mxu0 0.0
      %6695 = vmatmul.mubr.f32.gmra.mrb[0].mxu0 %v5095
      %v6696 = vpop.f32.mrb[0].mxu0
      %v6697 = vadd.f32 0.0, %v6696
      %v6698 = vpop.f32.mrb[0].mxu0
      %6699 = vmatprep.mubr.f32.mxu0 0.0
      %6700 = vmatmul.mubr.f32.gmra.mrb[0].mxu0 %v5097
      %v6701 = vpop.f32.mrb[0].mxu0
      %v6702 = vadd.f32 0.0, %v6701
      %v6703 = vpop.f32.mrb[0].mxu0
      %6704 = vmatprep.mubr.f32.mxu0 0.0
      %6705 = vmatmul.mubr.f32.gmra.mrb[0].mxu0 %v5099
      %v6706 = vpop.f32.mrb[0].mxu0
      %v6707 = vadd.f32 0.0, %v6706
      %v6708 = vpop.f32.mrb[0].mxu0
      %6709 = vmatprep.mubr.f32.mxu0 0.0
      %6710 = vmatmul.mubr.f32.gmra.mrb[0].mxu0 %v5101
      %v6711 = vpop.f32.mrb[0].mxu0
      %v6712 = vadd.f32 0.0, %v6711
      %v6713 = vpop.f32.mrb[0].mxu0
      %6714 = vmatprep.mubr.f32.mxu0 0.0
      %6715 = vmatmul.mubr.f32.gmra.mrb[0].mxu0 %v5103
      %v6716 = vpop.f32.mrb[0].mxu0
      %v6717 = vadd.f32 0.0, %v6716
      %v6718 = vpop.f32.mrb[0].mxu0
      %6719 = vmatprep.mubr.f32.mxu0 0.0
      %6720 = vmatmul.mubr.f32.gmra.mrb[0].mxu0 %v5105
      %v6721 = vpop.f32.mrb[0].mxu0
      %v6722 = vadd.f32 0.0, %v6721
      %v6723 = vpop.f32.mrb[0].mxu0
      %6724 = vmatprep.mubr.f32.mxu0 0.0
      %6725 = vmatmul.mubr.f32.gmra.mrb[0].mxu0 %v5107
      %v6726 = vpop.f32.mrb[0].mxu0
      %v6727 = vadd.f32 0.0, %v6726
      %v6728 = vpop.f32.mrb[0].mxu0
      %6729 = vmatprep.mubr.f32.mxu0 0.0
      %6730 = vmatmul.mubr.f32.gmra.mrb[0].mxu0 %v5109
      %v6731 = vpop.f32.mrb[0].mxu0
      %v6732 = vadd.f32 0.0, %v6731
      %v6733 = vpop.f32.mrb[0].mxu0
      %6734 = vmatprep.mubr.f32.mxu0 0.0
      %6735 = vmatmul.mubr.f32.gmra.mrb[0].mxu0 %v5111
      %v6736 = vpop.f32.mrb[0].mxu0
      %v6737 = vadd.f32 0.0, %v6736
      %v6738 = vpop.f32.mrb[0].mxu0
      %6739 = vmatprep.mubr.f32.mxu0 0.0
      %6740 = vmatmul.mubr.f32.gmra.mrb[0].mxu0 %v5113
      %v6741 = vpop.f32.mrb[0].mxu0
      %v6742 = vadd.f32 0.0, %v6741
      %v6743 = vpop.f32.mrb[0].mxu0
      %6744 = vmatprep.mubr.f32.mxu0 0.0
      %6745 = vmatmul.mubr.f32.gmra.mrb[0].mxu0 %v5115
      %v6746 = vpop.f32.mrb[0].mxu0
      %v6747 = vadd.f32 0.0, %v6746
      %v6748 = vpop.f32.mrb[0].mxu0
      %6749 = vmatprep.mubr.f32.mxu0 0.0
      %6750 = vmatmul.mubr.f32.gmra.mrb[0].mxu0 %v5117
      %v6751 = vpop.f32.mrb[0].mxu0
      %v6752 = vadd.f32 0.0, %v6751
      %v6753 = vpop.f32.mrb[0].mxu0
      %6754 = vmatprep.mubr.f32.mxu0 0.0
      %6755 = vmatmul.mubr.f32.gmra.mrb[0].mxu0 %v5119
      %v6756 = vpop.f32.mrb[0].mxu0
      %v6757 = vadd.f32 0.0, %v6756
      %v6758 = vpop.f32.mrb[0].mxu0
      %6759 = vmatprep.mubr.f32.mxu0 0.0
      %6760 = vmatmul.mubr.f32.gmra.mrb[0].mxu0 %v5121
      %v6761 = vpop.f32.mrb[0].mxu0
      %v6762 = vadd.f32 0.0, %v6761
      %v6763 = vpop.f32.mrb[0].mxu0
      %6764 = vmatprep.mubr.f32.mxu0 0.0
      %6765 = vmatmul.mubr.f32.gmra.mrb[0].mxu0 %v5123
      %v6766 = vpop.f32.mrb[0].mxu0
      %v6767 = vadd.f32 0.0, %v6766
      %v6768 = vpop.f32.mrb[0].mxu0
      %6769 = vmatprep.mubr.f32.mxu0 0.0
      %6770 = vmatmul.mubr.f32.gmra.mrb[0].mxu0 %v5125
      %v6771 = vpop.f32.mrb[0].mxu0
      %v6772 = vadd.f32 0.0, %v6771
      %v6773 = vpop.f32.mrb[0].mxu0
      %6774 = vmatprep.mubr.f32.mxu0 0.0
      %6775 = vmatmul.mubr.f32.gmra.mrb[0].mxu0 %v5760
      %v6776 = vpop.f32.mrb[0].mxu0
      %v6777 = vadd.f32 0.0, %v6776
      %v6778 = vpop.f32.mrb[0].mxu0
      %6779 = vmatprep.mubr.f32.mxu0 0.0
      %6780 = vmatmul.mubr.f32.gmra.mrb[0].mxu0 %v5763
      %v6781 = vpop.f32.mrb[0].mxu0
      %v6782 = vadd.f32 0.0, %v6781
      %v6783 = vpop.f32.mrb[0].mxu0
      %6784 = vmatprep.mubr.f32.mxu0 0.0
      %6785 = vmatmul.mubr.f32.gmra.mrb[0].mxu0 %v6565
      %v6786 = vpop.f32.mrb[0].mxu0
      %v6787 = vadd.f32 0.0, %v6786
      %v6788 = vpop.f32.mrb[0].mxu0
      %6789 = vmatprep.mubr.f32.mxu0 0.0
      %6790 = vmatmul.mubr.f32.gmra.mrb[0].mxu0 %v6568
      %v6791 = vpop.f32.mrb[0].mxu0
      %v6792 = vadd.f32 0.0, %v6791
      %v6793 = vpop.f32.mrb[0].mxu0
      %6794 = vdwg.mxu0
      %v6795 = vadd.f32 %v6529, %v6637
      %v6796 = vadd.f32 %v6530, %v6642
      %v6797 = vadd.f32 %v6531, %v6647
      %v6798 = vadd.f32 %v6532, %v6652
      %v6799 = vadd.f32 %v6533, %v6657
      %v6800 = vadd.f32 %v6534, %v6662
      %v6801 = vadd.f32 %v6535, %v6667
      %v6802 = vadd.f32 %v6536, %v6672
      %v6803 = vadd.f32 %v6537, %v6677
      %v6804 = vadd.f32 %v6538, %v6682
      %v6805 = vadd.f32 %v6539, %v6687
      %v6806 = vadd.f32 %v6540, %v6692
      %v6807 = vadd.f32 %v6541, %v6697
      %v6808 = vadd.f32 %v6542, %v6702
      %v6809 = vadd.f32 %v6543, %v6707
      %v6810 = vadd.f32 %v6544, %v6712
      %v6811 = vadd.f32 %v6545, %v6717
      %v6812 = vadd.f32 %v6546, %v6722
      %v6813 = vadd.f32 %v6547, %v6727
      %v6814 = vadd.f32 %v6548, %v6732
      %v6815 = vadd.f32 %v6549, %v6737
      %v6816 = vadd.f32 %v6550, %v6742
      %v6817 = vadd.f32 %v6551, %v6747
      %v6818 = vadd.f32 %v6552, %v6752
      %v6819 = vadd.f32 %v6553, %v6757
      %v6820 = vadd.f32 %v6554, %v6762
      %v6821 = vadd.f32 %v6555, %v6767
      %v6822 = vadd.f32 %v6556, %v6772
      %v6823 = vadd.f32 %v6557, %v6777
      %v6824 = vadd.f32 %v6558, %v6782
      %v6825 = vadd.f32 %v6559, %v6787
      %v6826 = vadd.f32 %v6560, %v6792
      %v6828 = vrot.slane %v4638, 1
      %v6829 = vrot.slane %v4639, 1
      %v6830 = vsel %vm1183, %v6828, %v6829
      %v6831 = vrot.slane %v4640, 1
      %v6832 = vsel %vm1183, %v6829, %v6831
      %s6833 = scalar_lea.vmem %s5, 112
      %v6834 = vld [vmem:[%s6833] sm:$0xff]
      %v6835 = vld [vmem:[%s6833 + $0x8] sm:$0xff]
      %v6836 = vsel %vm306, %v6830, 0
      %v6838 = vsel %vm306, %v6832, 0
      %6840 = vmatprep.subr.mxu0 0.0
      %6841 = vmatpush1.msra.mxu0 %v6834
      %6842 = vmatprep.subr.mxu0 0.0
      %6843 = vmatpush1.msra.mxu0 %v6835
      %6844 = vmatprep.subr.mxu0 0.0
      %6845 = vmatpush1.msra.mxu0 0.0
      %6846 = vmatprep.subr.mxu0 0.0
      %6847 = vmatpush1.msra.mxu0 0.0
      %6848 = vmatprep.subr.mxu0 0.0
      %6849 = vmatpush1.msra.mxu0 0.0
      %6850 = vmatprep.subr.mxu0 0.0
      %6851 = vmatpush1.msra.mxu0 0.0
      %6852 = vmatprep.subr.mxu0 0.0
      %6853 = vmatpush1.msra.mxu0 0.0
      %6854 = vmatprep.subr.mxu0 0.0
      %6855 = vmatpush1.msra.mxu0 0.0
      %6856 = vmatprep.subr.mxu0 0.0
      %6857 = vmatpush1.msra.mxu0 0.0
      %6858 = vmatprep.subr.mxu0 0.0
      %6859 = vmatpush1.msra.mxu0 0.0
      %6860 = vmatprep.subr.mxu0 0.0
      %6861 = vmatpush1.msra.mxu0 0.0
      %6862 = vmatprep.subr.mxu0 0.0
      %6863 = vmatpush1.msra.mxu0 0.0
      %6864 = vmatprep.subr.mxu0 0.0
      %6865 = vmatpush1.msra.mxu0 0.0
      %6866 = vmatprep.subr.mxu0 0.0
      %6867 = vmatpush1.msra.mxu0 0.0
      %6868 = vmatprep.subr.mxu0 0.0
      %6869 = vmatpush1.msra.mxu0 0.0
      %6870 = vmatprep.subr.mxu0 0.0
      %6871 = vmatpush1.msra.mxu0 0.0
      %6872 = vmatprep.subr.mxu0 0.0
      %6873 = vmatpush1.msra.mxu0 0.0
      %6874 = vmatprep.subr.mxu0 0.0
      %6875 = vmatpush1.msra.mxu0 0.0
      %6876 = vmatprep.subr.mxu0 0.0
      %6877 = vmatpush1.msra.mxu0 0.0
      %6878 = vmatprep.subr.mxu0 0.0
      %6879 = vmatpush1.msra.mxu0 0.0
      %6880 = vmatprep.subr.mxu0 0.0
      %6881 = vmatpush1.msra.mxu0 0.0
      %6882 = vmatprep.subr.mxu0 0.0
      %6883 = vmatpush1.msra.mxu0 0.0
      %6884 = vmatprep.subr.mxu0 0.0
      %6885 = vmatpush1.msra.mxu0 0.0
      %6886 = vmatprep.subr.mxu0 0.0
      %6887 = vmatpush1.msra.mxu0 0.0
      %6888 = vmatprep.subr.mxu0 0.0
      %6889 = vmatpush1.msra.mxu0 0.0
      %6890 = vmatprep.subr.mxu0 0.0
      %6891 = vmatpush1.msra.mxu0 0.0
      %6892 = vmatprep.subr.mxu0 0.0
      %6893 = vmatpush1.msra.mxu0 0.0
      %6894 = vmatprep.subr.mxu0 0.0
      %6895 = vmatpush1.msra.mxu0 0.0
      %6896 = vmatprep.subr.mxu0 0.0
      %6897 = vmatpush1.msra.mxu0 0.0
      %6898 = vmatprep.subr.mxu0 0.0
      %6899 = vmatpush1.msra.mxu0 0.0
      %6900 = vmatprep.subr.mxu0 0.0
      %6901 = vmatpush1.msra.mxu0 0.0
      %6902 = vmatprep.subr.mxu0 0.0
      %6903 = vmatpush1.msra.mxu0 0.0
      %6904 = vmatprep.mubr.f32.mxu0 0.0
      %6905 = vmatmul.mubr.f32.gmra.mrb[0].mxu0 %v4782
      %v6906 = vpop.f32.mrb[0].mxu0
      %v6907 = vadd.f32 0.0, %v6906
      %v6908 = vpop.f32.mrb[0].mxu0
      %6909 = vmatprep.mubr.f32.mxu0 0.0
      %6910 = vmatmul.mubr.f32.gmra.mrb[0].mxu0 %v4784
      %v6911 = vpop.f32.mrb[0].mxu0
      %v6912 = vadd.f32 0.0, %v6911
      %v6913 = vpop.f32.mrb[0].mxu0
      %6914 = vmatprep.mubr.f32.mxu0 0.0
      %6915 = vmatmul.mubr.f32.gmra.mrb[0].mxu0 %v4786
      %v6916 = vpop.f32.mrb[0].mxu0
      %v6917 = vadd.f32 0.0, %v6916
      %v6918 = vpop.f32.mrb[0].mxu0
      %6919 = vmatprep.mubr.f32.mxu0 0.0
      %6920 = vmatmul.mubr.f32.gmra.mrb[0].mxu0 %v4788
      %v6921 = vpop.f32.mrb[0].mxu0
      %v6922 = vadd.f32 0.0, %v6921
      %v6923 = vpop.f32.mrb[0].mxu0
      %6924 = vmatprep.mubr.f32.mxu0 0.0
      %6925 = vmatmul.mubr.f32.gmra.mrb[0].mxu0 %v4790
      %v6926 = vpop.f32.mrb[0].mxu0
      %v6927 = vadd.f32 0.0, %v6926
      %v6928 = vpop.f32.mrb[0].mxu0
      %6929 = vmatprep.mubr.f32.mxu0 0.0
      %6930 = vmatmul.mubr.f32.gmra.mrb[0].mxu0 %v4792
      %v6931 = vpop.f32.mrb[0].mxu0
      %v6932 = vadd.f32 0.0, %v6931
      %v6933 = vpop.f32.mrb[0].mxu0
      %6934 = vmatprep.mubr.f32.mxu0 0.0
      %6935 = vmatmul.mubr.f32.gmra.mrb[0].mxu0 %v4794
      %v6936 = vpop.f32.mrb[0].mxu0
      %v6937 = vadd.f32 0.0, %v6936
      %v6938 = vpop.f32.mrb[0].mxu0
      %6939 = vmatprep.mubr.f32.mxu0 0.0
      %6940 = vmatmul.mubr.f32.gmra.mrb[0].mxu0 %v4796
      %v6941 = vpop.f32.mrb[0].mxu0
      %v6942 = vadd.f32 0.0, %v6941
      %v6943 = vpop.f32.mrb[0].mxu0
      %6944 = vmatprep.mubr.f32.mxu0 0.0
      %6945 = vmatmul.mubr.f32.gmra.mrb[0].mxu0 %v4798
      %v6946 = vpop.f32.mrb[0].mxu0
      %v6947 = vadd.f32 0.0, %v6946
      %v6948 = vpop.f32.mrb[0].mxu0
      %6949 = vmatprep.mubr.f32.mxu0 0.0
      %6950 = vmatmul.mubr.f32.gmra.mrb[0].mxu0 %v4800
      %v6951 = vpop.f32.mrb[0].mxu0
      %v6952 = vadd.f32 0.0, %v6951
      %v6953 = vpop.f32.mrb[0].mxu0
      %6954 = vmatprep.mubr.f32.mxu0 0.0
      %6955 = vmatmul.mubr.f32.gmra.mrb[0].mxu0 %v4802
      %v6956 = vpop.f32.mrb[0].mxu0
      %v6957 = vadd.f32 0.0, %v6956
      %v6958 = vpop.f32.mrb[0].mxu0
      %6959 = vmatprep.mubr.f32.mxu0 0.0
      %6960 = vmatmul.mubr.f32.gmra.mrb[0].mxu0 %v4804
      %v6961 = vpop.f32.mrb[0].mxu0
      %v6962 = vadd.f32 0.0, %v6961
      %v6963 = vpop.f32.mrb[0].mxu0
      %6964 = vmatprep.mubr.f32.mxu0 0.0
      %6965 = vmatmul.mubr.f32.gmra.mrb[0].mxu0 %v4806
      %v6966 = vpop.f32.mrb[0].mxu0
      %v6967 = vadd.f32 0.0, %v6966
      %v6968 = vpop.f32.mrb[0].mxu0
      %6969 = vmatprep.mubr.f32.mxu0 0.0
      %6970 = vmatmul.mubr.f32.gmra.mrb[0].mxu0 %v4808
      %v6971 = vpop.f32.mrb[0].mxu0
      %v6972 = vadd.f32 0.0, %v6971
      %v6973 = vpop.f32.mrb[0].mxu0
      %6974 = vmatprep.mubr.f32.mxu0 0.0
      %6975 = vmatmul.mubr.f32.gmra.mrb[0].mxu0 %v4810
      %v6976 = vpop.f32.mrb[0].mxu0
      %v6977 = vadd.f32 0.0, %v6976
      %v6978 = vpop.f32.mrb[0].mxu0
      %6979 = vmatprep.mubr.f32.mxu0 0.0
      %6980 = vmatmul.mubr.f32.gmra.mrb[0].mxu0 %v4812
      %v6981 = vpop.f32.mrb[0].mxu0
      %v6982 = vadd.f32 0.0, %v6981
      %v6983 = vpop.f32.mrb[0].mxu0
      %6984 = vmatprep.mubr.f32.mxu0 0.0
      %6985 = vmatmul.mubr.f32.gmra.mrb[0].mxu0 %v4814
      %v6986 = vpop.f32.mrb[0].mxu0
      %v6987 = vadd.f32 0.0, %v6986
      %v6988 = vpop.f32.mrb[0].mxu0
      %6989 = vmatprep.mubr.f32.mxu0 0.0
      %6990 = vmatmul.mubr.f32.gmra.mrb[0].mxu0 %v4816
      %v6991 = vpop.f32.mrb[0].mxu0
      %v6992 = vadd.f32 0.0, %v6991
      %v6993 = vpop.f32.mrb[0].mxu0
      %6994 = vmatprep.mubr.f32.mxu0 0.0
      %6995 = vmatmul.mubr.f32.gmra.mrb[0].mxu0 %v4818
      %v6996 = vpop.f32.mrb[0].mxu0
      %v6997 = vadd.f32 0.0, %v6996
      %v6998 = vpop.f32.mrb[0].mxu0
      %6999 = vmatprep.mubr.f32.mxu0 0.0
      %7000 = vmatmul.mubr.f32.gmra.mrb[0].mxu0 %v4820
      %v7001 = vpop.f32.mrb[0].mxu0
      %v7002 = vadd.f32 0.0, %v7001
      %v7003 = vpop.f32.mrb[0].mxu0
      %7004 = vmatprep.mubr.f32.mxu0 0.0
      %7005 = vmatmul.mubr.f32.gmra.mrb[0].mxu0 %v4822
      %v7006 = vpop.f32.mrb[0].mxu0
      %v7007 = vadd.f32 0.0, %v7006
      %v7008 = vpop.f32.mrb[0].mxu0
      %7009 = vmatprep.mubr.f32.mxu0 0.0
      %7010 = vmatmul.mubr.f32.gmra.mrb[0].mxu0 %v4824
      %v7011 = vpop.f32.mrb[0].mxu0
      %v7012 = vadd.f32 0.0, %v7011
      %v7013 = vpop.f32.mrb[0].mxu0
      %7014 = vmatprep.mubr.f32.mxu0 0.0
      %7015 = vmatmul.mubr.f32.gmra.mrb[0].mxu0 %v4826
      %v7016 = vpop.f32.mrb[0].mxu0
      %v7017 = vadd.f32 0.0, %v7016
      %v7018 = vpop.f32.mrb[0].mxu0
      %7019 = vmatprep.mubr.f32.mxu0 0.0
      %7020 = vmatmul.mubr.f32.gmra.mrb[0].mxu0 %v4828
      %v7021 = vpop.f32.mrb[0].mxu0
      %v7022 = vadd.f32 0.0, %v7021
      %v7023 = vpop.f32.mrb[0].mxu0
      %7024 = vmatprep.mubr.f32.mxu0 0.0
      %7025 = vmatmul.mubr.f32.gmra.mrb[0].mxu0 %v4830
      %v7026 = vpop.f32.mrb[0].mxu0
      %v7027 = vadd.f32 0.0, %v7026
      %v7028 = vpop.f32.mrb[0].mxu0
      %7029 = vmatprep.mubr.f32.mxu0 0.0
      %7030 = vmatmul.mubr.f32.gmra.mrb[0].mxu0 %v4832
      %v7031 = vpop.f32.mrb[0].mxu0
      %v7032 = vadd.f32 0.0, %v7031
      %v7033 = vpop.f32.mrb[0].mxu0
      %7034 = vmatprep.mubr.f32.mxu0 0.0
      %7035 = vmatmul.mubr.f32.gmra.mrb[0].mxu0 %v4834
      %v7036 = vpop.f32.mrb[0].mxu0
      %v7037 = vadd.f32 0.0, %v7036
      %v7038 = vpop.f32.mrb[0].mxu0
      %7039 = vmatprep.mubr.f32.mxu0 0.0
      %7040 = vmatmul.mubr.f32.gmra.mrb[0].mxu0 %v4836
      %v7041 = vpop.f32.mrb[0].mxu0
      %v7042 = vadd.f32 0.0, %v7041
      %v7043 = vpop.f32.mrb[0].mxu0
      %7044 = vmatprep.mubr.f32.mxu0 0.0
      %7045 = vmatmul.mubr.f32.gmra.mrb[0].mxu0 %v6031
      %v7046 = vpop.f32.mrb[0].mxu0
      %v7047 = vadd.f32 0.0, %v7046
      %v7048 = vpop.f32.mrb[0].mxu0
      %7049 = vmatprep.mubr.f32.mxu0 0.0
      %7050 = vmatmul.mubr.f32.gmra.mrb[0].mxu0 %v6033
      %v7051 = vpop.f32.mrb[0].mxu0
      %v7052 = vadd.f32 0.0, %v7051
      %v7053 = vpop.f32.mrb[0].mxu0
      %7054 = vmatprep.mubr.f32.mxu0 0.0
      %7055 = vmatmul.mubr.f32.gmra.mrb[0].mxu0 %v6836
      %v7056 = vpop.f32.mrb[0].mxu0
      %v7057 = vadd.f32 0.0, %v7056
      %v7058 = vpop.f32.mrb[0].mxu0
      %7059 = vmatprep.mubr.f32.mxu0 0.0
      %7060 = vmatmul.mubr.f32.gmra.mrb[0].mxu0 %v6838
      %v7061 = vpop.f32.mrb[0].mxu0
      %v7062 = vadd.f32 0.0, %v7061
      %v7063 = vpop.f32.mrb[0].mxu0
      %7064 = vdwg.mxu0
      %v7065 = vadd.f32 %v6795, %v6907
      %v7066 = vadd.f32 %v6796, %v6912
      %v7067 = vadd.f32 %v6797, %v6917
      %v7068 = vadd.f32 %v6798, %v6922
      %v7069 = vadd.f32 %v6799, %v6927
      %v7070 = vadd.f32 %v6800, %v6932
      %v7071 = vadd.f32 %v6801, %v6937
      %v7072 = vadd.f32 %v6802, %v6942
      %v7073 = vadd.f32 %v6803, %v6947
      %v7074 = vadd.f32 %v6804, %v6952
      %v7075 = vadd.f32 %v6805, %v6957
      %v7076 = vadd.f32 %v6806, %v6962
      %v7077 = vadd.f32 %v6807, %v6967
      %v7078 = vadd.f32 %v6808, %v6972
      %v7079 = vadd.f32 %v6809, %v6977
      %v7080 = vadd.f32 %v6810, %v6982
      %v7081 = vadd.f32 %v6811, %v6987
      %v7082 = vadd.f32 %v6812, %v6992
      %v7083 = vadd.f32 %v6813, %v6997
      %v7084 = vadd.f32 %v6814, %v7002
      %v7085 = vadd.f32 %v6815, %v7007
      %v7086 = vadd.f32 %v6816, %v7012
      %v7087 = vadd.f32 %v6817, %v7017
      %v7088 = vadd.f32 %v6818, %v7022
      %v7089 = vadd.f32 %v6819, %v7027
      %v7090 = vadd.f32 %v6820, %v7032
      %v7091 = vadd.f32 %v6821, %v7037
      %v7092 = vadd.f32 %v6822, %v7042
      %v7093 = vadd.f32 %v6823, %v7047
      %v7094 = vadd.f32 %v6824, %v7052
      %v7095 = vadd.f32 %v6825, %v7057
      %v7096 = vadd.f32 %v6826, %v7062
      %v7097 = vrot.slane %v4638, 2
      %v7098 = vrot.slane %v4639, 2
      %v7099 = vsel %vm1328, %v7097, %v7098
      %v7100 = vrot.slane %v4640, 2
      %v7101 = vsel %vm1328, %v7098, %v7100
      %s7102 = scalar_lea.vmem %s5, 128
      %v7103 = vld [vmem:[%s7102] sm:$0xff]
      %v7104 = vld [vmem:[%s7102 + $0x8] sm:$0xff]
      %v7105 = vsel %vm306, %v7099, 0
      %v7107 = vsel %vm306, %v7101, 0
      %7109 = vmatprep.subr.mxu0 0.0
      %7110 = vmatpush1.msra.mxu0 %v7103
      %7111 = vmatprep.subr.mxu0 0.0
      %7112 = vmatpush1.msra.mxu0 %v7104
      %7113 = vmatprep.subr.mxu0 0.0
      %7114 = vmatpush1.msra.mxu0 0.0
      %7115 = vmatprep.subr.mxu0 0.0
      %7116 = vmatpush1.msra.mxu0 0.0
      %7117 = vmatprep.subr.mxu0 0.0
      %7118 = vmatpush1.msra.mxu0 0.0
      %7119 = vmatprep.subr.mxu0 0.0
      %7120 = vmatpush1.msra.mxu0 0.0
      %7121 = vmatprep.subr.mxu0 0.0
      %7122 = vmatpush1.msra.mxu0 0.0
      %7123 = vmatprep.subr.mxu0 0.0
      %7124 = vmatpush1.msra.mxu0 0.0
      %7125 = vmatprep.subr.mxu0 0.0
      %7126 = vmatpush1.msra.mxu0 0.0
      %7127 = vmatprep.subr.mxu0 0.0
      %7128 = vmatpush1.msra.mxu0 0.0
      %7129 = vmatprep.subr.mxu0 0.0
      %7130 = vmatpush1.msra.mxu0 0.0
      %7131 = vmatprep.subr.mxu0 0.0
      %7132 = vmatpush1.msra.mxu0 0.0
      %7133 = vmatprep.subr.mxu0 0.0
      %7134 = vmatpush1.msra.mxu0 0.0
      %7135 = vmatprep.subr.mxu0 0.0
      %7136 = vmatpush1.msra.mxu0 0.0
      %7137 = vmatprep.subr.mxu0 0.0
      %7138 = vmatpush1.msra.mxu0 0.0
      %7139 = vmatprep.subr.mxu0 0.0
      %7140 = vmatpush1.msra.mxu0 0.0
      %7141 = vmatprep.subr.mxu0 0.0
      %7142 = vmatpush1.msra.mxu0 0.0
      %7143 = vmatprep.subr.mxu0 0.0
      %7144 = vmatpush1.msra.mxu0 0.0
      %7145 = vmatprep.subr.mxu0 0.0
      %7146 = vmatpush1.msra.mxu0 0.0
      %7147 = vmatprep.subr.mxu0 0.0
      %7148 = vmatpush1.msra.mxu0 0.0
      %7149 = vmatprep.subr.mxu0 0.0
      %7150 = vmatpush1.msra.mxu0 0.0
      %7151 = vmatprep.subr.mxu0 0.0
      %7152 = vmatpush1.msra.mxu0 0.0
      %7153 = vmatprep.subr.mxu0 0.0
      %7154 = vmatpush1.msra.mxu0 0.0
      %7155 = vmatprep.subr.mxu0 0.0
      %7156 = vmatpush1.msra.mxu0 0.0
      %7157 = vmatprep.subr.mxu0 0.0
      %7158 = vmatpush1.msra.mxu0 0.0
      %7159 = vmatprep.subr.mxu0 0.0
      %7160 = vmatpush1.msra.mxu0 0.0
      %7161 = vmatprep.subr.mxu0 0.0
      %7162 = vmatpush1.msra.mxu0 0.0
      %7163 = vmatprep.subr.mxu0 0.0
      %7164 = vmatpush1.msra.mxu0 0.0
      %7165 = vmatprep.subr.mxu0 0.0
      %7166 = vmatpush1.msra.mxu0 0.0
      %7167 = vmatprep.subr.mxu0 0.0
      %7168 = vmatpush1.msra.mxu0 0.0
      %7169 = vmatprep.subr.mxu0 0.0
      %7170 = vmatpush1.msra.mxu0 0.0
      %7171 = vmatprep.subr.mxu0 0.0
      %7172 = vmatpush1.msra.mxu0 0.0
      %7173 = vmatprep.mubr.f32.mxu0 0.0
      %7174 = vmatmul.mubr.f32.gmra.mrb[0].mxu0 %v5443
      %v7175 = vpop.f32.mrb[0].mxu0
      %v7176 = vadd.f32 0.0, %v7175
      %v7177 = vpop.f32.mrb[0].mxu0
      %7178 = vmatprep.mubr.f32.mxu0 0.0
      %7179 = vmatmul.mubr.f32.gmra.mrb[0].mxu0 %v5445
      %v7180 = vpop.f32.mrb[0].mxu0
      %v7181 = vadd.f32 0.0, %v7180
      %v7182 = vpop.f32.mrb[0].mxu0
      %7183 = vmatprep.mubr.f32.mxu0 0.0
      %7184 = vmatmul.mubr.f32.gmra.mrb[0].mxu0 %v5447
      %v7185 = vpop.f32.mrb[0].mxu0
      %v7186 = vadd.f32 0.0, %v7185
      %v7187 = vpop.f32.mrb[0].mxu0
      %7188 = vmatprep.mubr.f32.mxu0 0.0
      %7189 = vmatmul.mubr.f32.gmra.mrb[0].mxu0 %v5449
      %v7190 = vpop.f32.mrb[0].mxu0
      %v7191 = vadd.f32 0.0, %v7190
      %v7192 = vpop.f32.mrb[0].mxu0
      %7193 = vmatprep.mubr.f32.mxu0 0.0
      %7194 = vmatmul.mubr.f32.gmra.mrb[0].mxu0 %v5451
      %v7195 = vpop.f32.mrb[0].mxu0
      %v7196 = vadd.f32 0.0, %v7195
      %v7197 = vpop.f32.mrb[0].mxu0
      %7198 = vmatprep.mubr.f32.mxu0 0.0
      %7199 = vmatmul.mubr.f32.gmra.mrb[0].mxu0 %v5453
      %v7200 = vpop.f32.mrb[0].mxu0
      %v7201 = vadd.f32 0.0, %v7200
      %v7202 = vpop.f32.mrb[0].mxu0
      %7203 = vmatprep.mubr.f32.mxu0 0.0
      %7204 = vmatmul.mubr.f32.gmra.mrb[0].mxu0 %v5455
      %v7205 = vpop.f32.mrb[0].mxu0
      %v7206 = vadd.f32 0.0, %v7205
      %v7207 = vpop.f32.mrb[0].mxu0
      %7208 = vmatprep.mubr.f32.mxu0 0.0
      %7209 = vmatmul.mubr.f32.gmra.mrb[0].mxu0 %v5457
      %v7210 = vpop.f32.mrb[0].mxu0
      %v7211 = vadd.f32 0.0, %v7210
      %v7212 = vpop.f32.mrb[0].mxu0
      %7213 = vmatprep.mubr.f32.mxu0 0.0
      %7214 = vmatmul.mubr.f32.gmra.mrb[0].mxu0 %v5459
      %v7215 = vpop.f32.mrb[0].mxu0
      %v7216 = vadd.f32 0.0, %v7215
      %v7217 = vpop.f32.mrb[0].mxu0
      %7218 = vmatprep.mubr.f32.mxu0 0.0
      %7219 = vmatmul.mubr.f32.gmra.mrb[0].mxu0 %v5461
      %v7220 = vpop.f32.mrb[0].mxu0
      %v7221 = vadd.f32 0.0, %v7220
      %v7222 = vpop.f32.mrb[0].mxu0
      %7223 = vmatprep.mubr.f32.mxu0 0.0
      %7224 = vmatmul.mubr.f32.gmra.mrb[0].mxu0 %v5463
      %v7225 = vpop.f32.mrb[0].mxu0
      %v7226 = vadd.f32 0.0, %v7225
      %v7227 = vpop.f32.mrb[0].mxu0
      %7228 = vmatprep.mubr.f32.mxu0 0.0
      %7229 = vmatmul.mubr.f32.gmra.mrb[0].mxu0 %v5465
      %v7230 = vpop.f32.mrb[0].mxu0
      %v7231 = vadd.f32 0.0, %v7230
      %v7232 = vpop.f32.mrb[0].mxu0
      %7233 = vmatprep.mubr.f32.mxu0 0.0
      %7234 = vmatmul.mubr.f32.gmra.mrb[0].mxu0 %v5467
      %v7235 = vpop.f32.mrb[0].mxu0
      %v7236 = vadd.f32 0.0, %v7235
      %v7237 = vpop.f32.mrb[0].mxu0
      %7238 = vmatprep.mubr.f32.mxu0 0.0
      %7239 = vmatmul.mubr.f32.gmra.mrb[0].mxu0 %v5469
      %v7240 = vpop.f32.mrb[0].mxu0
      %v7241 = vadd.f32 0.0, %v7240
      %v7242 = vpop.f32.mrb[0].mxu0
      %7243 = vmatprep.mubr.f32.mxu0 0.0
      %7244 = vmatmul.mubr.f32.gmra.mrb[0].mxu0 %v5471
      %v7245 = vpop.f32.mrb[0].mxu0
      %v7246 = vadd.f32 0.0, %v7245
      %v7247 = vpop.f32.mrb[0].mxu0
      %7248 = vmatprep.mubr.f32.mxu0 0.0
      %7249 = vmatmul.mubr.f32.gmra.mrb[0].mxu0 %v5473
      %v7250 = vpop.f32.mrb[0].mxu0
      %v7251 = vadd.f32 0.0, %v7250
      %v7252 = vpop.f32.mrb[0].mxu0
      %7253 = vmatprep.mubr.f32.mxu0 0.0
      %7254 = vmatmul.mubr.f32.gmra.mrb[0].mxu0 %v5475
      %v7255 = vpop.f32.mrb[0].mxu0
      %v7256 = vadd.f32 0.0, %v7255
      %v7257 = vpop.f32.mrb[0].mxu0
      %7258 = vmatprep.mubr.f32.mxu0 0.0
      %7259 = vmatmul.mubr.f32.gmra.mrb[0].mxu0 %v5477
      %v7260 = vpop.f32.mrb[0].mxu0
      %v7261 = vadd.f32 0.0, %v7260
      %v7262 = vpop.f32.mrb[0].mxu0
      %7263 = vmatprep.mubr.f32.mxu0 0.0
      %7264 = vmatmul.mubr.f32.gmra.mrb[0].mxu0 %v5479
      %v7265 = vpop.f32.mrb[0].mxu0
      %v7266 = vadd.f32 0.0, %v7265
      %v7267 = vpop.f32.mrb[0].mxu0
      %7268 = vmatprep.mubr.f32.mxu0 0.0
      %7269 = vmatmul.mubr.f32.gmra.mrb[0].mxu0 %v5481
      %v7270 = vpop.f32.mrb[0].mxu0
      %v7271 = vadd.f32 0.0, %v7270
      %v7272 = vpop.f32.mrb[0].mxu0
      %7273 = vmatprep.mubr.f32.mxu0 0.0
      %7274 = vmatmul.mubr.f32.gmra.mrb[0].mxu0 %v5483
      %v7275 = vpop.f32.mrb[0].mxu0
      %v7276 = vadd.f32 0.0, %v7275
      %v7277 = vpop.f32.mrb[0].mxu0
      %7278 = vmatprep.mubr.f32.mxu0 0.0
      %7279 = vmatmul.mubr.f32.gmra.mrb[0].mxu0 %v5485
      %v7280 = vpop.f32.mrb[0].mxu0
      %v7281 = vadd.f32 0.0, %v7280
      %v7282 = vpop.f32.mrb[0].mxu0
      %7283 = vmatprep.mubr.f32.mxu0 0.0
      %7284 = vmatmul.mubr.f32.gmra.mrb[0].mxu0 %v5487
      %v7285 = vpop.f32.mrb[0].mxu0
      %v7286 = vadd.f32 0.0, %v7285
      %v7287 = vpop.f32.mrb[0].mxu0
      %7288 = vmatprep.mubr.f32.mxu0 0.0
      %7289 = vmatmul.mubr.f32.gmra.mrb[0].mxu0 %v5489
      %v7290 = vpop.f32.mrb[0].mxu0
      %v7291 = vadd.f32 0.0, %v7290
      %v7292 = vpop.f32.mrb[0].mxu0
      %7293 = vmatprep.mubr.f32.mxu0 0.0
      %7294 = vmatmul.mubr.f32.gmra.mrb[0].mxu0 %v5491
      %v7295 = vpop.f32.mrb[0].mxu0
      %v7296 = vadd.f32 0.0, %v7295
      %v7297 = vpop.f32.mrb[0].mxu0
      %7298 = vmatprep.mubr.f32.mxu0 0.0
      %7299 = vmatmul.mubr.f32.gmra.mrb[0].mxu0 %v5493
      %v7300 = vpop.f32.mrb[0].mxu0
      %v7301 = vadd.f32 0.0, %v7300
      %v7302 = vpop.f32.mrb[0].mxu0
      %7303 = vmatprep.mubr.f32.mxu0 0.0
      %7304 = vmatmul.mubr.f32.gmra.mrb[0].mxu0 %v5495
      %v7305 = vpop.f32.mrb[0].mxu0
      %v7306 = vadd.f32 0.0, %v7305
      %v7307 = vpop.f32.mrb[0].mxu0
      %7308 = vmatprep.mubr.f32.mxu0 0.0
      %7309 = vmatmul.mubr.f32.gmra.mrb[0].mxu0 %v5497
      %v7310 = vpop.f32.mrb[0].mxu0
      %v7311 = vadd.f32 0.0, %v7310
      %v7312 = vpop.f32.mrb[0].mxu0
      %7313 = vmatprep.mubr.f32.mxu0 0.0
      %7314 = vmatmul.mubr.f32.gmra.mrb[0].mxu0 %v6300
      %v7315 = vpop.f32.mrb[0].mxu0
      %v7316 = vadd.f32 0.0, %v7315
      %v7317 = vpop.f32.mrb[0].mxu0
      %7318 = vmatprep.mubr.f32.mxu0 0.0
      %7319 = vmatmul.mubr.f32.gmra.mrb[0].mxu0 %v6302
      %v7320 = vpop.f32.mrb[0].mxu0
      %v7321 = vadd.f32 0.0, %v7320
      %v7322 = vpop.f32.mrb[0].mxu0
      %7323 = vmatprep.mubr.f32.mxu0 0.0
      %7324 = vmatmul.mubr.f32.gmra.mrb[0].mxu0 %v7105
      %v7325 = vpop.f32.mrb[0].mxu0
      %v7326 = vadd.f32 0.0, %v7325
      %v7327 = vpop.f32.mrb[0].mxu0
      %7328 = vmatprep.mubr.f32.mxu0 0.0
      %7329 = vmatmul.mubr.f32.gmra.mrb[0].mxu0 %v7107
      %v7330 = vpop.f32.mrb[0].mxu0
      %v7331 = vadd.f32 0.0, %v7330
      %v7332 = vpop.f32.mrb[0].mxu0
      %7333 = vdwg.mxu0
      %v7334 = vadd.f32 %v7065, %v7176
      %v7335 = vadd.f32 %v7066, %v7181
      %v7336 = vadd.f32 %v7067, %v7186
      %v7337 = vadd.f32 %v7068, %v7191
      %v7338 = vadd.f32 %v7069, %v7196
      %v7339 = vadd.f32 %v7070, %v7201
      %v7340 = vadd.f32 %v7071, %v7206
      %v7341 = vadd.f32 %v7072, %v7211
      %v7342 = vadd.f32 %v7073, %v7216
      %v7343 = vadd.f32 %v7074, %v7221
      %v7344 = vadd.f32 %v7075, %v7226
      %v7345 = vadd.f32 %v7076, %v7231
      %v7346 = vadd.f32 %v7077, %v7236
      %v7347 = vadd.f32 %v7078, %v7241
      %v7348 = vadd.f32 %v7079, %v7246
      %v7349 = vadd.f32 %v7080, %v7251
      %v7350 = vadd.f32 %v7081, %v7256
      %v7351 = vadd.f32 %v7082, %v7261
      %v7352 = vadd.f32 %v7083, %v7266
      %v7353 = vadd.f32 %v7084, %v7271
      %v7354 = vadd.f32 %v7085, %v7276
      %v7355 = vadd.f32 %v7086, %v7281
      %v7356 = vadd.f32 %v7087, %v7286
      %v7357 = vadd.f32 %v7088, %v7291
      %v7358 = vadd.f32 %v7089, %v7296
      %v7359 = vadd.f32 %v7090, %v7301
      %v7360 = vadd.f32 %v7091, %v7306
      %v7361 = vadd.f32 %v7092, %v7311
      %v7362 = vadd.f32 %v7093, %v7316
      %v7363 = vadd.f32 %v7094, %v7321
      %v7364 = vadd.f32 %v7095, %v7326
      %v7365 = vadd.f32 %v7096, %v7331
      %v7366 = vld [vmem:[%s6] sm:$0x1]
      %v7368 = vlaneseq
      %v7369 = vshrl.u32 %v7368, 7
      %v7370 = vsub.s32 0, %v7369
      %v7371 = vrot.slane %v7366, %v7370
      %v7373 = vadd.f32 %v7334, %v7371
      %v7374 = vadd.f32 %v7335, %v7371
      %v7375 = vadd.f32 %v7336, %v7371
      %v7376 = vadd.f32 %v7337, %v7371
      %v7377 = vadd.f32 %v7338, %v7371
      %v7378 = vadd.f32 %v7339, %v7371
      %v7379 = vadd.f32 %v7340, %v7371
      %v7380 = vadd.f32 %v7341, %v7371
      %v7381 = vadd.f32 %v7342, %v7371
      %v7382 = vadd.f32 %v7343, %v7371
      %v7383 = vadd.f32 %v7344, %v7371
      %v7384 = vadd.f32 %v7345, %v7371
      %v7385 = vadd.f32 %v7346, %v7371
      %v7386 = vadd.f32 %v7347, %v7371
      %v7387 = vadd.f32 %v7348, %v7371
      %v7388 = vadd.f32 %v7349, %v7371
      %v7389 = vadd.f32 %v7350, %v7371
      %v7390 = vadd.f32 %v7351, %v7371
      %v7391 = vadd.f32 %v7352, %v7371
      %v7392 = vadd.f32 %v7353, %v7371
      %v7393 = vadd.f32 %v7354, %v7371
      %v7394 = vadd.f32 %v7355, %v7371
      %v7395 = vadd.f32 %v7356, %v7371
      %v7396 = vadd.f32 %v7357, %v7371
      %v7397 = vadd.f32 %v7358, %v7371
      %v7398 = vadd.f32 %v7359, %v7371
      %v7399 = vadd.f32 %v7360, %v7371
      %v7400 = vadd.f32 %v7361, %v7371
      %v7401 = vadd.f32 %v7362, %v7371
      %v7402 = vadd.f32 %v7363, %v7371
      %v7403 = vadd.f32 %v7364, %v7371
      %v7404 = vadd.f32 %v7365, %v7371
      %v7405 = vmax.f32 %v7373, 0.0
      %v7406 = vmax.f32 %v7374, 0.0
      %v7407 = vmax.f32 %v7375, 0.0
      %v7408 = vmax.f32 %v7376, 0.0
      %v7409 = vmax.f32 %v7377, 0.0
      %v7410 = vmax.f32 %v7378, 0.0
      %v7411 = vmax.f32 %v7379, 0.0
      %v7412 = vmax.f32 %v7380, 0.0
      %v7413 = vmax.f32 %v7381, 0.0
      %v7414 = vmax.f32 %v7382, 0.0
      %v7415 = vmax.f32 %v7383, 0.0
      %v7416 = vmax.f32 %v7384, 0.0
      %v7417 = vmax.f32 %v7385, 0.0
      %v7418 = vmax.f32 %v7386, 0.0
      %v7419 = vmax.f32 %v7387, 0.0
      %v7420 = vmax.f32 %v7388, 0.0
      %v7421 = vmax.f32 %v7389, 0.0
      %v7422 = vmax.f32 %v7390, 0.0
      %v7423 = vmax.f32 %v7391, 0.0
      %v7424 = vmax.f32 %v7392, 0.0
      %v7425 = vmax.f32 %v7393, 0.0
      %v7426 = vmax.f32 %v7394, 0.0
      %v7427 = vmax.f32 %v7395, 0.0
      %v7428 = vmax.f32 %v7396, 0.0
      %v7429 = vmax.f32 %v7397, 0.0
      %v7430 = vmax.f32 %v7398, 0.0
      %v7431 = vmax.f32 %v7399, 0.0
      %v7432 = vmax.f32 %v7400, 0.0
      %v7433 = vmax.f32 %v7401, 0.0
      %v7434 = vmax.f32 %v7402, 0.0
      %v7435 = vmax.f32 %v7403, 0.0
      %v7436 = vmax.f32 %v7404, 0.0
      %7469 = vrot.lane.b32.xlu0 %v792, 112
      %v7470 = vpop.permute.xlu0 %7469
      %7471 = vrot.lane.b32.xlu0 %v793, 112
      %v7472 = vpop.permute.xlu0 %7471
      %7473 = vrot.lane.b32.xlu0 %v794, 112
      %v7474 = vpop.permute.xlu0 %7473
      %7475 = vrot.lane.b32.xlu0 %v795, 112
      %v7476 = vpop.permute.xlu0 %7475
      %7477 = vrot.lane.b32.xlu0 %v796, 112
      %v7478 = vpop.permute.xlu0 %7477
      %7479 = vrot.lane.b32.xlu0 %v797, 112
      %v7480 = vpop.permute.xlu0 %7479
      %7481 = vrot.lane.b32.xlu0 %v798, 112
      %v7482 = vpop.permute.xlu0 %7481
      %7483 = vrot.lane.b32.xlu0 %v799, 112
      %v7484 = vpop.permute.xlu0 %7483
      %7485 = vrot.lane.b32.xlu0 %v800, 112
      %v7486 = vpop.permute.xlu0 %7485
      %7487 = vrot.lane.b32.xlu0 %v801, 112
      %v7488 = vpop.permute.xlu0 %7487
      %7489 = vrot.lane.b32.xlu0 %v802, 112
      %v7490 = vpop.permute.xlu0 %7489
      %7491 = vrot.lane.b32.xlu0 %v803, 112
      %v7492 = vpop.permute.xlu0 %7491
      %7493 = vrot.lane.b32.xlu0 %v804, 112
      %v7494 = vpop.permute.xlu0 %7493
      %7495 = vrot.lane.b32.xlu0 %v805, 112
      %v7496 = vpop.permute.xlu0 %7495
      %7497 = vrot.lane.b32.xlu0 %v806, 112
      %v7498 = vpop.permute.xlu0 %7497
      %7499 = vrot.lane.b32.xlu0 %v807, 112
      %v7500 = vpop.permute.xlu0 %7499
      %7501 = vrot.lane.b32.xlu0 %v808, 112
      %v7502 = vpop.permute.xlu0 %7501
      %7503 = vrot.lane.b32.xlu0 %v809, 112
      %v7504 = vpop.permute.xlu0 %7503
      %7505 = vrot.lane.b32.xlu0 %v810, 112
      %v7506 = vpop.permute.xlu0 %7505
      %7507 = vrot.lane.b32.xlu0 %v811, 112
      %v7508 = vpop.permute.xlu0 %7507
      %7509 = vrot.lane.b32.xlu0 %v812, 112
      %v7510 = vpop.permute.xlu0 %7509
      %7511 = vrot.lane.b32.xlu0 %v813, 112
      %v7512 = vpop.permute.xlu0 %7511
      %7513 = vrot.lane.b32.xlu0 %v814, 112
      %v7514 = vpop.permute.xlu0 %7513
      %7515 = vrot.lane.b32.xlu0 %v815, 112
      %v7516 = vpop.permute.xlu0 %7515
      %7517 = vrot.lane.b32.xlu0 %v816, 112
      %v7518 = vpop.permute.xlu0 %7517
      %7519 = vrot.lane.b32.xlu0 %v817, 112
      %v7520 = vpop.permute.xlu0 %7519
      %7521 = vrot.lane.b32.xlu0 %v818, 112
      %v7522 = vpop.permute.xlu0 %7521
      %7523 = vrot.lane.b32.xlu0 %v819, 112
      %v7524 = vpop.permute.xlu0 %7523
      %7525 = vrot.lane.b32.xlu0 %v820, 112
      %v7526 = vpop.permute.xlu0 %7525
      %7527 = vrot.lane.b32.xlu0 %v821, 112
      %v7528 = vpop.permute.xlu0 %7527
      %7529 = vrot.lane.b32.xlu0 %v822, 112
      %v7530 = vpop.permute.xlu0 %7529
      %7531 = vrot.lane.b32.xlu0 %v823, 112
      %v7532 = vpop.permute.xlu0 %7531
      %7565 = vrot.lane.b32.xlu0 %v4395, 8
      %v7566 = vpop.permute.xlu0 %7565
      %7567 = vrot.lane.b32.xlu0 %v4396, 8
      %v7568 = vpop.permute.xlu0 %7567
      %7569 = vrot.lane.b32.xlu0 %v4397, 8
      %v7570 = vpop.permute.xlu0 %7569
      %7571 = vrot.lane.b32.xlu0 %v4398, 8
      %v7572 = vpop.permute.xlu0 %7571
      %7573 = vrot.lane.b32.xlu0 %v4399, 8
      %v7574 = vpop.permute.xlu0 %7573
      %7575 = vrot.lane.b32.xlu0 %v4400, 8
      %v7576 = vpop.permute.xlu0 %7575
      %7577 = vrot.lane.b32.xlu0 %v4401, 8
      %v7578 = vpop.permute.xlu0 %7577
      %7579 = vrot.lane.b32.xlu0 %v4402, 8
      %v7580 = vpop.permute.xlu0 %7579
      %7581 = vrot.lane.b32.xlu0 %v4403, 8
      %v7582 = vpop.permute.xlu0 %7581
      %7583 = vrot.lane.b32.xlu0 %v4404, 8
      %v7584 = vpop.permute.xlu0 %7583
      %7585 = vrot.lane.b32.xlu0 %v4405, 8
      %v7586 = vpop.permute.xlu0 %7585
      %7587 = vrot.lane.b32.xlu0 %v4406, 8
      %v7588 = vpop.permute.xlu0 %7587
      %7589 = vrot.lane.b32.xlu0 %v4407, 8
      %v7590 = vpop.permute.xlu0 %7589
      %7591 = vrot.lane.b32.xlu0 %v4408, 8
      %v7592 = vpop.permute.xlu0 %7591
      %7593 = vrot.lane.b32.xlu0 %v4409, 8
      %v7594 = vpop.permute.xlu0 %7593
      %7595 = vrot.lane.b32.xlu0 %v4410, 8
      %v7596 = vpop.permute.xlu0 %7595
      %7597 = vrot.lane.b32.xlu0 %v4411, 8
      %v7598 = vpop.permute.xlu0 %7597
      %7599 = vrot.lane.b32.xlu0 %v4412, 8
      %v7600 = vpop.permute.xlu0 %7599
      %7601 = vrot.lane.b32.xlu0 %v4413, 8
      %v7602 = vpop.permute.xlu0 %7601
      %7603 = vrot.lane.b32.xlu0 %v4414, 8
      %v7604 = vpop.permute.xlu0 %7603
      %7605 = vrot.lane.b32.xlu0 %v4415, 8
      %v7606 = vpop.permute.xlu0 %7605
      %7607 = vrot.lane.b32.xlu0 %v4416, 8
      %v7608 = vpop.permute.xlu0 %7607
      %7609 = vrot.lane.b32.xlu0 %v4417, 8
      %v7610 = vpop.permute.xlu0 %7609
      %7611 = vrot.lane.b32.xlu0 %v4418, 8
      %v7612 = vpop.permute.xlu0 %7611
      %7613 = vrot.lane.b32.xlu0 %v4419, 8
      %v7614 = vpop.permute.xlu0 %7613
      %7615 = vrot.lane.b32.xlu0 %v4420, 8
      %v7616 = vpop.permute.xlu0 %7615
      %7617 = vrot.lane.b32.xlu0 %v4421, 8
      %v7618 = vpop.permute.xlu0 %7617
      %7619 = vrot.lane.b32.xlu0 %v4422, 8
      %v7620 = vpop.permute.xlu0 %7619
      %7621 = vrot.lane.b32.xlu0 %v4423, 8
      %v7622 = vpop.permute.xlu0 %7621
      %7623 = vrot.lane.b32.xlu0 %v4424, 8
      %v7624 = vpop.permute.xlu0 %7623
      %7625 = vrot.lane.b32.xlu0 %v4425, 8
      %v7626 = vpop.permute.xlu0 %7625
      %7627 = vrot.lane.b32.xlu0 %v4426, 8
      %v7628 = vpop.permute.xlu0 %7627
      %7693 = vrot.lane.b32.xlu0 %v7405, 24
      %v7694 = vpop.permute.xlu0 %7693
      %7695 = vrot.lane.b32.xlu0 %v7406, 24
      %v7696 = vpop.permute.xlu0 %7695
      %7697 = vrot.lane.b32.xlu0 %v7407, 24
      %v7698 = vpop.permute.xlu0 %7697
      %7699 = vrot.lane.b32.xlu0 %v7408, 24
      %v7700 = vpop.permute.xlu0 %7699
      %7701 = vrot.lane.b32.xlu0 %v7409, 24
      %v7702 = vpop.permute.xlu0 %7701
      %7703 = vrot.lane.b32.xlu0 %v7410, 24
      %v7704 = vpop.permute.xlu0 %7703
      %7705 = vrot.lane.b32.xlu0 %v7411, 24
      %v7706 = vpop.permute.xlu0 %7705
      %7707 = vrot.lane.b32.xlu0 %v7412, 24
      %v7708 = vpop.permute.xlu0 %7707
      %7709 = vrot.lane.b32.xlu0 %v7413, 24
      %v7710 = vpop.permute.xlu0 %7709
      %7711 = vrot.lane.b32.xlu0 %v7414, 24
      %v7712 = vpop.permute.xlu0 %7711
      %7713 = vrot.lane.b32.xlu0 %v7415, 24
      %v7714 = vpop.permute.xlu0 %7713
      %7715 = vrot.lane.b32.xlu0 %v7416, 24
      %v7716 = vpop.permute.xlu0 %7715
      %7717 = vrot.lane.b32.xlu0 %v7417, 24
      %v7718 = vpop.permute.xlu0 %7717
      %7719 = vrot.lane.b32.xlu0 %v7418, 24
      %v7720 = vpop.permute.xlu0 %7719
      %7721 = vrot.lane.b32.xlu0 %v7419, 24
      %v7722 = vpop.permute.xlu0 %7721
      %7723 = vrot.lane.b32.xlu0 %v7420, 24
      %v7724 = vpop.permute.xlu0 %7723
      %7725 = vrot.lane.b32.xlu0 %v7421, 24
      %v7726 = vpop.permute.xlu0 %7725
      %7727 = vrot.lane.b32.xlu0 %v7422, 24
      %v7728 = vpop.permute.xlu0 %7727
      %7729 = vrot.lane.b32.xlu0 %v7423, 24
      %v7730 = vpop.permute.xlu0 %7729
      %7731 = vrot.lane.b32.xlu0 %v7424, 24
      %v7732 = vpop.permute.xlu0 %7731
      %7733 = vrot.lane.b32.xlu0 %v7425, 24
      %v7734 = vpop.permute.xlu0 %7733
      %7735 = vrot.lane.b32.xlu0 %v7426, 24
      %v7736 = vpop.permute.xlu0 %7735
      %7737 = vrot.lane.b32.xlu0 %v7427, 24
      %v7738 = vpop.permute.xlu0 %7737
      %7739 = vrot.lane.b32.xlu0 %v7428, 24
      %v7740 = vpop.permute.xlu0 %7739
      %7741 = vrot.lane.b32.xlu0 %v7429, 24
      %v7742 = vpop.permute.xlu0 %7741
      %7743 = vrot.lane.b32.xlu0 %v7430, 24
      %v7744 = vpop.permute.xlu0 %7743
      %7745 = vrot.lane.b32.xlu0 %v7431, 24
      %v7746 = vpop.permute.xlu0 %7745
      %7747 = vrot.lane.b32.xlu0 %v7432, 24
      %v7748 = vpop.permute.xlu0 %7747
      %7749 = vrot.lane.b32.xlu0 %v7433, 24
      %v7750 = vpop.permute.xlu0 %7749
      %7751 = vrot.lane.b32.xlu0 %v7434, 24
      %v7752 = vpop.permute.xlu0 %7751
      %7753 = vrot.lane.b32.xlu0 %v7435, 24
      %v7754 = vpop.permute.xlu0 %7753
      %7755 = vrot.lane.b32.xlu0 %v7436, 24
      %v7756 = vpop.permute.xlu0 %7755
      %7821 = vrot.lane.b32.xlu0 %v1512, 40
      %v7822 = vpop.permute.xlu0 %7821
      %7823 = vrot.lane.b32.xlu0 %v1513, 40
      %v7824 = vpop.permute.xlu0 %7823
      %7825 = vrot.lane.b32.xlu0 %v1514, 40
      %v7826 = vpop.permute.xlu0 %7825
      %7827 = vrot.lane.b32.xlu0 %v1515, 40
      %v7828 = vpop.permute.xlu0 %7827
      %7829 = vrot.lane.b32.xlu0 %v1516, 40
      %v7830 = vpop.permute.xlu0 %7829
      %7831 = vrot.lane.b32.xlu0 %v1517, 40
      %v7832 = vpop.permute.xlu0 %7831
      %7833 = vrot.lane.b32.xlu0 %v1518, 40
      %v7834 = vpop.permute.xlu0 %7833
      %7835 = vrot.lane.b32.xlu0 %v1519, 40
      %v7836 = vpop.permute.xlu0 %7835
      %7837 = vrot.lane.b32.xlu0 %v1520, 40
      %v7838 = vpop.permute.xlu0 %7837
      %7839 = vrot.lane.b32.xlu0 %v1521, 40
      %v7840 = vpop.permute.xlu0 %7839
      %7841 = vrot.lane.b32.xlu0 %v1522, 40
      %v7842 = vpop.permute.xlu0 %7841
      %7843 = vrot.lane.b32.xlu0 %v1523, 40
      %v7844 = vpop.permute.xlu0 %7843
      %7845 = vrot.lane.b32.xlu0 %v1524, 40
      %v7846 = vpop.permute.xlu0 %7845
      %7847 = vrot.lane.b32.xlu0 %v1525, 40
      %v7848 = vpop.permute.xlu0 %7847
      %7849 = vrot.lane.b32.xlu0 %v1526, 40
      %v7850 = vpop.permute.xlu0 %7849
      %7851 = vrot.lane.b32.xlu0 %v1527, 40
      %v7852 = vpop.permute.xlu0 %7851
      %7853 = vrot.lane.b32.xlu0 %v1528, 40
      %v7854 = vpop.permute.xlu0 %7853
      %7855 = vrot.lane.b32.xlu0 %v1529, 40
      %v7856 = vpop.permute.xlu0 %7855
      %7857 = vrot.lane.b32.xlu0 %v1530, 40
      %v7858 = vpop.permute.xlu0 %7857
      %7859 = vrot.lane.b32.xlu0 %v1531, 40
      %v7860 = vpop.permute.xlu0 %7859
      %7861 = vrot.lane.b32.xlu0 %v1532, 40
      %v7862 = vpop.permute.xlu0 %7861
      %7863 = vrot.lane.b32.xlu0 %v1533, 40
      %v7864 = vpop.permute.xlu0 %7863
      %7865 = vrot.lane.b32.xlu0 %v1534, 40
      %v7866 = vpop.permute.xlu0 %7865
      %7867 = vrot.lane.b32.xlu0 %v1535, 40
      %v7868 = vpop.permute.xlu0 %7867
      %7869 = vrot.lane.b32.xlu0 %v1536, 40
      %v7870 = vpop.permute.xlu0 %7869
      %7871 = vrot.lane.b32.xlu0 %v1537, 40
      %v7872 = vpop.permute.xlu0 %7871
      %7873 = vrot.lane.b32.xlu0 %v1538, 40
      %v7874 = vpop.permute.xlu0 %7873
      %7875 = vrot.lane.b32.xlu0 %v1539, 40
      %v7876 = vpop.permute.xlu0 %7875
      %7877 = vrot.lane.b32.xlu0 %v1540, 40
      %v7878 = vpop.permute.xlu0 %7877
      %7879 = vrot.lane.b32.xlu0 %v1541, 40
      %v7880 = vpop.permute.xlu0 %7879
      %7881 = vrot.lane.b32.xlu0 %v1542, 40
      %v7882 = vpop.permute.xlu0 %7881
      %7883 = vrot.lane.b32.xlu0 %v1543, 40
      %v7884 = vpop.permute.xlu0 %7883
      %v7917 = vsel %vm352, %v7470, %v7566
      %v7918 = vsel %vm352, %v7472, %v7568
      %v7919 = vsel %vm352, %v7474, %v7570
      %v7920 = vsel %vm352, %v7476, %v7572
      %v7921 = vsel %vm352, %v7478, %v7574
      %v7922 = vsel %vm352, %v7480, %v7576
      %v7923 = vsel %vm352, %v7482, %v7578
      %v7924 = vsel %vm352, %v7484, %v7580
      %v7925 = vsel %vm352, %v7486, %v7582
      %v7926 = vsel %vm352, %v7488, %v7584
      %v7927 = vsel %vm352, %v7490, %v7586
      %v7928 = vsel %vm352, %v7492, %v7588
      %v7929 = vsel %vm352, %v7494, %v7590
      %v7930 = vsel %vm352, %v7496, %v7592
      %v7931 = vsel %vm352, %v7498, %v7594
      %v7932 = vsel %vm352, %v7500, %v7596
      %v7933 = vsel %vm352, %v7502, %v7598
      %v7934 = vsel %vm352, %v7504, %v7600
      %v7935 = vsel %vm352, %v7506, %v7602
      %v7936 = vsel %vm352, %v7508, %v7604
      %v7937 = vsel %vm352, %v7510, %v7606
      %v7938 = vsel %vm352, %v7512, %v7608
      %v7939 = vsel %vm352, %v7514, %v7610
      %v7940 = vsel %vm352, %v7516, %v7612
      %v7941 = vsel %vm352, %v7518, %v7614
      %v7942 = vsel %vm352, %v7520, %v7616
      %v7943 = vsel %vm352, %v7522, %v7618
      %v7944 = vsel %vm352, %v7524, %v7620
      %v7945 = vsel %vm352, %v7526, %v7622
      %v7946 = vsel %vm352, %v7528, %v7624
      %v7947 = vsel %vm352, %v7530, %v7626
      %v7948 = vsel %vm352, %v7532, %v7628
      %vm7949 = vcmask 195584
      %v7950 = vsel %vm7949, %v7917, %v7694
      %v7951 = vsel %vm7949, %v7918, %v7696
      %v7952 = vsel %vm7949, %v7919, %v7698
      %v7953 = vsel %vm7949, %v7920, %v7700
      %v7954 = vsel %vm7949, %v7921, %v7702
      %v7955 = vsel %vm7949, %v7922, %v7704
      %v7956 = vsel %vm7949, %v7923, %v7706
      %v7957 = vsel %vm7949, %v7924, %v7708
      %v7958 = vsel %vm7949, %v7925, %v7710
      %v7959 = vsel %vm7949, %v7926, %v7712
      %v7960 = vsel %vm7949, %v7927, %v7714
      %v7961 = vsel %vm7949, %v7928, %v7716
      %v7962 = vsel %vm7949, %v7929, %v7718
      %v7963 = vsel %vm7949, %v7930, %v7720
      %v7964 = vsel %vm7949, %v7931, %v7722
      %v7965 = vsel %vm7949, %v7932, %v7724
      %v7966 = vsel %vm7949, %v7933, %v7726
      %v7967 = vsel %vm7949, %v7934, %v7728
      %v7968 = vsel %vm7949, %v7935, %v7730
      %v7969 = vsel %vm7949, %v7936, %v7732
      %v7970 = vsel %vm7949, %v7937, %v7734
      %v7971 = vsel %vm7949, %v7938, %v7736
      %v7972 = vsel %vm7949, %v7939, %v7738
      %v7973 = vsel %vm7949, %v7940, %v7740
      %v7974 = vsel %vm7949, %v7941, %v7742
      %v7975 = vsel %vm7949, %v7942, %v7744
      %v7976 = vsel %vm7949, %v7943, %v7746
      %v7977 = vsel %vm7949, %v7944, %v7748
      %v7978 = vsel %vm7949, %v7945, %v7750
      %v7979 = vsel %vm7949, %v7946, %v7752
      %v7980 = vsel %vm7949, %v7947, %v7754
      %v7981 = vsel %vm7949, %v7948, %v7756
      %vm7982 = vcmask 326656
      %v7983 = vsel %vm7982, %v7950, %v7822
      %v7984 = vsel %vm7982, %v7951, %v7824
      %v7985 = vsel %vm7982, %v7952, %v7826
      %v7986 = vsel %vm7982, %v7953, %v7828
      %v7987 = vsel %vm7982, %v7954, %v7830
      %v7988 = vsel %vm7982, %v7955, %v7832
      %v7989 = vsel %vm7982, %v7956, %v7834
      %v7990 = vsel %vm7982, %v7957, %v7836
      %v7991 = vsel %vm7982, %v7958, %v7838
      %v7992 = vsel %vm7982, %v7959, %v7840
      %v7993 = vsel %vm7982, %v7960, %v7842
      %v7994 = vsel %vm7982, %v7961, %v7844
      %v7995 = vsel %vm7982, %v7962, %v7846
      %v7996 = vsel %vm7982, %v7963, %v7848
      %v7997 = vsel %vm7982, %v7964, %v7850
      %v7998 = vsel %vm7982, %v7965, %v7852
      %v7999 = vsel %vm7982, %v7966, %v7854
      %v8000 = vsel %vm7982, %v7967, %v7856
      %v8001 = vsel %vm7982, %v7968, %v7858
      %v8002 = vsel %vm7982, %v7969, %v7860
      %v8003 = vsel %vm7982, %v7970, %v7862
      %v8004 = vsel %vm7982, %v7971, %v7864
      %v8005 = vsel %vm7982, %v7972, %v7866
      %v8006 = vsel %vm7982, %v7973, %v7868
      %v8007 = vsel %vm7982, %v7974, %v7870
      %v8008 = vsel %vm7982, %v7975, %v7872
      %v8009 = vsel %vm7982, %v7976, %v7874
      %v8010 = vsel %vm7982, %v7977, %v7876
      %v8011 = vsel %vm7982, %v7978, %v7878
      %v8012 = vsel %vm7982, %v7979, %v7880
      %v8013 = vsel %vm7982, %v7980, %v7882
      %v8014 = vsel %vm7982, %v7981, %v7884
      %vm8015 = vcmask 392192
      %8016 = vst.msk [vmem:[%s305] sm:$0xff] %vm8015, %v7983
      %8017 = vst.msk [vmem:[%s305 + $0x8] sm:$0xff] %vm8015, %v7984
      %8018 = vst.msk [vmem:[%s305 + $0x10] sm:$0xff] %vm8015, %v7985
      %8019 = vst.msk [vmem:[%s305 + $0x18] sm:$0xff] %vm8015, %v7986
      %8020 = vst.msk [vmem:[%s305 + $0x20] sm:$0xff] %vm8015, %v7987
      %8021 = vst.msk [vmem:[%s305 + $0x28] sm:$0xff] %vm8015, %v7988
      %8022 = vst.msk [vmem:[%s305 + $0x30] sm:$0xff] %vm8015, %v7989
      %8023 = vst.msk [vmem:[%s305 + $0x38] sm:$0xff] %vm8015, %v7990
      %8024 = vst.msk [vmem:[%s305 + $0x40] sm:$0xff] %vm8015, %v7991
      %8025 = vst.msk [vmem:[%s305 + $0x48] sm:$0xff] %vm8015, %v7992
      %8026 = vst.msk [vmem:[%s305 + $0x50] sm:$0xff] %vm8015, %v7993
      %8027 = vst.msk [vmem:[%s305 + $0x58] sm:$0xff] %vm8015, %v7994
      %8028 = vst.msk [vmem:[%s305 + $0x60] sm:$0xff] %vm8015, %v7995
      %8029 = vst.msk [vmem:[%s305 + $0x68] sm:$0xff] %vm8015, %v7996
      %8030 = vst.msk [vmem:[%s305 + $0x70] sm:$0xff] %vm8015, %v7997
      %8031 = vst.msk [vmem:[%s305 + $0x78] sm:$0xff] %vm8015, %v7998
      %8032 = vst.msk [vmem:[%s305 + $0x80] sm:$0xff] %vm8015, %v7999
      %8033 = vst.msk [vmem:[%s305 + $0x88] sm:$0xff] %vm8015, %v8000
      %8034 = vst.msk [vmem:[%s305 + $0x90] sm:$0xff] %vm8015, %v8001
      %8035 = vst.msk [vmem:[%s305 + $0x98] sm:$0xff] %vm8015, %v8002
      %8036 = vst.msk [vmem:[%s305 + $0xa0] sm:$0xff] %vm8015, %v8003
      %8037 = vst.msk [vmem:[%s305 + $0xa8] sm:$0xff] %vm8015, %v8004
      %8038 = vst.msk [vmem:[%s305 + $0xb0] sm:$0xff] %vm8015, %v8005
      %8039 = vst.msk [vmem:[%s305 + $0xb8] sm:$0xff] %vm8015, %v8006
      %8040 = vst.msk [vmem:[%s305 + $0xc0] sm:$0xff] %vm8015, %v8007
      %8041 = vst.msk [vmem:[%s305 + $0xc8] sm:$0xff] %vm8015, %v8008
      %8042 = vst.msk [vmem:[%s305 + $0xd0] sm:$0xff] %vm8015, %v8009
      %8043 = vst.msk [vmem:[%s305 + $0xd8] sm:$0xff] %vm8015, %v8010
      %8044 = vst.msk [vmem:[%s305 + $0xe0] sm:$0xff] %vm8015, %v8011
      %8045 = vst.msk [vmem:[%s305 + $0xe8] sm:$0xff] %vm8015, %v8012
      %8046 = vst.msk [vmem:[%s305 + $0xf0] sm:$0xff] %vm8015, %v8013
      %8047 = vst.msk [vmem:[%s305 + $0xf8] sm:$0xff] %vm8015, %v8014
      %p8048 = scmp.lt.s32.totalorder %s19, 1
      %s8049 = scalar_select %p8048, %s19, 1
      %s8050 = smul.addr %s8049, 32
      %s8051 = smul.addr %s8050, 8
      %s8052 = scalar_lea.vmem %s8, %s8051
      // Predicated region
      $region53: #{tpu_custom_call.1} parent=51 // pred_check
        %p8053 = pneg %p210
      $region54: #{tpu_custom_call.1} parent=51 // pred_check_branch
        %8055 = sbr.rel (%p8053) target = $region56
      $region55: #{tpu_custom_call.1} parent=51 // pred_region
        _
      $region56: #{tpu_custom_call.1} parent=51 // pred_fallthru
        _
    $region52: #{tpu_custom_call.1} parent=5 // pred_fallthru
      _
    %p8056 = scmp.le.s32.totalorder 2, %s14
    // Predicated region
    $region57: #{tpu_custom_call.1} parent=5 // pred_check
      %p8057 = pneg %p8056
    $region58: #{tpu_custom_call.1} parent=5 // pred_check_branch
      %8059 = sbr.rel (%p8057) target = $region60
    $region59: #{tpu_custom_call.1} parent=5 // pred_region
      %s8060 = ssub.s32 %s14, 2
      // Predicated region
      $region61: #{tpu_custom_call.1} parent=59 // pred_check
        %p8061 = pneg %p216
      $region62: #{tpu_custom_call.1} parent=59 // pred_check_branch
        %8063 = sbr.rel (%p8061) target = $region64
      $region63: #{tpu_custom_call.1} parent=59 // pred_region
        %p8064 = scmp.lt.s32.totalorder %s20, 1
        %s8065 = scalar_select %p8064, %s20, 1
        %s8066 = smul.addr %s8065, 32
        %s8067 = smul.addr %s8066, 8
        %s8068 = scalar_lea.vmem %s8, %s8067
      $region64: #{tpu_custom_call.1} parent=59 // pred_fallthru
        _
    $region60: #{tpu_custom_call.1} parent=5 // pred_fallthru
      _
  $region6: #{tpu_custom_call.1} parent=0 // loop_footer
    %s18 = sadd.s32 1, %s14
  $region7: #{tpu_custom_call.1} parent=0 // loop_footer_branch
    %13 = sbr.rel target = $region3
  $region8: #{tpu_custom_call.1} parent=0 // loop_exit
    _

</llo_original>
